<compile_context>
chip_gen: v7x
topology: tpu7x:2x2x1
jax: 0.10.0
libtpu: 0.0.40
codegen_flags: <defaults>
</compile_context>

<pallas_src>
import jax
import jax.numpy as jnp
from jax import lax
from jax.experimental import pallas as pl
from jax.experimental.pallas import tpu as pltpu

FEATS = 11
WORDS = 154
DAYS = 512
INPUT_DIMS = FEATS + WORDS            # 165
K_TOTAL = DAYS * INPUT_DIMS           # 84480 == 660 * 128 (lane aligned)


def _largest_divisor_leq(n, cap):
    for d in range(min(cap, n), 0, -1):
        if n % d == 0:
            return d
    return 1


def _make_linear_kernel(batch, feats, slab_cols):
    """VPU multiply-accumulate linear kernel: o[c,b,f] += sum_k x[b,k] * w[f,k]."""
    slab = slab_cols * 128

    def kernel(x_ref, w_ref, o_ref):
        # x_ref: (batch, tk) f32   w_ref: (feats, tk) bf16 (or f32)   o_ref: (1, batch, feats) f32
        k = pl.program_id(1)
        tk = x_ref.shape[1]
        n_slabs = tk // slab

        # Lane-wide f32 accumulators (feats, 128), one per batch row, held in vregs.
        acc = [jnp.zeros((feats, 128), jnp.float32) for _ in range(batch)]

        for s in range(n_slabs):                                   # static unroll
            lo = s * slab
            # cast immediately after load: keeps bf16 only on the DMA (v5e has no bf16 VPU)
            w_s = w_ref[:, lo:lo + slab].astype(jnp.float32)       # (feats, slab)
            for b in range(batch):
                x_s = x_ref[b:b + 1, lo:lo + slab]                 # (1, slab) f32
                prod = x_s * w_s                                   # (feats, slab) on the VPU
                # fold the slab's 128-lane columns into one column (vreg adds, layout-free)
                folded = prod[:, 0:128]
                for c in range(1, slab_cols):
                    folded = folded + prod[:, c * 128:(c + 1) * 128]
                acc[b] = acc[b] + folded                           # (feats, 128)

        # One cross-lane (XLU) reduction per grid step -> (batch, feats) partial.
        partial = jnp.sum(jnp.stack(acc, axis=0), axis=-1)         # (batch, feats) f32

        @pl.when(k == 0)
        def _():
            o_ref[...] = partial[None, :, :]

        @pl.when(k != 0)
        def _():
            o_ref[...] = o_ref[...] + partial[None, :, :]

    return kernel


def neural_network_forward(x, weight, bias, *, core_splits=2, k_steps_per_core=1):
    """Pallas equivalent of NeuralNetwork.forward.

    x:      (..., days, feats+words) float32 (flattened to (B, K) like the PyTorch reshape)
    weight: (feats, K) in native nn.Linear layout; bf16 storage recommended (cast in-kernel)
    bias:   (feats,)
    returns (B, feats) in x.dtype
    """
    feats, K = weight.shape
    x_flat = x.reshape(-1, K)                       # same flatten as the PyTorch forward
    batch = x_flat.shape[0]
    assert K % 128 == 0, "K must be lane-aligned (true for feats=11, words=154, days=512)"

    total_cols = K // 128                           # 660
    nc = core_splits if (core_splits > 0 and total_cols % core_splits == 0) else 1
    cols_per_core = total_cols // nc
    nk = _largest_divisor_leq(cols_per_core, max(1, k_steps_per_core))
    cols_per_step = cols_per_core // nk
    tk = cols_per_step * 128
    slab_cols = _largest_divisor_leq(cols_per_step, 6)   # keep per-slab live vregs small

    kernel = _make_linear_kernel(batch, feats, slab_cols)

    partials = pl.pallas_call(
        kernel,
        out_shape=jax.ShapeDtypeStruct((nc, batch, feats), jnp.float32),
        grid_spec=pltpu.PrefetchScalarGridSpec(
            num_scalar_prefetch=0,
            grid=(nc, nk),                                           # (core split, K reduction)
            in_specs=[
                pl.BlockSpec((batch, tk), lambda c, k: (0, c * nk + k)),   # x tile over K
                pl.BlockSpec((feats, tk), lambda c, k: (0, c * nk + k)),   # W tile, native layout
            ],
            out_specs=pl.BlockSpec((1, batch, feats), lambda c, k: (c, 0, 0)),  # per-core partial
        ),
        compiler_params=pltpu.CompilerParams(
            dimension_semantics=("parallel", "arbitrary"),
            vmem_limit_bytes=16 << 20),
    )(x_flat, weight)

    # Combine the per-core partials and add the bias once (tiny 2x2x11 op, fuses in XLA).
    out = partials.sum(axis=0) + bias.reshape(1, feats).astype(jnp.float32)
    return out.astype(x.dtype)


if __name__ == "__main__":
    key = jax.random.PRNGKey(0)
    kx, kw, kb = jax.random.split(key, 3)

    B = 2
    x = jax.random.normal(kx, (B, DAYS, INPUT_DIMS), dtype=jnp.float32)
    weight = jax.random.normal(kw, (FEATS, K_TOTAL), dtype=jnp.float32) * 0.01
    bias = jax.random.normal(kb, (FEATS,), dtype=jnp.float32) * 0.01

    # One-time storage-format prep: the weight lives in HBM as bf16 (halves DMA per call).
    weight_bf16 = weight.astype(jnp.bfloat16)

    out = neural_network_forward(x, weight_bf16, bias)
    out = jax.block_until_ready(out)

    # Reference uses the same bf16 weight storage with f32 accumulation, so the only
    # difference vs the kernel is summation order.
    w_ref32 = weight_bf16.astype(jnp.float32)
    ref = jnp.dot(x.reshape(B, -1), w_ref32.T, precision=lax.Precision.HIGHEST) + bias

    assert out.shape == (B, FEATS)
    assert jnp.allclose(out, ref, rtol=1e-3, atol=1e-3), float(jnp.max(jnp.abs(out - ref)))

    print("KERNEL_OK")
</pallas_src>

<mosaic_0001>
module attributes {stable_mosaic.version = 11 : i64} {
  func.func @kernel(%arg0: i32, %arg1: i32, %arg2: memref<2x42240xf32, #tpu.memory_space<vmem>>, %arg3: memref<11x42240xbf16, #tpu.memory_space<vmem>>, %arg4: memref<1x2x11xf32, #tpu.memory_space<vmem>>) attributes {dimension_semantics = [#tpu.dimension_semantics<parallel>, #tpu.dimension_semantics<arbitrary>], iteration_bounds = array<i64: 2, 1>, scalar_prefetch = 0 : i64, scratch_operands = 0 : i64, tpu.core_type = #tpu.core_type<tc>, window_params = [{transform_indices = @transform_0, window_bounds = array<i64: 2, 42240>}, {transform_indices = @transform_1, window_bounds = array<i64: 11, 42240>}, {transform_indices = @transform_2, window_bounds = array<i64: 1, 2, 11>}]} {
    %cst = arith.constant 0.000000e+00 : f32
    %0 = vector.broadcast %cst : f32 to vector<11x128xf32>
    %cst_0 = arith.constant 0.000000e+00 : f32
    %1 = vector.broadcast %cst_0 : f32 to vector<11x128xf32>
    %c0 = arith.constant 0 : index
    %c0_1 = arith.constant 0 : index
    %2 = vector.load %arg3[%c0, %c0_1] : memref<11x42240xbf16, #tpu.memory_space<vmem>>, vector<11x768xbf16>
    %3 = arith.extf %2 : vector<11x768xbf16> to vector<11x768xf32>
    %c0_2 = arith.constant 0 : index
    %c0_3 = arith.constant 0 : index
    %4 = vector.load %arg2[%c0_2, %c0_3] : memref<2x42240xf32, #tpu.memory_space<vmem>>, vector<1x768xf32>
    %5 = vector.broadcast %4 : vector<1x768xf32> to vector<11x768xf32>
    %6 = arith.mulf %5, %3 : vector<11x768xf32>
    %7 = vector.extract_strided_slice %6 {offsets = [0, 0], sizes = [11, 128], strides = [1, 1]} : vector<11x768xf32> to vector<11x128xf32>
    %8 = vector.extract_strided_slice %6 {offsets = [0, 128], sizes = [11, 128], strides = [1, 1]} : vector<11x768xf32> to vector<11x128xf32>
    %9 = arith.addf %7, %8 : vector<11x128xf32>
    %10 = vector.extract_strided_slice %6 {offsets = [0, 256], sizes = [11, 128], strides = [1, 1]} : vector<11x768xf32> to vector<11x128xf32>
    %11 = arith.addf %9, %10 : vector<11x128xf32>
    %12 = vector.extract_strided_slice %6 {offsets = [0, 384], sizes = [11, 128], strides = [1, 1]} : vector<11x768xf32> to vector<11x128xf32>
    %13 = arith.addf %11, %12 : vector<11x128xf32>
    %14 = vector.extract_strided_slice %6 {offsets = [0, 512], sizes = [11, 128], strides = [1, 1]} : vector<11x768xf32> to vector<11x128xf32>
    %15 = arith.addf %13, %14 : vector<11x128xf32>
    %16 = vector.extract_strided_slice %6 {offsets = [0, 640], sizes = [11, 128], strides = [1, 1]} : vector<11x768xf32> to vector<11x128xf32>
    %17 = arith.addf %15, %16 : vector<11x128xf32>
    %18 = arith.addf %0, %17 : vector<11x128xf32>
    %c1 = arith.constant 1 : index
    %c0_4 = arith.constant 0 : index
    %19 = vector.load %arg2[%c1, %c0_4] : memref<2x42240xf32, #tpu.memory_space<vmem>>, vector<1x768xf32>
    %20 = vector.broadcast %19 : vector<1x768xf32> to vector<11x768xf32>
    %21 = arith.mulf %20, %3 : vector<11x768xf32>
    %22 = vector.extract_strided_slice %21 {offsets = [0, 0], sizes = [11, 128], strides = [1, 1]} : vector<11x768xf32> to vector<11x128xf32>
    %23 = vector.extract_strided_slice %21 {offsets = [0, 128], sizes = [11, 128], strides = [1, 1]} : vector<11x768xf32> to vector<11x128xf32>
    %24 = arith.addf %22, %23 : vector<11x128xf32>
    %25 = vector.extract_strided_slice %21 {offsets = [0, 256], sizes = [11, 128], strides = [1, 1]} : vector<11x768xf32> to vector<11x128xf32>
    %26 = arith.addf %24, %25 : vector<11x128xf32>
    %27 = vector.extract_strided_slice %21 {offsets = [0, 384], sizes = [11, 128], strides = [1, 1]} : vector<11x768xf32> to vector<11x128xf32>
    %28 = arith.addf %26, %27 : vector<11x128xf32>
    %29 = vector.extract_strided_slice %21 {offsets = [0, 512], sizes = [11, 128], strides = [1, 1]} : vector<11x768xf32> to vector<11x128xf32>
    %30 = arith.addf %28, %29 : vector<11x128xf32>
    %31 = vector.extract_strided_slice %21 {offsets = [0, 640], sizes = [11, 128], strides = [1, 1]} : vector<11x768xf32> to vector<11x128xf32>
    %32 = arith.addf %30, %31 : vector<11x128xf32>
    %33 = arith.addf %1, %32 : vector<11x128xf32>
    %c0_5 = arith.constant 0 : index
    %c768 = arith.constant 768 : index
    %34 = vector.load %arg3[%c0_5, %c768] : memref<11x42240xbf16, #tpu.memory_space<vmem>>, vector<11x768xbf16>
    %35 = arith.extf %34 : vector<11x768xbf16> to vector<11x768xf32>
    %c0_6 = arith.constant 0 : index
    %c768_7 = arith.constant 768 : index
    %36 = vector.load %arg2[%c0_6, %c768_7] : memref<2x42240xf32, #tpu.memory_space<vmem>>, vector<1x768xf32>
    %37 = vector.broadcast %36 : vector<1x768xf32> to vector<11x768xf32>
    %38 = arith.mulf %37, %35 : vector<11x768xf32>
    %39 = vector.extract_strided_slice %38 {offsets = [0, 0], sizes = [11, 128], strides = [1, 1]} : vector<11x768xf32> to vector<11x128xf32>
    %40 = vector.extract_strided_slice %38 {offsets = [0, 128], sizes = [11, 128], strides = [1, 1]} : vector<11x768xf32> to vector<11x128xf32>
    %41 = arith.addf %39, %40 : vector<11x128xf32>
    %42 = vector.extract_strided_slice %38 {offsets = [0, 256], sizes = [11, 128], strides = [1, 1]} : vector<11x768xf32> to vector<11x128xf32>
    %43 = arith.addf %41, %42 : vector<11x128xf32>
    %44 = vector.extract_strided_slice %38 {offsets = [0, 384], sizes = [11, 128], strides = [1, 1]} : vector<11x768xf32> to vector<11x128xf32>
    %45 = arith.addf %43, %44 : vector<11x128xf32>
    %46 = vector.extract_strided_slice %38 {offsets = [0, 512], sizes = [11, 128], strides = [1, 1]} : vector<11x768xf32> to vector<11x128xf32>
    %47 = arith.addf %45, %46 : vector<11x128xf32>
    %48 = vector.extract_strided_slice %38 {offsets = [0, 640], sizes = [11, 128], strides = [1, 1]} : vector<11x768xf32> to vector<11x128xf32>
    %49 = arith.addf %47, %48 : vector<11x128xf32>
    %50 = arith.addf %18, %49 : vector<11x128xf32>
    %c1_8 = arith.constant 1 : index
    %c768_9 = arith.constant 768 : index
    %51 = vector.load %arg2[%c1_8, %c768_9] : memref<2x42240xf32, #tpu.memory_space<vmem>>, vector<1x768xf32>
    %52 = vector.broadcast %51 : vector<1x768xf32> to vector<11x768xf32>
    %53 = arith.mulf %52, %35 : vector<11x768xf32>
    %54 = vector.extract_strided_slice %53 {offsets = [0, 0], sizes = [11, 128], strides = [1, 1]} : vector<11x768xf32> to vector<11x128xf32>
    %55 = vector.extract_strided_slice %53 {offsets = [0, 128], sizes = [11, 128], strides = [1, 1]} : vector<11x768xf32> to vector<11x128xf32>
    %56 = arith.addf %54, %55 : vector<11x128xf32>
    %57 = vector.extract_strided_slice %53 {offsets = [0, 256], sizes = [11, 128], strides = [1, 1]} : vector<11x768xf32> to vector<11x128xf32>
    %58 = arith.addf %56, %57 : vector<11x128xf32>
    %59 = vector.extract_strided_slice %53 {offsets = [0, 384], sizes = [11, 128], strides = [1, 1]} : vector<11x768xf32> to vector<11x128xf32>
    %60 = arith.addf %58, %59 : vector<11x128xf32>
    %61 = vector.extract_strided_slice %53 {offsets = [0, 512], sizes = [11, 128], strides = [1, 1]} : vector<11x768xf32> to vector<11x128xf32>
    %62 = arith.addf %60, %61 : vector<11x128xf32>
    %63 = vector.extract_strided_slice %53 {offsets = [0, 640], sizes = [11, 128], strides = [1, 1]} : vector<11x768xf32> to vector<11x128xf32>
    %64 = arith.addf %62, %63 : vector<11x128xf32>
    %65 = arith.addf %33, %64 : vector<11x128xf32>
    %c0_10 = arith.constant 0 : index
    %c1536 = arith.constant 1536 : index
    %66 = vector.load %arg3[%c0_10, %c1536] : memref<11x42240xbf16, #tpu.memory_space<vmem>>, vector<11x768xbf16>
    %67 = arith.extf %66 : vector<11x768xbf16> to vector<11x768xf32>
    %c0_11 = arith.constant 0 : index
    %c1536_12 = arith.constant 1536 : index
    %68 = vector.load %arg2[%c0_11, %c1536_12] : memref<2x42240xf32, #tpu.memory_space<vmem>>, vector<1x768xf32>
    %69 = vector.broadcast %68 : vector<1x768xf32> to vector<11x768xf32>
    %70 = arith.mulf %69, %67 : vector<11x768xf32>
    %71 = vector.extract_strided_slice %70 {offsets = [0, 0], sizes = [11, 128], strides = [1, 1]} : vector<11x768xf32> to vector<11x128xf32>
    %72 = vector.extract_strided_slice %70 {offsets = [0, 128], sizes = [11, 128], strides = [1, 1]} : vector<11x768xf32> to vector<11x128xf32>
    %73 = arith.addf %71, %72 : vector<11x128xf32>
    %74 = vector.extract_strided_slice %70 {offsets = [0, 256], sizes = [11, 128], strides = [1, 1]} : vector<11x768xf32> to vector<11x128xf32>
    %75 = arith.addf %73, %74 : vector<11x128xf32>
    %76 = vector.extract_strided_slice %70 {offsets = [0, 384], sizes = [11, 128], strides = [1, 1]} : vector<11x768xf32> to vector<11x128xf32>
    %77 = arith.addf %75, %76 : vector<11x128xf32>
    %78 = vector.extract_strided_slice %70 {offsets = [0, 512], sizes = [11, 128], strides = [1, 1]} : vector<11x768xf32> to vector<11x128xf32>
    %79 = arith.addf %77, %78 : vector<11x128xf32>
    %80 = vector.extract_strided_slice %70 {offsets = [0, 640], sizes = [11, 128], strides = [1, 1]} : vector<11x768xf32> to vector<11x128xf32>
    %81 = arith.addf %79, %80 : vector<11x128xf32>
    %82 = arith.addf %50, %81 : vector<11x128xf32>
    %c1_13 = arith.constant 1 : index
    %c1536_14 = arith.constant 1536 : index
    %83 = vector.load %arg2[%c1_13, %c1536_14] : memref<2x42240xf32, #tpu.memory_space<vmem>>, vector<1x768xf32>
    %84 = vector.broadcast %83 : vector<1x768xf32> to vector<11x768xf32>
    %85 = arith.mulf %84, %67 : vector<11x768xf32>
    %86 = vector.extract_strided_slice %85 {offsets = [0, 0], sizes = [11, 128], strides = [1, 1]} : vector<11x768xf32> to vector<11x128xf32>
    %87 = vector.extract_strided_slice %85 {offsets = [0, 128], sizes = [11, 128], strides = [1, 1]} : vector<11x768xf32> to vector<11x128xf32>
    %88 = arith.addf %86, %87 : vector<11x128xf32>
    %89 = vector.extract_strided_slice %85 {offsets = [0, 256], sizes = [11, 128], strides = [1, 1]} : vector<11x768xf32> to vector<11x128xf32>
    %90 = arith.addf %88, %89 : vector<11x128xf32>
    %91 = vector.extract_strided_slice %85 {offsets = [0, 384], sizes = [11, 128], strides = [1, 1]} : vector<11x768xf32> to vector<11x128xf32>
    %92 = arith.addf %90, %91 : vector<11x128xf32>
    %93 = vector.extract_strided_slice %85 {offsets = [0, 512], sizes = [11, 128], strides = [1, 1]} : vector<11x768xf32> to vector<11x128xf32>
    %94 = arith.addf %92, %93 : vector<11x128xf32>
    %95 = vector.extract_strided_slice %85 {offsets = [0, 640], sizes = [11, 128], strides = [1, 1]} : vector<11x768xf32> to vector<11x128xf32>
    %96 = arith.addf %94, %95 : vector<11x128xf32>
    %97 = arith.addf %65, %96 : vector<11x128xf32>
    %c0_15 = arith.constant 0 : index
    %c2304 = arith.constant 2304 : index
    %98 = vector.load %arg3[%c0_15, %c2304] : memref<11x42240xbf16, #tpu.memory_space<vmem>>, vector<11x768xbf16>
    %99 = arith.extf %98 : vector<11x768xbf16> to vector<11x768xf32>
    %c0_16 = arith.constant 0 : index
    %c2304_17 = arith.constant 2304 : index
    %100 = vector.load %arg2[%c0_16, %c2304_17] : memref<2x42240xf32, #tpu.memory_space<vmem>>, vector<1x768xf32>
    %101 = vector.broadcast %100 : vector<1x768xf32> to vector<11x768xf32>
    %102 = arith.mulf %101, %99 : vector<11x768xf32>
    %103 = vector.extract_strided_slice %102 {offsets = [0, 0], sizes = [11, 128], strides = [1, 1]} : vector<11x768xf32> to vector<11x128xf32>
    %104 = vector.extract_strided_slice %102 {offsets = [0, 128], sizes = [11, 128], strides = [1, 1]} : vector<11x768xf32> to vector<11x128xf32>
    %105 = arith.addf %103, %104 : vector<11x128xf32>
    %106 = vector.extract_strided_slice %102 {offsets = [0, 256], sizes = [11, 128], strides = [1, 1]} : vector<11x768xf32> to vector<11x128xf32>
    %107 = arith.addf %105, %106 : vector<11x128xf32>
    %108 = vector.extract_strided_slice %102 {offsets = [0, 384], sizes = [11, 128], strides = [1, 1]} : vector<11x768xf32> to vector<11x128xf32>
    %109 = arith.addf %107, %108 : vector<11x128xf32>
    %110 = vector.extract_strided_slice %102 {offsets = [0, 512], sizes = [11, 128], strides = [1, 1]} : vector<11x768xf32> to vector<11x128xf32>
    %111 = arith.addf %109, %110 : vector<11x128xf32>
    %112 = vector.extract_strided_slice %102 {offsets = [0, 640], sizes = [11, 128], strides = [1, 1]} : vector<11x768xf32> to vector<11x128xf32>
    %113 = arith.addf %111, %112 : vector<11x128xf32>
    %114 = arith.addf %82, %113 : vector<11x128xf32>
    %c1_18 = arith.constant 1 : index
    %c2304_19 = arith.constant 2304 : index
    %115 = vector.load %arg2[%c1_18, %c2304_19] : memref<2x42240xf32, #tpu.memory_space<vmem>>, vector<1x768xf32>
    %116 = vector.broadcast %115 : vector<1x768xf32> to vector<11x768xf32>
    %117 = arith.mulf %116, %99 : vector<11x768xf32>
    %118 = vector.extract_strided_slice %117 {offsets = [0, 0], sizes = [11, 128], strides = [1, 1]} : vector<11x768xf32> to vector<11x128xf32>
    %119 = vector.extract_strided_slice %117 {offsets = [0, 128], sizes = [11, 128], strides = [1, 1]} : vector<11x768xf32> to vector<11x128xf32>
    %120 = arith.addf %118, %119 : vector<11x128xf32>
    %121 = vector.extract_strided_slice %117 {offsets = [0, 256], sizes = [11, 128], strides = [1, 1]} : vector<11x768xf32> to vector<11x128xf32>
    %122 = arith.addf %120, %121 : vector<11x128xf32>
    %123 = vector.extract_strided_slice %117 {offsets = [0, 384], sizes = [11, 128], strides = [1, 1]} : vector<11x768xf32> to vector<11x128xf32>
    %124 = arith.addf %122, %123 : vector<11x128xf32>
    %125 = vector.extract_strided_slice %117 {offsets = [0, 512], sizes = [11, 128], strides = [1, 1]} : vector<11x768xf32> to vector<11x128xf32>
    %126 = arith.addf %124, %125 : vector<11x128xf32>
    %127 = vector.extract_strided_slice %117 {offsets = [0, 640], sizes = [11, 128], strides = [1, 1]} : vector<11x768xf32> to vector<11x128xf32>
    %128 = arith.addf %126, %127 : vector<11x128xf32>
    %129 = arith.addf %97, %128 : vector<11x128xf32>
    %c0_20 = arith.constant 0 : index
    %c3072 = arith.constant 3072 : index
    %130 = vector.load %arg3[%c0_20, %c3072] : memref<11x42240xbf16, #tpu.memory_space<vmem>>, vector<11x768xbf16>
    %131 = arith.extf %130 : vector<11x768xbf16> to vector<11x768xf32>
    %c0_21 = arith.constant 0 : index
    %c3072_22 = arith.constant 3072 : index
    %132 = vector.load %arg2[%c0_21, %c3072_22] : memref<2x42240xf32, #tpu.memory_space<vmem>>, vector<1x768xf32>
    %133 = vector.broadcast %132 : vector<1x768xf32> to vector<11x768xf32>
    %134 = arith.mulf %133, %131 : vector<11x768xf32>
    %135 = vector.extract_strided_slice %134 {offsets = [0, 0], sizes = [11, 128], strides = [1, 1]} : vector<11x768xf32> to vector<11x128xf32>
    %136 = vector.extract_strided_slice %134 {offsets = [0, 128], sizes = [11, 128], strides = [1, 1]} : vector<11x768xf32> to vector<11x128xf32>
    %137 = arith.addf %135, %136 : vector<11x128xf32>
    %138 = vector.extract_strided_slice %134 {offsets = [0, 256], sizes = [11, 128], strides = [1, 1]} : vector<11x768xf32> to vector<11x128xf32>
    %139 = arith.addf %137, %138 : vector<11x128xf32>
    %140 = vector.extract_strided_slice %134 {offsets = [0, 384], sizes = [11, 128], strides = [1, 1]} : vector<11x768xf32> to vector<11x128xf32>
    %141 = arith.addf %139, %140 : vector<11x128xf32>
    %142 = vector.extract_strided_slice %134 {offsets = [0, 512], sizes = [11, 128], strides = [1, 1]} : vector<11x768xf32> to vector<11x128xf32>
    %143 = arith.addf %141, %142 : vector<11x128xf32>
    %144 = vector.extract_strided_slice %134 {offsets = [0, 640], sizes = [11, 128], strides = [1, 1]} : vector<11x768xf32> to vector<11x128xf32>
    %145 = arith.addf %143, %144 : vector<11x128xf32>
    %146 = arith.addf %114, %145 : vector<11x128xf32>
    %c1_23 = arith.constant 1 : index
    %c3072_24 = arith.constant 3072 : index
    %147 = vector.load %arg2[%c1_23, %c3072_24] : memref<2x42240xf32, #tpu.memory_space<vmem>>, vector<1x768xf32>
    %148 = vector.broadcast %147 : vector<1x768xf32> to vector<11x768xf32>
    %149 = arith.mulf %148, %131 : vector<11x768xf32>
    %150 = vector.extract_strided_slice %149 {offsets = [0, 0], sizes = [11, 128], strides = [1, 1]} : vector<11x768xf32> to vector<11x128xf32>
    %151 = vector.extract_strided_slice %149 {offsets = [0, 128], sizes = [11, 128], strides = [1, 1]} : vector<11x768xf32> to vector<11x128xf32>
    %152 = arith.addf %150, %151 : vector<11x128xf32>
    %153 = vector.extract_strided_slice %149 {offsets = [0, 256], sizes = [11, 128], strides = [1, 1]} : vector<11x768xf32> to vector<11x128xf32>
    %154 = arith.addf %152, %153 : vector<11x128xf32>
    %155 = vector.extract_strided_slice %149 {offsets = [0, 384], sizes = [11, 128], strides = [1, 1]} : vector<11x768xf32> to vector<11x128xf32>
    %156 = arith.addf %154, %155 : vector<11x128xf32>
    %157 = vector.extract_strided_slice %149 {offsets = [0, 512], sizes = [11, 128], strides = [1, 1]} : vector<11x768xf32> to vector<11x128xf32>
    %158 = arith.addf %156, %157 : vector<11x128xf32>
    %159 = vector.extract_strided_slice %149 {offsets = [0, 640], sizes = [11, 128], strides = [1, 1]} : vector<11x768xf32> to vector<11x128xf32>
    %160 = arith.addf %158, %159 : vector<11x128xf32>
    %161 = arith.addf %129, %160 : vector<11x128xf32>
    %c0_25 = arith.constant 0 : index
    %c3840 = arith.constant 3840 : index
    %162 = vector.load %arg3[%c0_25, %c3840] : memref<11x42240xbf16, #tpu.memory_space<vmem>>, vector<11x768xbf16>
    %163 = arith.extf %162 : vector<11x768xbf16> to vector<11x768xf32>
    %c0_26 = arith.constant 0 : index
    %c3840_27 = arith.constant 3840 : index
    %164 = vector.load %arg2[%c0_26, %c3840_27] : memref<2x42240xf32, #tpu.memory_space<vmem>>, vector<1x768xf32>
    %165 = vector.broadcast %164 : vector<1x768xf32> to vector<11x768xf32>
    %166 = arith.mulf %165, %163 : vector<11x768xf32>
    %167 = vector.extract_strided_slice %166 {offsets = [0, 0], sizes = [11, 128], strides = [1, 1]} : vector<11x768xf32> to vector<11x128xf32>
    %168 = vector.extract_strided_slice %166 {offsets = [0, 128], sizes = [11, 128], strides = [1, 1]} : vector<11x768xf32> to vector<11x128xf32>
    %169 = arith.addf %167, %168 : vector<11x128xf32>
    %170 = vector.extract_strided_slice %166 {offsets = [0, 256], sizes = [11, 128], strides = [1, 1]} : vector<11x768xf32> to vector<11x128xf32>
    %171 = arith.addf %169, %170 : vector<11x128xf32>
    %172 = vector.extract_strided_slice %166 {offsets = [0, 384], sizes = [11, 128], strides = [1, 1]} : vector<11x768xf32> to vector<11x128xf32>
    %173 = arith.addf %171, %172 : vector<11x128xf32>
    %174 = vector.extract_strided_slice %166 {offsets = [0, 512], sizes = [11, 128], strides = [1, 1]} : vector<11x768xf32> to vector<11x128xf32>
    %175 = arith.addf %173, %174 : vector<11x128xf32>
    %176 = vector.extract_strided_slice %166 {offsets = [0, 640], sizes = [11, 128], strides = [1, 1]} : vector<11x768xf32> to vector<11x128xf32>
    %177 = arith.addf %175, %176 : vector<11x128xf32>
    %178 = arith.addf %146, %177 : vector<11x128xf32>
    %c1_28 = arith.constant 1 : index
    %c3840_29 = arith.constant 3840 : index
    %179 = vector.load %arg2[%c1_28, %c3840_29] : memref<2x42240xf32, #tpu.memory_space<vmem>>, vector<1x768xf32>
    %180 = vector.broadcast %179 : vector<1x768xf32> to vector<11x768xf32>
    %181 = arith.mulf %180, %163 : vector<11x768xf32>
    %182 = vector.extract_strided_slice %181 {offsets = [0, 0], sizes = [11, 128], strides = [1, 1]} : vector<11x768xf32> to vector<11x128xf32>
    %183 = vector.extract_strided_slice %181 {offsets = [0, 128], sizes = [11, 128], strides = [1, 1]} : vector<11x768xf32> to vector<11x128xf32>
    %184 = arith.addf %182, %183 : vector<11x128xf32>
    %185 = vector.extract_strided_slice %181 {offsets = [0, 256], sizes = [11, 128], strides = [1, 1]} : vector<11x768xf32> to vector<11x128xf32>
    %186 = arith.addf %184, %185 : vector<11x128xf32>
    %187 = vector.extract_strided_slice %181 {offsets = [0, 384], sizes = [11, 128], strides = [1, 1]} : vector<11x768xf32> to vector<11x128xf32>
    %188 = arith.addf %186, %187 : vector<11x128xf32>
    %189 = vector.extract_strided_slice %181 {offsets = [0, 512], sizes = [11, 128], strides = [1, 1]} : vector<11x768xf32> to vector<11x128xf32>
    %190 = arith.addf %188, %189 : vector<11x128xf32>
    %191 = vector.extract_strided_slice %181 {offsets = [0, 640], sizes = [11, 128], strides = [1, 1]} : vector<11x768xf32> to vector<11x128xf32>
    %192 = arith.addf %190, %191 : vector<11x128xf32>
    %193 = arith.addf %161, %192 : vector<11x128xf32>
    %c0_30 = arith.constant 0 : index
    %c4608 = arith.constant 4608 : index
    %194 = vector.load %arg3[%c0_30, %c4608] : memref<11x42240xbf16, #tpu.memory_space<vmem>>, vector<11x768xbf16>
    %195 = arith.extf %194 : vector<11x768xbf16> to vector<11x768xf32>
    %c0_31 = arith.constant 0 : index
    %c4608_32 = arith.constant 4608 : index
    %196 = vector.load %arg2[%c0_31, %c4608_32] : memref<2x42240xf32, #tpu.memory_space<vmem>>, vector<1x768xf32>
    %197 = vector.broadcast %196 : vector<1x768xf32> to vector<11x768xf32>
    %198 = arith.mulf %197, %195 : vector<11x768xf32>
    %199 = vector.extract_strided_slice %198 {offsets = [0, 0], sizes = [11, 128], strides = [1, 1]} : vector<11x768xf32> to vector<11x128xf32>
    %200 = vector.extract_strided_slice %198 {offsets = [0, 128], sizes = [11, 128], strides = [1, 1]} : vector<11x768xf32> to vector<11x128xf32>
    %201 = arith.addf %199, %200 : vector<11x128xf32>
    %202 = vector.extract_strided_slice %198 {offsets = [0, 256], sizes = [11, 128], strides = [1, 1]} : vector<11x768xf32> to vector<11x128xf32>
    %203 = arith.addf %201, %202 : vector<11x128xf32>
    %204 = vector.extract_strided_slice %198 {offsets = [0, 384], sizes = [11, 128], strides = [1, 1]} : vector<11x768xf32> to vector<11x128xf32>
    %205 = arith.addf %203, %204 : vector<11x128xf32>
    %206 = vector.extract_strided_slice %198 {offsets = [0, 512], sizes = [11, 128], strides = [1, 1]} : vector<11x768xf32> to vector<11x128xf32>
    %207 = arith.addf %205, %206 : vector<11x128xf32>
    %208 = vector.extract_strided_slice %198 {offsets = [0, 640], sizes = [11, 128], strides = [1, 1]} : vector<11x768xf32> to vector<11x128xf32>
    %209 = arith.addf %207, %208 : vector<11x128xf32>
    %210 = arith.addf %178, %209 : vector<11x128xf32>
    %c1_33 = arith.constant 1 : index
    %c4608_34 = arith.constant 4608 : index
    %211 = vector.load %arg2[%c1_33, %c4608_34] : memref<2x42240xf32, #tpu.memory_space<vmem>>, vector<1x768xf32>
    %212 = vector.broadcast %211 : vector<1x768xf32> to vector<11x768xf32>
    %213 = arith.mulf %212, %195 : vector<11x768xf32>
    %214 = vector.extract_strided_slice %213 {offsets = [0, 0], sizes = [11, 128], strides = [1, 1]} : vector<11x768xf32> to vector<11x128xf32>
    %215 = vector.extract_strided_slice %213 {offsets = [0, 128], sizes = [11, 128], strides = [1, 1]} : vector<11x768xf32> to vector<11x128xf32>
    %216 = arith.addf %214, %215 : vector<11x128xf32>
    %217 = vector.extract_strided_slice %213 {offsets = [0, 256], sizes = [11, 128], strides = [1, 1]} : vector<11x768xf32> to vector<11x128xf32>
    %218 = arith.addf %216, %217 : vector<11x128xf32>
    %219 = vector.extract_strided_slice %213 {offsets = [0, 384], sizes = [11, 128], strides = [1, 1]} : vector<11x768xf32> to vector<11x128xf32>
    %220 = arith.addf %218, %219 : vector<11x128xf32>
    %221 = vector.extract_strided_slice %213 {offsets = [0, 512], sizes = [11, 128], strides = [1, 1]} : vector<11x768xf32> to vector<11x128xf32>
    %222 = arith.addf %220, %221 : vector<11x128xf32>
    %223 = vector.extract_strided_slice %213 {offsets = [0, 640], sizes = [11, 128], strides = [1, 1]} : vector<11x768xf32> to vector<11x128xf32>
    %224 = arith.addf %222, %223 : vector<11x128xf32>
    %225 = arith.addf %193, %224 : vector<11x128xf32>
    %c0_35 = arith.constant 0 : index
    %c5376 = arith.constant 5376 : index
    %226 = vector.load %arg3[%c0_35, %c5376] : memref<11x42240xbf16, #tpu.memory_space<vmem>>, vector<11x768xbf16>
    %227 = arith.extf %226 : vector<11x768xbf16> to vector<11x768xf32>
    %c0_36 = arith.constant 0 : index
    %c5376_37 = arith.constant 5376 : index
    %228 = vector.load %arg2[%c0_36, %c5376_37] : memref<2x42240xf32, #tpu.memory_space<vmem>>, vector<1x768xf32>
    %229 = vector.broadcast %228 : vector<1x768xf32> to vector<11x768xf32>
    %230 = arith.mulf %229, %227 : vector<11x768xf32>
    %231 = vector.extract_strided_slice %230 {offsets = [0, 0], sizes = [11, 128], strides = [1, 1]} : vector<11x768xf32> to vector<11x128xf32>
    %232 = vector.extract_strided_slice %230 {offsets = [0, 128], sizes = [11, 128], strides = [1, 1]} : vector<11x768xf32> to vector<11x128xf32>
    %233 = arith.addf %231, %232 : vector<11x128xf32>
    %234 = vector.extract_strided_slice %230 {offsets = [0, 256], sizes = [11, 128], strides = [1, 1]} : vector<11x768xf32> to vector<11x128xf32>
    %235 = arith.addf %233, %234 : vector<11x128xf32>
    %236 = vector.extract_strided_slice %230 {offsets = [0, 384], sizes = [11, 128], strides = [1, 1]} : vector<11x768xf32> to vector<11x128xf32>
    %237 = arith.addf %235, %236 : vector<11x128xf32>
    %238 = vector.extract_strided_slice %230 {offsets = [0, 512], sizes = [11, 128], strides = [1, 1]} : vector<11x768xf32> to vector<11x128xf32>
    %239 = arith.addf %237, %238 : vector<11x128xf32>
    %240 = vector.extract_strided_slice %230 {offsets = [0, 640], sizes = [11, 128], strides = [1, 1]} : vector<11x768xf32> to vector<11x128xf32>
    %241 = arith.addf %239, %240 : vector<11x128xf32>
    %242 = arith.addf %210, %241 : vector<11x128xf32>
    %c1_38 = arith.constant 1 : index
    %c5376_39 = arith.constant 5376 : index
    %243 = vector.load %arg2[%c1_38, %c5376_39] : memref<2x42240xf32, #tpu.memory_space<vmem>>, vector<1x768xf32>
    %244 = vector.broadcast %243 : vector<1x768xf32> to vector<11x768xf32>
    %245 = arith.mulf %244, %227 : vector<11x768xf32>
    %246 = vector.extract_strided_slice %245 {offsets = [0, 0], sizes = [11, 128], strides = [1, 1]} : vector<11x768xf32> to vector<11x128xf32>
    %247 = vector.extract_strided_slice %245 {offsets = [0, 128], sizes = [11, 128], strides = [1, 1]} : vector<11x768xf32> to vector<11x128xf32>
    %248 = arith.addf %246, %247 : vector<11x128xf32>
    %249 = vector.extract_strided_slice %245 {offsets = [0, 256], sizes = [11, 128], strides = [1, 1]} : vector<11x768xf32> to vector<11x128xf32>
    %250 = arith.addf %248, %249 : vector<11x128xf32>
    %251 = vector.extract_strided_slice %245 {offsets = [0, 384], sizes = [11, 128], strides = [1, 1]} : vector<11x768xf32> to vector<11x128xf32>
    %252 = arith.addf %250, %251 : vector<11x128xf32>
    %253 = vector.extract_strided_slice %245 {offsets = [0, 512], sizes = [11, 128], strides = [1, 1]} : vector<11x768xf32> to vector<11x128xf32>
    %254 = arith.addf %252, %253 : vector<11x128xf32>
    %255 = vector.extract_strided_slice %245 {offsets = [0, 640], sizes = [11, 128], strides = [1, 1]} : vector<11x768xf32> to vector<11x128xf32>
    %256 = arith.addf %254, %255 : vector<11x128xf32>
    %257 = arith.addf %225, %256 : vector<11x128xf32>
    %c0_40 = arith.constant 0 : index
    %c6144 = arith.constant 6144 : index
    %258 = vector.load %arg3[%c0_40, %c6144] : memref<11x42240xbf16, #tpu.memory_space<vmem>>, vector<11x768xbf16>
    %259 = arith.extf %258 : vector<11x768xbf16> to vector<11x768xf32>
    %c0_41 = arith.constant 0 : index
    %c6144_42 = arith.constant 6144 : index
    %260 = vector.load %arg2[%c0_41, %c6144_42] : memref<2x42240xf32, #tpu.memory_space<vmem>>, vector<1x768xf32>
    %261 = vector.broadcast %260 : vector<1x768xf32> to vector<11x768xf32>
    %262 = arith.mulf %261, %259 : vector<11x768xf32>
    %263 = vector.extract_strided_slice %262 {offsets = [0, 0], sizes = [11, 128], strides = [1, 1]} : vector<11x768xf32> to vector<11x128xf32>
    %264 = vector.extract_strided_slice %262 {offsets = [0, 128], sizes = [11, 128], strides = [1, 1]} : vector<11x768xf32> to vector<11x128xf32>
    %265 = arith.addf %263, %264 : vector<11x128xf32>
    %266 = vector.extract_strided_slice %262 {offsets = [0, 256], sizes = [11, 128], strides = [1, 1]} : vector<11x768xf32> to vector<11x128xf32>
    %267 = arith.addf %265, %266 : vector<11x128xf32>
    %268 = vector.extract_strided_slice %262 {offsets = [0, 384], sizes = [11, 128], strides = [1, 1]} : vector<11x768xf32> to vector<11x128xf32>
    %269 = arith.addf %267, %268 : vector<11x128xf32>
    %270 = vector.extract_strided_slice %262 {offsets = [0, 512], sizes = [11, 128], strides = [1, 1]} : vector<11x768xf32> to vector<11x128xf32>
    %271 = arith.addf %269, %270 : vector<11x128xf32>
    %272 = vector.extract_strided_slice %262 {offsets = [0, 640], sizes = [11, 128], strides = [1, 1]} : vector<11x768xf32> to vector<11x128xf32>
    %273 = arith.addf %271, %272 : vector<11x128xf32>
    %274 = arith.addf %242, %273 : vector<11x128xf32>
    %c1_43 = arith.constant 1 : index
    %c6144_44 = arith.constant 6144 : index
    %275 = vector.load %arg2[%c1_43, %c6144_44] : memref<2x42240xf32, #tpu.memory_space<vmem>>, vector<1x768xf32>
    %276 = vector.broadcast %275 : vector<1x768xf32> to vector<11x768xf32>
    %277 = arith.mulf %276, %259 : vector<11x768xf32>
    %278 = vector.extract_strided_slice %277 {offsets = [0, 0], sizes = [11, 128], strides = [1, 1]} : vector<11x768xf32> to vector<11x128xf32>
    %279 = vector.extract_strided_slice %277 {offsets = [0, 128], sizes = [11, 128], strides = [1, 1]} : vector<11x768xf32> to vector<11x128xf32>
    %280 = arith.addf %278, %279 : vector<11x128xf32>
    %281 = vector.extract_strided_slice %277 {offsets = [0, 256], sizes = [11, 128], strides = [1, 1]} : vector<11x768xf32> to vector<11x128xf32>
    %282 = arith.addf %280, %281 : vector<11x128xf32>
    %283 = vector.extract_strided_slice %277 {offsets = [0, 384], sizes = [11, 128], strides = [1, 1]} : vector<11x768xf32> to vector<11x128xf32>
    %284 = arith.addf %282, %283 : vector<11x128xf32>
    %285 = vector.extract_strided_slice %277 {offsets = [0, 512], sizes = [11, 128], strides = [1, 1]} : vector<11x768xf32> to vector<11x128xf32>
    %286 = arith.addf %284, %285 : vector<11x128xf32>
    %287 = vector.extract_strided_slice %277 {offsets = [0, 640], sizes = [11, 128], strides = [1, 1]} : vector<11x768xf32> to vector<11x128xf32>
    %288 = arith.addf %286, %287 : vector<11x128xf32>
    %289 = arith.addf %257, %288 : vector<11x128xf32>
    %c0_45 = arith.constant 0 : index
    %c6912 = arith.constant 6912 : index
    %290 = vector.load %arg3[%c0_45, %c6912] : memref<11x42240xbf16, #tpu.memory_space<vmem>>, vector<11x768xbf16>
    %291 = arith.extf %290 : vector<11x768xbf16> to vector<11x768xf32>
    %c0_46 = arith.constant 0 : index
    %c6912_47 = arith.constant 6912 : index
    %292 = vector.load %arg2[%c0_46, %c6912_47] : memref<2x42240xf32, #tpu.memory_space<vmem>>, vector<1x768xf32>
    %293 = vector.broadcast %292 : vector<1x768xf32> to vector<11x768xf32>
    %294 = arith.mulf %293, %291 : vector<11x768xf32>
    %295 = vector.extract_strided_slice %294 {offsets = [0, 0], sizes = [11, 128], strides = [1, 1]} : vector<11x768xf32> to vector<11x128xf32>
    %296 = vector.extract_strided_slice %294 {offsets = [0, 128], sizes = [11, 128], strides = [1, 1]} : vector<11x768xf32> to vector<11x128xf32>
    %297 = arith.addf %295, %296 : vector<11x128xf32>
    %298 = vector.extract_strided_slice %294 {offsets = [0, 256], sizes = [11, 128], strides = [1, 1]} : vector<11x768xf32> to vector<11x128xf32>
    %299 = arith.addf %297, %298 : vector<11x128xf32>
    %300 = vector.extract_strided_slice %294 {offsets = [0, 384], sizes = [11, 128], strides = [1, 1]} : vector<11x768xf32> to vector<11x128xf32>
    %301 = arith.addf %299, %300 : vector<11x128xf32>
    %302 = vector.extract_strided_slice %294 {offsets = [0, 512], sizes = [11, 128], strides = [1, 1]} : vector<11x768xf32> to vector<11x128xf32>
    %303 = arith.addf %301, %302 : vector<11x128xf32>
    %304 = vector.extract_strided_slice %294 {offsets = [0, 640], sizes = [11, 128], strides = [1, 1]} : vector<11x768xf32> to vector<11x128xf32>
    %305 = arith.addf %303, %304 : vector<11x128xf32>
    %306 = arith.addf %274, %305 : vector<11x128xf32>
    %c1_48 = arith.constant 1 : index
    %c6912_49 = arith.constant 6912 : index
    %307 = vector.load %arg2[%c1_48, %c6912_49] : memref<2x42240xf32, #tpu.memory_space<vmem>>, vector<1x768xf32>
    %308 = vector.broadcast %307 : vector<1x768xf32> to vector<11x768xf32>
    %309 = arith.mulf %308, %291 : vector<11x768xf32>
    %310 = vector.extract_strided_slice %309 {offsets = [0, 0], sizes = [11, 128], strides = [1, 1]} : vector<11x768xf32> to vector<11x128xf32>
    %311 = vector.extract_strided_slice %309 {offsets = [0, 128], sizes = [11, 128], strides = [1, 1]} : vector<11x768xf32> to vector<11x128xf32>
    %312 = arith.addf %310, %311 : vector<11x128xf32>
    %313 = vector.extract_strided_slice %309 {offsets = [0, 256], sizes = [11, 128], strides = [1, 1]} : vector<11x768xf32> to vector<11x128xf32>
    %314 = arith.addf %312, %313 : vector<11x128xf32>
    %315 = vector.extract_strided_slice %309 {offsets = [0, 384], sizes = [11, 128], strides = [1, 1]} : vector<11x768xf32> to vector<11x128xf32>
    %316 = arith.addf %314, %315 : vector<11x128xf32>
    %317 = vector.extract_strided_slice %309 {offsets = [0, 512], sizes = [11, 128], strides = [1, 1]} : vector<11x768xf32> to vector<11x128xf32>
    %318 = arith.addf %316, %317 : vector<11x128xf32>
    %319 = vector.extract_strided_slice %309 {offsets = [0, 640], sizes = [11, 128], strides = [1, 1]} : vector<11x768xf32> to vector<11x128xf32>
    %320 = arith.addf %318, %319 : vector<11x128xf32>
    %321 = arith.addf %289, %320 : vector<11x128xf32>
    %c0_50 = arith.constant 0 : index
    %c7680 = arith.constant 7680 : index
    %322 = vector.load %arg3[%c0_50, %c7680] : memref<11x42240xbf16, #tpu.memory_space<vmem>>, vector<11x768xbf16>
    %323 = arith.extf %322 : vector<11x768xbf16> to vector<11x768xf32>
    %c0_51 = arith.constant 0 : index
    %c7680_52 = arith.constant 7680 : index
    %324 = vector.load %arg2[%c0_51, %c7680_52] : memref<2x42240xf32, #tpu.memory_space<vmem>>, vector<1x768xf32>
    %325 = vector.broadcast %324 : vector<1x768xf32> to vector<11x768xf32>
    %326 = arith.mulf %325, %323 : vector<11x768xf32>
    %327 = vector.extract_strided_slice %326 {offsets = [0, 0], sizes = [11, 128], strides = [1, 1]} : vector<11x768xf32> to vector<11x128xf32>
    %328 = vector.extract_strided_slice %326 {offsets = [0, 128], sizes = [11, 128], strides = [1, 1]} : vector<11x768xf32> to vector<11x128xf32>
    %329 = arith.addf %327, %328 : vector<11x128xf32>
    %330 = vector.extract_strided_slice %326 {offsets = [0, 256], sizes = [11, 128], strides = [1, 1]} : vector<11x768xf32> to vector<11x128xf32>
    %331 = arith.addf %329, %330 : vector<11x128xf32>
    %332 = vector.extract_strided_slice %326 {offsets = [0, 384], sizes = [11, 128], strides = [1, 1]} : vector<11x768xf32> to vector<11x128xf32>
    %333 = arith.addf %331, %332 : vector<11x128xf32>
    %334 = vector.extract_strided_slice %326 {offsets = [0, 512], sizes = [11, 128], strides = [1, 1]} : vector<11x768xf32> to vector<11x128xf32>
    %335 = arith.addf %333, %334 : vector<11x128xf32>
    %336 = vector.extract_strided_slice %326 {offsets = [0, 640], sizes = [11, 128], strides = [1, 1]} : vector<11x768xf32> to vector<11x128xf32>
    %337 = arith.addf %335, %336 : vector<11x128xf32>
    %338 = arith.addf %306, %337 : vector<11x128xf32>
    %c1_53 = arith.constant 1 : index
    %c7680_54 = arith.constant 7680 : index
    %339 = vector.load %arg2[%c1_53, %c7680_54] : memref<2x42240xf32, #tpu.memory_space<vmem>>, vector<1x768xf32>
    %340 = vector.broadcast %339 : vector<1x768xf32> to vector<11x768xf32>
    %341 = arith.mulf %340, %323 : vector<11x768xf32>
    %342 = vector.extract_strided_slice %341 {offsets = [0, 0], sizes = [11, 128], strides = [1, 1]} : vector<11x768xf32> to vector<11x128xf32>
    %343 = vector.extract_strided_slice %341 {offsets = [0, 128], sizes = [11, 128], strides = [1, 1]} : vector<11x768xf32> to vector<11x128xf32>
    %344 = arith.addf %342, %343 : vector<11x128xf32>
    %345 = vector.extract_strided_slice %341 {offsets = [0, 256], sizes = [11, 128], strides = [1, 1]} : vector<11x768xf32> to vector<11x128xf32>
    %346 = arith.addf %344, %345 : vector<11x128xf32>
    %347 = vector.extract_strided_slice %341 {offsets = [0, 384], sizes = [11, 128], strides = [1, 1]} : vector<11x768xf32> to vector<11x128xf32>
    %348 = arith.addf %346, %347 : vector<11x128xf32>
    %349 = vector.extract_strided_slice %341 {offsets = [0, 512], sizes = [11, 128], strides = [1, 1]} : vector<11x768xf32> to vector<11x128xf32>
    %350 = arith.addf %348, %349 : vector<11x128xf32>
    %351 = vector.extract_strided_slice %341 {offsets = [0, 640], sizes = [11, 128], strides = [1, 1]} : vector<11x768xf32> to vector<11x128xf32>
    %352 = arith.addf %350, %351 : vector<11x128xf32>
    %353 = arith.addf %321, %352 : vector<11x128xf32>
    %c0_55 = arith.constant 0 : index
    %c8448 = arith.constant 8448 : index
    %354 = vector.load %arg3[%c0_55, %c8448] : memref<11x42240xbf16, #tpu.memory_space<vmem>>, vector<11x768xbf16>
    %355 = arith.extf %354 : vector<11x768xbf16> to vector<11x768xf32>
    %c0_56 = arith.constant 0 : index
    %c8448_57 = arith.constant 8448 : index
    %356 = vector.load %arg2[%c0_56, %c8448_57] : memref<2x42240xf32, #tpu.memory_space<vmem>>, vector<1x768xf32>
    %357 = vector.broadcast %356 : vector<1x768xf32> to vector<11x768xf32>
    %358 = arith.mulf %357, %355 : vector<11x768xf32>
    %359 = vector.extract_strided_slice %358 {offsets = [0, 0], sizes = [11, 128], strides = [1, 1]} : vector<11x768xf32> to vector<11x128xf32>
    %360 = vector.extract_strided_slice %358 {offsets = [0, 128], sizes = [11, 128], strides = [1, 1]} : vector<11x768xf32> to vector<11x128xf32>
    %361 = arith.addf %359, %360 : vector<11x128xf32>
    %362 = vector.extract_strided_slice %358 {offsets = [0, 256], sizes = [11, 128], strides = [1, 1]} : vector<11x768xf32> to vector<11x128xf32>
    %363 = arith.addf %361, %362 : vector<11x128xf32>
    %364 = vector.extract_strided_slice %358 {offsets = [0, 384], sizes = [11, 128], strides = [1, 1]} : vector<11x768xf32> to vector<11x128xf32>
    %365 = arith.addf %363, %364 : vector<11x128xf32>
    %366 = vector.extract_strided_slice %358 {offsets = [0, 512], sizes = [11, 128], strides = [1, 1]} : vector<11x768xf32> to vector<11x128xf32>
    %367 = arith.addf %365, %366 : vector<11x128xf32>
    %368 = vector.extract_strided_slice %358 {offsets = [0, 640], sizes = [11, 128], strides = [1, 1]} : vector<11x768xf32> to vector<11x128xf32>
    %369 = arith.addf %367, %368 : vector<11x128xf32>
    %370 = arith.addf %338, %369 : vector<11x128xf32>
    %c1_58 = arith.constant 1 : index
    %c8448_59 = arith.constant 8448 : index
    %371 = vector.load %arg2[%c1_58, %c8448_59] : memref<2x42240xf32, #tpu.memory_space<vmem>>, vector<1x768xf32>
    %372 = vector.broadcast %371 : vector<1x768xf32> to vector<11x768xf32>
    %373 = arith.mulf %372, %355 : vector<11x768xf32>
    %374 = vector.extract_strided_slice %373 {offsets = [0, 0], sizes = [11, 128], strides = [1, 1]} : vector<11x768xf32> to vector<11x128xf32>
    %375 = vector.extract_strided_slice %373 {offsets = [0, 128], sizes = [11, 128], strides = [1, 1]} : vector<11x768xf32> to vector<11x128xf32>
    %376 = arith.addf %374, %375 : vector<11x128xf32>
    %377 = vector.extract_strided_slice %373 {offsets = [0, 256], sizes = [11, 128], strides = [1, 1]} : vector<11x768xf32> to vector<11x128xf32>
    %378 = arith.addf %376, %377 : vector<11x128xf32>
    %379 = vector.extract_strided_slice %373 {offsets = [0, 384], sizes = [11, 128], strides = [1, 1]} : vector<11x768xf32> to vector<11x128xf32>
    %380 = arith.addf %378, %379 : vector<11x128xf32>
    %381 = vector.extract_strided_slice %373 {offsets = [0, 512], sizes = [11, 128], strides = [1, 1]} : vector<11x768xf32> to vector<11x128xf32>
    %382 = arith.addf %380, %381 : vector<11x128xf32>
    %383 = vector.extract_strided_slice %373 {offsets = [0, 640], sizes = [11, 128], strides = [1, 1]} : vector<11x768xf32> to vector<11x128xf32>
    %384 = arith.addf %382, %383 : vector<11x128xf32>
    %385 = arith.addf %353, %384 : vector<11x128xf32>
    %c0_60 = arith.constant 0 : index
    %c9216 = arith.constant 9216 : index
    %386 = vector.load %arg3[%c0_60, %c9216] : memref<11x42240xbf16, #tpu.memory_space<vmem>>, vector<11x768xbf16>
    %387 = arith.extf %386 : vector<11x768xbf16> to vector<11x768xf32>
    %c0_61 = arith.constant 0 : index
    %c9216_62 = arith.constant 9216 : index
    %388 = vector.load %arg2[%c0_61, %c9216_62] : memref<2x42240xf32, #tpu.memory_space<vmem>>, vector<1x768xf32>
    %389 = vector.broadcast %388 : vector<1x768xf32> to vector<11x768xf32>
    %390 = arith.mulf %389, %387 : vector<11x768xf32>
    %391 = vector.extract_strided_slice %390 {offsets = [0, 0], sizes = [11, 128], strides = [1, 1]} : vector<11x768xf32> to vector<11x128xf32>
    %392 = vector.extract_strided_slice %390 {offsets = [0, 128], sizes = [11, 128], strides = [1, 1]} : vector<11x768xf32> to vector<11x128xf32>
    %393 = arith.addf %391, %392 : vector<11x128xf32>
    %394 = vector.extract_strided_slice %390 {offsets = [0, 256], sizes = [11, 128], strides = [1, 1]} : vector<11x768xf32> to vector<11x128xf32>
    %395 = arith.addf %393, %394 : vector<11x128xf32>
    %396 = vector.extract_strided_slice %390 {offsets = [0, 384], sizes = [11, 128], strides = [1, 1]} : vector<11x768xf32> to vector<11x128xf32>
    %397 = arith.addf %395, %396 : vector<11x128xf32>
    %398 = vector.extract_strided_slice %390 {offsets = [0, 512], sizes = [11, 128], strides = [1, 1]} : vector<11x768xf32> to vector<11x128xf32>
    %399 = arith.addf %397, %398 : vector<11x128xf32>
    %400 = vector.extract_strided_slice %390 {offsets = [0, 640], sizes = [11, 128], strides = [1, 1]} : vector<11x768xf32> to vector<11x128xf32>
    %401 = arith.addf %399, %400 : vector<11x128xf32>
    %402 = arith.addf %370, %401 : vector<11x128xf32>
    %c1_63 = arith.constant 1 : index
    %c9216_64 = arith.constant 9216 : index
    %403 = vector.load %arg2[%c1_63, %c9216_64] : memref<2x42240xf32, #tpu.memory_space<vmem>>, vector<1x768xf32>
    %404 = vector.broadcast %403 : vector<1x768xf32> to vector<11x768xf32>
    %405 = arith.mulf %404, %387 : vector<11x768xf32>
    %406 = vector.extract_strided_slice %405 {offsets = [0, 0], sizes = [11, 128], strides = [1, 1]} : vector<11x768xf32> to vector<11x128xf32>
    %407 = vector.extract_strided_slice %405 {offsets = [0, 128], sizes = [11, 128], strides = [1, 1]} : vector<11x768xf32> to vector<11x128xf32>
    %408 = arith.addf %406, %407 : vector<11x128xf32>
    %409 = vector.extract_strided_slice %405 {offsets = [0, 256], sizes = [11, 128], strides = [1, 1]} : vector<11x768xf32> to vector<11x128xf32>
    %410 = arith.addf %408, %409 : vector<11x128xf32>
    %411 = vector.extract_strided_slice %405 {offsets = [0, 384], sizes = [11, 128], strides = [1, 1]} : vector<11x768xf32> to vector<11x128xf32>
    %412 = arith.addf %410, %411 : vector<11x128xf32>
    %413 = vector.extract_strided_slice %405 {offsets = [0, 512], sizes = [11, 128], strides = [1, 1]} : vector<11x768xf32> to vector<11x128xf32>
    %414 = arith.addf %412, %413 : vector<11x128xf32>
    %415 = vector.extract_strided_slice %405 {offsets = [0, 640], sizes = [11, 128], strides = [1, 1]} : vector<11x768xf32> to vector<11x128xf32>
    %416 = arith.addf %414, %415 : vector<11x128xf32>
    %417 = arith.addf %385, %416 : vector<11x128xf32>
    %c0_65 = arith.constant 0 : index
    %c9984 = arith.constant 9984 : index
    %418 = vector.load %arg3[%c0_65, %c9984] : memref<11x42240xbf16, #tpu.memory_space<vmem>>, vector<11x768xbf16>
    %419 = arith.extf %418 : vector<11x768xbf16> to vector<11x768xf32>
    %c0_66 = arith.constant 0 : index
    %c9984_67 = arith.constant 9984 : index
    %420 = vector.load %arg2[%c0_66, %c9984_67] : memref<2x42240xf32, #tpu.memory_space<vmem>>, vector<1x768xf32>
    %421 = vector.broadcast %420 : vector<1x768xf32> to vector<11x768xf32>
    %422 = arith.mulf %421, %419 : vector<11x768xf32>
    %423 = vector.extract_strided_slice %422 {offsets = [0, 0], sizes = [11, 128], strides = [1, 1]} : vector<11x768xf32> to vector<11x128xf32>
    %424 = vector.extract_strided_slice %422 {offsets = [0, 128], sizes = [11, 128], strides = [1, 1]} : vector<11x768xf32> to vector<11x128xf32>
    %425 = arith.addf %423, %424 : vector<11x128xf32>
    %426 = vector.extract_strided_slice %422 {offsets = [0, 256], sizes = [11, 128], strides = [1, 1]} : vector<11x768xf32> to vector<11x128xf32>
    %427 = arith.addf %425, %426 : vector<11x128xf32>
    %428 = vector.extract_strided_slice %422 {offsets = [0, 384], sizes = [11, 128], strides = [1, 1]} : vector<11x768xf32> to vector<11x128xf32>
    %429 = arith.addf %427, %428 : vector<11x128xf32>
    %430 = vector.extract_strided_slice %422 {offsets = [0, 512], sizes = [11, 128], strides = [1, 1]} : vector<11x768xf32> to vector<11x128xf32>
    %431 = arith.addf %429, %430 : vector<11x128xf32>
    %432 = vector.extract_strided_slice %422 {offsets = [0, 640], sizes = [11, 128], strides = [1, 1]} : vector<11x768xf32> to vector<11x128xf32>
    %433 = arith.addf %431, %432 : vector<11x128xf32>
    %434 = arith.addf %402, %433 : vector<11x128xf32>
    %c1_68 = arith.constant 1 : index
    %c9984_69 = arith.constant 9984 : index
    %435 = vector.load %arg2[%c1_68, %c9984_69] : memref<2x42240xf32, #tpu.memory_space<vmem>>, vector<1x768xf32>
    %436 = vector.broadcast %435 : vector<1x768xf32> to vector<11x768xf32>
    %437 = arith.mulf %436, %419 : vector<11x768xf32>
    %438 = vector.extract_strided_slice %437 {offsets = [0, 0], sizes = [11, 128], strides = [1, 1]} : vector<11x768xf32> to vector<11x128xf32>
    %439 = vector.extract_strided_slice %437 {offsets = [0, 128], sizes = [11, 128], strides = [1, 1]} : vector<11x768xf32> to vector<11x128xf32>
    %440 = arith.addf %438, %439 : vector<11x128xf32>
    %441 = vector.extract_strided_slice %437 {offsets = [0, 256], sizes = [11, 128], strides = [1, 1]} : vector<11x768xf32> to vector<11x128xf32>
    %442 = arith.addf %440, %441 : vector<11x128xf32>
    %443 = vector.extract_strided_slice %437 {offsets = [0, 384], sizes = [11, 128], strides = [1, 1]} : vector<11x768xf32> to vector<11x128xf32>
    %444 = arith.addf %442, %443 : vector<11x128xf32>
    %445 = vector.extract_strided_slice %437 {offsets = [0, 512], sizes = [11, 128], strides = [1, 1]} : vector<11x768xf32> to vector<11x128xf32>
    %446 = arith.addf %444, %445 : vector<11x128xf32>
    %447 = vector.extract_strided_slice %437 {offsets = [0, 640], sizes = [11, 128], strides = [1, 1]} : vector<11x768xf32> to vector<11x128xf32>
    %448 = arith.addf %446, %447 : vector<11x128xf32>
    %449 = arith.addf %417, %448 : vector<11x128xf32>
    %c0_70 = arith.constant 0 : index
    %c10752 = arith.constant 10752 : index
    %450 = vector.load %arg3[%c0_70, %c10752] : memref<11x42240xbf16, #tpu.memory_space<vmem>>, vector<11x768xbf16>
    %451 = arith.extf %450 : vector<11x768xbf16> to vector<11x768xf32>
    %c0_71 = arith.constant 0 : index
    %c10752_72 = arith.constant 10752 : index
    %452 = vector.load %arg2[%c0_71, %c10752_72] : memref<2x42240xf32, #tpu.memory_space<vmem>>, vector<1x768xf32>
    %453 = vector.broadcast %452 : vector<1x768xf32> to vector<11x768xf32>
    %454 = arith.mulf %453, %451 : vector<11x768xf32>
    %455 = vector.extract_strided_slice %454 {offsets = [0, 0], sizes = [11, 128], strides = [1, 1]} : vector<11x768xf32> to vector<11x128xf32>
    %456 = vector.extract_strided_slice %454 {offsets = [0, 128], sizes = [11, 128], strides = [1, 1]} : vector<11x768xf32> to vector<11x128xf32>
    %457 = arith.addf %455, %456 : vector<11x128xf32>
    %458 = vector.extract_strided_slice %454 {offsets = [0, 256], sizes = [11, 128], strides = [1, 1]} : vector<11x768xf32> to vector<11x128xf32>
    %459 = arith.addf %457, %458 : vector<11x128xf32>
    %460 = vector.extract_strided_slice %454 {offsets = [0, 384], sizes = [11, 128], strides = [1, 1]} : vector<11x768xf32> to vector<11x128xf32>
    %461 = arith.addf %459, %460 : vector<11x128xf32>
    %462 = vector.extract_strided_slice %454 {offsets = [0, 512], sizes = [11, 128], strides = [1, 1]} : vector<11x768xf32> to vector<11x128xf32>
    %463 = arith.addf %461, %462 : vector<11x128xf32>
    %464 = vector.extract_strided_slice %454 {offsets = [0, 640], sizes = [11, 128], strides = [1, 1]} : vector<11x768xf32> to vector<11x128xf32>
    %465 = arith.addf %463, %464 : vector<11x128xf32>
    %466 = arith.addf %434, %465 : vector<11x128xf32>
    %c1_73 = arith.constant 1 : index
    %c10752_74 = arith.constant 10752 : index
    %467 = vector.load %arg2[%c1_73, %c10752_74] : memref<2x42240xf32, #tpu.memory_space<vmem>>, vector<1x768xf32>
    %468 = vector.broadcast %467 : vector<1x768xf32> to vector<11x768xf32>
    %469 = arith.mulf %468, %451 : vector<11x768xf32>
    %470 = vector.extract_strided_slice %469 {offsets = [0, 0], sizes = [11, 128], strides = [1, 1]} : vector<11x768xf32> to vector<11x128xf32>
    %471 = vector.extract_strided_slice %469 {offsets = [0, 128], sizes = [11, 128], strides = [1, 1]} : vector<11x768xf32> to vector<11x128xf32>
    %472 = arith.addf %470, %471 : vector<11x128xf32>
    %473 = vector.extract_strided_slice %469 {offsets = [0, 256], sizes = [11, 128], strides = [1, 1]} : vector<11x768xf32> to vector<11x128xf32>
    %474 = arith.addf %472, %473 : vector<11x128xf32>
    %475 = vector.extract_strided_slice %469 {offsets = [0, 384], sizes = [11, 128], strides = [1, 1]} : vector<11x768xf32> to vector<11x128xf32>
    %476 = arith.addf %474, %475 : vector<11x128xf32>
    %477 = vector.extract_strided_slice %469 {offsets = [0, 512], sizes = [11, 128], strides = [1, 1]} : vector<11x768xf32> to vector<11x128xf32>
    %478 = arith.addf %476, %477 : vector<11x128xf32>
    %479 = vector.extract_strided_slice %469 {offsets = [0, 640], sizes = [11, 128], strides = [1, 1]} : vector<11x768xf32> to vector<11x128xf32>
    %480 = arith.addf %478, %479 : vector<11x128xf32>
    %481 = arith.addf %449, %480 : vector<11x128xf32>
    %c0_75 = arith.constant 0 : index
    %c11520 = arith.constant 11520 : index
    %482 = vector.load %arg3[%c0_75, %c11520] : memref<11x42240xbf16, #tpu.memory_space<vmem>>, vector<11x768xbf16>
    %483 = arith.extf %482 : vector<11x768xbf16> to vector<11x768xf32>
    %c0_76 = arith.constant 0 : index
    %c11520_77 = arith.constant 11520 : index
    %484 = vector.load %arg2[%c0_76, %c11520_77] : memref<2x42240xf32, #tpu.memory_space<vmem>>, vector<1x768xf32>
    %485 = vector.broadcast %484 : vector<1x768xf32> to vector<11x768xf32>
    %486 = arith.mulf %485, %483 : vector<11x768xf32>
    %487 = vector.extract_strided_slice %486 {offsets = [0, 0], sizes = [11, 128], strides = [1, 1]} : vector<11x768xf32> to vector<11x128xf32>
    %488 = vector.extract_strided_slice %486 {offsets = [0, 128], sizes = [11, 128], strides = [1, 1]} : vector<11x768xf32> to vector<11x128xf32>
    %489 = arith.addf %487, %488 : vector<11x128xf32>
    %490 = vector.extract_strided_slice %486 {offsets = [0, 256], sizes = [11, 128], strides = [1, 1]} : vector<11x768xf32> to vector<11x128xf32>
    %491 = arith.addf %489, %490 : vector<11x128xf32>
    %492 = vector.extract_strided_slice %486 {offsets = [0, 384], sizes = [11, 128], strides = [1, 1]} : vector<11x768xf32> to vector<11x128xf32>
    %493 = arith.addf %491, %492 : vector<11x128xf32>
    %494 = vector.extract_strided_slice %486 {offsets = [0, 512], sizes = [11, 128], strides = [1, 1]} : vector<11x768xf32> to vector<11x128xf32>
    %495 = arith.addf %493, %494 : vector<11x128xf32>
    %496 = vector.extract_strided_slice %486 {offsets = [0, 640], sizes = [11, 128], strides = [1, 1]} : vector<11x768xf32> to vector<11x128xf32>
    %497 = arith.addf %495, %496 : vector<11x128xf32>
    %498 = arith.addf %466, %497 : vector<11x128xf32>
    %c1_78 = arith.constant 1 : index
    %c11520_79 = arith.constant 11520 : index
    %499 = vector.load %arg2[%c1_78, %c11520_79] : memref<2x42240xf32, #tpu.memory_space<vmem>>, vector<1x768xf32>
    %500 = vector.broadcast %499 : vector<1x768xf32> to vector<11x768xf32>
    %501 = arith.mulf %500, %483 : vector<11x768xf32>
    %502 = vector.extract_strided_slice %501 {offsets = [0, 0], sizes = [11, 128], strides = [1, 1]} : vector<11x768xf32> to vector<11x128xf32>
    %503 = vector.extract_strided_slice %501 {offsets = [0, 128], sizes = [11, 128], strides = [1, 1]} : vector<11x768xf32> to vector<11x128xf32>
    %504 = arith.addf %502, %503 : vector<11x128xf32>
    %505 = vector.extract_strided_slice %501 {offsets = [0, 256], sizes = [11, 128], strides = [1, 1]} : vector<11x768xf32> to vector<11x128xf32>
    %506 = arith.addf %504, %505 : vector<11x128xf32>
    %507 = vector.extract_strided_slice %501 {offsets = [0, 384], sizes = [11, 128], strides = [1, 1]} : vector<11x768xf32> to vector<11x128xf32>
    %508 = arith.addf %506, %507 : vector<11x128xf32>
    %509 = vector.extract_strided_slice %501 {offsets = [0, 512], sizes = [11, 128], strides = [1, 1]} : vector<11x768xf32> to vector<11x128xf32>
    %510 = arith.addf %508, %509 : vector<11x128xf32>
    %511 = vector.extract_strided_slice %501 {offsets = [0, 640], sizes = [11, 128], strides = [1, 1]} : vector<11x768xf32> to vector<11x128xf32>
    %512 = arith.addf %510, %511 : vector<11x128xf32>
    %513 = arith.addf %481, %512 : vector<11x128xf32>
    %c0_80 = arith.constant 0 : index
    %c12288 = arith.constant 12288 : index
    %514 = vector.load %arg3[%c0_80, %c12288] : memref<11x42240xbf16, #tpu.memory_space<vmem>>, vector<11x768xbf16>
    %515 = arith.extf %514 : vector<11x768xbf16> to vector<11x768xf32>
    %c0_81 = arith.constant 0 : index
    %c12288_82 = arith.constant 12288 : index
    %516 = vector.load %arg2[%c0_81, %c12288_82] : memref<2x42240xf32, #tpu.memory_space<vmem>>, vector<1x768xf32>
    %517 = vector.broadcast %516 : vector<1x768xf32> to vector<11x768xf32>
    %518 = arith.mulf %517, %515 : vector<11x768xf32>
    %519 = vector.extract_strided_slice %518 {offsets = [0, 0], sizes = [11, 128], strides = [1, 1]} : vector<11x768xf32> to vector<11x128xf32>
    %520 = vector.extract_strided_slice %518 {offsets = [0, 128], sizes = [11, 128], strides = [1, 1]} : vector<11x768xf32> to vector<11x128xf32>
    %521 = arith.addf %519, %520 : vector<11x128xf32>
    %522 = vector.extract_strided_slice %518 {offsets = [0, 256], sizes = [11, 128], strides = [1, 1]} : vector<11x768xf32> to vector<11x128xf32>
    %523 = arith.addf %521, %522 : vector<11x128xf32>
    %524 = vector.extract_strided_slice %518 {offsets = [0, 384], sizes = [11, 128], strides = [1, 1]} : vector<11x768xf32> to vector<11x128xf32>
    %525 = arith.addf %523, %524 : vector<11x128xf32>
    %526 = vector.extract_strided_slice %518 {offsets = [0, 512], sizes = [11, 128], strides = [1, 1]} : vector<11x768xf32> to vector<11x128xf32>
    %527 = arith.addf %525, %526 : vector<11x128xf32>
    %528 = vector.extract_strided_slice %518 {offsets = [0, 640], sizes = [11, 128], strides = [1, 1]} : vector<11x768xf32> to vector<11x128xf32>
    %529 = arith.addf %527, %528 : vector<11x128xf32>
    %530 = arith.addf %498, %529 : vector<11x128xf32>
    %c1_83 = arith.constant 1 : index
    %c12288_84 = arith.constant 12288 : index
    %531 = vector.load %arg2[%c1_83, %c12288_84] : memref<2x42240xf32, #tpu.memory_space<vmem>>, vector<1x768xf32>
    %532 = vector.broadcast %531 : vector<1x768xf32> to vector<11x768xf32>
    %533 = arith.mulf %532, %515 : vector<11x768xf32>
    %534 = vector.extract_strided_slice %533 {offsets = [0, 0], sizes = [11, 128], strides = [1, 1]} : vector<11x768xf32> to vector<11x128xf32>
    %535 = vector.extract_strided_slice %533 {offsets = [0, 128], sizes = [11, 128], strides = [1, 1]} : vector<11x768xf32> to vector<11x128xf32>
    %536 = arith.addf %534, %535 : vector<11x128xf32>
    %537 = vector.extract_strided_slice %533 {offsets = [0, 256], sizes = [11, 128], strides = [1, 1]} : vector<11x768xf32> to vector<11x128xf32>
    %538 = arith.addf %536, %537 : vector<11x128xf32>
    %539 = vector.extract_strided_slice %533 {offsets = [0, 384], sizes = [11, 128], strides = [1, 1]} : vector<11x768xf32> to vector<11x128xf32>
    %540 = arith.addf %538, %539 : vector<11x128xf32>
    %541 = vector.extract_strided_slice %533 {offsets = [0, 512], sizes = [11, 128], strides = [1, 1]} : vector<11x768xf32> to vector<11x128xf32>
    %542 = arith.addf %540, %541 : vector<11x128xf32>
    %543 = vector.extract_strided_slice %533 {offsets = [0, 640], sizes = [11, 128], strides = [1, 1]} : vector<11x768xf32> to vector<11x128xf32>
    %544 = arith.addf %542, %543 : vector<11x128xf32>
    %545 = arith.addf %513, %544 : vector<11x128xf32>
    %c0_85 = arith.constant 0 : index
    %c13056 = arith.constant 13056 : index
    %546 = vector.load %arg3[%c0_85, %c13056] : memref<11x42240xbf16, #tpu.memory_space<vmem>>, vector<11x768xbf16>
    %547 = arith.extf %546 : vector<11x768xbf16> to vector<11x768xf32>
    %c0_86 = arith.constant 0 : index
    %c13056_87 = arith.constant 13056 : index
    %548 = vector.load %arg2[%c0_86, %c13056_87] : memref<2x42240xf32, #tpu.memory_space<vmem>>, vector<1x768xf32>
    %549 = vector.broadcast %548 : vector<1x768xf32> to vector<11x768xf32>
    %550 = arith.mulf %549, %547 : vector<11x768xf32>
    %551 = vector.extract_strided_slice %550 {offsets = [0, 0], sizes = [11, 128], strides = [1, 1]} : vector<11x768xf32> to vector<11x128xf32>
    %552 = vector.extract_strided_slice %550 {offsets = [0, 128], sizes = [11, 128], strides = [1, 1]} : vector<11x768xf32> to vector<11x128xf32>
    %553 = arith.addf %551, %552 : vector<11x128xf32>
    %554 = vector.extract_strided_slice %550 {offsets = [0, 256], sizes = [11, 128], strides = [1, 1]} : vector<11x768xf32> to vector<11x128xf32>
    %555 = arith.addf %553, %554 : vector<11x128xf32>
    %556 = vector.extract_strided_slice %550 {offsets = [0, 384], sizes = [11, 128], strides = [1, 1]} : vector<11x768xf32> to vector<11x128xf32>
    %557 = arith.addf %555, %556 : vector<11x128xf32>
    %558 = vector.extract_strided_slice %550 {offsets = [0, 512], sizes = [11, 128], strides = [1, 1]} : vector<11x768xf32> to vector<11x128xf32>
    %559 = arith.addf %557, %558 : vector<11x128xf32>
    %560 = vector.extract_strided_slice %550 {offsets = [0, 640], sizes = [11, 128], strides = [1, 1]} : vector<11x768xf32> to vector<11x128xf32>
    %561 = arith.addf %559, %560 : vector<11x128xf32>
    %562 = arith.addf %530, %561 : vector<11x128xf32>
    %c1_88 = arith.constant 1 : index
    %c13056_89 = arith.constant 13056 : index
    %563 = vector.load %arg2[%c1_88, %c13056_89] : memref<2x42240xf32, #tpu.memory_space<vmem>>, vector<1x768xf32>
    %564 = vector.broadcast %563 : vector<1x768xf32> to vector<11x768xf32>
    %565 = arith.mulf %564, %547 : vector<11x768xf32>
    %566 = vector.extract_strided_slice %565 {offsets = [0, 0], sizes = [11, 128], strides = [1, 1]} : vector<11x768xf32> to vector<11x128xf32>
    %567 = vector.extract_strided_slice %565 {offsets = [0, 128], sizes = [11, 128], strides = [1, 1]} : vector<11x768xf32> to vector<11x128xf32>
    %568 = arith.addf %566, %567 : vector<11x128xf32>
    %569 = vector.extract_strided_slice %565 {offsets = [0, 256], sizes = [11, 128], strides = [1, 1]} : vector<11x768xf32> to vector<11x128xf32>
    %570 = arith.addf %568, %569 : vector<11x128xf32>
    %571 = vector.extract_strided_slice %565 {offsets = [0, 384], sizes = [11, 128], strides = [1, 1]} : vector<11x768xf32> to vector<11x128xf32>
    %572 = arith.addf %570, %571 : vector<11x128xf32>
    %573 = vector.extract_strided_slice %565 {offsets = [0, 512], sizes = [11, 128], strides = [1, 1]} : vector<11x768xf32> to vector<11x128xf32>
    %574 = arith.addf %572, %573 : vector<11x128xf32>
    %575 = vector.extract_strided_slice %565 {offsets = [0, 640], sizes = [11, 128], strides = [1, 1]} : vector<11x768xf32> to vector<11x128xf32>
    %576 = arith.addf %574, %575 : vector<11x128xf32>
    %577 = arith.addf %545, %576 : vector<11x128xf32>
    %c0_90 = arith.constant 0 : index
    %c13824 = arith.constant 13824 : index
    %578 = vector.load %arg3[%c0_90, %c13824] : memref<11x42240xbf16, #tpu.memory_space<vmem>>, vector<11x768xbf16>
    %579 = arith.extf %578 : vector<11x768xbf16> to vector<11x768xf32>
    %c0_91 = arith.constant 0 : index
    %c13824_92 = arith.constant 13824 : index
    %580 = vector.load %arg2[%c0_91, %c13824_92] : memref<2x42240xf32, #tpu.memory_space<vmem>>, vector<1x768xf32>
    %581 = vector.broadcast %580 : vector<1x768xf32> to vector<11x768xf32>
    %582 = arith.mulf %581, %579 : vector<11x768xf32>
    %583 = vector.extract_strided_slice %582 {offsets = [0, 0], sizes = [11, 128], strides = [1, 1]} : vector<11x768xf32> to vector<11x128xf32>
    %584 = vector.extract_strided_slice %582 {offsets = [0, 128], sizes = [11, 128], strides = [1, 1]} : vector<11x768xf32> to vector<11x128xf32>
    %585 = arith.addf %583, %584 : vector<11x128xf32>
    %586 = vector.extract_strided_slice %582 {offsets = [0, 256], sizes = [11, 128], strides = [1, 1]} : vector<11x768xf32> to vector<11x128xf32>
    %587 = arith.addf %585, %586 : vector<11x128xf32>
    %588 = vector.extract_strided_slice %582 {offsets = [0, 384], sizes = [11, 128], strides = [1, 1]} : vector<11x768xf32> to vector<11x128xf32>
    %589 = arith.addf %587, %588 : vector<11x128xf32>
    %590 = vector.extract_strided_slice %582 {offsets = [0, 512], sizes = [11, 128], strides = [1, 1]} : vector<11x768xf32> to vector<11x128xf32>
    %591 = arith.addf %589, %590 : vector<11x128xf32>
    %592 = vector.extract_strided_slice %582 {offsets = [0, 640], sizes = [11, 128], strides = [1, 1]} : vector<11x768xf32> to vector<11x128xf32>
    %593 = arith.addf %591, %592 : vector<11x128xf32>
    %594 = arith.addf %562, %593 : vector<11x128xf32>
    %c1_93 = arith.constant 1 : index
    %c13824_94 = arith.constant 13824 : index
    %595 = vector.load %arg2[%c1_93, %c13824_94] : memref<2x42240xf32, #tpu.memory_space<vmem>>, vector<1x768xf32>
    %596 = vector.broadcast %595 : vector<1x768xf32> to vector<11x768xf32>
    %597 = arith.mulf %596, %579 : vector<11x768xf32>
    %598 = vector.extract_strided_slice %597 {offsets = [0, 0], sizes = [11, 128], strides = [1, 1]} : vector<11x768xf32> to vector<11x128xf32>
    %599 = vector.extract_strided_slice %597 {offsets = [0, 128], sizes = [11, 128], strides = [1, 1]} : vector<11x768xf32> to vector<11x128xf32>
    %600 = arith.addf %598, %599 : vector<11x128xf32>
    %601 = vector.extract_strided_slice %597 {offsets = [0, 256], sizes = [11, 128], strides = [1, 1]} : vector<11x768xf32> to vector<11x128xf32>
    %602 = arith.addf %600, %601 : vector<11x128xf32>
    %603 = vector.extract_strided_slice %597 {offsets = [0, 384], sizes = [11, 128], strides = [1, 1]} : vector<11x768xf32> to vector<11x128xf32>
    %604 = arith.addf %602, %603 : vector<11x128xf32>
    %605 = vector.extract_strided_slice %597 {offsets = [0, 512], sizes = [11, 128], strides = [1, 1]} : vector<11x768xf32> to vector<11x128xf32>
    %606 = arith.addf %604, %605 : vector<11x128xf32>
    %607 = vector.extract_strided_slice %597 {offsets = [0, 640], sizes = [11, 128], strides = [1, 1]} : vector<11x768xf32> to vector<11x128xf32>
    %608 = arith.addf %606, %607 : vector<11x128xf32>
    %609 = arith.addf %577, %608 : vector<11x128xf32>
    %c0_95 = arith.constant 0 : index
    %c14592 = arith.constant 14592 : index
    %610 = vector.load %arg3[%c0_95, %c14592] : memref<11x42240xbf16, #tpu.memory_space<vmem>>, vector<11x768xbf16>
    %611 = arith.extf %610 : vector<11x768xbf16> to vector<11x768xf32>
    %c0_96 = arith.constant 0 : index
    %c14592_97 = arith.constant 14592 : index
    %612 = vector.load %arg2[%c0_96, %c14592_97] : memref<2x42240xf32, #tpu.memory_space<vmem>>, vector<1x768xf32>
    %613 = vector.broadcast %612 : vector<1x768xf32> to vector<11x768xf32>
    %614 = arith.mulf %613, %611 : vector<11x768xf32>
    %615 = vector.extract_strided_slice %614 {offsets = [0, 0], sizes = [11, 128], strides = [1, 1]} : vector<11x768xf32> to vector<11x128xf32>
    %616 = vector.extract_strided_slice %614 {offsets = [0, 128], sizes = [11, 128], strides = [1, 1]} : vector<11x768xf32> to vector<11x128xf32>
    %617 = arith.addf %615, %616 : vector<11x128xf32>
    %618 = vector.extract_strided_slice %614 {offsets = [0, 256], sizes = [11, 128], strides = [1, 1]} : vector<11x768xf32> to vector<11x128xf32>
    %619 = arith.addf %617, %618 : vector<11x128xf32>
    %620 = vector.extract_strided_slice %614 {offsets = [0, 384], sizes = [11, 128], strides = [1, 1]} : vector<11x768xf32> to vector<11x128xf32>
    %621 = arith.addf %619, %620 : vector<11x128xf32>
    %622 = vector.extract_strided_slice %614 {offsets = [0, 512], sizes = [11, 128], strides = [1, 1]} : vector<11x768xf32> to vector<11x128xf32>
    %623 = arith.addf %621, %622 : vector<11x128xf32>
    %624 = vector.extract_strided_slice %614 {offsets = [0, 640], sizes = [11, 128], strides = [1, 1]} : vector<11x768xf32> to vector<11x128xf32>
    %625 = arith.addf %623, %624 : vector<11x128xf32>
    %626 = arith.addf %594, %625 : vector<11x128xf32>
    %c1_98 = arith.constant 1 : index
    %c14592_99 = arith.constant 14592 : index
    %627 = vector.load %arg2[%c1_98, %c14592_99] : memref<2x42240xf32, #tpu.memory_space<vmem>>, vector<1x768xf32>
    %628 = vector.broadcast %627 : vector<1x768xf32> to vector<11x768xf32>
    %629 = arith.mulf %628, %611 : vector<11x768xf32>
    %630 = vector.extract_strided_slice %629 {offsets = [0, 0], sizes = [11, 128], strides = [1, 1]} : vector<11x768xf32> to vector<11x128xf32>
    %631 = vector.extract_strided_slice %629 {offsets = [0, 128], sizes = [11, 128], strides = [1, 1]} : vector<11x768xf32> to vector<11x128xf32>
    %632 = arith.addf %630, %631 : vector<11x128xf32>
    %633 = vector.extract_strided_slice %629 {offsets = [0, 256], sizes = [11, 128], strides = [1, 1]} : vector<11x768xf32> to vector<11x128xf32>
    %634 = arith.addf %632, %633 : vector<11x128xf32>
    %635 = vector.extract_strided_slice %629 {offsets = [0, 384], sizes = [11, 128], strides = [1, 1]} : vector<11x768xf32> to vector<11x128xf32>
    %636 = arith.addf %634, %635 : vector<11x128xf32>
    %637 = vector.extract_strided_slice %629 {offsets = [0, 512], sizes = [11, 128], strides = [1, 1]} : vector<11x768xf32> to vector<11x128xf32>
    %638 = arith.addf %636, %637 : vector<11x128xf32>
    %639 = vector.extract_strided_slice %629 {offsets = [0, 640], sizes = [11, 128], strides = [1, 1]} : vector<11x768xf32> to vector<11x128xf32>
    %640 = arith.addf %638, %639 : vector<11x128xf32>
    %641 = arith.addf %609, %640 : vector<11x128xf32>
    %c0_100 = arith.constant 0 : index
    %c15360 = arith.constant 15360 : index
    %642 = vector.load %arg3[%c0_100, %c15360] : memref<11x42240xbf16, #tpu.memory_space<vmem>>, vector<11x768xbf16>
    %643 = arith.extf %642 : vector<11x768xbf16> to vector<11x768xf32>
    %c0_101 = arith.constant 0 : index
    %c15360_102 = arith.constant 15360 : index
    %644 = vector.load %arg2[%c0_101, %c15360_102] : memref<2x42240xf32, #tpu.memory_space<vmem>>, vector<1x768xf32>
    %645 = vector.broadcast %644 : vector<1x768xf32> to vector<11x768xf32>
    %646 = arith.mulf %645, %643 : vector<11x768xf32>
    %647 = vector.extract_strided_slice %646 {offsets = [0, 0], sizes = [11, 128], strides = [1, 1]} : vector<11x768xf32> to vector<11x128xf32>
    %648 = vector.extract_strided_slice %646 {offsets = [0, 128], sizes = [11, 128], strides = [1, 1]} : vector<11x768xf32> to vector<11x128xf32>
    %649 = arith.addf %647, %648 : vector<11x128xf32>
    %650 = vector.extract_strided_slice %646 {offsets = [0, 256], sizes = [11, 128], strides = [1, 1]} : vector<11x768xf32> to vector<11x128xf32>
    %651 = arith.addf %649, %650 : vector<11x128xf32>
    %652 = vector.extract_strided_slice %646 {offsets = [0, 384], sizes = [11, 128], strides = [1, 1]} : vector<11x768xf32> to vector<11x128xf32>
    %653 = arith.addf %651, %652 : vector<11x128xf32>
    %654 = vector.extract_strided_slice %646 {offsets = [0, 512], sizes = [11, 128], strides = [1, 1]} : vector<11x768xf32> to vector<11x128xf32>
    %655 = arith.addf %653, %654 : vector<11x128xf32>
    %656 = vector.extract_strided_slice %646 {offsets = [0, 640], sizes = [11, 128], strides = [1, 1]} : vector<11x768xf32> to vector<11x128xf32>
    %657 = arith.addf %655, %656 : vector<11x128xf32>
    %658 = arith.addf %626, %657 : vector<11x128xf32>
    %c1_103 = arith.constant 1 : index
    %c15360_104 = arith.constant 15360 : index
    %659 = vector.load %arg2[%c1_103, %c15360_104] : memref<2x42240xf32, #tpu.memory_space<vmem>>, vector<1x768xf32>
    %660 = vector.broadcast %659 : vector<1x768xf32> to vector<11x768xf32>
    %661 = arith.mulf %660, %643 : vector<11x768xf32>
    %662 = vector.extract_strided_slice %661 {offsets = [0, 0], sizes = [11, 128], strides = [1, 1]} : vector<11x768xf32> to vector<11x128xf32>
    %663 = vector.extract_strided_slice %661 {offsets = [0, 128], sizes = [11, 128], strides = [1, 1]} : vector<11x768xf32> to vector<11x128xf32>
    %664 = arith.addf %662, %663 : vector<11x128xf32>
    %665 = vector.extract_strided_slice %661 {offsets = [0, 256], sizes = [11, 128], strides = [1, 1]} : vector<11x768xf32> to vector<11x128xf32>
    %666 = arith.addf %664, %665 : vector<11x128xf32>
    %667 = vector.extract_strided_slice %661 {offsets = [0, 384], sizes = [11, 128], strides = [1, 1]} : vector<11x768xf32> to vector<11x128xf32>
    %668 = arith.addf %666, %667 : vector<11x128xf32>
    %669 = vector.extract_strided_slice %661 {offsets = [0, 512], sizes = [11, 128], strides = [1, 1]} : vector<11x768xf32> to vector<11x128xf32>
    %670 = arith.addf %668, %669 : vector<11x128xf32>
    %671 = vector.extract_strided_slice %661 {offsets = [0, 640], sizes = [11, 128], strides = [1, 1]} : vector<11x768xf32> to vector<11x128xf32>
    %672 = arith.addf %670, %671 : vector<11x128xf32>
    %673 = arith.addf %641, %672 : vector<11x128xf32>
    %c0_105 = arith.constant 0 : index
    %c16128 = arith.constant 16128 : index
    %674 = vector.load %arg3[%c0_105, %c16128] : memref<11x42240xbf16, #tpu.memory_space<vmem>>, vector<11x768xbf16>
    %675 = arith.extf %674 : vector<11x768xbf16> to vector<11x768xf32>
    %c0_106 = arith.constant 0 : index
    %c16128_107 = arith.constant 16128 : index
    %676 = vector.load %arg2[%c0_106, %c16128_107] : memref<2x42240xf32, #tpu.memory_space<vmem>>, vector<1x768xf32>
    %677 = vector.broadcast %676 : vector<1x768xf32> to vector<11x768xf32>
    %678 = arith.mulf %677, %675 : vector<11x768xf32>
    %679 = vector.extract_strided_slice %678 {offsets = [0, 0], sizes = [11, 128], strides = [1, 1]} : vector<11x768xf32> to vector<11x128xf32>
    %680 = vector.extract_strided_slice %678 {offsets = [0, 128], sizes = [11, 128], strides = [1, 1]} : vector<11x768xf32> to vector<11x128xf32>
    %681 = arith.addf %679, %680 : vector<11x128xf32>
    %682 = vector.extract_strided_slice %678 {offsets = [0, 256], sizes = [11, 128], strides = [1, 1]} : vector<11x768xf32> to vector<11x128xf32>
    %683 = arith.addf %681, %682 : vector<11x128xf32>
    %684 = vector.extract_strided_slice %678 {offsets = [0, 384], sizes = [11, 128], strides = [1, 1]} : vector<11x768xf32> to vector<11x128xf32>
    %685 = arith.addf %683, %684 : vector<11x128xf32>
    %686 = vector.extract_strided_slice %678 {offsets = [0, 512], sizes = [11, 128], strides = [1, 1]} : vector<11x768xf32> to vector<11x128xf32>
    %687 = arith.addf %685, %686 : vector<11x128xf32>
    %688 = vector.extract_strided_slice %678 {offsets = [0, 640], sizes = [11, 128], strides = [1, 1]} : vector<11x768xf32> to vector<11x128xf32>
    %689 = arith.addf %687, %688 : vector<11x128xf32>
    %690 = arith.addf %658, %689 : vector<11x128xf32>
    %c1_108 = arith.constant 1 : index
    %c16128_109 = arith.constant 16128 : index
    %691 = vector.load %arg2[%c1_108, %c16128_109] : memref<2x42240xf32, #tpu.memory_space<vmem>>, vector<1x768xf32>
    %692 = vector.broadcast %691 : vector<1x768xf32> to vector<11x768xf32>
    %693 = arith.mulf %692, %675 : vector<11x768xf32>
    %694 = vector.extract_strided_slice %693 {offsets = [0, 0], sizes = [11, 128], strides = [1, 1]} : vector<11x768xf32> to vector<11x128xf32>
    %695 = vector.extract_strided_slice %693 {offsets = [0, 128], sizes = [11, 128], strides = [1, 1]} : vector<11x768xf32> to vector<11x128xf32>
    %696 = arith.addf %694, %695 : vector<11x128xf32>
    %697 = vector.extract_strided_slice %693 {offsets = [0, 256], sizes = [11, 128], strides = [1, 1]} : vector<11x768xf32> to vector<11x128xf32>
    %698 = arith.addf %696, %697 : vector<11x128xf32>
    %699 = vector.extract_strided_slice %693 {offsets = [0, 384], sizes = [11, 128], strides = [1, 1]} : vector<11x768xf32> to vector<11x128xf32>
    %700 = arith.addf %698, %699 : vector<11x128xf32>
    %701 = vector.extract_strided_slice %693 {offsets = [0, 512], sizes = [11, 128], strides = [1, 1]} : vector<11x768xf32> to vector<11x128xf32>
    %702 = arith.addf %700, %701 : vector<11x128xf32>
    %703 = vector.extract_strided_slice %693 {offsets = [0, 640], sizes = [11, 128], strides = [1, 1]} : vector<11x768xf32> to vector<11x128xf32>
    %704 = arith.addf %702, %703 : vector<11x128xf32>
    %705 = arith.addf %673, %704 : vector<11x128xf32>
    %c0_110 = arith.constant 0 : index
    %c16896 = arith.constant 16896 : index
    %706 = vector.load %arg3[%c0_110, %c16896] : memref<11x42240xbf16, #tpu.memory_space<vmem>>, vector<11x768xbf16>
    %707 = arith.extf %706 : vector<11x768xbf16> to vector<11x768xf32>
    %c0_111 = arith.constant 0 : index
    %c16896_112 = arith.constant 16896 : index
    %708 = vector.load %arg2[%c0_111, %c16896_112] : memref<2x42240xf32, #tpu.memory_space<vmem>>, vector<1x768xf32>
    %709 = vector.broadcast %708 : vector<1x768xf32> to vector<11x768xf32>
    %710 = arith.mulf %709, %707 : vector<11x768xf32>
    %711 = vector.extract_strided_slice %710 {offsets = [0, 0], sizes = [11, 128], strides = [1, 1]} : vector<11x768xf32> to vector<11x128xf32>
    %712 = vector.extract_strided_slice %710 {offsets = [0, 128], sizes = [11, 128], strides = [1, 1]} : vector<11x768xf32> to vector<11x128xf32>
    %713 = arith.addf %711, %712 : vector<11x128xf32>
    %714 = vector.extract_strided_slice %710 {offsets = [0, 256], sizes = [11, 128], strides = [1, 1]} : vector<11x768xf32> to vector<11x128xf32>
    %715 = arith.addf %713, %714 : vector<11x128xf32>
    %716 = vector.extract_strided_slice %710 {offsets = [0, 384], sizes = [11, 128], strides = [1, 1]} : vector<11x768xf32> to vector<11x128xf32>
    %717 = arith.addf %715, %716 : vector<11x128xf32>
    %718 = vector.extract_strided_slice %710 {offsets = [0, 512], sizes = [11, 128], strides = [1, 1]} : vector<11x768xf32> to vector<11x128xf32>
    %719 = arith.addf %717, %718 : vector<11x128xf32>
    %720 = vector.extract_strided_slice %710 {offsets = [0, 640], sizes = [11, 128], strides = [1, 1]} : vector<11x768xf32> to vector<11x128xf32>
    %721 = arith.addf %719, %720 : vector<11x128xf32>
    %722 = arith.addf %690, %721 : vector<11x128xf32>
    %c1_113 = arith.constant 1 : index
    %c16896_114 = arith.constant 16896 : index
    %723 = vector.load %arg2[%c1_113, %c16896_114] : memref<2x42240xf32, #tpu.memory_space<vmem>>, vector<1x768xf32>
    %724 = vector.broadcast %723 : vector<1x768xf32> to vector<11x768xf32>
    %725 = arith.mulf %724, %707 : vector<11x768xf32>
    %726 = vector.extract_strided_slice %725 {offsets = [0, 0], sizes = [11, 128], strides = [1, 1]} : vector<11x768xf32> to vector<11x128xf32>
    %727 = vector.extract_strided_slice %725 {offsets = [0, 128], sizes = [11, 128], strides = [1, 1]} : vector<11x768xf32> to vector<11x128xf32>
    %728 = arith.addf %726, %727 : vector<11x128xf32>
    %729 = vector.extract_strided_slice %725 {offsets = [0, 256], sizes = [11, 128], strides = [1, 1]} : vector<11x768xf32> to vector<11x128xf32>
    %730 = arith.addf %728, %729 : vector<11x128xf32>
    %731 = vector.extract_strided_slice %725 {offsets = [0, 384], sizes = [11, 128], strides = [1, 1]} : vector<11x768xf32> to vector<11x128xf32>
    %732 = arith.addf %730, %731 : vector<11x128xf32>
    %733 = vector.extract_strided_slice %725 {offsets = [0, 512], sizes = [11, 128], strides = [1, 1]} : vector<11x768xf32> to vector<11x128xf32>
    %734 = arith.addf %732, %733 : vector<11x128xf32>
    %735 = vector.extract_strided_slice %725 {offsets = [0, 640], sizes = [11, 128], strides = [1, 1]} : vector<11x768xf32> to vector<11x128xf32>
    %736 = arith.addf %734, %735 : vector<11x128xf32>
    %737 = arith.addf %705, %736 : vector<11x128xf32>
    %c0_115 = arith.constant 0 : index
    %c17664 = arith.constant 17664 : index
    %738 = vector.load %arg3[%c0_115, %c17664] : memref<11x42240xbf16, #tpu.memory_space<vmem>>, vector<11x768xbf16>
    %739 = arith.extf %738 : vector<11x768xbf16> to vector<11x768xf32>
    %c0_116 = arith.constant 0 : index
    %c17664_117 = arith.constant 17664 : index
    %740 = vector.load %arg2[%c0_116, %c17664_117] : memref<2x42240xf32, #tpu.memory_space<vmem>>, vector<1x768xf32>
    %741 = vector.broadcast %740 : vector<1x768xf32> to vector<11x768xf32>
    %742 = arith.mulf %741, %739 : vector<11x768xf32>
    %743 = vector.extract_strided_slice %742 {offsets = [0, 0], sizes = [11, 128], strides = [1, 1]} : vector<11x768xf32> to vector<11x128xf32>
    %744 = vector.extract_strided_slice %742 {offsets = [0, 128], sizes = [11, 128], strides = [1, 1]} : vector<11x768xf32> to vector<11x128xf32>
    %745 = arith.addf %743, %744 : vector<11x128xf32>
    %746 = vector.extract_strided_slice %742 {offsets = [0, 256], sizes = [11, 128], strides = [1, 1]} : vector<11x768xf32> to vector<11x128xf32>
    %747 = arith.addf %745, %746 : vector<11x128xf32>
    %748 = vector.extract_strided_slice %742 {offsets = [0, 384], sizes = [11, 128], strides = [1, 1]} : vector<11x768xf32> to vector<11x128xf32>
    %749 = arith.addf %747, %748 : vector<11x128xf32>
    %750 = vector.extract_strided_slice %742 {offsets = [0, 512], sizes = [11, 128], strides = [1, 1]} : vector<11x768xf32> to vector<11x128xf32>
    %751 = arith.addf %749, %750 : vector<11x128xf32>
    %752 = vector.extract_strided_slice %742 {offsets = [0, 640], sizes = [11, 128], strides = [1, 1]} : vector<11x768xf32> to vector<11x128xf32>
    %753 = arith.addf %751, %752 : vector<11x128xf32>
    %754 = arith.addf %722, %753 : vector<11x128xf32>
    %c1_118 = arith.constant 1 : index
    %c17664_119 = arith.constant 17664 : index
    %755 = vector.load %arg2[%c1_118, %c17664_119] : memref<2x42240xf32, #tpu.memory_space<vmem>>, vector<1x768xf32>
    %756 = vector.broadcast %755 : vector<1x768xf32> to vector<11x768xf32>
    %757 = arith.mulf %756, %739 : vector<11x768xf32>
    %758 = vector.extract_strided_slice %757 {offsets = [0, 0], sizes = [11, 128], strides = [1, 1]} : vector<11x768xf32> to vector<11x128xf32>
    %759 = vector.extract_strided_slice %757 {offsets = [0, 128], sizes = [11, 128], strides = [1, 1]} : vector<11x768xf32> to vector<11x128xf32>
    %760 = arith.addf %758, %759 : vector<11x128xf32>
    %761 = vector.extract_strided_slice %757 {offsets = [0, 256], sizes = [11, 128], strides = [1, 1]} : vector<11x768xf32> to vector<11x128xf32>
    %762 = arith.addf %760, %761 : vector<11x128xf32>
    %763 = vector.extract_strided_slice %757 {offsets = [0, 384], sizes = [11, 128], strides = [1, 1]} : vector<11x768xf32> to vector<11x128xf32>
    %764 = arith.addf %762, %763 : vector<11x128xf32>
    %765 = vector.extract_strided_slice %757 {offsets = [0, 512], sizes = [11, 128], strides = [1, 1]} : vector<11x768xf32> to vector<11x128xf32>
    %766 = arith.addf %764, %765 : vector<11x128xf32>
    %767 = vector.extract_strided_slice %757 {offsets = [0, 640], sizes = [11, 128], strides = [1, 1]} : vector<11x768xf32> to vector<11x128xf32>
    %768 = arith.addf %766, %767 : vector<11x128xf32>
    %769 = arith.addf %737, %768 : vector<11x128xf32>
    %c0_120 = arith.constant 0 : index
    %c18432 = arith.constant 18432 : index
    %770 = vector.load %arg3[%c0_120, %c18432] : memref<11x42240xbf16, #tpu.memory_space<vmem>>, vector<11x768xbf16>
    %771 = arith.extf %770 : vector<11x768xbf16> to vector<11x768xf32>
    %c0_121 = arith.constant 0 : index
    %c18432_122 = arith.constant 18432 : index
    %772 = vector.load %arg2[%c0_121, %c18432_122] : memref<2x42240xf32, #tpu.memory_space<vmem>>, vector<1x768xf32>
    %773 = vector.broadcast %772 : vector<1x768xf32> to vector<11x768xf32>
    %774 = arith.mulf %773, %771 : vector<11x768xf32>
    %775 = vector.extract_strided_slice %774 {offsets = [0, 0], sizes = [11, 128], strides = [1, 1]} : vector<11x768xf32> to vector<11x128xf32>
    %776 = vector.extract_strided_slice %774 {offsets = [0, 128], sizes = [11, 128], strides = [1, 1]} : vector<11x768xf32> to vector<11x128xf32>
    %777 = arith.addf %775, %776 : vector<11x128xf32>
    %778 = vector.extract_strided_slice %774 {offsets = [0, 256], sizes = [11, 128], strides = [1, 1]} : vector<11x768xf32> to vector<11x128xf32>
    %779 = arith.addf %777, %778 : vector<11x128xf32>
    %780 = vector.extract_strided_slice %774 {offsets = [0, 384], sizes = [11, 128], strides = [1, 1]} : vector<11x768xf32> to vector<11x128xf32>
    %781 = arith.addf %779, %780 : vector<11x128xf32>
    %782 = vector.extract_strided_slice %774 {offsets = [0, 512], sizes = [11, 128], strides = [1, 1]} : vector<11x768xf32> to vector<11x128xf32>
    %783 = arith.addf %781, %782 : vector<11x128xf32>
    %784 = vector.extract_strided_slice %774 {offsets = [0, 640], sizes = [11, 128], strides = [1, 1]} : vector<11x768xf32> to vector<11x128xf32>
    %785 = arith.addf %783, %784 : vector<11x128xf32>
    %786 = arith.addf %754, %785 : vector<11x128xf32>
    %c1_123 = arith.constant 1 : index
    %c18432_124 = arith.constant 18432 : index
    %787 = vector.load %arg2[%c1_123, %c18432_124] : memref<2x42240xf32, #tpu.memory_space<vmem>>, vector<1x768xf32>
    %788 = vector.broadcast %787 : vector<1x768xf32> to vector<11x768xf32>
    %789 = arith.mulf %788, %771 : vector<11x768xf32>
    %790 = vector.extract_strided_slice %789 {offsets = [0, 0], sizes = [11, 128], strides = [1, 1]} : vector<11x768xf32> to vector<11x128xf32>
    %791 = vector.extract_strided_slice %789 {offsets = [0, 128], sizes = [11, 128], strides = [1, 1]} : vector<11x768xf32> to vector<11x128xf32>
    %792 = arith.addf %790, %791 : vector<11x128xf32>
    %793 = vector.extract_strided_slice %789 {offsets = [0, 256], sizes = [11, 128], strides = [1, 1]} : vector<11x768xf32> to vector<11x128xf32>
    %794 = arith.addf %792, %793 : vector<11x128xf32>
    %795 = vector.extract_strided_slice %789 {offsets = [0, 384], sizes = [11, 128], strides = [1, 1]} : vector<11x768xf32> to vector<11x128xf32>
    %796 = arith.addf %794, %795 : vector<11x128xf32>
    %797 = vector.extract_strided_slice %789 {offsets = [0, 512], sizes = [11, 128], strides = [1, 1]} : vector<11x768xf32> to vector<11x128xf32>
    %798 = arith.addf %796, %797 : vector<11x128xf32>
    %799 = vector.extract_strided_slice %789 {offsets = [0, 640], sizes = [11, 128], strides = [1, 1]} : vector<11x768xf32> to vector<11x128xf32>
    %800 = arith.addf %798, %799 : vector<11x128xf32>
    %801 = arith.addf %769, %800 : vector<11x128xf32>
    %c0_125 = arith.constant 0 : index
    %c19200 = arith.constant 19200 : index
    %802 = vector.load %arg3[%c0_125, %c19200] : memref<11x42240xbf16, #tpu.memory_space<vmem>>, vector<11x768xbf16>
    %803 = arith.extf %802 : vector<11x768xbf16> to vector<11x768xf32>
    %c0_126 = arith.constant 0 : index
    %c19200_127 = arith.constant 19200 : index
    %804 = vector.load %arg2[%c0_126, %c19200_127] : memref<2x42240xf32, #tpu.memory_space<vmem>>, vector<1x768xf32>
    %805 = vector.broadcast %804 : vector<1x768xf32> to vector<11x768xf32>
    %806 = arith.mulf %805, %803 : vector<11x768xf32>
    %807 = vector.extract_strided_slice %806 {offsets = [0, 0], sizes = [11, 128], strides = [1, 1]} : vector<11x768xf32> to vector<11x128xf32>
    %808 = vector.extract_strided_slice %806 {offsets = [0, 128], sizes = [11, 128], strides = [1, 1]} : vector<11x768xf32> to vector<11x128xf32>
    %809 = arith.addf %807, %808 : vector<11x128xf32>
    %810 = vector.extract_strided_slice %806 {offsets = [0, 256], sizes = [11, 128], strides = [1, 1]} : vector<11x768xf32> to vector<11x128xf32>
    %811 = arith.addf %809, %810 : vector<11x128xf32>
    %812 = vector.extract_strided_slice %806 {offsets = [0, 384], sizes = [11, 128], strides = [1, 1]} : vector<11x768xf32> to vector<11x128xf32>
    %813 = arith.addf %811, %812 : vector<11x128xf32>
    %814 = vector.extract_strided_slice %806 {offsets = [0, 512], sizes = [11, 128], strides = [1, 1]} : vector<11x768xf32> to vector<11x128xf32>
    %815 = arith.addf %813, %814 : vector<11x128xf32>
    %816 = vector.extract_strided_slice %806 {offsets = [0, 640], sizes = [11, 128], strides = [1, 1]} : vector<11x768xf32> to vector<11x128xf32>
    %817 = arith.addf %815, %816 : vector<11x128xf32>
    %818 = arith.addf %786, %817 : vector<11x128xf32>
    %c1_128 = arith.constant 1 : index
    %c19200_129 = arith.constant 19200 : index
    %819 = vector.load %arg2[%c1_128, %c19200_129] : memref<2x42240xf32, #tpu.memory_space<vmem>>, vector<1x768xf32>
    %820 = vector.broadcast %819 : vector<1x768xf32> to vector<11x768xf32>
    %821 = arith.mulf %820, %803 : vector<11x768xf32>
    %822 = vector.extract_strided_slice %821 {offsets = [0, 0], sizes = [11, 128], strides = [1, 1]} : vector<11x768xf32> to vector<11x128xf32>
    %823 = vector.extract_strided_slice %821 {offsets = [0, 128], sizes = [11, 128], strides = [1, 1]} : vector<11x768xf32> to vector<11x128xf32>
    %824 = arith.addf %822, %823 : vector<11x128xf32>
    %825 = vector.extract_strided_slice %821 {offsets = [0, 256], sizes = [11, 128], strides = [1, 1]} : vector<11x768xf32> to vector<11x128xf32>
    %826 = arith.addf %824, %825 : vector<11x128xf32>
    %827 = vector.extract_strided_slice %821 {offsets = [0, 384], sizes = [11, 128], strides = [1, 1]} : vector<11x768xf32> to vector<11x128xf32>
    %828 = arith.addf %826, %827 : vector<11x128xf32>
    %829 = vector.extract_strided_slice %821 {offsets = [0, 512], sizes = [11, 128], strides = [1, 1]} : vector<11x768xf32> to vector<11x128xf32>
    %830 = arith.addf %828, %829 : vector<11x128xf32>
    %831 = vector.extract_strided_slice %821 {offsets = [0, 640], sizes = [11, 128], strides = [1, 1]} : vector<11x768xf32> to vector<11x128xf32>
    %832 = arith.addf %830, %831 : vector<11x128xf32>
    %833 = arith.addf %801, %832 : vector<11x128xf32>
    %c0_130 = arith.constant 0 : index
    %c19968 = arith.constant 19968 : index
    %834 = vector.load %arg3[%c0_130, %c19968] : memref<11x42240xbf16, #tpu.memory_space<vmem>>, vector<11x768xbf16>
    %835 = arith.extf %834 : vector<11x768xbf16> to vector<11x768xf32>
    %c0_131 = arith.constant 0 : index
    %c19968_132 = arith.constant 19968 : index
    %836 = vector.load %arg2[%c0_131, %c19968_132] : memref<2x42240xf32, #tpu.memory_space<vmem>>, vector<1x768xf32>
    %837 = vector.broadcast %836 : vector<1x768xf32> to vector<11x768xf32>
    %838 = arith.mulf %837, %835 : vector<11x768xf32>
    %839 = vector.extract_strided_slice %838 {offsets = [0, 0], sizes = [11, 128], strides = [1, 1]} : vector<11x768xf32> to vector<11x128xf32>
    %840 = vector.extract_strided_slice %838 {offsets = [0, 128], sizes = [11, 128], strides = [1, 1]} : vector<11x768xf32> to vector<11x128xf32>
    %841 = arith.addf %839, %840 : vector<11x128xf32>
    %842 = vector.extract_strided_slice %838 {offsets = [0, 256], sizes = [11, 128], strides = [1, 1]} : vector<11x768xf32> to vector<11x128xf32>
    %843 = arith.addf %841, %842 : vector<11x128xf32>
    %844 = vector.extract_strided_slice %838 {offsets = [0, 384], sizes = [11, 128], strides = [1, 1]} : vector<11x768xf32> to vector<11x128xf32>
    %845 = arith.addf %843, %844 : vector<11x128xf32>
    %846 = vector.extract_strided_slice %838 {offsets = [0, 512], sizes = [11, 128], strides = [1, 1]} : vector<11x768xf32> to vector<11x128xf32>
    %847 = arith.addf %845, %846 : vector<11x128xf32>
    %848 = vector.extract_strided_slice %838 {offsets = [0, 640], sizes = [11, 128], strides = [1, 1]} : vector<11x768xf32> to vector<11x128xf32>
    %849 = arith.addf %847, %848 : vector<11x128xf32>
    %850 = arith.addf %818, %849 : vector<11x128xf32>
    %c1_133 = arith.constant 1 : index
    %c19968_134 = arith.constant 19968 : index
    %851 = vector.load %arg2[%c1_133, %c19968_134] : memref<2x42240xf32, #tpu.memory_space<vmem>>, vector<1x768xf32>
    %852 = vector.broadcast %851 : vector<1x768xf32> to vector<11x768xf32>
    %853 = arith.mulf %852, %835 : vector<11x768xf32>
    %854 = vector.extract_strided_slice %853 {offsets = [0, 0], sizes = [11, 128], strides = [1, 1]} : vector<11x768xf32> to vector<11x128xf32>
    %855 = vector.extract_strided_slice %853 {offsets = [0, 128], sizes = [11, 128], strides = [1, 1]} : vector<11x768xf32> to vector<11x128xf32>
    %856 = arith.addf %854, %855 : vector<11x128xf32>
    %857 = vector.extract_strided_slice %853 {offsets = [0, 256], sizes = [11, 128], strides = [1, 1]} : vector<11x768xf32> to vector<11x128xf32>
    %858 = arith.addf %856, %857 : vector<11x128xf32>
    %859 = vector.extract_strided_slice %853 {offsets = [0, 384], sizes = [11, 128], strides = [1, 1]} : vector<11x768xf32> to vector<11x128xf32>
    %860 = arith.addf %858, %859 : vector<11x128xf32>
    %861 = vector.extract_strided_slice %853 {offsets = [0, 512], sizes = [11, 128], strides = [1, 1]} : vector<11x768xf32> to vector<11x128xf32>
    %862 = arith.addf %860, %861 : vector<11x128xf32>
    %863 = vector.extract_strided_slice %853 {offsets = [0, 640], sizes = [11, 128], strides = [1, 1]} : vector<11x768xf32> to vector<11x128xf32>
    %864 = arith.addf %862, %863 : vector<11x128xf32>
    %865 = arith.addf %833, %864 : vector<11x128xf32>
    %c0_135 = arith.constant 0 : index
    %c20736 = arith.constant 20736 : index
    %866 = vector.load %arg3[%c0_135, %c20736] : memref<11x42240xbf16, #tpu.memory_space<vmem>>, vector<11x768xbf16>
    %867 = arith.extf %866 : vector<11x768xbf16> to vector<11x768xf32>
    %c0_136 = arith.constant 0 : index
    %c20736_137 = arith.constant 20736 : index
    %868 = vector.load %arg2[%c0_136, %c20736_137] : memref<2x42240xf32, #tpu.memory_space<vmem>>, vector<1x768xf32>
    %869 = vector.broadcast %868 : vector<1x768xf32> to vector<11x768xf32>
    %870 = arith.mulf %869, %867 : vector<11x768xf32>
    %871 = vector.extract_strided_slice %870 {offsets = [0, 0], sizes = [11, 128], strides = [1, 1]} : vector<11x768xf32> to vector<11x128xf32>
    %872 = vector.extract_strided_slice %870 {offsets = [0, 128], sizes = [11, 128], strides = [1, 1]} : vector<11x768xf32> to vector<11x128xf32>
    %873 = arith.addf %871, %872 : vector<11x128xf32>
    %874 = vector.extract_strided_slice %870 {offsets = [0, 256], sizes = [11, 128], strides = [1, 1]} : vector<11x768xf32> to vector<11x128xf32>
    %875 = arith.addf %873, %874 : vector<11x128xf32>
    %876 = vector.extract_strided_slice %870 {offsets = [0, 384], sizes = [11, 128], strides = [1, 1]} : vector<11x768xf32> to vector<11x128xf32>
    %877 = arith.addf %875, %876 : vector<11x128xf32>
    %878 = vector.extract_strided_slice %870 {offsets = [0, 512], sizes = [11, 128], strides = [1, 1]} : vector<11x768xf32> to vector<11x128xf32>
    %879 = arith.addf %877, %878 : vector<11x128xf32>
    %880 = vector.extract_strided_slice %870 {offsets = [0, 640], sizes = [11, 128], strides = [1, 1]} : vector<11x768xf32> to vector<11x128xf32>
    %881 = arith.addf %879, %880 : vector<11x128xf32>
    %882 = arith.addf %850, %881 : vector<11x128xf32>
    %c1_138 = arith.constant 1 : index
    %c20736_139 = arith.constant 20736 : index
    %883 = vector.load %arg2[%c1_138, %c20736_139] : memref<2x42240xf32, #tpu.memory_space<vmem>>, vector<1x768xf32>
    %884 = vector.broadcast %883 : vector<1x768xf32> to vector<11x768xf32>
    %885 = arith.mulf %884, %867 : vector<11x768xf32>
    %886 = vector.extract_strided_slice %885 {offsets = [0, 0], sizes = [11, 128], strides = [1, 1]} : vector<11x768xf32> to vector<11x128xf32>
    %887 = vector.extract_strided_slice %885 {offsets = [0, 128], sizes = [11, 128], strides = [1, 1]} : vector<11x768xf32> to vector<11x128xf32>
    %888 = arith.addf %886, %887 : vector<11x128xf32>
    %889 = vector.extract_strided_slice %885 {offsets = [0, 256], sizes = [11, 128], strides = [1, 1]} : vector<11x768xf32> to vector<11x128xf32>
    %890 = arith.addf %888, %889 : vector<11x128xf32>
    %891 = vector.extract_strided_slice %885 {offsets = [0, 384], sizes = [11, 128], strides = [1, 1]} : vector<11x768xf32> to vector<11x128xf32>
    %892 = arith.addf %890, %891 : vector<11x128xf32>
    %893 = vector.extract_strided_slice %885 {offsets = [0, 512], sizes = [11, 128], strides = [1, 1]} : vector<11x768xf32> to vector<11x128xf32>
    %894 = arith.addf %892, %893 : vector<11x128xf32>
    %895 = vector.extract_strided_slice %885 {offsets = [0, 640], sizes = [11, 128], strides = [1, 1]} : vector<11x768xf32> to vector<11x128xf32>
    %896 = arith.addf %894, %895 : vector<11x128xf32>
    %897 = arith.addf %865, %896 : vector<11x128xf32>
    %c0_140 = arith.constant 0 : index
    %c21504 = arith.constant 21504 : index
    %898 = vector.load %arg3[%c0_140, %c21504] : memref<11x42240xbf16, #tpu.memory_space<vmem>>, vector<11x768xbf16>
    %899 = arith.extf %898 : vector<11x768xbf16> to vector<11x768xf32>
    %c0_141 = arith.constant 0 : index
    %c21504_142 = arith.constant 21504 : index
    %900 = vector.load %arg2[%c0_141, %c21504_142] : memref<2x42240xf32, #tpu.memory_space<vmem>>, vector<1x768xf32>
    %901 = vector.broadcast %900 : vector<1x768xf32> to vector<11x768xf32>
    %902 = arith.mulf %901, %899 : vector<11x768xf32>
    %903 = vector.extract_strided_slice %902 {offsets = [0, 0], sizes = [11, 128], strides = [1, 1]} : vector<11x768xf32> to vector<11x128xf32>
    %904 = vector.extract_strided_slice %902 {offsets = [0, 128], sizes = [11, 128], strides = [1, 1]} : vector<11x768xf32> to vector<11x128xf32>
    %905 = arith.addf %903, %904 : vector<11x128xf32>
    %906 = vector.extract_strided_slice %902 {offsets = [0, 256], sizes = [11, 128], strides = [1, 1]} : vector<11x768xf32> to vector<11x128xf32>
    %907 = arith.addf %905, %906 : vector<11x128xf32>
    %908 = vector.extract_strided_slice %902 {offsets = [0, 384], sizes = [11, 128], strides = [1, 1]} : vector<11x768xf32> to vector<11x128xf32>
    %909 = arith.addf %907, %908 : vector<11x128xf32>
    %910 = vector.extract_strided_slice %902 {offsets = [0, 512], sizes = [11, 128], strides = [1, 1]} : vector<11x768xf32> to vector<11x128xf32>
    %911 = arith.addf %909, %910 : vector<11x128xf32>
    %912 = vector.extract_strided_slice %902 {offsets = [0, 640], sizes = [11, 128], strides = [1, 1]} : vector<11x768xf32> to vector<11x128xf32>
    %913 = arith.addf %911, %912 : vector<11x128xf32>
    %914 = arith.addf %882, %913 : vector<11x128xf32>
    %c1_143 = arith.constant 1 : index
    %c21504_144 = arith.constant 21504 : index
    %915 = vector.load %arg2[%c1_143, %c21504_144] : memref<2x42240xf32, #tpu.memory_space<vmem>>, vector<1x768xf32>
    %916 = vector.broadcast %915 : vector<1x768xf32> to vector<11x768xf32>
    %917 = arith.mulf %916, %899 : vector<11x768xf32>
    %918 = vector.extract_strided_slice %917 {offsets = [0, 0], sizes = [11, 128], strides = [1, 1]} : vector<11x768xf32> to vector<11x128xf32>
    %919 = vector.extract_strided_slice %917 {offsets = [0, 128], sizes = [11, 128], strides = [1, 1]} : vector<11x768xf32> to vector<11x128xf32>
    %920 = arith.addf %918, %919 : vector<11x128xf32>
    %921 = vector.extract_strided_slice %917 {offsets = [0, 256], sizes = [11, 128], strides = [1, 1]} : vector<11x768xf32> to vector<11x128xf32>
    %922 = arith.addf %920, %921 : vector<11x128xf32>
    %923 = vector.extract_strided_slice %917 {offsets = [0, 384], sizes = [11, 128], strides = [1, 1]} : vector<11x768xf32> to vector<11x128xf32>
    %924 = arith.addf %922, %923 : vector<11x128xf32>
    %925 = vector.extract_strided_slice %917 {offsets = [0, 512], sizes = [11, 128], strides = [1, 1]} : vector<11x768xf32> to vector<11x128xf32>
    %926 = arith.addf %924, %925 : vector<11x128xf32>
    %927 = vector.extract_strided_slice %917 {offsets = [0, 640], sizes = [11, 128], strides = [1, 1]} : vector<11x768xf32> to vector<11x128xf32>
    %928 = arith.addf %926, %927 : vector<11x128xf32>
    %929 = arith.addf %897, %928 : vector<11x128xf32>
    %c0_145 = arith.constant 0 : index
    %c22272 = arith.constant 22272 : index
    %930 = vector.load %arg3[%c0_145, %c22272] : memref<11x42240xbf16, #tpu.memory_space<vmem>>, vector<11x768xbf16>
    %931 = arith.extf %930 : vector<11x768xbf16> to vector<11x768xf32>
    %c0_146 = arith.constant 0 : index
    %c22272_147 = arith.constant 22272 : index
    %932 = vector.load %arg2[%c0_146, %c22272_147] : memref<2x42240xf32, #tpu.memory_space<vmem>>, vector<1x768xf32>
    %933 = vector.broadcast %932 : vector<1x768xf32> to vector<11x768xf32>
    %934 = arith.mulf %933, %931 : vector<11x768xf32>
    %935 = vector.extract_strided_slice %934 {offsets = [0, 0], sizes = [11, 128], strides = [1, 1]} : vector<11x768xf32> to vector<11x128xf32>
    %936 = vector.extract_strided_slice %934 {offsets = [0, 128], sizes = [11, 128], strides = [1, 1]} : vector<11x768xf32> to vector<11x128xf32>
    %937 = arith.addf %935, %936 : vector<11x128xf32>
    %938 = vector.extract_strided_slice %934 {offsets = [0, 256], sizes = [11, 128], strides = [1, 1]} : vector<11x768xf32> to vector<11x128xf32>
    %939 = arith.addf %937, %938 : vector<11x128xf32>
    %940 = vector.extract_strided_slice %934 {offsets = [0, 384], sizes = [11, 128], strides = [1, 1]} : vector<11x768xf32> to vector<11x128xf32>
    %941 = arith.addf %939, %940 : vector<11x128xf32>
    %942 = vector.extract_strided_slice %934 {offsets = [0, 512], sizes = [11, 128], strides = [1, 1]} : vector<11x768xf32> to vector<11x128xf32>
    %943 = arith.addf %941, %942 : vector<11x128xf32>
    %944 = vector.extract_strided_slice %934 {offsets = [0, 640], sizes = [11, 128], strides = [1, 1]} : vector<11x768xf32> to vector<11x128xf32>
    %945 = arith.addf %943, %944 : vector<11x128xf32>
    %946 = arith.addf %914, %945 : vector<11x128xf32>
    %c1_148 = arith.constant 1 : index
    %c22272_149 = arith.constant 22272 : index
    %947 = vector.load %arg2[%c1_148, %c22272_149] : memref<2x42240xf32, #tpu.memory_space<vmem>>, vector<1x768xf32>
    %948 = vector.broadcast %947 : vector<1x768xf32> to vector<11x768xf32>
    %949 = arith.mulf %948, %931 : vector<11x768xf32>
    %950 = vector.extract_strided_slice %949 {offsets = [0, 0], sizes = [11, 128], strides = [1, 1]} : vector<11x768xf32> to vector<11x128xf32>
    %951 = vector.extract_strided_slice %949 {offsets = [0, 128], sizes = [11, 128], strides = [1, 1]} : vector<11x768xf32> to vector<11x128xf32>
    %952 = arith.addf %950, %951 : vector<11x128xf32>
    %953 = vector.extract_strided_slice %949 {offsets = [0, 256], sizes = [11, 128], strides = [1, 1]} : vector<11x768xf32> to vector<11x128xf32>
    %954 = arith.addf %952, %953 : vector<11x128xf32>
    %955 = vector.extract_strided_slice %949 {offsets = [0, 384], sizes = [11, 128], strides = [1, 1]} : vector<11x768xf32> to vector<11x128xf32>
    %956 = arith.addf %954, %955 : vector<11x128xf32>
    %957 = vector.extract_strided_slice %949 {offsets = [0, 512], sizes = [11, 128], strides = [1, 1]} : vector<11x768xf32> to vector<11x128xf32>
    %958 = arith.addf %956, %957 : vector<11x128xf32>
    %959 = vector.extract_strided_slice %949 {offsets = [0, 640], sizes = [11, 128], strides = [1, 1]} : vector<11x768xf32> to vector<11x128xf32>
    %960 = arith.addf %958, %959 : vector<11x128xf32>
    %961 = arith.addf %929, %960 : vector<11x128xf32>
    %c0_150 = arith.constant 0 : index
    %c23040 = arith.constant 23040 : index
    %962 = vector.load %arg3[%c0_150, %c23040] : memref<11x42240xbf16, #tpu.memory_space<vmem>>, vector<11x768xbf16>
    %963 = arith.extf %962 : vector<11x768xbf16> to vector<11x768xf32>
    %c0_151 = arith.constant 0 : index
    %c23040_152 = arith.constant 23040 : index
    %964 = vector.load %arg2[%c0_151, %c23040_152] : memref<2x42240xf32, #tpu.memory_space<vmem>>, vector<1x768xf32>
    %965 = vector.broadcast %964 : vector<1x768xf32> to vector<11x768xf32>
    %966 = arith.mulf %965, %963 : vector<11x768xf32>
    %967 = vector.extract_strided_slice %966 {offsets = [0, 0], sizes = [11, 128], strides = [1, 1]} : vector<11x768xf32> to vector<11x128xf32>
    %968 = vector.extract_strided_slice %966 {offsets = [0, 128], sizes = [11, 128], strides = [1, 1]} : vector<11x768xf32> to vector<11x128xf32>
    %969 = arith.addf %967, %968 : vector<11x128xf32>
    %970 = vector.extract_strided_slice %966 {offsets = [0, 256], sizes = [11, 128], strides = [1, 1]} : vector<11x768xf32> to vector<11x128xf32>
    %971 = arith.addf %969, %970 : vector<11x128xf32>
    %972 = vector.extract_strided_slice %966 {offsets = [0, 384], sizes = [11, 128], strides = [1, 1]} : vector<11x768xf32> to vector<11x128xf32>
    %973 = arith.addf %971, %972 : vector<11x128xf32>
    %974 = vector.extract_strided_slice %966 {offsets = [0, 512], sizes = [11, 128], strides = [1, 1]} : vector<11x768xf32> to vector<11x128xf32>
    %975 = arith.addf %973, %974 : vector<11x128xf32>
    %976 = vector.extract_strided_slice %966 {offsets = [0, 640], sizes = [11, 128], strides = [1, 1]} : vector<11x768xf32> to vector<11x128xf32>
    %977 = arith.addf %975, %976 : vector<11x128xf32>
    %978 = arith.addf %946, %977 : vector<11x128xf32>
    %c1_153 = arith.constant 1 : index
    %c23040_154 = arith.constant 23040 : index
    %979 = vector.load %arg2[%c1_153, %c23040_154] : memref<2x42240xf32, #tpu.memory_space<vmem>>, vector<1x768xf32>
    %980 = vector.broadcast %979 : vector<1x768xf32> to vector<11x768xf32>
    %981 = arith.mulf %980, %963 : vector<11x768xf32>
    %982 = vector.extract_strided_slice %981 {offsets = [0, 0], sizes = [11, 128], strides = [1, 1]} : vector<11x768xf32> to vector<11x128xf32>
    %983 = vector.extract_strided_slice %981 {offsets = [0, 128], sizes = [11, 128], strides = [1, 1]} : vector<11x768xf32> to vector<11x128xf32>
    %984 = arith.addf %982, %983 : vector<11x128xf32>
    %985 = vector.extract_strided_slice %981 {offsets = [0, 256], sizes = [11, 128], strides = [1, 1]} : vector<11x768xf32> to vector<11x128xf32>
    %986 = arith.addf %984, %985 : vector<11x128xf32>
    %987 = vector.extract_strided_slice %981 {offsets = [0, 384], sizes = [11, 128], strides = [1, 1]} : vector<11x768xf32> to vector<11x128xf32>
    %988 = arith.addf %986, %987 : vector<11x128xf32>
    %989 = vector.extract_strided_slice %981 {offsets = [0, 512], sizes = [11, 128], strides = [1, 1]} : vector<11x768xf32> to vector<11x128xf32>
    %990 = arith.addf %988, %989 : vector<11x128xf32>
    %991 = vector.extract_strided_slice %981 {offsets = [0, 640], sizes = [11, 128], strides = [1, 1]} : vector<11x768xf32> to vector<11x128xf32>
    %992 = arith.addf %990, %991 : vector<11x128xf32>
    %993 = arith.addf %961, %992 : vector<11x128xf32>
    %c0_155 = arith.constant 0 : index
    %c23808 = arith.constant 23808 : index
    %994 = vector.load %arg3[%c0_155, %c23808] : memref<11x42240xbf16, #tpu.memory_space<vmem>>, vector<11x768xbf16>
    %995 = arith.extf %994 : vector<11x768xbf16> to vector<11x768xf32>
    %c0_156 = arith.constant 0 : index
    %c23808_157 = arith.constant 23808 : index
    %996 = vector.load %arg2[%c0_156, %c23808_157] : memref<2x42240xf32, #tpu.memory_space<vmem>>, vector<1x768xf32>
    %997 = vector.broadcast %996 : vector<1x768xf32> to vector<11x768xf32>
    %998 = arith.mulf %997, %995 : vector<11x768xf32>
    %999 = vector.extract_strided_slice %998 {offsets = [0, 0], sizes = [11, 128], strides = [1, 1]} : vector<11x768xf32> to vector<11x128xf32>
    %1000 = vector.extract_strided_slice %998 {offsets = [0, 128], sizes = [11, 128], strides = [1, 1]} : vector<11x768xf32> to vector<11x128xf32>
    %1001 = arith.addf %999, %1000 : vector<11x128xf32>
    %1002 = vector.extract_strided_slice %998 {offsets = [0, 256], sizes = [11, 128], strides = [1, 1]} : vector<11x768xf32> to vector<11x128xf32>
    %1003 = arith.addf %1001, %1002 : vector<11x128xf32>
    %1004 = vector.extract_strided_slice %998 {offsets = [0, 384], sizes = [11, 128], strides = [1, 1]} : vector<11x768xf32> to vector<11x128xf32>
    %1005 = arith.addf %1003, %1004 : vector<11x128xf32>
    %1006 = vector.extract_strided_slice %998 {offsets = [0, 512], sizes = [11, 128], strides = [1, 1]} : vector<11x768xf32> to vector<11x128xf32>
    %1007 = arith.addf %1005, %1006 : vector<11x128xf32>
    %1008 = vector.extract_strided_slice %998 {offsets = [0, 640], sizes = [11, 128], strides = [1, 1]} : vector<11x768xf32> to vector<11x128xf32>
    %1009 = arith.addf %1007, %1008 : vector<11x128xf32>
    %1010 = arith.addf %978, %1009 : vector<11x128xf32>
    %c1_158 = arith.constant 1 : index
    %c23808_159 = arith.constant 23808 : index
    %1011 = vector.load %arg2[%c1_158, %c23808_159] : memref<2x42240xf32, #tpu.memory_space<vmem>>, vector<1x768xf32>
    %1012 = vector.broadcast %1011 : vector<1x768xf32> to vector<11x768xf32>
    %1013 = arith.mulf %1012, %995 : vector<11x768xf32>
    %1014 = vector.extract_strided_slice %1013 {offsets = [0, 0], sizes = [11, 128], strides = [1, 1]} : vector<11x768xf32> to vector<11x128xf32>
    %1015 = vector.extract_strided_slice %1013 {offsets = [0, 128], sizes = [11, 128], strides = [1, 1]} : vector<11x768xf32> to vector<11x128xf32>
    %1016 = arith.addf %1014, %1015 : vector<11x128xf32>
    %1017 = vector.extract_strided_slice %1013 {offsets = [0, 256], sizes = [11, 128], strides = [1, 1]} : vector<11x768xf32> to vector<11x128xf32>
    %1018 = arith.addf %1016, %1017 : vector<11x128xf32>
    %1019 = vector.extract_strided_slice %1013 {offsets = [0, 384], sizes = [11, 128], strides = [1, 1]} : vector<11x768xf32> to vector<11x128xf32>
    %1020 = arith.addf %1018, %1019 : vector<11x128xf32>
    %1021 = vector.extract_strided_slice %1013 {offsets = [0, 512], sizes = [11, 128], strides = [1, 1]} : vector<11x768xf32> to vector<11x128xf32>
    %1022 = arith.addf %1020, %1021 : vector<11x128xf32>
    %1023 = vector.extract_strided_slice %1013 {offsets = [0, 640], sizes = [11, 128], strides = [1, 1]} : vector<11x768xf32> to vector<11x128xf32>
    %1024 = arith.addf %1022, %1023 : vector<11x128xf32>
    %1025 = arith.addf %993, %1024 : vector<11x128xf32>
    %c0_160 = arith.constant 0 : index
    %c24576 = arith.constant 24576 : index
    %1026 = vector.load %arg3[%c0_160, %c24576] : memref<11x42240xbf16, #tpu.memory_space<vmem>>, vector<11x768xbf16>
    %1027 = arith.extf %1026 : vector<11x768xbf16> to vector<11x768xf32>
    %c0_161 = arith.constant 0 : index
    %c24576_162 = arith.constant 24576 : index
    %1028 = vector.load %arg2[%c0_161, %c24576_162] : memref<2x42240xf32, #tpu.memory_space<vmem>>, vector<1x768xf32>
    %1029 = vector.broadcast %1028 : vector<1x768xf32> to vector<11x768xf32>
    %1030 = arith.mulf %1029, %1027 : vector<11x768xf32>
    %1031 = vector.extract_strided_slice %1030 {offsets = [0, 0], sizes = [11, 128], strides = [1, 1]} : vector<11x768xf32> to vector<11x128xf32>
    %1032 = vector.extract_strided_slice %1030 {offsets = [0, 128], sizes = [11, 128], strides = [1, 1]} : vector<11x768xf32> to vector<11x128xf32>
    %1033 = arith.addf %1031, %1032 : vector<11x128xf32>
    %1034 = vector.extract_strided_slice %1030 {offsets = [0, 256], sizes = [11, 128], strides = [1, 1]} : vector<11x768xf32> to vector<11x128xf32>
    %1035 = arith.addf %1033, %1034 : vector<11x128xf32>
    %1036 = vector.extract_strided_slice %1030 {offsets = [0, 384], sizes = [11, 128], strides = [1, 1]} : vector<11x768xf32> to vector<11x128xf32>
    %1037 = arith.addf %1035, %1036 : vector<11x128xf32>
    %1038 = vector.extract_strided_slice %1030 {offsets = [0, 512], sizes = [11, 128], strides = [1, 1]} : vector<11x768xf32> to vector<11x128xf32>
    %1039 = arith.addf %1037, %1038 : vector<11x128xf32>
    %1040 = vector.extract_strided_slice %1030 {offsets = [0, 640], sizes = [11, 128], strides = [1, 1]} : vector<11x768xf32> to vector<11x128xf32>
    %1041 = arith.addf %1039, %1040 : vector<11x128xf32>
    %1042 = arith.addf %1010, %1041 : vector<11x128xf32>
    %c1_163 = arith.constant 1 : index
    %c24576_164 = arith.constant 24576 : index
    %1043 = vector.load %arg2[%c1_163, %c24576_164] : memref<2x42240xf32, #tpu.memory_space<vmem>>, vector<1x768xf32>
    %1044 = vector.broadcast %1043 : vector<1x768xf32> to vector<11x768xf32>
    %1045 = arith.mulf %1044, %1027 : vector<11x768xf32>
    %1046 = vector.extract_strided_slice %1045 {offsets = [0, 0], sizes = [11, 128], strides = [1, 1]} : vector<11x768xf32> to vector<11x128xf32>
    %1047 = vector.extract_strided_slice %1045 {offsets = [0, 128], sizes = [11, 128], strides = [1, 1]} : vector<11x768xf32> to vector<11x128xf32>
    %1048 = arith.addf %1046, %1047 : vector<11x128xf32>
    %1049 = vector.extract_strided_slice %1045 {offsets = [0, 256], sizes = [11, 128], strides = [1, 1]} : vector<11x768xf32> to vector<11x128xf32>
    %1050 = arith.addf %1048, %1049 : vector<11x128xf32>
    %1051 = vector.extract_strided_slice %1045 {offsets = [0, 384], sizes = [11, 128], strides = [1, 1]} : vector<11x768xf32> to vector<11x128xf32>
    %1052 = arith.addf %1050, %1051 : vector<11x128xf32>
    %1053 = vector.extract_strided_slice %1045 {offsets = [0, 512], sizes = [11, 128], strides = [1, 1]} : vector<11x768xf32> to vector<11x128xf32>
    %1054 = arith.addf %1052, %1053 : vector<11x128xf32>
    %1055 = vector.extract_strided_slice %1045 {offsets = [0, 640], sizes = [11, 128], strides = [1, 1]} : vector<11x768xf32> to vector<11x128xf32>
    %1056 = arith.addf %1054, %1055 : vector<11x128xf32>
    %1057 = arith.addf %1025, %1056 : vector<11x128xf32>
    %c0_165 = arith.constant 0 : index
    %c25344 = arith.constant 25344 : index
    %1058 = vector.load %arg3[%c0_165, %c25344] : memref<11x42240xbf16, #tpu.memory_space<vmem>>, vector<11x768xbf16>
    %1059 = arith.extf %1058 : vector<11x768xbf16> to vector<11x768xf32>
    %c0_166 = arith.constant 0 : index
    %c25344_167 = arith.constant 25344 : index
    %1060 = vector.load %arg2[%c0_166, %c25344_167] : memref<2x42240xf32, #tpu.memory_space<vmem>>, vector<1x768xf32>
    %1061 = vector.broadcast %1060 : vector<1x768xf32> to vector<11x768xf32>
    %1062 = arith.mulf %1061, %1059 : vector<11x768xf32>
    %1063 = vector.extract_strided_slice %1062 {offsets = [0, 0], sizes = [11, 128], strides = [1, 1]} : vector<11x768xf32> to vector<11x128xf32>
    %1064 = vector.extract_strided_slice %1062 {offsets = [0, 128], sizes = [11, 128], strides = [1, 1]} : vector<11x768xf32> to vector<11x128xf32>
    %1065 = arith.addf %1063, %1064 : vector<11x128xf32>
    %1066 = vector.extract_strided_slice %1062 {offsets = [0, 256], sizes = [11, 128], strides = [1, 1]} : vector<11x768xf32> to vector<11x128xf32>
    %1067 = arith.addf %1065, %1066 : vector<11x128xf32>
    %1068 = vector.extract_strided_slice %1062 {offsets = [0, 384], sizes = [11, 128], strides = [1, 1]} : vector<11x768xf32> to vector<11x128xf32>
    %1069 = arith.addf %1067, %1068 : vector<11x128xf32>
    %1070 = vector.extract_strided_slice %1062 {offsets = [0, 512], sizes = [11, 128], strides = [1, 1]} : vector<11x768xf32> to vector<11x128xf32>
    %1071 = arith.addf %1069, %1070 : vector<11x128xf32>
    %1072 = vector.extract_strided_slice %1062 {offsets = [0, 640], sizes = [11, 128], strides = [1, 1]} : vector<11x768xf32> to vector<11x128xf32>
    %1073 = arith.addf %1071, %1072 : vector<11x128xf32>
    %1074 = arith.addf %1042, %1073 : vector<11x128xf32>
    %c1_168 = arith.constant 1 : index
    %c25344_169 = arith.constant 25344 : index
    %1075 = vector.load %arg2[%c1_168, %c25344_169] : memref<2x42240xf32, #tpu.memory_space<vmem>>, vector<1x768xf32>
    %1076 = vector.broadcast %1075 : vector<1x768xf32> to vector<11x768xf32>
    %1077 = arith.mulf %1076, %1059 : vector<11x768xf32>
    %1078 = vector.extract_strided_slice %1077 {offsets = [0, 0], sizes = [11, 128], strides = [1, 1]} : vector<11x768xf32> to vector<11x128xf32>
    %1079 = vector.extract_strided_slice %1077 {offsets = [0, 128], sizes = [11, 128], strides = [1, 1]} : vector<11x768xf32> to vector<11x128xf32>
    %1080 = arith.addf %1078, %1079 : vector<11x128xf32>
    %1081 = vector.extract_strided_slice %1077 {offsets = [0, 256], sizes = [11, 128], strides = [1, 1]} : vector<11x768xf32> to vector<11x128xf32>
    %1082 = arith.addf %1080, %1081 : vector<11x128xf32>
    %1083 = vector.extract_strided_slice %1077 {offsets = [0, 384], sizes = [11, 128], strides = [1, 1]} : vector<11x768xf32> to vector<11x128xf32>
    %1084 = arith.addf %1082, %1083 : vector<11x128xf32>
    %1085 = vector.extract_strided_slice %1077 {offsets = [0, 512], sizes = [11, 128], strides = [1, 1]} : vector<11x768xf32> to vector<11x128xf32>
    %1086 = arith.addf %1084, %1085 : vector<11x128xf32>
    %1087 = vector.extract_strided_slice %1077 {offsets = [0, 640], sizes = [11, 128], strides = [1, 1]} : vector<11x768xf32> to vector<11x128xf32>
    %1088 = arith.addf %1086, %1087 : vector<11x128xf32>
    %1089 = arith.addf %1057, %1088 : vector<11x128xf32>
    %c0_170 = arith.constant 0 : index
    %c26112 = arith.constant 26112 : index
    %1090 = vector.load %arg3[%c0_170, %c26112] : memref<11x42240xbf16, #tpu.memory_space<vmem>>, vector<11x768xbf16>
    %1091 = arith.extf %1090 : vector<11x768xbf16> to vector<11x768xf32>
    %c0_171 = arith.constant 0 : index
    %c26112_172 = arith.constant 26112 : index
    %1092 = vector.load %arg2[%c0_171, %c26112_172] : memref<2x42240xf32, #tpu.memory_space<vmem>>, vector<1x768xf32>
    %1093 = vector.broadcast %1092 : vector<1x768xf32> to vector<11x768xf32>
    %1094 = arith.mulf %1093, %1091 : vector<11x768xf32>
    %1095 = vector.extract_strided_slice %1094 {offsets = [0, 0], sizes = [11, 128], strides = [1, 1]} : vector<11x768xf32> to vector<11x128xf32>
    %1096 = vector.extract_strided_slice %1094 {offsets = [0, 128], sizes = [11, 128], strides = [1, 1]} : vector<11x768xf32> to vector<11x128xf32>
    %1097 = arith.addf %1095, %1096 : vector<11x128xf32>
    %1098 = vector.extract_strided_slice %1094 {offsets = [0, 256], sizes = [11, 128], strides = [1, 1]} : vector<11x768xf32> to vector<11x128xf32>
    %1099 = arith.addf %1097, %1098 : vector<11x128xf32>
    %1100 = vector.extract_strided_slice %1094 {offsets = [0, 384], sizes = [11, 128], strides = [1, 1]} : vector<11x768xf32> to vector<11x128xf32>
    %1101 = arith.addf %1099, %1100 : vector<11x128xf32>
    %1102 = vector.extract_strided_slice %1094 {offsets = [0, 512], sizes = [11, 128], strides = [1, 1]} : vector<11x768xf32> to vector<11x128xf32>
    %1103 = arith.addf %1101, %1102 : vector<11x128xf32>
    %1104 = vector.extract_strided_slice %1094 {offsets = [0, 640], sizes = [11, 128], strides = [1, 1]} : vector<11x768xf32> to vector<11x128xf32>
    %1105 = arith.addf %1103, %1104 : vector<11x128xf32>
    %1106 = arith.addf %1074, %1105 : vector<11x128xf32>
    %c1_173 = arith.constant 1 : index
    %c26112_174 = arith.constant 26112 : index
    %1107 = vector.load %arg2[%c1_173, %c26112_174] : memref<2x42240xf32, #tpu.memory_space<vmem>>, vector<1x768xf32>
    %1108 = vector.broadcast %1107 : vector<1x768xf32> to vector<11x768xf32>
    %1109 = arith.mulf %1108, %1091 : vector<11x768xf32>
    %1110 = vector.extract_strided_slice %1109 {offsets = [0, 0], sizes = [11, 128], strides = [1, 1]} : vector<11x768xf32> to vector<11x128xf32>
    %1111 = vector.extract_strided_slice %1109 {offsets = [0, 128], sizes = [11, 128], strides = [1, 1]} : vector<11x768xf32> to vector<11x128xf32>
    %1112 = arith.addf %1110, %1111 : vector<11x128xf32>
    %1113 = vector.extract_strided_slice %1109 {offsets = [0, 256], sizes = [11, 128], strides = [1, 1]} : vector<11x768xf32> to vector<11x128xf32>
    %1114 = arith.addf %1112, %1113 : vector<11x128xf32>
    %1115 = vector.extract_strided_slice %1109 {offsets = [0, 384], sizes = [11, 128], strides = [1, 1]} : vector<11x768xf32> to vector<11x128xf32>
    %1116 = arith.addf %1114, %1115 : vector<11x128xf32>
    %1117 = vector.extract_strided_slice %1109 {offsets = [0, 512], sizes = [11, 128], strides = [1, 1]} : vector<11x768xf32> to vector<11x128xf32>
    %1118 = arith.addf %1116, %1117 : vector<11x128xf32>
    %1119 = vector.extract_strided_slice %1109 {offsets = [0, 640], sizes = [11, 128], strides = [1, 1]} : vector<11x768xf32> to vector<11x128xf32>
    %1120 = arith.addf %1118, %1119 : vector<11x128xf32>
    %1121 = arith.addf %1089, %1120 : vector<11x128xf32>
    %c0_175 = arith.constant 0 : index
    %c26880 = arith.constant 26880 : index
    %1122 = vector.load %arg3[%c0_175, %c26880] : memref<11x42240xbf16, #tpu.memory_space<vmem>>, vector<11x768xbf16>
    %1123 = arith.extf %1122 : vector<11x768xbf16> to vector<11x768xf32>
    %c0_176 = arith.constant 0 : index
    %c26880_177 = arith.constant 26880 : index
    %1124 = vector.load %arg2[%c0_176, %c26880_177] : memref<2x42240xf32, #tpu.memory_space<vmem>>, vector<1x768xf32>
    %1125 = vector.broadcast %1124 : vector<1x768xf32> to vector<11x768xf32>
    %1126 = arith.mulf %1125, %1123 : vector<11x768xf32>
    %1127 = vector.extract_strided_slice %1126 {offsets = [0, 0], sizes = [11, 128], strides = [1, 1]} : vector<11x768xf32> to vector<11x128xf32>
    %1128 = vector.extract_strided_slice %1126 {offsets = [0, 128], sizes = [11, 128], strides = [1, 1]} : vector<11x768xf32> to vector<11x128xf32>
    %1129 = arith.addf %1127, %1128 : vector<11x128xf32>
    %1130 = vector.extract_strided_slice %1126 {offsets = [0, 256], sizes = [11, 128], strides = [1, 1]} : vector<11x768xf32> to vector<11x128xf32>
    %1131 = arith.addf %1129, %1130 : vector<11x128xf32>
    %1132 = vector.extract_strided_slice %1126 {offsets = [0, 384], sizes = [11, 128], strides = [1, 1]} : vector<11x768xf32> to vector<11x128xf32>
    %1133 = arith.addf %1131, %1132 : vector<11x128xf32>
    %1134 = vector.extract_strided_slice %1126 {offsets = [0, 512], sizes = [11, 128], strides = [1, 1]} : vector<11x768xf32> to vector<11x128xf32>
    %1135 = arith.addf %1133, %1134 : vector<11x128xf32>
    %1136 = vector.extract_strided_slice %1126 {offsets = [0, 640], sizes = [11, 128], strides = [1, 1]} : vector<11x768xf32> to vector<11x128xf32>
    %1137 = arith.addf %1135, %1136 : vector<11x128xf32>
    %1138 = arith.addf %1106, %1137 : vector<11x128xf32>
    %c1_178 = arith.constant 1 : index
    %c26880_179 = arith.constant 26880 : index
    %1139 = vector.load %arg2[%c1_178, %c26880_179] : memref<2x42240xf32, #tpu.memory_space<vmem>>, vector<1x768xf32>
    %1140 = vector.broadcast %1139 : vector<1x768xf32> to vector<11x768xf32>
    %1141 = arith.mulf %1140, %1123 : vector<11x768xf32>
    %1142 = vector.extract_strided_slice %1141 {offsets = [0, 0], sizes = [11, 128], strides = [1, 1]} : vector<11x768xf32> to vector<11x128xf32>
    %1143 = vector.extract_strided_slice %1141 {offsets = [0, 128], sizes = [11, 128], strides = [1, 1]} : vector<11x768xf32> to vector<11x128xf32>
    %1144 = arith.addf %1142, %1143 : vector<11x128xf32>
    %1145 = vector.extract_strided_slice %1141 {offsets = [0, 256], sizes = [11, 128], strides = [1, 1]} : vector<11x768xf32> to vector<11x128xf32>
    %1146 = arith.addf %1144, %1145 : vector<11x128xf32>
    %1147 = vector.extract_strided_slice %1141 {offsets = [0, 384], sizes = [11, 128], strides = [1, 1]} : vector<11x768xf32> to vector<11x128xf32>
    %1148 = arith.addf %1146, %1147 : vector<11x128xf32>
    %1149 = vector.extract_strided_slice %1141 {offsets = [0, 512], sizes = [11, 128], strides = [1, 1]} : vector<11x768xf32> to vector<11x128xf32>
    %1150 = arith.addf %1148, %1149 : vector<11x128xf32>
    %1151 = vector.extract_strided_slice %1141 {offsets = [0, 640], sizes = [11, 128], strides = [1, 1]} : vector<11x768xf32> to vector<11x128xf32>
    %1152 = arith.addf %1150, %1151 : vector<11x128xf32>
    %1153 = arith.addf %1121, %1152 : vector<11x128xf32>
    %c0_180 = arith.constant 0 : index
    %c27648 = arith.constant 27648 : index
    %1154 = vector.load %arg3[%c0_180, %c27648] : memref<11x42240xbf16, #tpu.memory_space<vmem>>, vector<11x768xbf16>
    %1155 = arith.extf %1154 : vector<11x768xbf16> to vector<11x768xf32>
    %c0_181 = arith.constant 0 : index
    %c27648_182 = arith.constant 27648 : index
    %1156 = vector.load %arg2[%c0_181, %c27648_182] : memref<2x42240xf32, #tpu.memory_space<vmem>>, vector<1x768xf32>
    %1157 = vector.broadcast %1156 : vector<1x768xf32> to vector<11x768xf32>
    %1158 = arith.mulf %1157, %1155 : vector<11x768xf32>
    %1159 = vector.extract_strided_slice %1158 {offsets = [0, 0], sizes = [11, 128], strides = [1, 1]} : vector<11x768xf32> to vector<11x128xf32>
    %1160 = vector.extract_strided_slice %1158 {offsets = [0, 128], sizes = [11, 128], strides = [1, 1]} : vector<11x768xf32> to vector<11x128xf32>
    %1161 = arith.addf %1159, %1160 : vector<11x128xf32>
    %1162 = vector.extract_strided_slice %1158 {offsets = [0, 256], sizes = [11, 128], strides = [1, 1]} : vector<11x768xf32> to vector<11x128xf32>
    %1163 = arith.addf %1161, %1162 : vector<11x128xf32>
    %1164 = vector.extract_strided_slice %1158 {offsets = [0, 384], sizes = [11, 128], strides = [1, 1]} : vector<11x768xf32> to vector<11x128xf32>
    %1165 = arith.addf %1163, %1164 : vector<11x128xf32>
    %1166 = vector.extract_strided_slice %1158 {offsets = [0, 512], sizes = [11, 128], strides = [1, 1]} : vector<11x768xf32> to vector<11x128xf32>
    %1167 = arith.addf %1165, %1166 : vector<11x128xf32>
    %1168 = vector.extract_strided_slice %1158 {offsets = [0, 640], sizes = [11, 128], strides = [1, 1]} : vector<11x768xf32> to vector<11x128xf32>
    %1169 = arith.addf %1167, %1168 : vector<11x128xf32>
    %1170 = arith.addf %1138, %1169 : vector<11x128xf32>
    %c1_183 = arith.constant 1 : index
    %c27648_184 = arith.constant 27648 : index
    %1171 = vector.load %arg2[%c1_183, %c27648_184] : memref<2x42240xf32, #tpu.memory_space<vmem>>, vector<1x768xf32>
    %1172 = vector.broadcast %1171 : vector<1x768xf32> to vector<11x768xf32>
    %1173 = arith.mulf %1172, %1155 : vector<11x768xf32>
    %1174 = vector.extract_strided_slice %1173 {offsets = [0, 0], sizes = [11, 128], strides = [1, 1]} : vector<11x768xf32> to vector<11x128xf32>
    %1175 = vector.extract_strided_slice %1173 {offsets = [0, 128], sizes = [11, 128], strides = [1, 1]} : vector<11x768xf32> to vector<11x128xf32>
    %1176 = arith.addf %1174, %1175 : vector<11x128xf32>
    %1177 = vector.extract_strided_slice %1173 {offsets = [0, 256], sizes = [11, 128], strides = [1, 1]} : vector<11x768xf32> to vector<11x128xf32>
    %1178 = arith.addf %1176, %1177 : vector<11x128xf32>
    %1179 = vector.extract_strided_slice %1173 {offsets = [0, 384], sizes = [11, 128], strides = [1, 1]} : vector<11x768xf32> to vector<11x128xf32>
    %1180 = arith.addf %1178, %1179 : vector<11x128xf32>
    %1181 = vector.extract_strided_slice %1173 {offsets = [0, 512], sizes = [11, 128], strides = [1, 1]} : vector<11x768xf32> to vector<11x128xf32>
    %1182 = arith.addf %1180, %1181 : vector<11x128xf32>
    %1183 = vector.extract_strided_slice %1173 {offsets = [0, 640], sizes = [11, 128], strides = [1, 1]} : vector<11x768xf32> to vector<11x128xf32>
    %1184 = arith.addf %1182, %1183 : vector<11x128xf32>
    %1185 = arith.addf %1153, %1184 : vector<11x128xf32>
    %c0_185 = arith.constant 0 : index
    %c28416 = arith.constant 28416 : index
    %1186 = vector.load %arg3[%c0_185, %c28416] : memref<11x42240xbf16, #tpu.memory_space<vmem>>, vector<11x768xbf16>
    %1187 = arith.extf %1186 : vector<11x768xbf16> to vector<11x768xf32>
    %c0_186 = arith.constant 0 : index
    %c28416_187 = arith.constant 28416 : index
    %1188 = vector.load %arg2[%c0_186, %c28416_187] : memref<2x42240xf32, #tpu.memory_space<vmem>>, vector<1x768xf32>
    %1189 = vector.broadcast %1188 : vector<1x768xf32> to vector<11x768xf32>
    %1190 = arith.mulf %1189, %1187 : vector<11x768xf32>
    %1191 = vector.extract_strided_slice %1190 {offsets = [0, 0], sizes = [11, 128], strides = [1, 1]} : vector<11x768xf32> to vector<11x128xf32>
    %1192 = vector.extract_strided_slice %1190 {offsets = [0, 128], sizes = [11, 128], strides = [1, 1]} : vector<11x768xf32> to vector<11x128xf32>
    %1193 = arith.addf %1191, %1192 : vector<11x128xf32>
    %1194 = vector.extract_strided_slice %1190 {offsets = [0, 256], sizes = [11, 128], strides = [1, 1]} : vector<11x768xf32> to vector<11x128xf32>
    %1195 = arith.addf %1193, %1194 : vector<11x128xf32>
    %1196 = vector.extract_strided_slice %1190 {offsets = [0, 384], sizes = [11, 128], strides = [1, 1]} : vector<11x768xf32> to vector<11x128xf32>
    %1197 = arith.addf %1195, %1196 : vector<11x128xf32>
    %1198 = vector.extract_strided_slice %1190 {offsets = [0, 512], sizes = [11, 128], strides = [1, 1]} : vector<11x768xf32> to vector<11x128xf32>
    %1199 = arith.addf %1197, %1198 : vector<11x128xf32>
    %1200 = vector.extract_strided_slice %1190 {offsets = [0, 640], sizes = [11, 128], strides = [1, 1]} : vector<11x768xf32> to vector<11x128xf32>
    %1201 = arith.addf %1199, %1200 : vector<11x128xf32>
    %1202 = arith.addf %1170, %1201 : vector<11x128xf32>
    %c1_188 = arith.constant 1 : index
    %c28416_189 = arith.constant 28416 : index
    %1203 = vector.load %arg2[%c1_188, %c28416_189] : memref<2x42240xf32, #tpu.memory_space<vmem>>, vector<1x768xf32>
    %1204 = vector.broadcast %1203 : vector<1x768xf32> to vector<11x768xf32>
    %1205 = arith.mulf %1204, %1187 : vector<11x768xf32>
    %1206 = vector.extract_strided_slice %1205 {offsets = [0, 0], sizes = [11, 128], strides = [1, 1]} : vector<11x768xf32> to vector<11x128xf32>
    %1207 = vector.extract_strided_slice %1205 {offsets = [0, 128], sizes = [11, 128], strides = [1, 1]} : vector<11x768xf32> to vector<11x128xf32>
    %1208 = arith.addf %1206, %1207 : vector<11x128xf32>
    %1209 = vector.extract_strided_slice %1205 {offsets = [0, 256], sizes = [11, 128], strides = [1, 1]} : vector<11x768xf32> to vector<11x128xf32>
    %1210 = arith.addf %1208, %1209 : vector<11x128xf32>
    %1211 = vector.extract_strided_slice %1205 {offsets = [0, 384], sizes = [11, 128], strides = [1, 1]} : vector<11x768xf32> to vector<11x128xf32>
    %1212 = arith.addf %1210, %1211 : vector<11x128xf32>
    %1213 = vector.extract_strided_slice %1205 {offsets = [0, 512], sizes = [11, 128], strides = [1, 1]} : vector<11x768xf32> to vector<11x128xf32>
    %1214 = arith.addf %1212, %1213 : vector<11x128xf32>
    %1215 = vector.extract_strided_slice %1205 {offsets = [0, 640], sizes = [11, 128], strides = [1, 1]} : vector<11x768xf32> to vector<11x128xf32>
    %1216 = arith.addf %1214, %1215 : vector<11x128xf32>
    %1217 = arith.addf %1185, %1216 : vector<11x128xf32>
    %c0_190 = arith.constant 0 : index
    %c29184 = arith.constant 29184 : index
    %1218 = vector.load %arg3[%c0_190, %c29184] : memref<11x42240xbf16, #tpu.memory_space<vmem>>, vector<11x768xbf16>
    %1219 = arith.extf %1218 : vector<11x768xbf16> to vector<11x768xf32>
    %c0_191 = arith.constant 0 : index
    %c29184_192 = arith.constant 29184 : index
    %1220 = vector.load %arg2[%c0_191, %c29184_192] : memref<2x42240xf32, #tpu.memory_space<vmem>>, vector<1x768xf32>
    %1221 = vector.broadcast %1220 : vector<1x768xf32> to vector<11x768xf32>
    %1222 = arith.mulf %1221, %1219 : vector<11x768xf32>
    %1223 = vector.extract_strided_slice %1222 {offsets = [0, 0], sizes = [11, 128], strides = [1, 1]} : vector<11x768xf32> to vector<11x128xf32>
    %1224 = vector.extract_strided_slice %1222 {offsets = [0, 128], sizes = [11, 128], strides = [1, 1]} : vector<11x768xf32> to vector<11x128xf32>
    %1225 = arith.addf %1223, %1224 : vector<11x128xf32>
    %1226 = vector.extract_strided_slice %1222 {offsets = [0, 256], sizes = [11, 128], strides = [1, 1]} : vector<11x768xf32> to vector<11x128xf32>
    %1227 = arith.addf %1225, %1226 : vector<11x128xf32>
    %1228 = vector.extract_strided_slice %1222 {offsets = [0, 384], sizes = [11, 128], strides = [1, 1]} : vector<11x768xf32> to vector<11x128xf32>
    %1229 = arith.addf %1227, %1228 : vector<11x128xf32>
    %1230 = vector.extract_strided_slice %1222 {offsets = [0, 512], sizes = [11, 128], strides = [1, 1]} : vector<11x768xf32> to vector<11x128xf32>
    %1231 = arith.addf %1229, %1230 : vector<11x128xf32>
    %1232 = vector.extract_strided_slice %1222 {offsets = [0, 640], sizes = [11, 128], strides = [1, 1]} : vector<11x768xf32> to vector<11x128xf32>
    %1233 = arith.addf %1231, %1232 : vector<11x128xf32>
    %1234 = arith.addf %1202, %1233 : vector<11x128xf32>
    %c1_193 = arith.constant 1 : index
    %c29184_194 = arith.constant 29184 : index
    %1235 = vector.load %arg2[%c1_193, %c29184_194] : memref<2x42240xf32, #tpu.memory_space<vmem>>, vector<1x768xf32>
    %1236 = vector.broadcast %1235 : vector<1x768xf32> to vector<11x768xf32>
    %1237 = arith.mulf %1236, %1219 : vector<11x768xf32>
    %1238 = vector.extract_strided_slice %1237 {offsets = [0, 0], sizes = [11, 128], strides = [1, 1]} : vector<11x768xf32> to vector<11x128xf32>
    %1239 = vector.extract_strided_slice %1237 {offsets = [0, 128], sizes = [11, 128], strides = [1, 1]} : vector<11x768xf32> to vector<11x128xf32>
    %1240 = arith.addf %1238, %1239 : vector<11x128xf32>
    %1241 = vector.extract_strided_slice %1237 {offsets = [0, 256], sizes = [11, 128], strides = [1, 1]} : vector<11x768xf32> to vector<11x128xf32>
    %1242 = arith.addf %1240, %1241 : vector<11x128xf32>
    %1243 = vector.extract_strided_slice %1237 {offsets = [0, 384], sizes = [11, 128], strides = [1, 1]} : vector<11x768xf32> to vector<11x128xf32>
    %1244 = arith.addf %1242, %1243 : vector<11x128xf32>
    %1245 = vector.extract_strided_slice %1237 {offsets = [0, 512], sizes = [11, 128], strides = [1, 1]} : vector<11x768xf32> to vector<11x128xf32>
    %1246 = arith.addf %1244, %1245 : vector<11x128xf32>
    %1247 = vector.extract_strided_slice %1237 {offsets = [0, 640], sizes = [11, 128], strides = [1, 1]} : vector<11x768xf32> to vector<11x128xf32>
    %1248 = arith.addf %1246, %1247 : vector<11x128xf32>
    %1249 = arith.addf %1217, %1248 : vector<11x128xf32>
    %c0_195 = arith.constant 0 : index
    %c29952 = arith.constant 29952 : index
    %1250 = vector.load %arg3[%c0_195, %c29952] : memref<11x42240xbf16, #tpu.memory_space<vmem>>, vector<11x768xbf16>
    %1251 = arith.extf %1250 : vector<11x768xbf16> to vector<11x768xf32>
    %c0_196 = arith.constant 0 : index
    %c29952_197 = arith.constant 29952 : index
    %1252 = vector.load %arg2[%c0_196, %c29952_197] : memref<2x42240xf32, #tpu.memory_space<vmem>>, vector<1x768xf32>
    %1253 = vector.broadcast %1252 : vector<1x768xf32> to vector<11x768xf32>
    %1254 = arith.mulf %1253, %1251 : vector<11x768xf32>
    %1255 = vector.extract_strided_slice %1254 {offsets = [0, 0], sizes = [11, 128], strides = [1, 1]} : vector<11x768xf32> to vector<11x128xf32>
    %1256 = vector.extract_strided_slice %1254 {offsets = [0, 128], sizes = [11, 128], strides = [1, 1]} : vector<11x768xf32> to vector<11x128xf32>
    %1257 = arith.addf %1255, %1256 : vector<11x128xf32>
    %1258 = vector.extract_strided_slice %1254 {offsets = [0, 256], sizes = [11, 128], strides = [1, 1]} : vector<11x768xf32> to vector<11x128xf32>
    %1259 = arith.addf %1257, %1258 : vector<11x128xf32>
    %1260 = vector.extract_strided_slice %1254 {offsets = [0, 384], sizes = [11, 128], strides = [1, 1]} : vector<11x768xf32> to vector<11x128xf32>
    %1261 = arith.addf %1259, %1260 : vector<11x128xf32>
    %1262 = vector.extract_strided_slice %1254 {offsets = [0, 512], sizes = [11, 128], strides = [1, 1]} : vector<11x768xf32> to vector<11x128xf32>
    %1263 = arith.addf %1261, %1262 : vector<11x128xf32>
    %1264 = vector.extract_strided_slice %1254 {offsets = [0, 640], sizes = [11, 128], strides = [1, 1]} : vector<11x768xf32> to vector<11x128xf32>
    %1265 = arith.addf %1263, %1264 : vector<11x128xf32>
    %1266 = arith.addf %1234, %1265 : vector<11x128xf32>
    %c1_198 = arith.constant 1 : index
    %c29952_199 = arith.constant 29952 : index
    %1267 = vector.load %arg2[%c1_198, %c29952_199] : memref<2x42240xf32, #tpu.memory_space<vmem>>, vector<1x768xf32>
    %1268 = vector.broadcast %1267 : vector<1x768xf32> to vector<11x768xf32>
    %1269 = arith.mulf %1268, %1251 : vector<11x768xf32>
    %1270 = vector.extract_strided_slice %1269 {offsets = [0, 0], sizes = [11, 128], strides = [1, 1]} : vector<11x768xf32> to vector<11x128xf32>
    %1271 = vector.extract_strided_slice %1269 {offsets = [0, 128], sizes = [11, 128], strides = [1, 1]} : vector<11x768xf32> to vector<11x128xf32>
    %1272 = arith.addf %1270, %1271 : vector<11x128xf32>
    %1273 = vector.extract_strided_slice %1269 {offsets = [0, 256], sizes = [11, 128], strides = [1, 1]} : vector<11x768xf32> to vector<11x128xf32>
    %1274 = arith.addf %1272, %1273 : vector<11x128xf32>
    %1275 = vector.extract_strided_slice %1269 {offsets = [0, 384], sizes = [11, 128], strides = [1, 1]} : vector<11x768xf32> to vector<11x128xf32>
    %1276 = arith.addf %1274, %1275 : vector<11x128xf32>
    %1277 = vector.extract_strided_slice %1269 {offsets = [0, 512], sizes = [11, 128], strides = [1, 1]} : vector<11x768xf32> to vector<11x128xf32>
    %1278 = arith.addf %1276, %1277 : vector<11x128xf32>
    %1279 = vector.extract_strided_slice %1269 {offsets = [0, 640], sizes = [11, 128], strides = [1, 1]} : vector<11x768xf32> to vector<11x128xf32>
    %1280 = arith.addf %1278, %1279 : vector<11x128xf32>
    %1281 = arith.addf %1249, %1280 : vector<11x128xf32>
    %c0_200 = arith.constant 0 : index
    %c30720 = arith.constant 30720 : index
    %1282 = vector.load %arg3[%c0_200, %c30720] : memref<11x42240xbf16, #tpu.memory_space<vmem>>, vector<11x768xbf16>
    %1283 = arith.extf %1282 : vector<11x768xbf16> to vector<11x768xf32>
    %c0_201 = arith.constant 0 : index
    %c30720_202 = arith.constant 30720 : index
    %1284 = vector.load %arg2[%c0_201, %c30720_202] : memref<2x42240xf32, #tpu.memory_space<vmem>>, vector<1x768xf32>
    %1285 = vector.broadcast %1284 : vector<1x768xf32> to vector<11x768xf32>
    %1286 = arith.mulf %1285, %1283 : vector<11x768xf32>
    %1287 = vector.extract_strided_slice %1286 {offsets = [0, 0], sizes = [11, 128], strides = [1, 1]} : vector<11x768xf32> to vector<11x128xf32>
    %1288 = vector.extract_strided_slice %1286 {offsets = [0, 128], sizes = [11, 128], strides = [1, 1]} : vector<11x768xf32> to vector<11x128xf32>
    %1289 = arith.addf %1287, %1288 : vector<11x128xf32>
    %1290 = vector.extract_strided_slice %1286 {offsets = [0, 256], sizes = [11, 128], strides = [1, 1]} : vector<11x768xf32> to vector<11x128xf32>
    %1291 = arith.addf %1289, %1290 : vector<11x128xf32>
    %1292 = vector.extract_strided_slice %1286 {offsets = [0, 384], sizes = [11, 128], strides = [1, 1]} : vector<11x768xf32> to vector<11x128xf32>
    %1293 = arith.addf %1291, %1292 : vector<11x128xf32>
    %1294 = vector.extract_strided_slice %1286 {offsets = [0, 512], sizes = [11, 128], strides = [1, 1]} : vector<11x768xf32> to vector<11x128xf32>
    %1295 = arith.addf %1293, %1294 : vector<11x128xf32>
    %1296 = vector.extract_strided_slice %1286 {offsets = [0, 640], sizes = [11, 128], strides = [1, 1]} : vector<11x768xf32> to vector<11x128xf32>
    %1297 = arith.addf %1295, %1296 : vector<11x128xf32>
    %1298 = arith.addf %1266, %1297 : vector<11x128xf32>
    %c1_203 = arith.constant 1 : index
    %c30720_204 = arith.constant 30720 : index
    %1299 = vector.load %arg2[%c1_203, %c30720_204] : memref<2x42240xf32, #tpu.memory_space<vmem>>, vector<1x768xf32>
    %1300 = vector.broadcast %1299 : vector<1x768xf32> to vector<11x768xf32>
    %1301 = arith.mulf %1300, %1283 : vector<11x768xf32>
    %1302 = vector.extract_strided_slice %1301 {offsets = [0, 0], sizes = [11, 128], strides = [1, 1]} : vector<11x768xf32> to vector<11x128xf32>
    %1303 = vector.extract_strided_slice %1301 {offsets = [0, 128], sizes = [11, 128], strides = [1, 1]} : vector<11x768xf32> to vector<11x128xf32>
    %1304 = arith.addf %1302, %1303 : vector<11x128xf32>
    %1305 = vector.extract_strided_slice %1301 {offsets = [0, 256], sizes = [11, 128], strides = [1, 1]} : vector<11x768xf32> to vector<11x128xf32>
    %1306 = arith.addf %1304, %1305 : vector<11x128xf32>
    %1307 = vector.extract_strided_slice %1301 {offsets = [0, 384], sizes = [11, 128], strides = [1, 1]} : vector<11x768xf32> to vector<11x128xf32>
    %1308 = arith.addf %1306, %1307 : vector<11x128xf32>
    %1309 = vector.extract_strided_slice %1301 {offsets = [0, 512], sizes = [11, 128], strides = [1, 1]} : vector<11x768xf32> to vector<11x128xf32>
    %1310 = arith.addf %1308, %1309 : vector<11x128xf32>
    %1311 = vector.extract_strided_slice %1301 {offsets = [0, 640], sizes = [11, 128], strides = [1, 1]} : vector<11x768xf32> to vector<11x128xf32>
    %1312 = arith.addf %1310, %1311 : vector<11x128xf32>
    %1313 = arith.addf %1281, %1312 : vector<11x128xf32>
    %c0_205 = arith.constant 0 : index
    %c31488 = arith.constant 31488 : index
    %1314 = vector.load %arg3[%c0_205, %c31488] : memref<11x42240xbf16, #tpu.memory_space<vmem>>, vector<11x768xbf16>
    %1315 = arith.extf %1314 : vector<11x768xbf16> to vector<11x768xf32>
    %c0_206 = arith.constant 0 : index
    %c31488_207 = arith.constant 31488 : index
    %1316 = vector.load %arg2[%c0_206, %c31488_207] : memref<2x42240xf32, #tpu.memory_space<vmem>>, vector<1x768xf32>
    %1317 = vector.broadcast %1316 : vector<1x768xf32> to vector<11x768xf32>
    %1318 = arith.mulf %1317, %1315 : vector<11x768xf32>
    %1319 = vector.extract_strided_slice %1318 {offsets = [0, 0], sizes = [11, 128], strides = [1, 1]} : vector<11x768xf32> to vector<11x128xf32>
    %1320 = vector.extract_strided_slice %1318 {offsets = [0, 128], sizes = [11, 128], strides = [1, 1]} : vector<11x768xf32> to vector<11x128xf32>
    %1321 = arith.addf %1319, %1320 : vector<11x128xf32>
    %1322 = vector.extract_strided_slice %1318 {offsets = [0, 256], sizes = [11, 128], strides = [1, 1]} : vector<11x768xf32> to vector<11x128xf32>
    %1323 = arith.addf %1321, %1322 : vector<11x128xf32>
    %1324 = vector.extract_strided_slice %1318 {offsets = [0, 384], sizes = [11, 128], strides = [1, 1]} : vector<11x768xf32> to vector<11x128xf32>
    %1325 = arith.addf %1323, %1324 : vector<11x128xf32>
    %1326 = vector.extract_strided_slice %1318 {offsets = [0, 512], sizes = [11, 128], strides = [1, 1]} : vector<11x768xf32> to vector<11x128xf32>
    %1327 = arith.addf %1325, %1326 : vector<11x128xf32>
    %1328 = vector.extract_strided_slice %1318 {offsets = [0, 640], sizes = [11, 128], strides = [1, 1]} : vector<11x768xf32> to vector<11x128xf32>
    %1329 = arith.addf %1327, %1328 : vector<11x128xf32>
    %1330 = arith.addf %1298, %1329 : vector<11x128xf32>
    %c1_208 = arith.constant 1 : index
    %c31488_209 = arith.constant 31488 : index
    %1331 = vector.load %arg2[%c1_208, %c31488_209] : memref<2x42240xf32, #tpu.memory_space<vmem>>, vector<1x768xf32>
    %1332 = vector.broadcast %1331 : vector<1x768xf32> to vector<11x768xf32>
    %1333 = arith.mulf %1332, %1315 : vector<11x768xf32>
    %1334 = vector.extract_strided_slice %1333 {offsets = [0, 0], sizes = [11, 128], strides = [1, 1]} : vector<11x768xf32> to vector<11x128xf32>
    %1335 = vector.extract_strided_slice %1333 {offsets = [0, 128], sizes = [11, 128], strides = [1, 1]} : vector<11x768xf32> to vector<11x128xf32>
    %1336 = arith.addf %1334, %1335 : vector<11x128xf32>
    %1337 = vector.extract_strided_slice %1333 {offsets = [0, 256], sizes = [11, 128], strides = [1, 1]} : vector<11x768xf32> to vector<11x128xf32>
    %1338 = arith.addf %1336, %1337 : vector<11x128xf32>
    %1339 = vector.extract_strided_slice %1333 {offsets = [0, 384], sizes = [11, 128], strides = [1, 1]} : vector<11x768xf32> to vector<11x128xf32>
    %1340 = arith.addf %1338, %1339 : vector<11x128xf32>
    %1341 = vector.extract_strided_slice %1333 {offsets = [0, 512], sizes = [11, 128], strides = [1, 1]} : vector<11x768xf32> to vector<11x128xf32>
    %1342 = arith.addf %1340, %1341 : vector<11x128xf32>
    %1343 = vector.extract_strided_slice %1333 {offsets = [0, 640], sizes = [11, 128], strides = [1, 1]} : vector<11x768xf32> to vector<11x128xf32>
    %1344 = arith.addf %1342, %1343 : vector<11x128xf32>
    %1345 = arith.addf %1313, %1344 : vector<11x128xf32>
    %c0_210 = arith.constant 0 : index
    %c32256 = arith.constant 32256 : index
    %1346 = vector.load %arg3[%c0_210, %c32256] : memref<11x42240xbf16, #tpu.memory_space<vmem>>, vector<11x768xbf16>
    %1347 = arith.extf %1346 : vector<11x768xbf16> to vector<11x768xf32>
    %c0_211 = arith.constant 0 : index
    %c32256_212 = arith.constant 32256 : index
    %1348 = vector.load %arg2[%c0_211, %c32256_212] : memref<2x42240xf32, #tpu.memory_space<vmem>>, vector<1x768xf32>
    %1349 = vector.broadcast %1348 : vector<1x768xf32> to vector<11x768xf32>
    %1350 = arith.mulf %1349, %1347 : vector<11x768xf32>
    %1351 = vector.extract_strided_slice %1350 {offsets = [0, 0], sizes = [11, 128], strides = [1, 1]} : vector<11x768xf32> to vector<11x128xf32>
    %1352 = vector.extract_strided_slice %1350 {offsets = [0, 128], sizes = [11, 128], strides = [1, 1]} : vector<11x768xf32> to vector<11x128xf32>
    %1353 = arith.addf %1351, %1352 : vector<11x128xf32>
    %1354 = vector.extract_strided_slice %1350 {offsets = [0, 256], sizes = [11, 128], strides = [1, 1]} : vector<11x768xf32> to vector<11x128xf32>
    %1355 = arith.addf %1353, %1354 : vector<11x128xf32>
    %1356 = vector.extract_strided_slice %1350 {offsets = [0, 384], sizes = [11, 128], strides = [1, 1]} : vector<11x768xf32> to vector<11x128xf32>
    %1357 = arith.addf %1355, %1356 : vector<11x128xf32>
    %1358 = vector.extract_strided_slice %1350 {offsets = [0, 512], sizes = [11, 128], strides = [1, 1]} : vector<11x768xf32> to vector<11x128xf32>
    %1359 = arith.addf %1357, %1358 : vector<11x128xf32>
    %1360 = vector.extract_strided_slice %1350 {offsets = [0, 640], sizes = [11, 128], strides = [1, 1]} : vector<11x768xf32> to vector<11x128xf32>
    %1361 = arith.addf %1359, %1360 : vector<11x128xf32>
    %1362 = arith.addf %1330, %1361 : vector<11x128xf32>
    %c1_213 = arith.constant 1 : index
    %c32256_214 = arith.constant 32256 : index
    %1363 = vector.load %arg2[%c1_213, %c32256_214] : memref<2x42240xf32, #tpu.memory_space<vmem>>, vector<1x768xf32>
    %1364 = vector.broadcast %1363 : vector<1x768xf32> to vector<11x768xf32>
    %1365 = arith.mulf %1364, %1347 : vector<11x768xf32>
    %1366 = vector.extract_strided_slice %1365 {offsets = [0, 0], sizes = [11, 128], strides = [1, 1]} : vector<11x768xf32> to vector<11x128xf32>
    %1367 = vector.extract_strided_slice %1365 {offsets = [0, 128], sizes = [11, 128], strides = [1, 1]} : vector<11x768xf32> to vector<11x128xf32>
    %1368 = arith.addf %1366, %1367 : vector<11x128xf32>
    %1369 = vector.extract_strided_slice %1365 {offsets = [0, 256], sizes = [11, 128], strides = [1, 1]} : vector<11x768xf32> to vector<11x128xf32>
    %1370 = arith.addf %1368, %1369 : vector<11x128xf32>
    %1371 = vector.extract_strided_slice %1365 {offsets = [0, 384], sizes = [11, 128], strides = [1, 1]} : vector<11x768xf32> to vector<11x128xf32>
    %1372 = arith.addf %1370, %1371 : vector<11x128xf32>
    %1373 = vector.extract_strided_slice %1365 {offsets = [0, 512], sizes = [11, 128], strides = [1, 1]} : vector<11x768xf32> to vector<11x128xf32>
    %1374 = arith.addf %1372, %1373 : vector<11x128xf32>
    %1375 = vector.extract_strided_slice %1365 {offsets = [0, 640], sizes = [11, 128], strides = [1, 1]} : vector<11x768xf32> to vector<11x128xf32>
    %1376 = arith.addf %1374, %1375 : vector<11x128xf32>
    %1377 = arith.addf %1345, %1376 : vector<11x128xf32>
    %c0_215 = arith.constant 0 : index
    %c33024 = arith.constant 33024 : index
    %1378 = vector.load %arg3[%c0_215, %c33024] : memref<11x42240xbf16, #tpu.memory_space<vmem>>, vector<11x768xbf16>
    %1379 = arith.extf %1378 : vector<11x768xbf16> to vector<11x768xf32>
    %c0_216 = arith.constant 0 : index
    %c33024_217 = arith.constant 33024 : index
    %1380 = vector.load %arg2[%c0_216, %c33024_217] : memref<2x42240xf32, #tpu.memory_space<vmem>>, vector<1x768xf32>
    %1381 = vector.broadcast %1380 : vector<1x768xf32> to vector<11x768xf32>
    %1382 = arith.mulf %1381, %1379 : vector<11x768xf32>
    %1383 = vector.extract_strided_slice %1382 {offsets = [0, 0], sizes = [11, 128], strides = [1, 1]} : vector<11x768xf32> to vector<11x128xf32>
    %1384 = vector.extract_strided_slice %1382 {offsets = [0, 128], sizes = [11, 128], strides = [1, 1]} : vector<11x768xf32> to vector<11x128xf32>
    %1385 = arith.addf %1383, %1384 : vector<11x128xf32>
    %1386 = vector.extract_strided_slice %1382 {offsets = [0, 256], sizes = [11, 128], strides = [1, 1]} : vector<11x768xf32> to vector<11x128xf32>
    %1387 = arith.addf %1385, %1386 : vector<11x128xf32>
    %1388 = vector.extract_strided_slice %1382 {offsets = [0, 384], sizes = [11, 128], strides = [1, 1]} : vector<11x768xf32> to vector<11x128xf32>
    %1389 = arith.addf %1387, %1388 : vector<11x128xf32>
    %1390 = vector.extract_strided_slice %1382 {offsets = [0, 512], sizes = [11, 128], strides = [1, 1]} : vector<11x768xf32> to vector<11x128xf32>
    %1391 = arith.addf %1389, %1390 : vector<11x128xf32>
    %1392 = vector.extract_strided_slice %1382 {offsets = [0, 640], sizes = [11, 128], strides = [1, 1]} : vector<11x768xf32> to vector<11x128xf32>
    %1393 = arith.addf %1391, %1392 : vector<11x128xf32>
    %1394 = arith.addf %1362, %1393 : vector<11x128xf32>
    %c1_218 = arith.constant 1 : index
    %c33024_219 = arith.constant 33024 : index
    %1395 = vector.load %arg2[%c1_218, %c33024_219] : memref<2x42240xf32, #tpu.memory_space<vmem>>, vector<1x768xf32>
    %1396 = vector.broadcast %1395 : vector<1x768xf32> to vector<11x768xf32>
    %1397 = arith.mulf %1396, %1379 : vector<11x768xf32>
    %1398 = vector.extract_strided_slice %1397 {offsets = [0, 0], sizes = [11, 128], strides = [1, 1]} : vector<11x768xf32> to vector<11x128xf32>
    %1399 = vector.extract_strided_slice %1397 {offsets = [0, 128], sizes = [11, 128], strides = [1, 1]} : vector<11x768xf32> to vector<11x128xf32>
    %1400 = arith.addf %1398, %1399 : vector<11x128xf32>
    %1401 = vector.extract_strided_slice %1397 {offsets = [0, 256], sizes = [11, 128], strides = [1, 1]} : vector<11x768xf32> to vector<11x128xf32>
    %1402 = arith.addf %1400, %1401 : vector<11x128xf32>
    %1403 = vector.extract_strided_slice %1397 {offsets = [0, 384], sizes = [11, 128], strides = [1, 1]} : vector<11x768xf32> to vector<11x128xf32>
    %1404 = arith.addf %1402, %1403 : vector<11x128xf32>
    %1405 = vector.extract_strided_slice %1397 {offsets = [0, 512], sizes = [11, 128], strides = [1, 1]} : vector<11x768xf32> to vector<11x128xf32>
    %1406 = arith.addf %1404, %1405 : vector<11x128xf32>
    %1407 = vector.extract_strided_slice %1397 {offsets = [0, 640], sizes = [11, 128], strides = [1, 1]} : vector<11x768xf32> to vector<11x128xf32>
    %1408 = arith.addf %1406, %1407 : vector<11x128xf32>
    %1409 = arith.addf %1377, %1408 : vector<11x128xf32>
    %c0_220 = arith.constant 0 : index
    %c33792 = arith.constant 33792 : index
    %1410 = vector.load %arg3[%c0_220, %c33792] : memref<11x42240xbf16, #tpu.memory_space<vmem>>, vector<11x768xbf16>
    %1411 = arith.extf %1410 : vector<11x768xbf16> to vector<11x768xf32>
    %c0_221 = arith.constant 0 : index
    %c33792_222 = arith.constant 33792 : index
    %1412 = vector.load %arg2[%c0_221, %c33792_222] : memref<2x42240xf32, #tpu.memory_space<vmem>>, vector<1x768xf32>
    %1413 = vector.broadcast %1412 : vector<1x768xf32> to vector<11x768xf32>
    %1414 = arith.mulf %1413, %1411 : vector<11x768xf32>
    %1415 = vector.extract_strided_slice %1414 {offsets = [0, 0], sizes = [11, 128], strides = [1, 1]} : vector<11x768xf32> to vector<11x128xf32>
    %1416 = vector.extract_strided_slice %1414 {offsets = [0, 128], sizes = [11, 128], strides = [1, 1]} : vector<11x768xf32> to vector<11x128xf32>
    %1417 = arith.addf %1415, %1416 : vector<11x128xf32>
    %1418 = vector.extract_strided_slice %1414 {offsets = [0, 256], sizes = [11, 128], strides = [1, 1]} : vector<11x768xf32> to vector<11x128xf32>
    %1419 = arith.addf %1417, %1418 : vector<11x128xf32>
    %1420 = vector.extract_strided_slice %1414 {offsets = [0, 384], sizes = [11, 128], strides = [1, 1]} : vector<11x768xf32> to vector<11x128xf32>
    %1421 = arith.addf %1419, %1420 : vector<11x128xf32>
    %1422 = vector.extract_strided_slice %1414 {offsets = [0, 512], sizes = [11, 128], strides = [1, 1]} : vector<11x768xf32> to vector<11x128xf32>
    %1423 = arith.addf %1421, %1422 : vector<11x128xf32>
    %1424 = vector.extract_strided_slice %1414 {offsets = [0, 640], sizes = [11, 128], strides = [1, 1]} : vector<11x768xf32> to vector<11x128xf32>
    %1425 = arith.addf %1423, %1424 : vector<11x128xf32>
    %1426 = arith.addf %1394, %1425 : vector<11x128xf32>
    %c1_223 = arith.constant 1 : index
    %c33792_224 = arith.constant 33792 : index
    %1427 = vector.load %arg2[%c1_223, %c33792_224] : memref<2x42240xf32, #tpu.memory_space<vmem>>, vector<1x768xf32>
    %1428 = vector.broadcast %1427 : vector<1x768xf32> to vector<11x768xf32>
    %1429 = arith.mulf %1428, %1411 : vector<11x768xf32>
    %1430 = vector.extract_strided_slice %1429 {offsets = [0, 0], sizes = [11, 128], strides = [1, 1]} : vector<11x768xf32> to vector<11x128xf32>
    %1431 = vector.extract_strided_slice %1429 {offsets = [0, 128], sizes = [11, 128], strides = [1, 1]} : vector<11x768xf32> to vector<11x128xf32>
    %1432 = arith.addf %1430, %1431 : vector<11x128xf32>
    %1433 = vector.extract_strided_slice %1429 {offsets = [0, 256], sizes = [11, 128], strides = [1, 1]} : vector<11x768xf32> to vector<11x128xf32>
    %1434 = arith.addf %1432, %1433 : vector<11x128xf32>
    %1435 = vector.extract_strided_slice %1429 {offsets = [0, 384], sizes = [11, 128], strides = [1, 1]} : vector<11x768xf32> to vector<11x128xf32>
    %1436 = arith.addf %1434, %1435 : vector<11x128xf32>
    %1437 = vector.extract_strided_slice %1429 {offsets = [0, 512], sizes = [11, 128], strides = [1, 1]} : vector<11x768xf32> to vector<11x128xf32>
    %1438 = arith.addf %1436, %1437 : vector<11x128xf32>
    %1439 = vector.extract_strided_slice %1429 {offsets = [0, 640], sizes = [11, 128], strides = [1, 1]} : vector<11x768xf32> to vector<11x128xf32>
    %1440 = arith.addf %1438, %1439 : vector<11x128xf32>
    %1441 = arith.addf %1409, %1440 : vector<11x128xf32>
    %c0_225 = arith.constant 0 : index
    %c34560 = arith.constant 34560 : index
    %1442 = vector.load %arg3[%c0_225, %c34560] : memref<11x42240xbf16, #tpu.memory_space<vmem>>, vector<11x768xbf16>
    %1443 = arith.extf %1442 : vector<11x768xbf16> to vector<11x768xf32>
    %c0_226 = arith.constant 0 : index
    %c34560_227 = arith.constant 34560 : index
    %1444 = vector.load %arg2[%c0_226, %c34560_227] : memref<2x42240xf32, #tpu.memory_space<vmem>>, vector<1x768xf32>
    %1445 = vector.broadcast %1444 : vector<1x768xf32> to vector<11x768xf32>
    %1446 = arith.mulf %1445, %1443 : vector<11x768xf32>
    %1447 = vector.extract_strided_slice %1446 {offsets = [0, 0], sizes = [11, 128], strides = [1, 1]} : vector<11x768xf32> to vector<11x128xf32>
    %1448 = vector.extract_strided_slice %1446 {offsets = [0, 128], sizes = [11, 128], strides = [1, 1]} : vector<11x768xf32> to vector<11x128xf32>
    %1449 = arith.addf %1447, %1448 : vector<11x128xf32>
    %1450 = vector.extract_strided_slice %1446 {offsets = [0, 256], sizes = [11, 128], strides = [1, 1]} : vector<11x768xf32> to vector<11x128xf32>
    %1451 = arith.addf %1449, %1450 : vector<11x128xf32>
    %1452 = vector.extract_strided_slice %1446 {offsets = [0, 384], sizes = [11, 128], strides = [1, 1]} : vector<11x768xf32> to vector<11x128xf32>
    %1453 = arith.addf %1451, %1452 : vector<11x128xf32>
    %1454 = vector.extract_strided_slice %1446 {offsets = [0, 512], sizes = [11, 128], strides = [1, 1]} : vector<11x768xf32> to vector<11x128xf32>
    %1455 = arith.addf %1453, %1454 : vector<11x128xf32>
    %1456 = vector.extract_strided_slice %1446 {offsets = [0, 640], sizes = [11, 128], strides = [1, 1]} : vector<11x768xf32> to vector<11x128xf32>
    %1457 = arith.addf %1455, %1456 : vector<11x128xf32>
    %1458 = arith.addf %1426, %1457 : vector<11x128xf32>
    %c1_228 = arith.constant 1 : index
    %c34560_229 = arith.constant 34560 : index
    %1459 = vector.load %arg2[%c1_228, %c34560_229] : memref<2x42240xf32, #tpu.memory_space<vmem>>, vector<1x768xf32>
    %1460 = vector.broadcast %1459 : vector<1x768xf32> to vector<11x768xf32>
    %1461 = arith.mulf %1460, %1443 : vector<11x768xf32>
    %1462 = vector.extract_strided_slice %1461 {offsets = [0, 0], sizes = [11, 128], strides = [1, 1]} : vector<11x768xf32> to vector<11x128xf32>
    %1463 = vector.extract_strided_slice %1461 {offsets = [0, 128], sizes = [11, 128], strides = [1, 1]} : vector<11x768xf32> to vector<11x128xf32>
    %1464 = arith.addf %1462, %1463 : vector<11x128xf32>
    %1465 = vector.extract_strided_slice %1461 {offsets = [0, 256], sizes = [11, 128], strides = [1, 1]} : vector<11x768xf32> to vector<11x128xf32>
    %1466 = arith.addf %1464, %1465 : vector<11x128xf32>
    %1467 = vector.extract_strided_slice %1461 {offsets = [0, 384], sizes = [11, 128], strides = [1, 1]} : vector<11x768xf32> to vector<11x128xf32>
    %1468 = arith.addf %1466, %1467 : vector<11x128xf32>
    %1469 = vector.extract_strided_slice %1461 {offsets = [0, 512], sizes = [11, 128], strides = [1, 1]} : vector<11x768xf32> to vector<11x128xf32>
    %1470 = arith.addf %1468, %1469 : vector<11x128xf32>
    %1471 = vector.extract_strided_slice %1461 {offsets = [0, 640], sizes = [11, 128], strides = [1, 1]} : vector<11x768xf32> to vector<11x128xf32>
    %1472 = arith.addf %1470, %1471 : vector<11x128xf32>
    %1473 = arith.addf %1441, %1472 : vector<11x128xf32>
    %c0_230 = arith.constant 0 : index
    %c35328 = arith.constant 35328 : index
    %1474 = vector.load %arg3[%c0_230, %c35328] : memref<11x42240xbf16, #tpu.memory_space<vmem>>, vector<11x768xbf16>
    %1475 = arith.extf %1474 : vector<11x768xbf16> to vector<11x768xf32>
    %c0_231 = arith.constant 0 : index
    %c35328_232 = arith.constant 35328 : index
    %1476 = vector.load %arg2[%c0_231, %c35328_232] : memref<2x42240xf32, #tpu.memory_space<vmem>>, vector<1x768xf32>
    %1477 = vector.broadcast %1476 : vector<1x768xf32> to vector<11x768xf32>
    %1478 = arith.mulf %1477, %1475 : vector<11x768xf32>
    %1479 = vector.extract_strided_slice %1478 {offsets = [0, 0], sizes = [11, 128], strides = [1, 1]} : vector<11x768xf32> to vector<11x128xf32>
    %1480 = vector.extract_strided_slice %1478 {offsets = [0, 128], sizes = [11, 128], strides = [1, 1]} : vector<11x768xf32> to vector<11x128xf32>
    %1481 = arith.addf %1479, %1480 : vector<11x128xf32>
    %1482 = vector.extract_strided_slice %1478 {offsets = [0, 256], sizes = [11, 128], strides = [1, 1]} : vector<11x768xf32> to vector<11x128xf32>
    %1483 = arith.addf %1481, %1482 : vector<11x128xf32>
    %1484 = vector.extract_strided_slice %1478 {offsets = [0, 384], sizes = [11, 128], strides = [1, 1]} : vector<11x768xf32> to vector<11x128xf32>
    %1485 = arith.addf %1483, %1484 : vector<11x128xf32>
    %1486 = vector.extract_strided_slice %1478 {offsets = [0, 512], sizes = [11, 128], strides = [1, 1]} : vector<11x768xf32> to vector<11x128xf32>
    %1487 = arith.addf %1485, %1486 : vector<11x128xf32>
    %1488 = vector.extract_strided_slice %1478 {offsets = [0, 640], sizes = [11, 128], strides = [1, 1]} : vector<11x768xf32> to vector<11x128xf32>
    %1489 = arith.addf %1487, %1488 : vector<11x128xf32>
    %1490 = arith.addf %1458, %1489 : vector<11x128xf32>
    %c1_233 = arith.constant 1 : index
    %c35328_234 = arith.constant 35328 : index
    %1491 = vector.load %arg2[%c1_233, %c35328_234] : memref<2x42240xf32, #tpu.memory_space<vmem>>, vector<1x768xf32>
    %1492 = vector.broadcast %1491 : vector<1x768xf32> to vector<11x768xf32>
    %1493 = arith.mulf %1492, %1475 : vector<11x768xf32>
    %1494 = vector.extract_strided_slice %1493 {offsets = [0, 0], sizes = [11, 128], strides = [1, 1]} : vector<11x768xf32> to vector<11x128xf32>
    %1495 = vector.extract_strided_slice %1493 {offsets = [0, 128], sizes = [11, 128], strides = [1, 1]} : vector<11x768xf32> to vector<11x128xf32>
    %1496 = arith.addf %1494, %1495 : vector<11x128xf32>
    %1497 = vector.extract_strided_slice %1493 {offsets = [0, 256], sizes = [11, 128], strides = [1, 1]} : vector<11x768xf32> to vector<11x128xf32>
    %1498 = arith.addf %1496, %1497 : vector<11x128xf32>
    %1499 = vector.extract_strided_slice %1493 {offsets = [0, 384], sizes = [11, 128], strides = [1, 1]} : vector<11x768xf32> to vector<11x128xf32>
    %1500 = arith.addf %1498, %1499 : vector<11x128xf32>
    %1501 = vector.extract_strided_slice %1493 {offsets = [0, 512], sizes = [11, 128], strides = [1, 1]} : vector<11x768xf32> to vector<11x128xf32>
    %1502 = arith.addf %1500, %1501 : vector<11x128xf32>
    %1503 = vector.extract_strided_slice %1493 {offsets = [0, 640], sizes = [11, 128], strides = [1, 1]} : vector<11x768xf32> to vector<11x128xf32>
    %1504 = arith.addf %1502, %1503 : vector<11x128xf32>
    %1505 = arith.addf %1473, %1504 : vector<11x128xf32>
    %c0_235 = arith.constant 0 : index
    %c36096 = arith.constant 36096 : index
    %1506 = vector.load %arg3[%c0_235, %c36096] : memref<11x42240xbf16, #tpu.memory_space<vmem>>, vector<11x768xbf16>
    %1507 = arith.extf %1506 : vector<11x768xbf16> to vector<11x768xf32>
    %c0_236 = arith.constant 0 : index
    %c36096_237 = arith.constant 36096 : index
    %1508 = vector.load %arg2[%c0_236, %c36096_237] : memref<2x42240xf32, #tpu.memory_space<vmem>>, vector<1x768xf32>
    %1509 = vector.broadcast %1508 : vector<1x768xf32> to vector<11x768xf32>
    %1510 = arith.mulf %1509, %1507 : vector<11x768xf32>
    %1511 = vector.extract_strided_slice %1510 {offsets = [0, 0], sizes = [11, 128], strides = [1, 1]} : vector<11x768xf32> to vector<11x128xf32>
    %1512 = vector.extract_strided_slice %1510 {offsets = [0, 128], sizes = [11, 128], strides = [1, 1]} : vector<11x768xf32> to vector<11x128xf32>
    %1513 = arith.addf %1511, %1512 : vector<11x128xf32>
    %1514 = vector.extract_strided_slice %1510 {offsets = [0, 256], sizes = [11, 128], strides = [1, 1]} : vector<11x768xf32> to vector<11x128xf32>
    %1515 = arith.addf %1513, %1514 : vector<11x128xf32>
    %1516 = vector.extract_strided_slice %1510 {offsets = [0, 384], sizes = [11, 128], strides = [1, 1]} : vector<11x768xf32> to vector<11x128xf32>
    %1517 = arith.addf %1515, %1516 : vector<11x128xf32>
    %1518 = vector.extract_strided_slice %1510 {offsets = [0, 512], sizes = [11, 128], strides = [1, 1]} : vector<11x768xf32> to vector<11x128xf32>
    %1519 = arith.addf %1517, %1518 : vector<11x128xf32>
    %1520 = vector.extract_strided_slice %1510 {offsets = [0, 640], sizes = [11, 128], strides = [1, 1]} : vector<11x768xf32> to vector<11x128xf32>
    %1521 = arith.addf %1519, %1520 : vector<11x128xf32>
    %1522 = arith.addf %1490, %1521 : vector<11x128xf32>
    %c1_238 = arith.constant 1 : index
    %c36096_239 = arith.constant 36096 : index
    %1523 = vector.load %arg2[%c1_238, %c36096_239] : memref<2x42240xf32, #tpu.memory_space<vmem>>, vector<1x768xf32>
    %1524 = vector.broadcast %1523 : vector<1x768xf32> to vector<11x768xf32>
    %1525 = arith.mulf %1524, %1507 : vector<11x768xf32>
    %1526 = vector.extract_strided_slice %1525 {offsets = [0, 0], sizes = [11, 128], strides = [1, 1]} : vector<11x768xf32> to vector<11x128xf32>
    %1527 = vector.extract_strided_slice %1525 {offsets = [0, 128], sizes = [11, 128], strides = [1, 1]} : vector<11x768xf32> to vector<11x128xf32>
    %1528 = arith.addf %1526, %1527 : vector<11x128xf32>
    %1529 = vector.extract_strided_slice %1525 {offsets = [0, 256], sizes = [11, 128], strides = [1, 1]} : vector<11x768xf32> to vector<11x128xf32>
    %1530 = arith.addf %1528, %1529 : vector<11x128xf32>
    %1531 = vector.extract_strided_slice %1525 {offsets = [0, 384], sizes = [11, 128], strides = [1, 1]} : vector<11x768xf32> to vector<11x128xf32>
    %1532 = arith.addf %1530, %1531 : vector<11x128xf32>
    %1533 = vector.extract_strided_slice %1525 {offsets = [0, 512], sizes = [11, 128], strides = [1, 1]} : vector<11x768xf32> to vector<11x128xf32>
    %1534 = arith.addf %1532, %1533 : vector<11x128xf32>
    %1535 = vector.extract_strided_slice %1525 {offsets = [0, 640], sizes = [11, 128], strides = [1, 1]} : vector<11x768xf32> to vector<11x128xf32>
    %1536 = arith.addf %1534, %1535 : vector<11x128xf32>
    %1537 = arith.addf %1505, %1536 : vector<11x128xf32>
    %c0_240 = arith.constant 0 : index
    %c36864 = arith.constant 36864 : index
    %1538 = vector.load %arg3[%c0_240, %c36864] : memref<11x42240xbf16, #tpu.memory_space<vmem>>, vector<11x768xbf16>
    %1539 = arith.extf %1538 : vector<11x768xbf16> to vector<11x768xf32>
    %c0_241 = arith.constant 0 : index
    %c36864_242 = arith.constant 36864 : index
    %1540 = vector.load %arg2[%c0_241, %c36864_242] : memref<2x42240xf32, #tpu.memory_space<vmem>>, vector<1x768xf32>
    %1541 = vector.broadcast %1540 : vector<1x768xf32> to vector<11x768xf32>
    %1542 = arith.mulf %1541, %1539 : vector<11x768xf32>
    %1543 = vector.extract_strided_slice %1542 {offsets = [0, 0], sizes = [11, 128], strides = [1, 1]} : vector<11x768xf32> to vector<11x128xf32>
    %1544 = vector.extract_strided_slice %1542 {offsets = [0, 128], sizes = [11, 128], strides = [1, 1]} : vector<11x768xf32> to vector<11x128xf32>
    %1545 = arith.addf %1543, %1544 : vector<11x128xf32>
    %1546 = vector.extract_strided_slice %1542 {offsets = [0, 256], sizes = [11, 128], strides = [1, 1]} : vector<11x768xf32> to vector<11x128xf32>
    %1547 = arith.addf %1545, %1546 : vector<11x128xf32>
    %1548 = vector.extract_strided_slice %1542 {offsets = [0, 384], sizes = [11, 128], strides = [1, 1]} : vector<11x768xf32> to vector<11x128xf32>
    %1549 = arith.addf %1547, %1548 : vector<11x128xf32>
    %1550 = vector.extract_strided_slice %1542 {offsets = [0, 512], sizes = [11, 128], strides = [1, 1]} : vector<11x768xf32> to vector<11x128xf32>
    %1551 = arith.addf %1549, %1550 : vector<11x128xf32>
    %1552 = vector.extract_strided_slice %1542 {offsets = [0, 640], sizes = [11, 128], strides = [1, 1]} : vector<11x768xf32> to vector<11x128xf32>
    %1553 = arith.addf %1551, %1552 : vector<11x128xf32>
    %1554 = arith.addf %1522, %1553 : vector<11x128xf32>
    %c1_243 = arith.constant 1 : index
    %c36864_244 = arith.constant 36864 : index
    %1555 = vector.load %arg2[%c1_243, %c36864_244] : memref<2x42240xf32, #tpu.memory_space<vmem>>, vector<1x768xf32>
    %1556 = vector.broadcast %1555 : vector<1x768xf32> to vector<11x768xf32>
    %1557 = arith.mulf %1556, %1539 : vector<11x768xf32>
    %1558 = vector.extract_strided_slice %1557 {offsets = [0, 0], sizes = [11, 128], strides = [1, 1]} : vector<11x768xf32> to vector<11x128xf32>
    %1559 = vector.extract_strided_slice %1557 {offsets = [0, 128], sizes = [11, 128], strides = [1, 1]} : vector<11x768xf32> to vector<11x128xf32>
    %1560 = arith.addf %1558, %1559 : vector<11x128xf32>
    %1561 = vector.extract_strided_slice %1557 {offsets = [0, 256], sizes = [11, 128], strides = [1, 1]} : vector<11x768xf32> to vector<11x128xf32>
    %1562 = arith.addf %1560, %1561 : vector<11x128xf32>
    %1563 = vector.extract_strided_slice %1557 {offsets = [0, 384], sizes = [11, 128], strides = [1, 1]} : vector<11x768xf32> to vector<11x128xf32>
    %1564 = arith.addf %1562, %1563 : vector<11x128xf32>
    %1565 = vector.extract_strided_slice %1557 {offsets = [0, 512], sizes = [11, 128], strides = [1, 1]} : vector<11x768xf32> to vector<11x128xf32>
    %1566 = arith.addf %1564, %1565 : vector<11x128xf32>
    %1567 = vector.extract_strided_slice %1557 {offsets = [0, 640], sizes = [11, 128], strides = [1, 1]} : vector<11x768xf32> to vector<11x128xf32>
    %1568 = arith.addf %1566, %1567 : vector<11x128xf32>
    %1569 = arith.addf %1537, %1568 : vector<11x128xf32>
    %c0_245 = arith.constant 0 : index
    %c37632 = arith.constant 37632 : index
    %1570 = vector.load %arg3[%c0_245, %c37632] : memref<11x42240xbf16, #tpu.memory_space<vmem>>, vector<11x768xbf16>
    %1571 = arith.extf %1570 : vector<11x768xbf16> to vector<11x768xf32>
    %c0_246 = arith.constant 0 : index
    %c37632_247 = arith.constant 37632 : index
    %1572 = vector.load %arg2[%c0_246, %c37632_247] : memref<2x42240xf32, #tpu.memory_space<vmem>>, vector<1x768xf32>
    %1573 = vector.broadcast %1572 : vector<1x768xf32> to vector<11x768xf32>
    %1574 = arith.mulf %1573, %1571 : vector<11x768xf32>
    %1575 = vector.extract_strided_slice %1574 {offsets = [0, 0], sizes = [11, 128], strides = [1, 1]} : vector<11x768xf32> to vector<11x128xf32>
    %1576 = vector.extract_strided_slice %1574 {offsets = [0, 128], sizes = [11, 128], strides = [1, 1]} : vector<11x768xf32> to vector<11x128xf32>
    %1577 = arith.addf %1575, %1576 : vector<11x128xf32>
    %1578 = vector.extract_strided_slice %1574 {offsets = [0, 256], sizes = [11, 128], strides = [1, 1]} : vector<11x768xf32> to vector<11x128xf32>
    %1579 = arith.addf %1577, %1578 : vector<11x128xf32>
    %1580 = vector.extract_strided_slice %1574 {offsets = [0, 384], sizes = [11, 128], strides = [1, 1]} : vector<11x768xf32> to vector<11x128xf32>
    %1581 = arith.addf %1579, %1580 : vector<11x128xf32>
    %1582 = vector.extract_strided_slice %1574 {offsets = [0, 512], sizes = [11, 128], strides = [1, 1]} : vector<11x768xf32> to vector<11x128xf32>
    %1583 = arith.addf %1581, %1582 : vector<11x128xf32>
    %1584 = vector.extract_strided_slice %1574 {offsets = [0, 640], sizes = [11, 128], strides = [1, 1]} : vector<11x768xf32> to vector<11x128xf32>
    %1585 = arith.addf %1583, %1584 : vector<11x128xf32>
    %1586 = arith.addf %1554, %1585 : vector<11x128xf32>
    %c1_248 = arith.constant 1 : index
    %c37632_249 = arith.constant 37632 : index
    %1587 = vector.load %arg2[%c1_248, %c37632_249] : memref<2x42240xf32, #tpu.memory_space<vmem>>, vector<1x768xf32>
    %1588 = vector.broadcast %1587 : vector<1x768xf32> to vector<11x768xf32>
    %1589 = arith.mulf %1588, %1571 : vector<11x768xf32>
    %1590 = vector.extract_strided_slice %1589 {offsets = [0, 0], sizes = [11, 128], strides = [1, 1]} : vector<11x768xf32> to vector<11x128xf32>
    %1591 = vector.extract_strided_slice %1589 {offsets = [0, 128], sizes = [11, 128], strides = [1, 1]} : vector<11x768xf32> to vector<11x128xf32>
    %1592 = arith.addf %1590, %1591 : vector<11x128xf32>
    %1593 = vector.extract_strided_slice %1589 {offsets = [0, 256], sizes = [11, 128], strides = [1, 1]} : vector<11x768xf32> to vector<11x128xf32>
    %1594 = arith.addf %1592, %1593 : vector<11x128xf32>
    %1595 = vector.extract_strided_slice %1589 {offsets = [0, 384], sizes = [11, 128], strides = [1, 1]} : vector<11x768xf32> to vector<11x128xf32>
    %1596 = arith.addf %1594, %1595 : vector<11x128xf32>
    %1597 = vector.extract_strided_slice %1589 {offsets = [0, 512], sizes = [11, 128], strides = [1, 1]} : vector<11x768xf32> to vector<11x128xf32>
    %1598 = arith.addf %1596, %1597 : vector<11x128xf32>
    %1599 = vector.extract_strided_slice %1589 {offsets = [0, 640], sizes = [11, 128], strides = [1, 1]} : vector<11x768xf32> to vector<11x128xf32>
    %1600 = arith.addf %1598, %1599 : vector<11x128xf32>
    %1601 = arith.addf %1569, %1600 : vector<11x128xf32>
    %c0_250 = arith.constant 0 : index
    %c38400 = arith.constant 38400 : index
    %1602 = vector.load %arg3[%c0_250, %c38400] : memref<11x42240xbf16, #tpu.memory_space<vmem>>, vector<11x768xbf16>
    %1603 = arith.extf %1602 : vector<11x768xbf16> to vector<11x768xf32>
    %c0_251 = arith.constant 0 : index
    %c38400_252 = arith.constant 38400 : index
    %1604 = vector.load %arg2[%c0_251, %c38400_252] : memref<2x42240xf32, #tpu.memory_space<vmem>>, vector<1x768xf32>
    %1605 = vector.broadcast %1604 : vector<1x768xf32> to vector<11x768xf32>
    %1606 = arith.mulf %1605, %1603 : vector<11x768xf32>
    %1607 = vector.extract_strided_slice %1606 {offsets = [0, 0], sizes = [11, 128], strides = [1, 1]} : vector<11x768xf32> to vector<11x128xf32>
    %1608 = vector.extract_strided_slice %1606 {offsets = [0, 128], sizes = [11, 128], strides = [1, 1]} : vector<11x768xf32> to vector<11x128xf32>
    %1609 = arith.addf %1607, %1608 : vector<11x128xf32>
    %1610 = vector.extract_strided_slice %1606 {offsets = [0, 256], sizes = [11, 128], strides = [1, 1]} : vector<11x768xf32> to vector<11x128xf32>
    %1611 = arith.addf %1609, %1610 : vector<11x128xf32>
    %1612 = vector.extract_strided_slice %1606 {offsets = [0, 384], sizes = [11, 128], strides = [1, 1]} : vector<11x768xf32> to vector<11x128xf32>
    %1613 = arith.addf %1611, %1612 : vector<11x128xf32>
    %1614 = vector.extract_strided_slice %1606 {offsets = [0, 512], sizes = [11, 128], strides = [1, 1]} : vector<11x768xf32> to vector<11x128xf32>
    %1615 = arith.addf %1613, %1614 : vector<11x128xf32>
    %1616 = vector.extract_strided_slice %1606 {offsets = [0, 640], sizes = [11, 128], strides = [1, 1]} : vector<11x768xf32> to vector<11x128xf32>
    %1617 = arith.addf %1615, %1616 : vector<11x128xf32>
    %1618 = arith.addf %1586, %1617 : vector<11x128xf32>
    %c1_253 = arith.constant 1 : index
    %c38400_254 = arith.constant 38400 : index
    %1619 = vector.load %arg2[%c1_253, %c38400_254] : memref<2x42240xf32, #tpu.memory_space<vmem>>, vector<1x768xf32>
    %1620 = vector.broadcast %1619 : vector<1x768xf32> to vector<11x768xf32>
    %1621 = arith.mulf %1620, %1603 : vector<11x768xf32>
    %1622 = vector.extract_strided_slice %1621 {offsets = [0, 0], sizes = [11, 128], strides = [1, 1]} : vector<11x768xf32> to vector<11x128xf32>
    %1623 = vector.extract_strided_slice %1621 {offsets = [0, 128], sizes = [11, 128], strides = [1, 1]} : vector<11x768xf32> to vector<11x128xf32>
    %1624 = arith.addf %1622, %1623 : vector<11x128xf32>
    %1625 = vector.extract_strided_slice %1621 {offsets = [0, 256], sizes = [11, 128], strides = [1, 1]} : vector<11x768xf32> to vector<11x128xf32>
    %1626 = arith.addf %1624, %1625 : vector<11x128xf32>
    %1627 = vector.extract_strided_slice %1621 {offsets = [0, 384], sizes = [11, 128], strides = [1, 1]} : vector<11x768xf32> to vector<11x128xf32>
    %1628 = arith.addf %1626, %1627 : vector<11x128xf32>
    %1629 = vector.extract_strided_slice %1621 {offsets = [0, 512], sizes = [11, 128], strides = [1, 1]} : vector<11x768xf32> to vector<11x128xf32>
    %1630 = arith.addf %1628, %1629 : vector<11x128xf32>
    %1631 = vector.extract_strided_slice %1621 {offsets = [0, 640], sizes = [11, 128], strides = [1, 1]} : vector<11x768xf32> to vector<11x128xf32>
    %1632 = arith.addf %1630, %1631 : vector<11x128xf32>
    %1633 = arith.addf %1601, %1632 : vector<11x128xf32>
    %c0_255 = arith.constant 0 : index
    %c39168 = arith.constant 39168 : index
    %1634 = vector.load %arg3[%c0_255, %c39168] : memref<11x42240xbf16, #tpu.memory_space<vmem>>, vector<11x768xbf16>
    %1635 = arith.extf %1634 : vector<11x768xbf16> to vector<11x768xf32>
    %c0_256 = arith.constant 0 : index
    %c39168_257 = arith.constant 39168 : index
    %1636 = vector.load %arg2[%c0_256, %c39168_257] : memref<2x42240xf32, #tpu.memory_space<vmem>>, vector<1x768xf32>
    %1637 = vector.broadcast %1636 : vector<1x768xf32> to vector<11x768xf32>
    %1638 = arith.mulf %1637, %1635 : vector<11x768xf32>
    %1639 = vector.extract_strided_slice %1638 {offsets = [0, 0], sizes = [11, 128], strides = [1, 1]} : vector<11x768xf32> to vector<11x128xf32>
    %1640 = vector.extract_strided_slice %1638 {offsets = [0, 128], sizes = [11, 128], strides = [1, 1]} : vector<11x768xf32> to vector<11x128xf32>
    %1641 = arith.addf %1639, %1640 : vector<11x128xf32>
    %1642 = vector.extract_strided_slice %1638 {offsets = [0, 256], sizes = [11, 128], strides = [1, 1]} : vector<11x768xf32> to vector<11x128xf32>
    %1643 = arith.addf %1641, %1642 : vector<11x128xf32>
    %1644 = vector.extract_strided_slice %1638 {offsets = [0, 384], sizes = [11, 128], strides = [1, 1]} : vector<11x768xf32> to vector<11x128xf32>
    %1645 = arith.addf %1643, %1644 : vector<11x128xf32>
    %1646 = vector.extract_strided_slice %1638 {offsets = [0, 512], sizes = [11, 128], strides = [1, 1]} : vector<11x768xf32> to vector<11x128xf32>
    %1647 = arith.addf %1645, %1646 : vector<11x128xf32>
    %1648 = vector.extract_strided_slice %1638 {offsets = [0, 640], sizes = [11, 128], strides = [1, 1]} : vector<11x768xf32> to vector<11x128xf32>
    %1649 = arith.addf %1647, %1648 : vector<11x128xf32>
    %1650 = arith.addf %1618, %1649 : vector<11x128xf32>
    %c1_258 = arith.constant 1 : index
    %c39168_259 = arith.constant 39168 : index
    %1651 = vector.load %arg2[%c1_258, %c39168_259] : memref<2x42240xf32, #tpu.memory_space<vmem>>, vector<1x768xf32>
    %1652 = vector.broadcast %1651 : vector<1x768xf32> to vector<11x768xf32>
    %1653 = arith.mulf %1652, %1635 : vector<11x768xf32>
    %1654 = vector.extract_strided_slice %1653 {offsets = [0, 0], sizes = [11, 128], strides = [1, 1]} : vector<11x768xf32> to vector<11x128xf32>
    %1655 = vector.extract_strided_slice %1653 {offsets = [0, 128], sizes = [11, 128], strides = [1, 1]} : vector<11x768xf32> to vector<11x128xf32>
    %1656 = arith.addf %1654, %1655 : vector<11x128xf32>
    %1657 = vector.extract_strided_slice %1653 {offsets = [0, 256], sizes = [11, 128], strides = [1, 1]} : vector<11x768xf32> to vector<11x128xf32>
    %1658 = arith.addf %1656, %1657 : vector<11x128xf32>
    %1659 = vector.extract_strided_slice %1653 {offsets = [0, 384], sizes = [11, 128], strides = [1, 1]} : vector<11x768xf32> to vector<11x128xf32>
    %1660 = arith.addf %1658, %1659 : vector<11x128xf32>
    %1661 = vector.extract_strided_slice %1653 {offsets = [0, 512], sizes = [11, 128], strides = [1, 1]} : vector<11x768xf32> to vector<11x128xf32>
    %1662 = arith.addf %1660, %1661 : vector<11x128xf32>
    %1663 = vector.extract_strided_slice %1653 {offsets = [0, 640], sizes = [11, 128], strides = [1, 1]} : vector<11x768xf32> to vector<11x128xf32>
    %1664 = arith.addf %1662, %1663 : vector<11x128xf32>
    %1665 = arith.addf %1633, %1664 : vector<11x128xf32>
    %c0_260 = arith.constant 0 : index
    %c39936 = arith.constant 39936 : index
    %1666 = vector.load %arg3[%c0_260, %c39936] : memref<11x42240xbf16, #tpu.memory_space<vmem>>, vector<11x768xbf16>
    %1667 = arith.extf %1666 : vector<11x768xbf16> to vector<11x768xf32>
    %c0_261 = arith.constant 0 : index
    %c39936_262 = arith.constant 39936 : index
    %1668 = vector.load %arg2[%c0_261, %c39936_262] : memref<2x42240xf32, #tpu.memory_space<vmem>>, vector<1x768xf32>
    %1669 = vector.broadcast %1668 : vector<1x768xf32> to vector<11x768xf32>
    %1670 = arith.mulf %1669, %1667 : vector<11x768xf32>
    %1671 = vector.extract_strided_slice %1670 {offsets = [0, 0], sizes = [11, 128], strides = [1, 1]} : vector<11x768xf32> to vector<11x128xf32>
    %1672 = vector.extract_strided_slice %1670 {offsets = [0, 128], sizes = [11, 128], strides = [1, 1]} : vector<11x768xf32> to vector<11x128xf32>
    %1673 = arith.addf %1671, %1672 : vector<11x128xf32>
    %1674 = vector.extract_strided_slice %1670 {offsets = [0, 256], sizes = [11, 128], strides = [1, 1]} : vector<11x768xf32> to vector<11x128xf32>
    %1675 = arith.addf %1673, %1674 : vector<11x128xf32>
    %1676 = vector.extract_strided_slice %1670 {offsets = [0, 384], sizes = [11, 128], strides = [1, 1]} : vector<11x768xf32> to vector<11x128xf32>
    %1677 = arith.addf %1675, %1676 : vector<11x128xf32>
    %1678 = vector.extract_strided_slice %1670 {offsets = [0, 512], sizes = [11, 128], strides = [1, 1]} : vector<11x768xf32> to vector<11x128xf32>
    %1679 = arith.addf %1677, %1678 : vector<11x128xf32>
    %1680 = vector.extract_strided_slice %1670 {offsets = [0, 640], sizes = [11, 128], strides = [1, 1]} : vector<11x768xf32> to vector<11x128xf32>
    %1681 = arith.addf %1679, %1680 : vector<11x128xf32>
    %1682 = arith.addf %1650, %1681 : vector<11x128xf32>
    %c1_263 = arith.constant 1 : index
    %c39936_264 = arith.constant 39936 : index
    %1683 = vector.load %arg2[%c1_263, %c39936_264] : memref<2x42240xf32, #tpu.memory_space<vmem>>, vector<1x768xf32>
    %1684 = vector.broadcast %1683 : vector<1x768xf32> to vector<11x768xf32>
    %1685 = arith.mulf %1684, %1667 : vector<11x768xf32>
    %1686 = vector.extract_strided_slice %1685 {offsets = [0, 0], sizes = [11, 128], strides = [1, 1]} : vector<11x768xf32> to vector<11x128xf32>
    %1687 = vector.extract_strided_slice %1685 {offsets = [0, 128], sizes = [11, 128], strides = [1, 1]} : vector<11x768xf32> to vector<11x128xf32>
    %1688 = arith.addf %1686, %1687 : vector<11x128xf32>
    %1689 = vector.extract_strided_slice %1685 {offsets = [0, 256], sizes = [11, 128], strides = [1, 1]} : vector<11x768xf32> to vector<11x128xf32>
    %1690 = arith.addf %1688, %1689 : vector<11x128xf32>
    %1691 = vector.extract_strided_slice %1685 {offsets = [0, 384], sizes = [11, 128], strides = [1, 1]} : vector<11x768xf32> to vector<11x128xf32>
    %1692 = arith.addf %1690, %1691 : vector<11x128xf32>
    %1693 = vector.extract_strided_slice %1685 {offsets = [0, 512], sizes = [11, 128], strides = [1, 1]} : vector<11x768xf32> to vector<11x128xf32>
    %1694 = arith.addf %1692, %1693 : vector<11x128xf32>
    %1695 = vector.extract_strided_slice %1685 {offsets = [0, 640], sizes = [11, 128], strides = [1, 1]} : vector<11x768xf32> to vector<11x128xf32>
    %1696 = arith.addf %1694, %1695 : vector<11x128xf32>
    %1697 = arith.addf %1665, %1696 : vector<11x128xf32>
    %c0_265 = arith.constant 0 : index
    %c40704 = arith.constant 40704 : index
    %1698 = vector.load %arg3[%c0_265, %c40704] : memref<11x42240xbf16, #tpu.memory_space<vmem>>, vector<11x768xbf16>
    %1699 = arith.extf %1698 : vector<11x768xbf16> to vector<11x768xf32>
    %c0_266 = arith.constant 0 : index
    %c40704_267 = arith.constant 40704 : index
    %1700 = vector.load %arg2[%c0_266, %c40704_267] : memref<2x42240xf32, #tpu.memory_space<vmem>>, vector<1x768xf32>
    %1701 = vector.broadcast %1700 : vector<1x768xf32> to vector<11x768xf32>
    %1702 = arith.mulf %1701, %1699 : vector<11x768xf32>
    %1703 = vector.extract_strided_slice %1702 {offsets = [0, 0], sizes = [11, 128], strides = [1, 1]} : vector<11x768xf32> to vector<11x128xf32>
    %1704 = vector.extract_strided_slice %1702 {offsets = [0, 128], sizes = [11, 128], strides = [1, 1]} : vector<11x768xf32> to vector<11x128xf32>
    %1705 = arith.addf %1703, %1704 : vector<11x128xf32>
    %1706 = vector.extract_strided_slice %1702 {offsets = [0, 256], sizes = [11, 128], strides = [1, 1]} : vector<11x768xf32> to vector<11x128xf32>
    %1707 = arith.addf %1705, %1706 : vector<11x128xf32>
    %1708 = vector.extract_strided_slice %1702 {offsets = [0, 384], sizes = [11, 128], strides = [1, 1]} : vector<11x768xf32> to vector<11x128xf32>
    %1709 = arith.addf %1707, %1708 : vector<11x128xf32>
    %1710 = vector.extract_strided_slice %1702 {offsets = [0, 512], sizes = [11, 128], strides = [1, 1]} : vector<11x768xf32> to vector<11x128xf32>
    %1711 = arith.addf %1709, %1710 : vector<11x128xf32>
    %1712 = vector.extract_strided_slice %1702 {offsets = [0, 640], sizes = [11, 128], strides = [1, 1]} : vector<11x768xf32> to vector<11x128xf32>
    %1713 = arith.addf %1711, %1712 : vector<11x128xf32>
    %1714 = arith.addf %1682, %1713 : vector<11x128xf32>
    %c1_268 = arith.constant 1 : index
    %c40704_269 = arith.constant 40704 : index
    %1715 = vector.load %arg2[%c1_268, %c40704_269] : memref<2x42240xf32, #tpu.memory_space<vmem>>, vector<1x768xf32>
    %1716 = vector.broadcast %1715 : vector<1x768xf32> to vector<11x768xf32>
    %1717 = arith.mulf %1716, %1699 : vector<11x768xf32>
    %1718 = vector.extract_strided_slice %1717 {offsets = [0, 0], sizes = [11, 128], strides = [1, 1]} : vector<11x768xf32> to vector<11x128xf32>
    %1719 = vector.extract_strided_slice %1717 {offsets = [0, 128], sizes = [11, 128], strides = [1, 1]} : vector<11x768xf32> to vector<11x128xf32>
    %1720 = arith.addf %1718, %1719 : vector<11x128xf32>
    %1721 = vector.extract_strided_slice %1717 {offsets = [0, 256], sizes = [11, 128], strides = [1, 1]} : vector<11x768xf32> to vector<11x128xf32>
    %1722 = arith.addf %1720, %1721 : vector<11x128xf32>
    %1723 = vector.extract_strided_slice %1717 {offsets = [0, 384], sizes = [11, 128], strides = [1, 1]} : vector<11x768xf32> to vector<11x128xf32>
    %1724 = arith.addf %1722, %1723 : vector<11x128xf32>
    %1725 = vector.extract_strided_slice %1717 {offsets = [0, 512], sizes = [11, 128], strides = [1, 1]} : vector<11x768xf32> to vector<11x128xf32>
    %1726 = arith.addf %1724, %1725 : vector<11x128xf32>
    %1727 = vector.extract_strided_slice %1717 {offsets = [0, 640], sizes = [11, 128], strides = [1, 1]} : vector<11x768xf32> to vector<11x128xf32>
    %1728 = arith.addf %1726, %1727 : vector<11x128xf32>
    %1729 = arith.addf %1697, %1728 : vector<11x128xf32>
    %c0_270 = arith.constant 0 : index
    %c41472 = arith.constant 41472 : index
    %1730 = vector.load %arg3[%c0_270, %c41472] : memref<11x42240xbf16, #tpu.memory_space<vmem>>, vector<11x768xbf16>
    %1731 = arith.extf %1730 : vector<11x768xbf16> to vector<11x768xf32>
    %c0_271 = arith.constant 0 : index
    %c41472_272 = arith.constant 41472 : index
    %1732 = vector.load %arg2[%c0_271, %c41472_272] : memref<2x42240xf32, #tpu.memory_space<vmem>>, vector<1x768xf32>
    %1733 = vector.broadcast %1732 : vector<1x768xf32> to vector<11x768xf32>
    %1734 = arith.mulf %1733, %1731 : vector<11x768xf32>
    %1735 = vector.extract_strided_slice %1734 {offsets = [0, 0], sizes = [11, 128], strides = [1, 1]} : vector<11x768xf32> to vector<11x128xf32>
    %1736 = vector.extract_strided_slice %1734 {offsets = [0, 128], sizes = [11, 128], strides = [1, 1]} : vector<11x768xf32> to vector<11x128xf32>
    %1737 = arith.addf %1735, %1736 : vector<11x128xf32>
    %1738 = vector.extract_strided_slice %1734 {offsets = [0, 256], sizes = [11, 128], strides = [1, 1]} : vector<11x768xf32> to vector<11x128xf32>
    %1739 = arith.addf %1737, %1738 : vector<11x128xf32>
    %1740 = vector.extract_strided_slice %1734 {offsets = [0, 384], sizes = [11, 128], strides = [1, 1]} : vector<11x768xf32> to vector<11x128xf32>
    %1741 = arith.addf %1739, %1740 : vector<11x128xf32>
    %1742 = vector.extract_strided_slice %1734 {offsets = [0, 512], sizes = [11, 128], strides = [1, 1]} : vector<11x768xf32> to vector<11x128xf32>
    %1743 = arith.addf %1741, %1742 : vector<11x128xf32>
    %1744 = vector.extract_strided_slice %1734 {offsets = [0, 640], sizes = [11, 128], strides = [1, 1]} : vector<11x768xf32> to vector<11x128xf32>
    %1745 = arith.addf %1743, %1744 : vector<11x128xf32>
    %1746 = arith.addf %1714, %1745 : vector<11x128xf32>
    %c1_273 = arith.constant 1 : index
    %c41472_274 = arith.constant 41472 : index
    %1747 = vector.load %arg2[%c1_273, %c41472_274] : memref<2x42240xf32, #tpu.memory_space<vmem>>, vector<1x768xf32>
    %1748 = vector.broadcast %1747 : vector<1x768xf32> to vector<11x768xf32>
    %1749 = arith.mulf %1748, %1731 : vector<11x768xf32>
    %1750 = vector.extract_strided_slice %1749 {offsets = [0, 0], sizes = [11, 128], strides = [1, 1]} : vector<11x768xf32> to vector<11x128xf32>
    %1751 = vector.extract_strided_slice %1749 {offsets = [0, 128], sizes = [11, 128], strides = [1, 1]} : vector<11x768xf32> to vector<11x128xf32>
    %1752 = arith.addf %1750, %1751 : vector<11x128xf32>
    %1753 = vector.extract_strided_slice %1749 {offsets = [0, 256], sizes = [11, 128], strides = [1, 1]} : vector<11x768xf32> to vector<11x128xf32>
    %1754 = arith.addf %1752, %1753 : vector<11x128xf32>
    %1755 = vector.extract_strided_slice %1749 {offsets = [0, 384], sizes = [11, 128], strides = [1, 1]} : vector<11x768xf32> to vector<11x128xf32>
    %1756 = arith.addf %1754, %1755 : vector<11x128xf32>
    %1757 = vector.extract_strided_slice %1749 {offsets = [0, 512], sizes = [11, 128], strides = [1, 1]} : vector<11x768xf32> to vector<11x128xf32>
    %1758 = arith.addf %1756, %1757 : vector<11x128xf32>
    %1759 = vector.extract_strided_slice %1749 {offsets = [0, 640], sizes = [11, 128], strides = [1, 1]} : vector<11x768xf32> to vector<11x128xf32>
    %1760 = arith.addf %1758, %1759 : vector<11x128xf32>
    %1761 = arith.addf %1729, %1760 : vector<11x128xf32>
    %1762 = vector.shape_cast %1746 : vector<11x128xf32> to vector<1x11x128xf32>
    %1763 = vector.shape_cast %1761 : vector<11x128xf32> to vector<1x11x128xf32>
    %1764 = tpu.concatenate %1762, %1763 in 0 : vector<1x11x128xf32>, vector<1x11x128xf32> -> vector<2x11x128xf32>
    %cst_275 = arith.constant dense<0.000000e+00> : vector<2x11xf32>
    %1765 = vector.multi_reduction <add>, %1764, %cst_275 [2] : vector<2x11x128xf32> to vector<2x11xf32>
    %c0_i32 = arith.constant 0 : i32
    %1766 = arith.cmpi eq, %arg1, %c0_i32 : i32
    %1767 = arith.extui %1766 : i1 to i32
    %c0_i32_276 = arith.constant 0 : i32
    %1768 = arith.cmpi ne, %1767, %c0_i32_276 : i32
    scf.if %1768 {
      %1772 = vector.shape_cast %1765 : vector<2x11xf32> to vector<1x2x11xf32>
      %c0_279 = arith.constant 0 : index
      %c0_280 = arith.constant 0 : index
      %c0_281 = arith.constant 0 : index
      %1773 = vector.load %arg4[%c0_279, %c0_280, %c0_281] : memref<1x2x11xf32, #tpu.memory_space<vmem>>, vector<1x2x11xf32>
      tpu.vector_store %arg4[%c0_279, %c0_280, %c0_281], %1772 {strides = array<i32>} : memref<1x2x11xf32, #tpu.memory_space<vmem>>, vector<1x2x11xf32>,
    } else {
    }
    %c0_i32_277 = arith.constant 0 : i32
    %1769 = arith.cmpi ne, %arg1, %c0_i32_277 : i32
    %1770 = arith.extui %1769 : i1 to i32
    %c0_i32_278 = arith.constant 0 : i32
    %1771 = arith.cmpi ne, %1770, %c0_i32_278 : i32
    scf.if %1771 {
      %c0_279 = arith.constant 0 : index
      %c0_280 = arith.constant 0 : index
      %c0_281 = arith.constant 0 : index
      %1772 = vector.load %arg4[%c0_279, %c0_280, %c0_281] : memref<1x2x11xf32, #tpu.memory_space<vmem>>, vector<1x2x11xf32>
      %1773 = vector.shape_cast %1765 : vector<2x11xf32> to vector<1x2x11xf32>
      %1774 = arith.addf %1772, %1773 : vector<1x2x11xf32>
      %c0_282 = arith.constant 0 : index
      %c0_283 = arith.constant 0 : index
      %c0_284 = arith.constant 0 : index
      %1775 = vector.load %arg4[%c0_282, %c0_283, %c0_284] : memref<1x2x11xf32, #tpu.memory_space<vmem>>, vector<1x2x11xf32>
      tpu.vector_store %arg4[%c0_282, %c0_283, %c0_284], %1774 {strides = array<i32>} : memref<1x2x11xf32, #tpu.memory_space<vmem>>, vector<1x2x11xf32>,
    } else {
    }
    return
  }
  func.func @transform_0(%arg0: i32, %arg1: i32) -> (i32, i32) {
    %c1_i32 = arith.constant 1 : i32
    %0 = arith.muli %arg0, %c1_i32 : i32
    %1 = arith.addi %0, %arg1 : i32
    %c0_i32 = arith.constant 0 : i32
    %c0_i32_0 = arith.constant 0 : i32
    return %c0_i32, %1 : i32, i32
  }
  func.func @transform_1(%arg0: i32, %arg1: i32) -> (i32, i32) {
    %c1_i32 = arith.constant 1 : i32
    %0 = arith.muli %arg0, %c1_i32 : i32
    %1 = arith.addi %0, %arg1 : i32
    %c0_i32 = arith.constant 0 : i32
    %c0_i32_0 = arith.constant 0 : i32
    return %c0_i32, %1 : i32, i32
  }
  func.func @transform_2(%arg0: i32, %arg1: i32) -> (i32, i32, i32) {
    %c0_i32 = arith.constant 0 : i32
    %c0_i32_0 = arith.constant 0 : i32
    %c0_i32_1 = arith.constant 0 : i32
    return %arg0, %c0_i32, %c0_i32_0 : i32, i32, i32
  }
}

</mosaic_0001>

<llo_original>
// kernel: tpu_custom_call.1
$region0: #{tpu_custom_call.1}
  #allocation0 [shape = 'u32[]', space=smem, size = 0x4, offset = 0x4, fixed_abs, tag = 'smem constant byte address 0x4 - core index']
  #allocation1 [shape = 'u32[144,128]{1,0:T(1,128)}', space=vmem, size = 0x12000, scoped, tag = 'internal scratch']
  %s0 = inlined_call_operand.hbm [shape: f32[2,84480], index: 0, kind: input, shape index: {}]
  %s1 = inlined_call_operand.hbm [shape: bf16[11,84480], index: 1, kind: input, shape index: {}]
  %s2 = inlined_call_operand.hbm [shape: f32[2,2,11], index: 2, kind: output, shape index: {}]
  %s3 = sld [smem:[#allocation0]]
  $region57: #{tpu_custom_call.1} parent=0
    _
  %s5 = ssub.s32 1, %s3
  %s6 = scalar_select 0, %s5, %s3
  $region1: #{tpu_custom_call.1} parent=0
    #allocation2 [shape = 'u8[675840]{0}', space=vmem, size = 0xa5000, scoped, tag = 'input window, operand 0']
    #allocation3 [shape = 's32[2]{0}', space=sflag, size = 0x8, scoped, tag = 'scoped memory for tpu_custom_call.1']
    #allocation4 [shape = 's32[2]{0}', space=sflag, size = 0x8, scoped, tag = 'scoped memory for tpu_custom_call.1']
    #allocation5 [shape = 'u8[2703360]{0}', space=vmem, size = 0x294000, scoped, tag = 'input window, operand 1']
    #allocation6 [shape = 's32[2]{0}', space=sflag, size = 0x8, scoped, tag = 'scoped memory for tpu_custom_call.1']
    #allocation7 [shape = 'u8[2048]{0}', space=vmem, size = 0x800, scoped, tag = 'output window, operand 0']
    %7 = vsyncpa [#allocation3], 0
    %s8 = scalar_lea.sflag [#allocation3], 1
    %9 = vsyncpa %s8, 0
    %10 = vsyncpa [#allocation6], 0
    %s11 = scalar_lea.sflag [#allocation6], 1
    %12 = vsyncpa %s11, 0
    %13 = vsyncpa [#allocation4], 0
    %s14 = scalar_lea.sflag [#allocation4], 1
    %15 = vsyncpa %s14, 0
    loop: start=0, step=1, limit=4
    $region2: #{tpu_custom_call.1} parent=1 // loop_pre_header
      _
    $region3: #{tpu_custom_call.1} parent=1 // loop_header
      %s17 = sphi 0, %s21
      %p18 = scmp.ge.s32.totalorder %s17, 4
      %s24 = sphi 0, %s36
      %s25 = sphi 0, %s32
      %s26 = sphi 0, %s24
      %s27 = sphi 0, %s25
      %s28 = sphi 0, %s26
      %s29 = sphi 0, %s27
      %s41 = sphi 0, %s43
      %s44 = sphi 0, %s41
      %s45 = sphi 0, %s44
      %s61 = sphi 0, %s45
      %s69 = sphi 0, %s71
      %s72 = sphi 0, %s69
      %s73 = sphi 0, %s72
      %s89 = sphi 0, %s73
      %s95 = sphi 0, %s97
      %s98 = sphi 0, %s95
      %s99 = sphi 0, %s98
      %s115 = sphi 0, %s99
    $region4: #{tpu_custom_call.1} parent=1 // loop_header_branch
      %20 = sbr.rel (%p18) target = $region8
    $region5: #{tpu_custom_call.1} parent=1 // loop_body
      %s22 = ssub.s32 %s17, 1
      %s23 = ssub.s32 %s17, 2
      %s30 = sadd.s32 1, %s25
      %p31 = scmp.ge.s32.totalorder %s30, 1
      %s32 = scalar_select %p31, 0, %s30
      %s33 = sadd.s32 1, %s24
      %s34 = scalar_select %p31, %s33, %s24
      %p35 = scmp.ge.s32.totalorder %s34, 2
      %s36 = scalar_select %p35, 0, %s34
      %s37 = sadd.s32 %s24, %s25
      %s38 = sadd.s32 %s36, %s32
      %s39 = ssub.s32 %s37, %s38
      %p40 = scmp.eq.s32.totalorder %s39, 0
      %s42 = sadd.s32 %s41, 1
      %s43 = scalar_select %p40, %s41, %s42
      %p46 = pneg %p40
      %p47 = scmp.eq.s32.totalorder %s17, 1
      %p48 = por %p46, %p47
      %p49 = scmp.ne.s32.totalorder %s41, %s44
      %p50 = scmp.eq.s32.totalorder %s17, 0
      %p51 = por %p49, %p50
      %p52 = scmp.ne.s32.totalorder %s41, %s44
      %p53 = scmp.eq.s32.totalorder %s22, 1
      %p54 = por %p52, %p53
      %p55 = scmp.ne.s32.totalorder %s44, %s45
      %p56 = scmp.eq.s32.totalorder %s22, 0
      %p57 = por %p55, %p56
      %p58 = scmp.ne.s32.totalorder %s44, %s45
      %p59 = scmp.eq.s32.totalorder %s23, 1
      %p60 = por %p58, %p59
      %p62 = scmp.ne.s32.totalorder %s45, %s61
      %p63 = scmp.eq.s32.totalorder %s23, 0
      %p64 = por %p62, %p63
      %s65 = sadd.s32 %s24, %s25
      %s66 = sadd.s32 %s36, %s32
      %s67 = ssub.s32 %s65, %s66
      %p68 = scmp.eq.s32.totalorder %s67, 0
      %s70 = sadd.s32 %s69, 1
      %s71 = scalar_select %p68, %s69, %s70
      %p74 = pneg %p68
      %p75 = scmp.eq.s32.totalorder %s17, 1
      %p76 = por %p74, %p75
      %p77 = scmp.ne.s32.totalorder %s69, %s72
      %p78 = scmp.eq.s32.totalorder %s17, 0
      %p79 = por %p77, %p78
      %p80 = scmp.ne.s32.totalorder %s69, %s72
      %p81 = scmp.eq.s32.totalorder %s22, 1
      %p82 = por %p80, %p81
      %p83 = scmp.ne.s32.totalorder %s72, %s73
      %p84 = scmp.eq.s32.totalorder %s22, 0
      %p85 = por %p83, %p84
      %p86 = scmp.ne.s32.totalorder %s72, %s73
      %p87 = scmp.eq.s32.totalorder %s23, 1
      %p88 = por %p86, %p87
      %p90 = scmp.ne.s32.totalorder %s73, %s89
      %p91 = scmp.eq.s32.totalorder %s23, 0
      %p92 = por %p90, %p91
      %s93 = ssub.s32 %s24, %s36
      %p94 = scmp.eq.s32.totalorder %s93, 0
      %s96 = sadd.s32 %s95, 1
      %s97 = scalar_select %p94, %s95, %s96
      %p100 = pneg %p94
      %p101 = scmp.eq.s32.totalorder %s17, 1
      %p102 = por %p100, %p101
      %p103 = scmp.ne.s32.totalorder %s95, %s98
      %p104 = scmp.eq.s32.totalorder %s17, 0
      %p105 = por %p103, %p104
      %p106 = scmp.ne.s32.totalorder %s95, %s98
      %p107 = scmp.eq.s32.totalorder %s22, 1
      %p108 = por %p106, %p107
      %p109 = scmp.ne.s32.totalorder %s98, %s99
      %p110 = scmp.eq.s32.totalorder %s22, 0
      %p111 = por %p109, %p110
      %p112 = scmp.ne.s32.totalorder %s98, %s99
      %p113 = scmp.eq.s32.totalorder %s23, 1
      %p114 = por %p112, %p113
      %p116 = scmp.ne.s32.totalorder %s99, %s115
      %p117 = scmp.eq.s32.totalorder %s23, 0
      %p118 = por %p116, %p117
      %p119 = scmp.le.s32.totalorder 1, %s17
      %p120 = scmp.lt.s32.totalorder %s17, 3
      %p121 = pnand %p119, %p120
      %p122 = pneg %p121
      // Predicated region
      $region9: #{tpu_custom_call.1} parent=5 // pred_check
        _
      $region10: #{tpu_custom_call.1} parent=5 // pred_check_branch
        %124 = sbr.rel (%p121) target = $region12
      $region11: #{tpu_custom_call.1} parent=5 // pred_region
        %s125 = ssub.s32 %s17, 1
      $region12: #{tpu_custom_call.1} parent=5 // pred_fallthru
        _
      %p126 = scmp.lt.s32.totalorder %s17, 2
      // Predicated region
      $region13: #{tpu_custom_call.1} parent=5 // pred_check
        %p127 = pneg %p126
      $region14: #{tpu_custom_call.1} parent=5 // pred_check_branch
        %129 = sbr.rel (%p127) target = $region16
      $region15: #{tpu_custom_call.1} parent=5 // pred_region
        // Predicated region
        $region17: #{tpu_custom_call.1} parent=15 // pred_check
          %p130 = pneg %p51
        $region18: #{tpu_custom_call.1} parent=15 // pred_check_branch
          %132 = sbr.rel (%p130) target = $region20
        $region19: #{tpu_custom_call.1} parent=15 // pred_region
          %s133 = sand.u32 %s41, 1
          %s134 = scalar_lea.sflag [#allocation3], %s133
          %s135 = sand.u32 %s41, 1
          %s136 = smul.addr %s135, 660
          %s137 = scalar_lea.vmem [#allocation2], %s136
          %s138 = sadd.s32 %s24, %s25
          %s139 = smul.u32 330, %s138
          %s141 = ssub.s32 10560, 10560
          %142 = vsyncadd %s134, %s141
          %s143 = smul.addr %s139, 32
          %s144 = scalar_lea.hbm %s0, %s143
          %s146 = sshll.u32 %s137, 4
          %s147 = int_to_ptr.vmem [resolvable:$true] %s146
          %149 = dma.hbm_to_vmem [thread:$0]  %s144, 10560, %s147, %s134
        $region20: #{tpu_custom_call.1} parent=15 // pred_fallthru
          _
        // Predicated region
        $region21: #{tpu_custom_call.1} parent=15 // pred_check
          %p150 = pneg %p79
        $region22: #{tpu_custom_call.1} parent=15 // pred_check_branch
          %152 = sbr.rel (%p150) target = $region24
        $region23: #{tpu_custom_call.1} parent=15 // pred_region
          %s153 = sand.u32 %s69, 1
          %s154 = scalar_lea.sflag [#allocation6], %s153
          %s155 = sand.u32 %s69, 1
          %s156 = smul.addr %s155, 2640
          %s157 = scalar_lea.vmem [#allocation5], %s156
          %s158 = sadd.s32 %s24, %s25
          %s159 = smul.u32 330, %s158
          %s161 = ssub.s32 42240, 42240
          %162 = vsyncadd %s154, %s161
          %s163 = smul.addr %s159, 64
          %s164 = scalar_lea.hbm %s1, %s163
          %s165 = sshll.u32 %s157, 4
          %s166 = int_to_ptr.vmem [resolvable:$true] %s165
          %171 = dma.hbm_to_vmem [thread:$0]  %s164, 42240, %s166, %s154, 42240, 21120, 1320
        $region24: #{tpu_custom_call.1} parent=15 // pred_fallthru
          _
      $region16: #{tpu_custom_call.1} parent=5 // pred_fallthru
        _
      %p172 = scmp.le.s32.totalorder 1, %s17
      %p173 = scmp.lt.s32.totalorder %s17, 3
      %p174 = pnand %p172, %p173
      %p175 = pneg %p174
      // Predicated region
      $region25: #{tpu_custom_call.1} parent=5 // pred_check
        _
      $region26: #{tpu_custom_call.1} parent=5 // pred_check_branch
        %177 = sbr.rel (%p174) target = $region28
      $region27: #{tpu_custom_call.1} parent=5 // pred_region
        %s178 = ssub.s32 %s17, 1
        %s179 = sand.u32 %s44, 1
        %s180 = scalar_lea.sflag [#allocation3], %s179
        %s181 = sand.u32 %s44, 1
        %s182 = smul.addr %s181, 660
        %s183 = scalar_lea.vmem [#allocation2], %s182
        // Predicated region
        $region29: #{tpu_custom_call.1} parent=27 // pred_check
          %p184 = pneg %p57
        $region30: #{tpu_custom_call.1} parent=27 // pred_check_branch
          %186 = sbr.rel (%p184) target = $region32
        $region31: #{tpu_custom_call.1} parent=27 // pred_region
          %187 = dma.done %s180, 10560
        $region32: #{tpu_custom_call.1} parent=27 // pred_fallthru
          _
        %s188 = sand.u32 %s72, 1
        %s189 = scalar_lea.sflag [#allocation6], %s188
        %s190 = sand.u32 %s72, 1
        %s191 = smul.addr %s190, 2640
        %s192 = scalar_lea.vmem [#allocation5], %s191
        // Predicated region
        $region33: #{tpu_custom_call.1} parent=27 // pred_check
          %p193 = pneg %p85
        $region34: #{tpu_custom_call.1} parent=27 // pred_check_branch
          %195 = sbr.rel (%p193) target = $region36
        $region35: #{tpu_custom_call.1} parent=27 // pred_region
          %196 = dma.done %s189, 42240
        $region36: #{tpu_custom_call.1} parent=27 // pred_fallthru
          _
        %s197 = sand.u32 %s44, 1
        %s198 = scalar_lea.sflag [#allocation3], %s197
        %s199 = sand.u32 %s44, 1
        %s200 = smul.addr %s199, 660
        %s201 = scalar_lea.vmem [#allocation2], %s200
        %p202 = pneg %p57
        %p203 = pneg %p54
        %s204 = sand.u32 %s72, 1
        %s205 = scalar_lea.sflag [#allocation6], %s204
        %s206 = sand.u32 %s72, 1
        %s207 = smul.addr %s206, 2640
        %s208 = scalar_lea.vmem [#allocation5], %s207
        %p209 = pneg %p85
        %p210 = pneg %p82
        %p211 = pneg %p111
        %p212 = pneg %p108
        %s213 = sand.u32 %s98, 1
        %s214 = scalar_lea.sflag [#allocation4], %s213
        %s215 = sand.u32 %s98, 1
        %s216 = smul.addr %s215, 2
        %s217 = scalar_lea.vmem [#allocation7], %s216
        %s218 = sadd.s32 %s26, %s27
        %s219 = smul.u32 330, %s218
        %s220 = sadd.s32 %s26, %s27
        %s221 = smul.u32 330, %s220
        %v222 = vld [vmem:[%s192] sm:$0xff]
        %v223 = vld [vmem:[%s192 + $0x8] sm:$0xff]
        %v224 = vld [vmem:[%s192 + $0x10] sm:$0xff]
        %v225 = vld [vmem:[%s192 + $0x528] sm:$0x33]
        %v226 = vld [vmem:[%s192 + $0x530] sm:$0x33]
        %v227 = vld [vmem:[%s192 + $0x538] sm:$0x33]
        %v228 = vunpack.c.l.bf16 %v222
        %v229 = vunpack.c.h.bf16 %v222
        %v230 = vunpack.c.l.bf16 %v223
        %v231 = vunpack.c.h.bf16 %v223
        %v232 = vunpack.c.l.bf16 %v224
        %v233 = vunpack.c.h.bf16 %v224
        %v234 = vunpack.c.l.bf16 %v225
        %v235 = vunpack.c.h.bf16 %v225
        %v236 = vunpack.c.l.bf16 %v226
        %v237 = vunpack.c.h.bf16 %v226
        %v238 = vunpack.c.l.bf16 %v227
        %v239 = vunpack.c.h.bf16 %v227
        %v240 = vld [vmem:[%s183] ss:$2 sm:$0x3f]
        %v242 = vlaneseq
        %v243 = vshrl.u32 %v242, 7
        %v244 = vsub.s32 0, %v243
        %v245 = vrot.slane %v240, %v244
        %v246 = vlaneseq
        %v247 = vshrl.u32 %v246, 7
        %v248 = vsub.s32 1, %v247
        %v249 = vrot.slane %v240, %v248
        %v250 = vlaneseq
        %v251 = vshrl.u32 %v250, 7
        %v252 = vsub.s32 2, %v251
        %v253 = vrot.slane %v240, %v252
        %v254 = vlaneseq
        %v255 = vshrl.u32 %v254, 7
        %v256 = vsub.s32 3, %v255
        %v257 = vrot.slane %v240, %v256
        %v258 = vlaneseq
        %v259 = vshrl.u32 %v258, 7
        %v260 = vsub.s32 4, %v259
        %v261 = vrot.slane %v240, %v260
        %v262 = vlaneseq
        %v263 = vshrl.u32 %v262, 7
        %v264 = vsub.s32 5, %v263
        %v265 = vrot.slane %v240, %v264
        %v272 = vmul.f32 %v245, %v228
        %v273 = vmul.f32 %v249, %v229
        %v274 = vmul.f32 %v253, %v230
        %v275 = vmul.f32 %v257, %v231
        %v276 = vmul.f32 %v261, %v232
        %v277 = vmul.f32 %v265, %v233
        %v278 = vmul.f32 %v245, %v234
        %v279 = vmul.f32 %v249, %v235
        %v280 = vmul.f32 %v253, %v236
        %v281 = vmul.f32 %v257, %v237
        %v282 = vmul.f32 %v261, %v238
        %v283 = vmul.f32 %v265, %v239
        %v284 = vadd.f32 %v272, %v273
        %v285 = vadd.f32 %v278, %v279
        %v286 = vadd.f32 %v284, %v274
        %v287 = vadd.f32 %v285, %v280
        %v288 = vadd.f32 %v286, %v275
        %v289 = vadd.f32 %v287, %v281
        %v290 = vadd.f32 %v288, %v276
        %v291 = vadd.f32 %v289, %v282
        %v292 = vadd.f32 %v290, %v277
        %v293 = vadd.f32 %v291, %v283
        %v294 = vadd.f32 %v292, 0.0
        %v295 = vadd.f32 %v293, 0.0
        %s296 = scalar_lea.vmem %s183, 1 [#allocation2]
        %v297 = vld [vmem:[%s296] ss:$2 sm:$0x3f]
        %v299 = vlaneseq
        %v300 = vshrl.u32 %v299, 7
        %v301 = vsub.s32 0, %v300
        %v302 = vrot.slane %v297, %v301
        %v303 = vlaneseq
        %v304 = vshrl.u32 %v303, 7
        %v305 = vsub.s32 1, %v304
        %v306 = vrot.slane %v297, %v305
        %v307 = vlaneseq
        %v308 = vshrl.u32 %v307, 7
        %v309 = vsub.s32 2, %v308
        %v310 = vrot.slane %v297, %v309
        %v311 = vlaneseq
        %v312 = vshrl.u32 %v311, 7
        %v313 = vsub.s32 3, %v312
        %v314 = vrot.slane %v297, %v313
        %v315 = vlaneseq
        %v316 = vshrl.u32 %v315, 7
        %v317 = vsub.s32 4, %v316
        %v318 = vrot.slane %v297, %v317
        %v319 = vlaneseq
        %v320 = vshrl.u32 %v319, 7
        %v321 = vsub.s32 5, %v320
        %v322 = vrot.slane %v297, %v321
        %v329 = vmul.f32 %v302, %v228
        %v330 = vmul.f32 %v306, %v229
        %v331 = vmul.f32 %v310, %v230
        %v332 = vmul.f32 %v314, %v231
        %v333 = vmul.f32 %v318, %v232
        %v334 = vmul.f32 %v322, %v233
        %v335 = vmul.f32 %v302, %v234
        %v336 = vmul.f32 %v306, %v235
        %v337 = vmul.f32 %v310, %v236
        %v338 = vmul.f32 %v314, %v237
        %v339 = vmul.f32 %v318, %v238
        %v340 = vmul.f32 %v322, %v239
        %v341 = vadd.f32 %v329, %v330
        %v342 = vadd.f32 %v335, %v336
        %v343 = vadd.f32 %v341, %v331
        %v344 = vadd.f32 %v342, %v337
        %v345 = vadd.f32 %v343, %v332
        %v346 = vadd.f32 %v344, %v338
        %v347 = vadd.f32 %v345, %v333
        %v348 = vadd.f32 %v346, %v339
        %v349 = vadd.f32 %v347, %v334
        %v350 = vadd.f32 %v348, %v340
        %v351 = vadd.f32 %v349, 0.0
        %v352 = vadd.f32 %v350, 0.0
        %v353 = vld [vmem:[%s192 + $0x18] sm:$0xff]
        %v354 = vld [vmem:[%s192 + $0x20] sm:$0xff]
        %v355 = vld [vmem:[%s192 + $0x28] sm:$0xff]
        %v356 = vld [vmem:[%s192 + $0x540] sm:$0x33]
        %v357 = vld [vmem:[%s192 + $0x548] sm:$0x33]
        %v358 = vld [vmem:[%s192 + $0x550] sm:$0x33]
        %v359 = vunpack.c.l.bf16 %v353
        %v360 = vunpack.c.h.bf16 %v353
        %v361 = vunpack.c.l.bf16 %v354
        %v362 = vunpack.c.h.bf16 %v354
        %v363 = vunpack.c.l.bf16 %v355
        %v364 = vunpack.c.h.bf16 %v355
        %v365 = vunpack.c.l.bf16 %v356
        %v366 = vunpack.c.h.bf16 %v356
        %v367 = vunpack.c.l.bf16 %v357
        %v368 = vunpack.c.h.bf16 %v357
        %v369 = vunpack.c.l.bf16 %v358
        %v370 = vunpack.c.h.bf16 %v358
        %s371 = scalar_lea.vmem %s183, 12 [#allocation2]
        %v372 = vld [vmem:[%s371] ss:$2 sm:$0x3f]
        %v374 = vlaneseq
        %v375 = vshrl.u32 %v374, 7
        %v376 = vsub.s32 0, %v375
        %v377 = vrot.slane %v372, %v376
        %v378 = vlaneseq
        %v379 = vshrl.u32 %v378, 7
        %v380 = vsub.s32 1, %v379
        %v381 = vrot.slane %v372, %v380
        %v382 = vlaneseq
        %v383 = vshrl.u32 %v382, 7
        %v384 = vsub.s32 2, %v383
        %v385 = vrot.slane %v372, %v384
        %v386 = vlaneseq
        %v387 = vshrl.u32 %v386, 7
        %v388 = vsub.s32 3, %v387
        %v389 = vrot.slane %v372, %v388
        %v390 = vlaneseq
        %v391 = vshrl.u32 %v390, 7
        %v392 = vsub.s32 4, %v391
        %v393 = vrot.slane %v372, %v392
        %v394 = vlaneseq
        %v395 = vshrl.u32 %v394, 7
        %v396 = vsub.s32 5, %v395
        %v397 = vrot.slane %v372, %v396
        %v404 = vmul.f32 %v377, %v359
        %v405 = vmul.f32 %v381, %v360
        %v406 = vmul.f32 %v385, %v361
        %v407 = vmul.f32 %v389, %v362
        %v408 = vmul.f32 %v393, %v363
        %v409 = vmul.f32 %v397, %v364
        %v410 = vmul.f32 %v377, %v365
        %v411 = vmul.f32 %v381, %v366
        %v412 = vmul.f32 %v385, %v367
        %v413 = vmul.f32 %v389, %v368
        %v414 = vmul.f32 %v393, %v369
        %v415 = vmul.f32 %v397, %v370
        %v416 = vadd.f32 %v404, %v405
        %v417 = vadd.f32 %v410, %v411
        %v418 = vadd.f32 %v416, %v406
        %v419 = vadd.f32 %v417, %v412
        %v420 = vadd.f32 %v418, %v407
        %v421 = vadd.f32 %v419, %v413
        %v422 = vadd.f32 %v420, %v408
        %v423 = vadd.f32 %v421, %v414
        %v424 = vadd.f32 %v422, %v409
        %v425 = vadd.f32 %v423, %v415
        %v426 = vadd.f32 %v294, %v424
        %v427 = vadd.f32 %v295, %v425
        %s428 = scalar_lea.vmem %s183, 13 [#allocation2]
        %v429 = vld [vmem:[%s428] ss:$2 sm:$0x3f]
        %v431 = vlaneseq
        %v432 = vshrl.u32 %v431, 7
        %v433 = vsub.s32 0, %v432
        %v434 = vrot.slane %v429, %v433
        %v435 = vlaneseq
        %v436 = vshrl.u32 %v435, 7
        %v437 = vsub.s32 1, %v436
        %v438 = vrot.slane %v429, %v437
        %v439 = vlaneseq
        %v440 = vshrl.u32 %v439, 7
        %v441 = vsub.s32 2, %v440
        %v442 = vrot.slane %v429, %v441
        %v443 = vlaneseq
        %v444 = vshrl.u32 %v443, 7
        %v445 = vsub.s32 3, %v444
        %v446 = vrot.slane %v429, %v445
        %v447 = vlaneseq
        %v448 = vshrl.u32 %v447, 7
        %v449 = vsub.s32 4, %v448
        %v450 = vrot.slane %v429, %v449
        %v451 = vlaneseq
        %v452 = vshrl.u32 %v451, 7
        %v453 = vsub.s32 5, %v452
        %v454 = vrot.slane %v429, %v453
        %v461 = vmul.f32 %v434, %v359
        %v462 = vmul.f32 %v438, %v360
        %v463 = vmul.f32 %v442, %v361
        %v464 = vmul.f32 %v446, %v362
        %v465 = vmul.f32 %v450, %v363
        %v466 = vmul.f32 %v454, %v364
        %v467 = vmul.f32 %v434, %v365
        %v468 = vmul.f32 %v438, %v366
        %v469 = vmul.f32 %v442, %v367
        %v470 = vmul.f32 %v446, %v368
        %v471 = vmul.f32 %v450, %v369
        %v472 = vmul.f32 %v454, %v370
        %v473 = vadd.f32 %v461, %v462
        %v474 = vadd.f32 %v467, %v468
        %v475 = vadd.f32 %v473, %v463
        %v476 = vadd.f32 %v474, %v469
        %v477 = vadd.f32 %v475, %v464
        %v478 = vadd.f32 %v476, %v470
        %v479 = vadd.f32 %v477, %v465
        %v480 = vadd.f32 %v478, %v471
        %v481 = vadd.f32 %v479, %v466
        %v482 = vadd.f32 %v480, %v472
        %v483 = vadd.f32 %v351, %v481
        %v484 = vadd.f32 %v352, %v482
        %v485 = vld [vmem:[%s192 + $0x30] sm:$0xff]
        %v486 = vld [vmem:[%s192 + $0x38] sm:$0xff]
        %v487 = vld [vmem:[%s192 + $0x40] sm:$0xff]
        %v488 = vld [vmem:[%s192 + $0x558] sm:$0x33]
        %v489 = vld [vmem:[%s192 + $0x560] sm:$0x33]
        %v490 = vld [vmem:[%s192 + $0x568] sm:$0x33]
        %v491 = vunpack.c.l.bf16 %v485
        %v492 = vunpack.c.h.bf16 %v485
        %v493 = vunpack.c.l.bf16 %v486
        %v494 = vunpack.c.h.bf16 %v486
        %v495 = vunpack.c.l.bf16 %v487
        %v496 = vunpack.c.h.bf16 %v487
        %v497 = vunpack.c.l.bf16 %v488
        %v498 = vunpack.c.h.bf16 %v488
        %v499 = vunpack.c.l.bf16 %v489
        %v500 = vunpack.c.h.bf16 %v489
        %v501 = vunpack.c.l.bf16 %v490
        %v502 = vunpack.c.h.bf16 %v490
        %s503 = scalar_lea.vmem %s183, 24 [#allocation2]
        %v504 = vld [vmem:[%s503] ss:$2 sm:$0x3f]
        %v506 = vlaneseq
        %v507 = vshrl.u32 %v506, 7
        %v508 = vsub.s32 0, %v507
        %v509 = vrot.slane %v504, %v508
        %v510 = vlaneseq
        %v511 = vshrl.u32 %v510, 7
        %v512 = vsub.s32 1, %v511
        %v513 = vrot.slane %v504, %v512
        %v514 = vlaneseq
        %v515 = vshrl.u32 %v514, 7
        %v516 = vsub.s32 2, %v515
        %v517 = vrot.slane %v504, %v516
        %v518 = vlaneseq
        %v519 = vshrl.u32 %v518, 7
        %v520 = vsub.s32 3, %v519
        %v521 = vrot.slane %v504, %v520
        %v522 = vlaneseq
        %v523 = vshrl.u32 %v522, 7
        %v524 = vsub.s32 4, %v523
        %v525 = vrot.slane %v504, %v524
        %v526 = vlaneseq
        %v527 = vshrl.u32 %v526, 7
        %v528 = vsub.s32 5, %v527
        %v529 = vrot.slane %v504, %v528
        %v536 = vmul.f32 %v509, %v491
        %v537 = vmul.f32 %v513, %v492
        %v538 = vmul.f32 %v517, %v493
        %v539 = vmul.f32 %v521, %v494
        %v540 = vmul.f32 %v525, %v495
        %v541 = vmul.f32 %v529, %v496
        %v542 = vmul.f32 %v509, %v497
        %v543 = vmul.f32 %v513, %v498
        %v544 = vmul.f32 %v517, %v499
        %v545 = vmul.f32 %v521, %v500
        %v546 = vmul.f32 %v525, %v501
        %v547 = vmul.f32 %v529, %v502
        %v548 = vadd.f32 %v536, %v537
        %v549 = vadd.f32 %v542, %v543
        %v550 = vadd.f32 %v548, %v538
        %v551 = vadd.f32 %v549, %v544
        %v552 = vadd.f32 %v550, %v539
        %v553 = vadd.f32 %v551, %v545
        %v554 = vadd.f32 %v552, %v540
        %v555 = vadd.f32 %v553, %v546
        %v556 = vadd.f32 %v554, %v541
        %v557 = vadd.f32 %v555, %v547
        %v558 = vadd.f32 %v426, %v556
        %v559 = vadd.f32 %v427, %v557
        %s560 = scalar_lea.vmem %s183, 25 [#allocation2]
        %v561 = vld [vmem:[%s560] ss:$2 sm:$0x3f]
        %v563 = vlaneseq
        %v564 = vshrl.u32 %v563, 7
        %v565 = vsub.s32 0, %v564
        %v566 = vrot.slane %v561, %v565
        %v567 = vlaneseq
        %v568 = vshrl.u32 %v567, 7
        %v569 = vsub.s32 1, %v568
        %v570 = vrot.slane %v561, %v569
        %v571 = vlaneseq
        %v572 = vshrl.u32 %v571, 7
        %v573 = vsub.s32 2, %v572
        %v574 = vrot.slane %v561, %v573
        %v575 = vlaneseq
        %v576 = vshrl.u32 %v575, 7
        %v577 = vsub.s32 3, %v576
        %v578 = vrot.slane %v561, %v577
        %v579 = vlaneseq
        %v580 = vshrl.u32 %v579, 7
        %v581 = vsub.s32 4, %v580
        %v582 = vrot.slane %v561, %v581
        %v583 = vlaneseq
        %v584 = vshrl.u32 %v583, 7
        %v585 = vsub.s32 5, %v584
        %v586 = vrot.slane %v561, %v585
        %v593 = vmul.f32 %v566, %v491
        %v594 = vmul.f32 %v570, %v492
        %v595 = vmul.f32 %v574, %v493
        %v596 = vmul.f32 %v578, %v494
        %v597 = vmul.f32 %v582, %v495
        %v598 = vmul.f32 %v586, %v496
        %v599 = vmul.f32 %v566, %v497
        %v600 = vmul.f32 %v570, %v498
        %v601 = vmul.f32 %v574, %v499
        %v602 = vmul.f32 %v578, %v500
        %v603 = vmul.f32 %v582, %v501
        %v604 = vmul.f32 %v586, %v502
        %v605 = vadd.f32 %v593, %v594
        %v606 = vadd.f32 %v599, %v600
        %v607 = vadd.f32 %v605, %v595
        %v608 = vadd.f32 %v606, %v601
        %v609 = vadd.f32 %v607, %v596
        %v610 = vadd.f32 %v608, %v602
        %v611 = vadd.f32 %v609, %v597
        %v612 = vadd.f32 %v610, %v603
        %v613 = vadd.f32 %v611, %v598
        %v614 = vadd.f32 %v612, %v604
        %v615 = vadd.f32 %v483, %v613
        %v616 = vadd.f32 %v484, %v614
        %v617 = vld [vmem:[%s192 + $0x48] sm:$0xff]
        %v618 = vld [vmem:[%s192 + $0x50] sm:$0xff]
        %v619 = vld [vmem:[%s192 + $0x58] sm:$0xff]
        %v620 = vld [vmem:[%s192 + $0x570] sm:$0x33]
        %v621 = vld [vmem:[%s192 + $0x578] sm:$0x33]
        %v622 = vld [vmem:[%s192 + $0x580] sm:$0x33]
        %v623 = vunpack.c.l.bf16 %v617
        %v624 = vunpack.c.h.bf16 %v617
        %v625 = vunpack.c.l.bf16 %v618
        %v626 = vunpack.c.h.bf16 %v618
        %v627 = vunpack.c.l.bf16 %v619
        %v628 = vunpack.c.h.bf16 %v619
        %v629 = vunpack.c.l.bf16 %v620
        %v630 = vunpack.c.h.bf16 %v620
        %v631 = vunpack.c.l.bf16 %v621
        %v632 = vunpack.c.h.bf16 %v621
        %v633 = vunpack.c.l.bf16 %v622
        %v634 = vunpack.c.h.bf16 %v622
        %s635 = scalar_lea.vmem %s183, 36 [#allocation2]
        %v636 = vld [vmem:[%s635] ss:$2 sm:$0x3f]
        %v638 = vlaneseq
        %v639 = vshrl.u32 %v638, 7
        %v640 = vsub.s32 0, %v639
        %v641 = vrot.slane %v636, %v640
        %v642 = vlaneseq
        %v643 = vshrl.u32 %v642, 7
        %v644 = vsub.s32 1, %v643
        %v645 = vrot.slane %v636, %v644
        %v646 = vlaneseq
        %v647 = vshrl.u32 %v646, 7
        %v648 = vsub.s32 2, %v647
        %v649 = vrot.slane %v636, %v648
        %v650 = vlaneseq
        %v651 = vshrl.u32 %v650, 7
        %v652 = vsub.s32 3, %v651
        %v653 = vrot.slane %v636, %v652
        %v654 = vlaneseq
        %v655 = vshrl.u32 %v654, 7
        %v656 = vsub.s32 4, %v655
        %v657 = vrot.slane %v636, %v656
        %v658 = vlaneseq
        %v659 = vshrl.u32 %v658, 7
        %v660 = vsub.s32 5, %v659
        %v661 = vrot.slane %v636, %v660
        %v668 = vmul.f32 %v641, %v623
        %v669 = vmul.f32 %v645, %v624
        %v670 = vmul.f32 %v649, %v625
        %v671 = vmul.f32 %v653, %v626
        %v672 = vmul.f32 %v657, %v627
        %v673 = vmul.f32 %v661, %v628
        %v674 = vmul.f32 %v641, %v629
        %v675 = vmul.f32 %v645, %v630
        %v676 = vmul.f32 %v649, %v631
        %v677 = vmul.f32 %v653, %v632
        %v678 = vmul.f32 %v657, %v633
        %v679 = vmul.f32 %v661, %v634
        %v680 = vadd.f32 %v668, %v669
        %v681 = vadd.f32 %v674, %v675
        %v682 = vadd.f32 %v680, %v670
        %v683 = vadd.f32 %v681, %v676
        %v684 = vadd.f32 %v682, %v671
        %v685 = vadd.f32 %v683, %v677
        %v686 = vadd.f32 %v684, %v672
        %v687 = vadd.f32 %v685, %v678
        %v688 = vadd.f32 %v686, %v673
        %v689 = vadd.f32 %v687, %v679
        %v690 = vadd.f32 %v558, %v688
        %v691 = vadd.f32 %v559, %v689
        %s692 = scalar_lea.vmem %s183, 37 [#allocation2]
        %v693 = vld [vmem:[%s692] ss:$2 sm:$0x3f]
        %v695 = vlaneseq
        %v696 = vshrl.u32 %v695, 7
        %v697 = vsub.s32 0, %v696
        %v698 = vrot.slane %v693, %v697
        %v699 = vlaneseq
        %v700 = vshrl.u32 %v699, 7
        %v701 = vsub.s32 1, %v700
        %v702 = vrot.slane %v693, %v701
        %v703 = vlaneseq
        %v704 = vshrl.u32 %v703, 7
        %v705 = vsub.s32 2, %v704
        %v706 = vrot.slane %v693, %v705
        %v707 = vlaneseq
        %v708 = vshrl.u32 %v707, 7
        %v709 = vsub.s32 3, %v708
        %v710 = vrot.slane %v693, %v709
        %v711 = vlaneseq
        %v712 = vshrl.u32 %v711, 7
        %v713 = vsub.s32 4, %v712
        %v714 = vrot.slane %v693, %v713
        %v715 = vlaneseq
        %v716 = vshrl.u32 %v715, 7
        %v717 = vsub.s32 5, %v716
        %v718 = vrot.slane %v693, %v717
        %v725 = vmul.f32 %v698, %v623
        %v726 = vmul.f32 %v702, %v624
        %v727 = vmul.f32 %v706, %v625
        %v728 = vmul.f32 %v710, %v626
        %v729 = vmul.f32 %v714, %v627
        %v730 = vmul.f32 %v718, %v628
        %v731 = vmul.f32 %v698, %v629
        %v732 = vmul.f32 %v702, %v630
        %v733 = vmul.f32 %v706, %v631
        %v734 = vmul.f32 %v710, %v632
        %v735 = vmul.f32 %v714, %v633
        %v736 = vmul.f32 %v718, %v634
        %v737 = vadd.f32 %v725, %v726
        %v738 = vadd.f32 %v731, %v732
        %v739 = vadd.f32 %v737, %v727
        %v740 = vadd.f32 %v738, %v733
        %v741 = vadd.f32 %v739, %v728
        %v742 = vadd.f32 %v740, %v734
        %v743 = vadd.f32 %v741, %v729
        %v744 = vadd.f32 %v742, %v735
        %v745 = vadd.f32 %v743, %v730
        %v746 = vadd.f32 %v744, %v736
        %v747 = vadd.f32 %v615, %v745
        %v748 = vadd.f32 %v616, %v746
        %v749 = vld [vmem:[%s192 + $0x60] sm:$0xff]
        %v750 = vld [vmem:[%s192 + $0x68] sm:$0xff]
        %v751 = vld [vmem:[%s192 + $0x70] sm:$0xff]
        %v752 = vld [vmem:[%s192 + $0x588] sm:$0x33]
        %v753 = vld [vmem:[%s192 + $0x590] sm:$0x33]
        %v754 = vld [vmem:[%s192 + $0x598] sm:$0x33]
        %v755 = vunpack.c.l.bf16 %v749
        %v756 = vunpack.c.h.bf16 %v749
        %v757 = vunpack.c.l.bf16 %v750
        %v758 = vunpack.c.h.bf16 %v750
        %v759 = vunpack.c.l.bf16 %v751
        %v760 = vunpack.c.h.bf16 %v751
        %v761 = vunpack.c.l.bf16 %v752
        %v762 = vunpack.c.h.bf16 %v752
        %v763 = vunpack.c.l.bf16 %v753
        %v764 = vunpack.c.h.bf16 %v753
        %v765 = vunpack.c.l.bf16 %v754
        %v766 = vunpack.c.h.bf16 %v754
        %s767 = scalar_lea.vmem %s183, 48 [#allocation2]
        %v768 = vld [vmem:[%s767] ss:$2 sm:$0x3f]
        %v770 = vlaneseq
        %v771 = vshrl.u32 %v770, 7
        %v772 = vsub.s32 0, %v771
        %v773 = vrot.slane %v768, %v772
        %v774 = vlaneseq
        %v775 = vshrl.u32 %v774, 7
        %v776 = vsub.s32 1, %v775
        %v777 = vrot.slane %v768, %v776
        %v778 = vlaneseq
        %v779 = vshrl.u32 %v778, 7
        %v780 = vsub.s32 2, %v779
        %v781 = vrot.slane %v768, %v780
        %v782 = vlaneseq
        %v783 = vshrl.u32 %v782, 7
        %v784 = vsub.s32 3, %v783
        %v785 = vrot.slane %v768, %v784
        %v786 = vlaneseq
        %v787 = vshrl.u32 %v786, 7
        %v788 = vsub.s32 4, %v787
        %v789 = vrot.slane %v768, %v788
        %v790 = vlaneseq
        %v791 = vshrl.u32 %v790, 7
        %v792 = vsub.s32 5, %v791
        %v793 = vrot.slane %v768, %v792
        %v800 = vmul.f32 %v773, %v755
        %v801 = vmul.f32 %v777, %v756
        %v802 = vmul.f32 %v781, %v757
        %v803 = vmul.f32 %v785, %v758
        %v804 = vmul.f32 %v789, %v759
        %v805 = vmul.f32 %v793, %v760
        %v806 = vmul.f32 %v773, %v761
        %v807 = vmul.f32 %v777, %v762
        %v808 = vmul.f32 %v781, %v763
        %v809 = vmul.f32 %v785, %v764
        %v810 = vmul.f32 %v789, %v765
        %v811 = vmul.f32 %v793, %v766
        %v812 = vadd.f32 %v800, %v801
        %v813 = vadd.f32 %v806, %v807
        %v814 = vadd.f32 %v812, %v802
        %v815 = vadd.f32 %v813, %v808
        %v816 = vadd.f32 %v814, %v803
        %v817 = vadd.f32 %v815, %v809
        %v818 = vadd.f32 %v816, %v804
        %v819 = vadd.f32 %v817, %v810
        %v820 = vadd.f32 %v818, %v805
        %v821 = vadd.f32 %v819, %v811
        %v822 = vadd.f32 %v690, %v820
        %v823 = vadd.f32 %v691, %v821
        %s824 = scalar_lea.vmem %s183, 49 [#allocation2]
        %v825 = vld [vmem:[%s824] ss:$2 sm:$0x3f]
        %v827 = vlaneseq
        %v828 = vshrl.u32 %v827, 7
        %v829 = vsub.s32 0, %v828
        %v830 = vrot.slane %v825, %v829
        %v831 = vlaneseq
        %v832 = vshrl.u32 %v831, 7
        %v833 = vsub.s32 1, %v832
        %v834 = vrot.slane %v825, %v833
        %v835 = vlaneseq
        %v836 = vshrl.u32 %v835, 7
        %v837 = vsub.s32 2, %v836
        %v838 = vrot.slane %v825, %v837
        %v839 = vlaneseq
        %v840 = vshrl.u32 %v839, 7
        %v841 = vsub.s32 3, %v840
        %v842 = vrot.slane %v825, %v841
        %v843 = vlaneseq
        %v844 = vshrl.u32 %v843, 7
        %v845 = vsub.s32 4, %v844
        %v846 = vrot.slane %v825, %v845
        %v847 = vlaneseq
        %v848 = vshrl.u32 %v847, 7
        %v849 = vsub.s32 5, %v848
        %v850 = vrot.slane %v825, %v849
        %v857 = vmul.f32 %v830, %v755
        %v858 = vmul.f32 %v834, %v756
        %v859 = vmul.f32 %v838, %v757
        %v860 = vmul.f32 %v842, %v758
        %v861 = vmul.f32 %v846, %v759
        %v862 = vmul.f32 %v850, %v760
        %v863 = vmul.f32 %v830, %v761
        %v864 = vmul.f32 %v834, %v762
        %v865 = vmul.f32 %v838, %v763
        %v866 = vmul.f32 %v842, %v764
        %v867 = vmul.f32 %v846, %v765
        %v868 = vmul.f32 %v850, %v766
        %v869 = vadd.f32 %v857, %v858
        %v870 = vadd.f32 %v863, %v864
        %v871 = vadd.f32 %v869, %v859
        %v872 = vadd.f32 %v870, %v865
        %v873 = vadd.f32 %v871, %v860
        %v874 = vadd.f32 %v872, %v866
        %v875 = vadd.f32 %v873, %v861
        %v876 = vadd.f32 %v874, %v867
        %v877 = vadd.f32 %v875, %v862
        %v878 = vadd.f32 %v876, %v868
        %v879 = vadd.f32 %v747, %v877
        %v880 = vadd.f32 %v748, %v878
        %v881 = vld [vmem:[%s192 + $0x78] sm:$0xff]
        %v882 = vld [vmem:[%s192 + $0x80] sm:$0xff]
        %v883 = vld [vmem:[%s192 + $0x88] sm:$0xff]
        %v884 = vld [vmem:[%s192 + $0x5a0] sm:$0x33]
        %v885 = vld [vmem:[%s192 + $0x5a8] sm:$0x33]
        %v886 = vld [vmem:[%s192 + $0x5b0] sm:$0x33]
        %v887 = vunpack.c.l.bf16 %v881
        %v888 = vunpack.c.h.bf16 %v881
        %v889 = vunpack.c.l.bf16 %v882
        %v890 = vunpack.c.h.bf16 %v882
        %v891 = vunpack.c.l.bf16 %v883
        %v892 = vunpack.c.h.bf16 %v883
        %v893 = vunpack.c.l.bf16 %v884
        %v894 = vunpack.c.h.bf16 %v884
        %v895 = vunpack.c.l.bf16 %v885
        %v896 = vunpack.c.h.bf16 %v885
        %v897 = vunpack.c.l.bf16 %v886
        %v898 = vunpack.c.h.bf16 %v886
        %s899 = scalar_lea.vmem %s183, 60 [#allocation2]
        %v900 = vld [vmem:[%s899] ss:$2 sm:$0x3f]
        %v902 = vlaneseq
        %v903 = vshrl.u32 %v902, 7
        %v904 = vsub.s32 0, %v903
        %v905 = vrot.slane %v900, %v904
        %v906 = vlaneseq
        %v907 = vshrl.u32 %v906, 7
        %v908 = vsub.s32 1, %v907
        %v909 = vrot.slane %v900, %v908
        %v910 = vlaneseq
        %v911 = vshrl.u32 %v910, 7
        %v912 = vsub.s32 2, %v911
        %v913 = vrot.slane %v900, %v912
        %v914 = vlaneseq
        %v915 = vshrl.u32 %v914, 7
        %v916 = vsub.s32 3, %v915
        %v917 = vrot.slane %v900, %v916
        %v918 = vlaneseq
        %v919 = vshrl.u32 %v918, 7
        %v920 = vsub.s32 4, %v919
        %v921 = vrot.slane %v900, %v920
        %v922 = vlaneseq
        %v923 = vshrl.u32 %v922, 7
        %v924 = vsub.s32 5, %v923
        %v925 = vrot.slane %v900, %v924
        %v932 = vmul.f32 %v905, %v887
        %v933 = vmul.f32 %v909, %v888
        %v934 = vmul.f32 %v913, %v889
        %v935 = vmul.f32 %v917, %v890
        %v936 = vmul.f32 %v921, %v891
        %v937 = vmul.f32 %v925, %v892
        %v938 = vmul.f32 %v905, %v893
        %v939 = vmul.f32 %v909, %v894
        %v940 = vmul.f32 %v913, %v895
        %v941 = vmul.f32 %v917, %v896
        %v942 = vmul.f32 %v921, %v897
        %v943 = vmul.f32 %v925, %v898
        %v944 = vadd.f32 %v932, %v933
        %v945 = vadd.f32 %v938, %v939
        %v946 = vadd.f32 %v944, %v934
        %v947 = vadd.f32 %v945, %v940
        %v948 = vadd.f32 %v946, %v935
        %v949 = vadd.f32 %v947, %v941
        %v950 = vadd.f32 %v948, %v936
        %v951 = vadd.f32 %v949, %v942
        %v952 = vadd.f32 %v950, %v937
        %v953 = vadd.f32 %v951, %v943
        %v954 = vadd.f32 %v822, %v952
        %v955 = vadd.f32 %v823, %v953
        %s956 = scalar_lea.vmem %s183, 61 [#allocation2]
        %v957 = vld [vmem:[%s956] ss:$2 sm:$0x3f]
        %v959 = vlaneseq
        %v960 = vshrl.u32 %v959, 7
        %v961 = vsub.s32 0, %v960
        %v962 = vrot.slane %v957, %v961
        %v963 = vlaneseq
        %v964 = vshrl.u32 %v963, 7
        %v965 = vsub.s32 1, %v964
        %v966 = vrot.slane %v957, %v965
        %v967 = vlaneseq
        %v968 = vshrl.u32 %v967, 7
        %v969 = vsub.s32 2, %v968
        %v970 = vrot.slane %v957, %v969
        %v971 = vlaneseq
        %v972 = vshrl.u32 %v971, 7
        %v973 = vsub.s32 3, %v972
        %v974 = vrot.slane %v957, %v973
        %v975 = vlaneseq
        %v976 = vshrl.u32 %v975, 7
        %v977 = vsub.s32 4, %v976
        %v978 = vrot.slane %v957, %v977
        %v979 = vlaneseq
        %v980 = vshrl.u32 %v979, 7
        %v981 = vsub.s32 5, %v980
        %v982 = vrot.slane %v957, %v981
        %v989 = vmul.f32 %v962, %v887
        %v990 = vmul.f32 %v966, %v888
        %v991 = vmul.f32 %v970, %v889
        %v992 = vmul.f32 %v974, %v890
        %v993 = vmul.f32 %v978, %v891
        %v994 = vmul.f32 %v982, %v892
        %v995 = vmul.f32 %v962, %v893
        %v996 = vmul.f32 %v966, %v894
        %v997 = vmul.f32 %v970, %v895
        %v998 = vmul.f32 %v974, %v896
        %v999 = vmul.f32 %v978, %v897
        %v1000 = vmul.f32 %v982, %v898
        %v1001 = vadd.f32 %v989, %v990
        %v1002 = vadd.f32 %v995, %v996
        %v1003 = vadd.f32 %v1001, %v991
        %v1004 = vadd.f32 %v1002, %v997
        %v1005 = vadd.f32 %v1003, %v992
        %v1006 = vadd.f32 %v1004, %v998
        %v1007 = vadd.f32 %v1005, %v993
        %v1008 = vadd.f32 %v1006, %v999
        %v1009 = vadd.f32 %v1007, %v994
        %v1010 = vadd.f32 %v1008, %v1000
        %v1011 = vadd.f32 %v879, %v1009
        %v1012 = vadd.f32 %v880, %v1010
        %v1013 = vld [vmem:[%s192 + $0x90] sm:$0xff]
        %v1014 = vld [vmem:[%s192 + $0x98] sm:$0xff]
        %v1015 = vld [vmem:[%s192 + $0xa0] sm:$0xff]
        %v1016 = vld [vmem:[%s192 + $0x5b8] sm:$0x33]
        %v1017 = vld [vmem:[%s192 + $0x5c0] sm:$0x33]
        %v1018 = vld [vmem:[%s192 + $0x5c8] sm:$0x33]
        %v1019 = vunpack.c.l.bf16 %v1013
        %v1020 = vunpack.c.h.bf16 %v1013
        %v1021 = vunpack.c.l.bf16 %v1014
        %v1022 = vunpack.c.h.bf16 %v1014
        %v1023 = vunpack.c.l.bf16 %v1015
        %v1024 = vunpack.c.h.bf16 %v1015
        %v1025 = vunpack.c.l.bf16 %v1016
        %v1026 = vunpack.c.h.bf16 %v1016
        %v1027 = vunpack.c.l.bf16 %v1017
        %v1028 = vunpack.c.h.bf16 %v1017
        %v1029 = vunpack.c.l.bf16 %v1018
        %v1030 = vunpack.c.h.bf16 %v1018
        %s1031 = scalar_lea.vmem %s183, 72 [#allocation2]
        %v1032 = vld [vmem:[%s1031] ss:$2 sm:$0x3f]
        %v1034 = vlaneseq
        %v1035 = vshrl.u32 %v1034, 7
        %v1036 = vsub.s32 0, %v1035
        %v1037 = vrot.slane %v1032, %v1036
        %v1038 = vlaneseq
        %v1039 = vshrl.u32 %v1038, 7
        %v1040 = vsub.s32 1, %v1039
        %v1041 = vrot.slane %v1032, %v1040
        %v1042 = vlaneseq
        %v1043 = vshrl.u32 %v1042, 7
        %v1044 = vsub.s32 2, %v1043
        %v1045 = vrot.slane %v1032, %v1044
        %v1046 = vlaneseq
        %v1047 = vshrl.u32 %v1046, 7
        %v1048 = vsub.s32 3, %v1047
        %v1049 = vrot.slane %v1032, %v1048
        %v1050 = vlaneseq
        %v1051 = vshrl.u32 %v1050, 7
        %v1052 = vsub.s32 4, %v1051
        %v1053 = vrot.slane %v1032, %v1052
        %v1054 = vlaneseq
        %v1055 = vshrl.u32 %v1054, 7
        %v1056 = vsub.s32 5, %v1055
        %v1057 = vrot.slane %v1032, %v1056
        %v1064 = vmul.f32 %v1037, %v1019
        %v1065 = vmul.f32 %v1041, %v1020
        %v1066 = vmul.f32 %v1045, %v1021
        %v1067 = vmul.f32 %v1049, %v1022
        %v1068 = vmul.f32 %v1053, %v1023
        %v1069 = vmul.f32 %v1057, %v1024
        %v1070 = vmul.f32 %v1037, %v1025
        %v1071 = vmul.f32 %v1041, %v1026
        %v1072 = vmul.f32 %v1045, %v1027
        %v1073 = vmul.f32 %v1049, %v1028
        %v1074 = vmul.f32 %v1053, %v1029
        %v1075 = vmul.f32 %v1057, %v1030
        %v1076 = vadd.f32 %v1064, %v1065
        %v1077 = vadd.f32 %v1070, %v1071
        %v1078 = vadd.f32 %v1076, %v1066
        %v1079 = vadd.f32 %v1077, %v1072
        %v1080 = vadd.f32 %v1078, %v1067
        %v1081 = vadd.f32 %v1079, %v1073
        %v1082 = vadd.f32 %v1080, %v1068
        %v1083 = vadd.f32 %v1081, %v1074
        %v1084 = vadd.f32 %v1082, %v1069
        %v1085 = vadd.f32 %v1083, %v1075
        %v1086 = vadd.f32 %v954, %v1084
        %v1087 = vadd.f32 %v955, %v1085
        %s1088 = scalar_lea.vmem %s183, 73 [#allocation2]
        %v1089 = vld [vmem:[%s1088] ss:$2 sm:$0x3f]
        %v1091 = vlaneseq
        %v1092 = vshrl.u32 %v1091, 7
        %v1093 = vsub.s32 0, %v1092
        %v1094 = vrot.slane %v1089, %v1093
        %v1095 = vlaneseq
        %v1096 = vshrl.u32 %v1095, 7
        %v1097 = vsub.s32 1, %v1096
        %v1098 = vrot.slane %v1089, %v1097
        %v1099 = vlaneseq
        %v1100 = vshrl.u32 %v1099, 7
        %v1101 = vsub.s32 2, %v1100
        %v1102 = vrot.slane %v1089, %v1101
        %v1103 = vlaneseq
        %v1104 = vshrl.u32 %v1103, 7
        %v1105 = vsub.s32 3, %v1104
        %v1106 = vrot.slane %v1089, %v1105
        %v1107 = vlaneseq
        %v1108 = vshrl.u32 %v1107, 7
        %v1109 = vsub.s32 4, %v1108
        %v1110 = vrot.slane %v1089, %v1109
        %v1111 = vlaneseq
        %v1112 = vshrl.u32 %v1111, 7
        %v1113 = vsub.s32 5, %v1112
        %v1114 = vrot.slane %v1089, %v1113
        %v1121 = vmul.f32 %v1094, %v1019
        %v1122 = vmul.f32 %v1098, %v1020
        %v1123 = vmul.f32 %v1102, %v1021
        %v1124 = vmul.f32 %v1106, %v1022
        %v1125 = vmul.f32 %v1110, %v1023
        %v1126 = vmul.f32 %v1114, %v1024
        %v1127 = vmul.f32 %v1094, %v1025
        %v1128 = vmul.f32 %v1098, %v1026
        %v1129 = vmul.f32 %v1102, %v1027
        %v1130 = vmul.f32 %v1106, %v1028
        %v1131 = vmul.f32 %v1110, %v1029
        %v1132 = vmul.f32 %v1114, %v1030
        %v1133 = vadd.f32 %v1121, %v1122
        %v1134 = vadd.f32 %v1127, %v1128
        %v1135 = vadd.f32 %v1133, %v1123
        %v1136 = vadd.f32 %v1134, %v1129
        %v1137 = vadd.f32 %v1135, %v1124
        %v1138 = vadd.f32 %v1136, %v1130
        %v1139 = vadd.f32 %v1137, %v1125
        %v1140 = vadd.f32 %v1138, %v1131
        %v1141 = vadd.f32 %v1139, %v1126
        %v1142 = vadd.f32 %v1140, %v1132
        %v1143 = vadd.f32 %v1011, %v1141
        %v1144 = vadd.f32 %v1012, %v1142
        %v1145 = vld [vmem:[%s192 + $0xa8] sm:$0xff]
        %v1146 = vld [vmem:[%s192 + $0xb0] sm:$0xff]
        %v1147 = vld [vmem:[%s192 + $0xb8] sm:$0xff]
        %v1148 = vld [vmem:[%s192 + $0x5d0] sm:$0x33]
        %v1149 = vld [vmem:[%s192 + $0x5d8] sm:$0x33]
        %v1150 = vld [vmem:[%s192 + $0x5e0] sm:$0x33]
        %v1151 = vunpack.c.l.bf16 %v1145
        %v1152 = vunpack.c.h.bf16 %v1145
        %v1153 = vunpack.c.l.bf16 %v1146
        %v1154 = vunpack.c.h.bf16 %v1146
        %v1155 = vunpack.c.l.bf16 %v1147
        %v1156 = vunpack.c.h.bf16 %v1147
        %v1157 = vunpack.c.l.bf16 %v1148
        %v1158 = vunpack.c.h.bf16 %v1148
        %v1159 = vunpack.c.l.bf16 %v1149
        %v1160 = vunpack.c.h.bf16 %v1149
        %v1161 = vunpack.c.l.bf16 %v1150
        %v1162 = vunpack.c.h.bf16 %v1150
        %s1163 = scalar_lea.vmem %s183, 84 [#allocation2]
        %v1164 = vld [vmem:[%s1163] ss:$2 sm:$0x3f]
        %v1166 = vlaneseq
        %v1167 = vshrl.u32 %v1166, 7
        %v1168 = vsub.s32 0, %v1167
        %v1169 = vrot.slane %v1164, %v1168
        %v1170 = vlaneseq
        %v1171 = vshrl.u32 %v1170, 7
        %v1172 = vsub.s32 1, %v1171
        %v1173 = vrot.slane %v1164, %v1172
        %v1174 = vlaneseq
        %v1175 = vshrl.u32 %v1174, 7
        %v1176 = vsub.s32 2, %v1175
        %v1177 = vrot.slane %v1164, %v1176
        %v1178 = vlaneseq
        %v1179 = vshrl.u32 %v1178, 7
        %v1180 = vsub.s32 3, %v1179
        %v1181 = vrot.slane %v1164, %v1180
        %v1182 = vlaneseq
        %v1183 = vshrl.u32 %v1182, 7
        %v1184 = vsub.s32 4, %v1183
        %v1185 = vrot.slane %v1164, %v1184
        %v1186 = vlaneseq
        %v1187 = vshrl.u32 %v1186, 7
        %v1188 = vsub.s32 5, %v1187
        %v1189 = vrot.slane %v1164, %v1188
        %v1196 = vmul.f32 %v1169, %v1151
        %v1197 = vmul.f32 %v1173, %v1152
        %v1198 = vmul.f32 %v1177, %v1153
        %v1199 = vmul.f32 %v1181, %v1154
        %v1200 = vmul.f32 %v1185, %v1155
        %v1201 = vmul.f32 %v1189, %v1156
        %v1202 = vmul.f32 %v1169, %v1157
        %v1203 = vmul.f32 %v1173, %v1158
        %v1204 = vmul.f32 %v1177, %v1159
        %v1205 = vmul.f32 %v1181, %v1160
        %v1206 = vmul.f32 %v1185, %v1161
        %v1207 = vmul.f32 %v1189, %v1162
        %v1208 = vadd.f32 %v1196, %v1197
        %v1209 = vadd.f32 %v1202, %v1203
        %v1210 = vadd.f32 %v1208, %v1198
        %v1211 = vadd.f32 %v1209, %v1204
        %v1212 = vadd.f32 %v1210, %v1199
        %v1213 = vadd.f32 %v1211, %v1205
        %v1214 = vadd.f32 %v1212, %v1200
        %v1215 = vadd.f32 %v1213, %v1206
        %v1216 = vadd.f32 %v1214, %v1201
        %v1217 = vadd.f32 %v1215, %v1207
        %v1218 = vadd.f32 %v1086, %v1216
        %v1219 = vadd.f32 %v1087, %v1217
        %s1220 = scalar_lea.vmem %s183, 85 [#allocation2]
        %v1221 = vld [vmem:[%s1220] ss:$2 sm:$0x3f]
        %v1223 = vlaneseq
        %v1224 = vshrl.u32 %v1223, 7
        %v1225 = vsub.s32 0, %v1224
        %v1226 = vrot.slane %v1221, %v1225
        %v1227 = vlaneseq
        %v1228 = vshrl.u32 %v1227, 7
        %v1229 = vsub.s32 1, %v1228
        %v1230 = vrot.slane %v1221, %v1229
        %v1231 = vlaneseq
        %v1232 = vshrl.u32 %v1231, 7
        %v1233 = vsub.s32 2, %v1232
        %v1234 = vrot.slane %v1221, %v1233
        %v1235 = vlaneseq
        %v1236 = vshrl.u32 %v1235, 7
        %v1237 = vsub.s32 3, %v1236
        %v1238 = vrot.slane %v1221, %v1237
        %v1239 = vlaneseq
        %v1240 = vshrl.u32 %v1239, 7
        %v1241 = vsub.s32 4, %v1240
        %v1242 = vrot.slane %v1221, %v1241
        %v1243 = vlaneseq
        %v1244 = vshrl.u32 %v1243, 7
        %v1245 = vsub.s32 5, %v1244
        %v1246 = vrot.slane %v1221, %v1245
        %v1253 = vmul.f32 %v1226, %v1151
        %v1254 = vmul.f32 %v1230, %v1152
        %v1255 = vmul.f32 %v1234, %v1153
        %v1256 = vmul.f32 %v1238, %v1154
        %v1257 = vmul.f32 %v1242, %v1155
        %v1258 = vmul.f32 %v1246, %v1156
        %v1259 = vmul.f32 %v1226, %v1157
        %v1260 = vmul.f32 %v1230, %v1158
        %v1261 = vmul.f32 %v1234, %v1159
        %v1262 = vmul.f32 %v1238, %v1160
        %v1263 = vmul.f32 %v1242, %v1161
        %v1264 = vmul.f32 %v1246, %v1162
        %v1265 = vadd.f32 %v1253, %v1254
        %v1266 = vadd.f32 %v1259, %v1260
        %v1267 = vadd.f32 %v1265, %v1255
        %v1268 = vadd.f32 %v1266, %v1261
        %v1269 = vadd.f32 %v1267, %v1256
        %v1270 = vadd.f32 %v1268, %v1262
        %v1271 = vadd.f32 %v1269, %v1257
        %v1272 = vadd.f32 %v1270, %v1263
        %v1273 = vadd.f32 %v1271, %v1258
        %v1274 = vadd.f32 %v1272, %v1264
        %v1275 = vadd.f32 %v1143, %v1273
        %v1276 = vadd.f32 %v1144, %v1274
        %v1277 = vld [vmem:[%s192 + $0xc0] sm:$0xff]
        %v1278 = vld [vmem:[%s192 + $0xc8] sm:$0xff]
        %v1279 = vld [vmem:[%s192 + $0xd0] sm:$0xff]
        %v1280 = vld [vmem:[%s192 + $0x5e8] sm:$0x33]
        %v1281 = vld [vmem:[%s192 + $0x5f0] sm:$0x33]
        %v1282 = vld [vmem:[%s192 + $0x5f8] sm:$0x33]
        %v1283 = vunpack.c.l.bf16 %v1277
        %v1284 = vunpack.c.h.bf16 %v1277
        %v1285 = vunpack.c.l.bf16 %v1278
        %v1286 = vunpack.c.h.bf16 %v1278
        %v1287 = vunpack.c.l.bf16 %v1279
        %v1288 = vunpack.c.h.bf16 %v1279
        %v1289 = vunpack.c.l.bf16 %v1280
        %v1290 = vunpack.c.h.bf16 %v1280
        %v1291 = vunpack.c.l.bf16 %v1281
        %v1292 = vunpack.c.h.bf16 %v1281
        %v1293 = vunpack.c.l.bf16 %v1282
        %v1294 = vunpack.c.h.bf16 %v1282
        %s1295 = scalar_lea.vmem %s183, 96 [#allocation2]
        %v1296 = vld [vmem:[%s1295] ss:$2 sm:$0x3f]
        %v1298 = vlaneseq
        %v1299 = vshrl.u32 %v1298, 7
        %v1300 = vsub.s32 0, %v1299
        %v1301 = vrot.slane %v1296, %v1300
        %v1302 = vlaneseq
        %v1303 = vshrl.u32 %v1302, 7
        %v1304 = vsub.s32 1, %v1303
        %v1305 = vrot.slane %v1296, %v1304
        %v1306 = vlaneseq
        %v1307 = vshrl.u32 %v1306, 7
        %v1308 = vsub.s32 2, %v1307
        %v1309 = vrot.slane %v1296, %v1308
        %v1310 = vlaneseq
        %v1311 = vshrl.u32 %v1310, 7
        %v1312 = vsub.s32 3, %v1311
        %v1313 = vrot.slane %v1296, %v1312
        %v1314 = vlaneseq
        %v1315 = vshrl.u32 %v1314, 7
        %v1316 = vsub.s32 4, %v1315
        %v1317 = vrot.slane %v1296, %v1316
        %v1318 = vlaneseq
        %v1319 = vshrl.u32 %v1318, 7
        %v1320 = vsub.s32 5, %v1319
        %v1321 = vrot.slane %v1296, %v1320
        %v1328 = vmul.f32 %v1301, %v1283
        %v1329 = vmul.f32 %v1305, %v1284
        %v1330 = vmul.f32 %v1309, %v1285
        %v1331 = vmul.f32 %v1313, %v1286
        %v1332 = vmul.f32 %v1317, %v1287
        %v1333 = vmul.f32 %v1321, %v1288
        %v1334 = vmul.f32 %v1301, %v1289
        %v1335 = vmul.f32 %v1305, %v1290
        %v1336 = vmul.f32 %v1309, %v1291
        %v1337 = vmul.f32 %v1313, %v1292
        %v1338 = vmul.f32 %v1317, %v1293
        %v1339 = vmul.f32 %v1321, %v1294
        %v1340 = vadd.f32 %v1328, %v1329
        %v1341 = vadd.f32 %v1334, %v1335
        %v1342 = vadd.f32 %v1340, %v1330
        %v1343 = vadd.f32 %v1341, %v1336
        %v1344 = vadd.f32 %v1342, %v1331
        %v1345 = vadd.f32 %v1343, %v1337
        %v1346 = vadd.f32 %v1344, %v1332
        %v1347 = vadd.f32 %v1345, %v1338
        %v1348 = vadd.f32 %v1346, %v1333
        %v1349 = vadd.f32 %v1347, %v1339
        %v1350 = vadd.f32 %v1218, %v1348
        %v1351 = vadd.f32 %v1219, %v1349
        %s1352 = scalar_lea.vmem %s183, 97 [#allocation2]
        %v1353 = vld [vmem:[%s1352] ss:$2 sm:$0x3f]
        %v1355 = vlaneseq
        %v1356 = vshrl.u32 %v1355, 7
        %v1357 = vsub.s32 0, %v1356
        %v1358 = vrot.slane %v1353, %v1357
        %v1359 = vlaneseq
        %v1360 = vshrl.u32 %v1359, 7
        %v1361 = vsub.s32 1, %v1360
        %v1362 = vrot.slane %v1353, %v1361
        %v1363 = vlaneseq
        %v1364 = vshrl.u32 %v1363, 7
        %v1365 = vsub.s32 2, %v1364
        %v1366 = vrot.slane %v1353, %v1365
        %v1367 = vlaneseq
        %v1368 = vshrl.u32 %v1367, 7
        %v1369 = vsub.s32 3, %v1368
        %v1370 = vrot.slane %v1353, %v1369
        %v1371 = vlaneseq
        %v1372 = vshrl.u32 %v1371, 7
        %v1373 = vsub.s32 4, %v1372
        %v1374 = vrot.slane %v1353, %v1373
        %v1375 = vlaneseq
        %v1376 = vshrl.u32 %v1375, 7
        %v1377 = vsub.s32 5, %v1376
        %v1378 = vrot.slane %v1353, %v1377
        %v1385 = vmul.f32 %v1358, %v1283
        %v1386 = vmul.f32 %v1362, %v1284
        %v1387 = vmul.f32 %v1366, %v1285
        %v1388 = vmul.f32 %v1370, %v1286
        %v1389 = vmul.f32 %v1374, %v1287
        %v1390 = vmul.f32 %v1378, %v1288
        %v1391 = vmul.f32 %v1358, %v1289
        %v1392 = vmul.f32 %v1362, %v1290
        %v1393 = vmul.f32 %v1366, %v1291
        %v1394 = vmul.f32 %v1370, %v1292
        %v1395 = vmul.f32 %v1374, %v1293
        %v1396 = vmul.f32 %v1378, %v1294
        %v1397 = vadd.f32 %v1385, %v1386
        %v1398 = vadd.f32 %v1391, %v1392
        %v1399 = vadd.f32 %v1397, %v1387
        %v1400 = vadd.f32 %v1398, %v1393
        %v1401 = vadd.f32 %v1399, %v1388
        %v1402 = vadd.f32 %v1400, %v1394
        %v1403 = vadd.f32 %v1401, %v1389
        %v1404 = vadd.f32 %v1402, %v1395
        %v1405 = vadd.f32 %v1403, %v1390
        %v1406 = vadd.f32 %v1404, %v1396
        %v1407 = vadd.f32 %v1275, %v1405
        %v1408 = vadd.f32 %v1276, %v1406
        %v1409 = vld [vmem:[%s192 + $0xd8] sm:$0xff]
        %v1410 = vld [vmem:[%s192 + $0xe0] sm:$0xff]
        %v1411 = vld [vmem:[%s192 + $0xe8] sm:$0xff]
        %v1412 = vld [vmem:[%s192 + $0x600] sm:$0x33]
        %v1413 = vld [vmem:[%s192 + $0x608] sm:$0x33]
        %v1414 = vld [vmem:[%s192 + $0x610] sm:$0x33]
        %v1415 = vunpack.c.l.bf16 %v1409
        %v1416 = vunpack.c.h.bf16 %v1409
        %v1417 = vunpack.c.l.bf16 %v1410
        %v1418 = vunpack.c.h.bf16 %v1410
        %v1419 = vunpack.c.l.bf16 %v1411
        %v1420 = vunpack.c.h.bf16 %v1411
        %v1421 = vunpack.c.l.bf16 %v1412
        %v1422 = vunpack.c.h.bf16 %v1412
        %v1423 = vunpack.c.l.bf16 %v1413
        %v1424 = vunpack.c.h.bf16 %v1413
        %v1425 = vunpack.c.l.bf16 %v1414
        %v1426 = vunpack.c.h.bf16 %v1414
        %s1427 = scalar_lea.vmem %s183, 108 [#allocation2]
        %v1428 = vld [vmem:[%s1427] ss:$2 sm:$0x3f]
        %v1430 = vlaneseq
        %v1431 = vshrl.u32 %v1430, 7
        %v1432 = vsub.s32 0, %v1431
        %v1433 = vrot.slane %v1428, %v1432
        %v1434 = vlaneseq
        %v1435 = vshrl.u32 %v1434, 7
        %v1436 = vsub.s32 1, %v1435
        %v1437 = vrot.slane %v1428, %v1436
        %v1438 = vlaneseq
        %v1439 = vshrl.u32 %v1438, 7
        %v1440 = vsub.s32 2, %v1439
        %v1441 = vrot.slane %v1428, %v1440
        %v1442 = vlaneseq
        %v1443 = vshrl.u32 %v1442, 7
        %v1444 = vsub.s32 3, %v1443
        %v1445 = vrot.slane %v1428, %v1444
        %v1446 = vlaneseq
        %v1447 = vshrl.u32 %v1446, 7
        %v1448 = vsub.s32 4, %v1447
        %v1449 = vrot.slane %v1428, %v1448
        %v1450 = vlaneseq
        %v1451 = vshrl.u32 %v1450, 7
        %v1452 = vsub.s32 5, %v1451
        %v1453 = vrot.slane %v1428, %v1452
        %v1460 = vmul.f32 %v1433, %v1415
        %v1461 = vmul.f32 %v1437, %v1416
        %v1462 = vmul.f32 %v1441, %v1417
        %v1463 = vmul.f32 %v1445, %v1418
        %v1464 = vmul.f32 %v1449, %v1419
        %v1465 = vmul.f32 %v1453, %v1420
        %v1466 = vmul.f32 %v1433, %v1421
        %v1467 = vmul.f32 %v1437, %v1422
        %v1468 = vmul.f32 %v1441, %v1423
        %v1469 = vmul.f32 %v1445, %v1424
        %v1470 = vmul.f32 %v1449, %v1425
        %v1471 = vmul.f32 %v1453, %v1426
        %v1472 = vadd.f32 %v1460, %v1461
        %v1473 = vadd.f32 %v1466, %v1467
        %v1474 = vadd.f32 %v1472, %v1462
        %v1475 = vadd.f32 %v1473, %v1468
        %v1476 = vadd.f32 %v1474, %v1463
        %v1477 = vadd.f32 %v1475, %v1469
        %v1478 = vadd.f32 %v1476, %v1464
        %v1479 = vadd.f32 %v1477, %v1470
        %v1480 = vadd.f32 %v1478, %v1465
        %v1481 = vadd.f32 %v1479, %v1471
        %v1482 = vadd.f32 %v1350, %v1480
        %v1483 = vadd.f32 %v1351, %v1481
        %s1484 = scalar_lea.vmem %s183, 109 [#allocation2]
        %v1485 = vld [vmem:[%s1484] ss:$2 sm:$0x3f]
        %v1487 = vlaneseq
        %v1488 = vshrl.u32 %v1487, 7
        %v1489 = vsub.s32 0, %v1488
        %v1490 = vrot.slane %v1485, %v1489
        %v1491 = vlaneseq
        %v1492 = vshrl.u32 %v1491, 7
        %v1493 = vsub.s32 1, %v1492
        %v1494 = vrot.slane %v1485, %v1493
        %v1495 = vlaneseq
        %v1496 = vshrl.u32 %v1495, 7
        %v1497 = vsub.s32 2, %v1496
        %v1498 = vrot.slane %v1485, %v1497
        %v1499 = vlaneseq
        %v1500 = vshrl.u32 %v1499, 7
        %v1501 = vsub.s32 3, %v1500
        %v1502 = vrot.slane %v1485, %v1501
        %v1503 = vlaneseq
        %v1504 = vshrl.u32 %v1503, 7
        %v1505 = vsub.s32 4, %v1504
        %v1506 = vrot.slane %v1485, %v1505
        %v1507 = vlaneseq
        %v1508 = vshrl.u32 %v1507, 7
        %v1509 = vsub.s32 5, %v1508
        %v1510 = vrot.slane %v1485, %v1509
        %v1517 = vmul.f32 %v1490, %v1415
        %v1518 = vmul.f32 %v1494, %v1416
        %v1519 = vmul.f32 %v1498, %v1417
        %v1520 = vmul.f32 %v1502, %v1418
        %v1521 = vmul.f32 %v1506, %v1419
        %v1522 = vmul.f32 %v1510, %v1420
        %v1523 = vmul.f32 %v1490, %v1421
        %v1524 = vmul.f32 %v1494, %v1422
        %v1525 = vmul.f32 %v1498, %v1423
        %v1526 = vmul.f32 %v1502, %v1424
        %v1527 = vmul.f32 %v1506, %v1425
        %v1528 = vmul.f32 %v1510, %v1426
        %v1529 = vadd.f32 %v1517, %v1518
        %v1530 = vadd.f32 %v1523, %v1524
        %v1531 = vadd.f32 %v1529, %v1519
        %v1532 = vadd.f32 %v1530, %v1525
        %v1533 = vadd.f32 %v1531, %v1520
        %v1534 = vadd.f32 %v1532, %v1526
        %v1535 = vadd.f32 %v1533, %v1521
        %v1536 = vadd.f32 %v1534, %v1527
        %v1537 = vadd.f32 %v1535, %v1522
        %v1538 = vadd.f32 %v1536, %v1528
        %v1539 = vadd.f32 %v1407, %v1537
        %v1540 = vadd.f32 %v1408, %v1538
        %v1541 = vld [vmem:[%s192 + $0xf0] sm:$0xff]
        %v1542 = vld [vmem:[%s192 + $0xf8] sm:$0xff]
        %v1543 = vld [vmem:[%s192 + $0x100] sm:$0xff]
        %v1544 = vld [vmem:[%s192 + $0x618] sm:$0x33]
        %v1545 = vld [vmem:[%s192 + $0x620] sm:$0x33]
        %v1546 = vld [vmem:[%s192 + $0x628] sm:$0x33]
        %v1547 = vunpack.c.l.bf16 %v1541
        %v1548 = vunpack.c.h.bf16 %v1541
        %v1549 = vunpack.c.l.bf16 %v1542
        %v1550 = vunpack.c.h.bf16 %v1542
        %v1551 = vunpack.c.l.bf16 %v1543
        %v1552 = vunpack.c.h.bf16 %v1543
        %v1553 = vunpack.c.l.bf16 %v1544
        %v1554 = vunpack.c.h.bf16 %v1544
        %v1555 = vunpack.c.l.bf16 %v1545
        %v1556 = vunpack.c.h.bf16 %v1545
        %v1557 = vunpack.c.l.bf16 %v1546
        %v1558 = vunpack.c.h.bf16 %v1546
        %s1559 = scalar_lea.vmem %s183, 120 [#allocation2]
        %v1560 = vld [vmem:[%s1559] ss:$2 sm:$0x3f]
        %v1562 = vlaneseq
        %v1563 = vshrl.u32 %v1562, 7
        %v1564 = vsub.s32 0, %v1563
        %v1565 = vrot.slane %v1560, %v1564
        %v1566 = vlaneseq
        %v1567 = vshrl.u32 %v1566, 7
        %v1568 = vsub.s32 1, %v1567
        %v1569 = vrot.slane %v1560, %v1568
        %v1570 = vlaneseq
        %v1571 = vshrl.u32 %v1570, 7
        %v1572 = vsub.s32 2, %v1571
        %v1573 = vrot.slane %v1560, %v1572
        %v1574 = vlaneseq
        %v1575 = vshrl.u32 %v1574, 7
        %v1576 = vsub.s32 3, %v1575
        %v1577 = vrot.slane %v1560, %v1576
        %v1578 = vlaneseq
        %v1579 = vshrl.u32 %v1578, 7
        %v1580 = vsub.s32 4, %v1579
        %v1581 = vrot.slane %v1560, %v1580
        %v1582 = vlaneseq
        %v1583 = vshrl.u32 %v1582, 7
        %v1584 = vsub.s32 5, %v1583
        %v1585 = vrot.slane %v1560, %v1584
        %v1592 = vmul.f32 %v1565, %v1547
        %v1593 = vmul.f32 %v1569, %v1548
        %v1594 = vmul.f32 %v1573, %v1549
        %v1595 = vmul.f32 %v1577, %v1550
        %v1596 = vmul.f32 %v1581, %v1551
        %v1597 = vmul.f32 %v1585, %v1552
        %v1598 = vmul.f32 %v1565, %v1553
        %v1599 = vmul.f32 %v1569, %v1554
        %v1600 = vmul.f32 %v1573, %v1555
        %v1601 = vmul.f32 %v1577, %v1556
        %v1602 = vmul.f32 %v1581, %v1557
        %v1603 = vmul.f32 %v1585, %v1558
        %v1604 = vadd.f32 %v1592, %v1593
        %v1605 = vadd.f32 %v1598, %v1599
        %v1606 = vadd.f32 %v1604, %v1594
        %v1607 = vadd.f32 %v1605, %v1600
        %v1608 = vadd.f32 %v1606, %v1595
        %v1609 = vadd.f32 %v1607, %v1601
        %v1610 = vadd.f32 %v1608, %v1596
        %v1611 = vadd.f32 %v1609, %v1602
        %v1612 = vadd.f32 %v1610, %v1597
        %v1613 = vadd.f32 %v1611, %v1603
        %v1614 = vadd.f32 %v1482, %v1612
        %v1615 = vadd.f32 %v1483, %v1613
        %s1616 = scalar_lea.vmem %s183, 121 [#allocation2]
        %v1617 = vld [vmem:[%s1616] ss:$2 sm:$0x3f]
        %v1619 = vlaneseq
        %v1620 = vshrl.u32 %v1619, 7
        %v1621 = vsub.s32 0, %v1620
        %v1622 = vrot.slane %v1617, %v1621
        %v1623 = vlaneseq
        %v1624 = vshrl.u32 %v1623, 7
        %v1625 = vsub.s32 1, %v1624
        %v1626 = vrot.slane %v1617, %v1625
        %v1627 = vlaneseq
        %v1628 = vshrl.u32 %v1627, 7
        %v1629 = vsub.s32 2, %v1628
        %v1630 = vrot.slane %v1617, %v1629
        %v1631 = vlaneseq
        %v1632 = vshrl.u32 %v1631, 7
        %v1633 = vsub.s32 3, %v1632
        %v1634 = vrot.slane %v1617, %v1633
        %v1635 = vlaneseq
        %v1636 = vshrl.u32 %v1635, 7
        %v1637 = vsub.s32 4, %v1636
        %v1638 = vrot.slane %v1617, %v1637
        %v1639 = vlaneseq
        %v1640 = vshrl.u32 %v1639, 7
        %v1641 = vsub.s32 5, %v1640
        %v1642 = vrot.slane %v1617, %v1641
        %v1649 = vmul.f32 %v1622, %v1547
        %v1650 = vmul.f32 %v1626, %v1548
        %v1651 = vmul.f32 %v1630, %v1549
        %v1652 = vmul.f32 %v1634, %v1550
        %v1653 = vmul.f32 %v1638, %v1551
        %v1654 = vmul.f32 %v1642, %v1552
        %v1655 = vmul.f32 %v1622, %v1553
        %v1656 = vmul.f32 %v1626, %v1554
        %v1657 = vmul.f32 %v1630, %v1555
        %v1658 = vmul.f32 %v1634, %v1556
        %v1659 = vmul.f32 %v1638, %v1557
        %v1660 = vmul.f32 %v1642, %v1558
        %v1661 = vadd.f32 %v1649, %v1650
        %v1662 = vadd.f32 %v1655, %v1656
        %v1663 = vadd.f32 %v1661, %v1651
        %v1664 = vadd.f32 %v1662, %v1657
        %v1665 = vadd.f32 %v1663, %v1652
        %v1666 = vadd.f32 %v1664, %v1658
        %v1667 = vadd.f32 %v1665, %v1653
        %v1668 = vadd.f32 %v1666, %v1659
        %v1669 = vadd.f32 %v1667, %v1654
        %v1670 = vadd.f32 %v1668, %v1660
        %v1671 = vadd.f32 %v1539, %v1669
        %v1672 = vadd.f32 %v1540, %v1670
        %v1673 = vld [vmem:[%s192 + $0x108] sm:$0xff]
        %v1674 = vld [vmem:[%s192 + $0x110] sm:$0xff]
        %v1675 = vld [vmem:[%s192 + $0x118] sm:$0xff]
        %v1676 = vld [vmem:[%s192 + $0x630] sm:$0x33]
        %v1677 = vld [vmem:[%s192 + $0x638] sm:$0x33]
        %v1678 = vld [vmem:[%s192 + $0x640] sm:$0x33]
        %v1679 = vunpack.c.l.bf16 %v1673
        %v1680 = vunpack.c.h.bf16 %v1673
        %v1681 = vunpack.c.l.bf16 %v1674
        %v1682 = vunpack.c.h.bf16 %v1674
        %v1683 = vunpack.c.l.bf16 %v1675
        %v1684 = vunpack.c.h.bf16 %v1675
        %v1685 = vunpack.c.l.bf16 %v1676
        %v1686 = vunpack.c.h.bf16 %v1676
        %v1687 = vunpack.c.l.bf16 %v1677
        %v1688 = vunpack.c.h.bf16 %v1677
        %v1689 = vunpack.c.l.bf16 %v1678
        %v1690 = vunpack.c.h.bf16 %v1678
        %s1691 = scalar_lea.vmem %s183, 132 [#allocation2]
        %v1692 = vld [vmem:[%s1691] ss:$2 sm:$0x3f]
        %v1694 = vlaneseq
        %v1695 = vshrl.u32 %v1694, 7
        %v1696 = vsub.s32 0, %v1695
        %v1697 = vrot.slane %v1692, %v1696
        %v1698 = vlaneseq
        %v1699 = vshrl.u32 %v1698, 7
        %v1700 = vsub.s32 1, %v1699
        %v1701 = vrot.slane %v1692, %v1700
        %v1702 = vlaneseq
        %v1703 = vshrl.u32 %v1702, 7
        %v1704 = vsub.s32 2, %v1703
        %v1705 = vrot.slane %v1692, %v1704
        %v1706 = vlaneseq
        %v1707 = vshrl.u32 %v1706, 7
        %v1708 = vsub.s32 3, %v1707
        %v1709 = vrot.slane %v1692, %v1708
        %v1710 = vlaneseq
        %v1711 = vshrl.u32 %v1710, 7
        %v1712 = vsub.s32 4, %v1711
        %v1713 = vrot.slane %v1692, %v1712
        %v1714 = vlaneseq
        %v1715 = vshrl.u32 %v1714, 7
        %v1716 = vsub.s32 5, %v1715
        %v1717 = vrot.slane %v1692, %v1716
        %v1724 = vmul.f32 %v1697, %v1679
        %v1725 = vmul.f32 %v1701, %v1680
        %v1726 = vmul.f32 %v1705, %v1681
        %v1727 = vmul.f32 %v1709, %v1682
        %v1728 = vmul.f32 %v1713, %v1683
        %v1729 = vmul.f32 %v1717, %v1684
        %v1730 = vmul.f32 %v1697, %v1685
        %v1731 = vmul.f32 %v1701, %v1686
        %v1732 = vmul.f32 %v1705, %v1687
        %v1733 = vmul.f32 %v1709, %v1688
        %v1734 = vmul.f32 %v1713, %v1689
        %v1735 = vmul.f32 %v1717, %v1690
        %v1736 = vadd.f32 %v1724, %v1725
        %v1737 = vadd.f32 %v1730, %v1731
        %v1738 = vadd.f32 %v1736, %v1726
        %v1739 = vadd.f32 %v1737, %v1732
        %v1740 = vadd.f32 %v1738, %v1727
        %v1741 = vadd.f32 %v1739, %v1733
        %v1742 = vadd.f32 %v1740, %v1728
        %v1743 = vadd.f32 %v1741, %v1734
        %v1744 = vadd.f32 %v1742, %v1729
        %v1745 = vadd.f32 %v1743, %v1735
        %v1746 = vadd.f32 %v1614, %v1744
        %v1747 = vadd.f32 %v1615, %v1745
        %s1748 = scalar_lea.vmem %s183, 133 [#allocation2]
        %v1749 = vld [vmem:[%s1748] ss:$2 sm:$0x3f]
        %v1751 = vlaneseq
        %v1752 = vshrl.u32 %v1751, 7
        %v1753 = vsub.s32 0, %v1752
        %v1754 = vrot.slane %v1749, %v1753
        %v1755 = vlaneseq
        %v1756 = vshrl.u32 %v1755, 7
        %v1757 = vsub.s32 1, %v1756
        %v1758 = vrot.slane %v1749, %v1757
        %v1759 = vlaneseq
        %v1760 = vshrl.u32 %v1759, 7
        %v1761 = vsub.s32 2, %v1760
        %v1762 = vrot.slane %v1749, %v1761
        %v1763 = vlaneseq
        %v1764 = vshrl.u32 %v1763, 7
        %v1765 = vsub.s32 3, %v1764
        %v1766 = vrot.slane %v1749, %v1765
        %v1767 = vlaneseq
        %v1768 = vshrl.u32 %v1767, 7
        %v1769 = vsub.s32 4, %v1768
        %v1770 = vrot.slane %v1749, %v1769
        %v1771 = vlaneseq
        %v1772 = vshrl.u32 %v1771, 7
        %v1773 = vsub.s32 5, %v1772
        %v1774 = vrot.slane %v1749, %v1773
        %v1781 = vmul.f32 %v1754, %v1679
        %v1782 = vmul.f32 %v1758, %v1680
        %v1783 = vmul.f32 %v1762, %v1681
        %v1784 = vmul.f32 %v1766, %v1682
        %v1785 = vmul.f32 %v1770, %v1683
        %v1786 = vmul.f32 %v1774, %v1684
        %v1787 = vmul.f32 %v1754, %v1685
        %v1788 = vmul.f32 %v1758, %v1686
        %v1789 = vmul.f32 %v1762, %v1687
        %v1790 = vmul.f32 %v1766, %v1688
        %v1791 = vmul.f32 %v1770, %v1689
        %v1792 = vmul.f32 %v1774, %v1690
        %v1793 = vadd.f32 %v1781, %v1782
        %v1794 = vadd.f32 %v1787, %v1788
        %v1795 = vadd.f32 %v1793, %v1783
        %v1796 = vadd.f32 %v1794, %v1789
        %v1797 = vadd.f32 %v1795, %v1784
        %v1798 = vadd.f32 %v1796, %v1790
        %v1799 = vadd.f32 %v1797, %v1785
        %v1800 = vadd.f32 %v1798, %v1791
        %v1801 = vadd.f32 %v1799, %v1786
        %v1802 = vadd.f32 %v1800, %v1792
        %v1803 = vadd.f32 %v1671, %v1801
        %v1804 = vadd.f32 %v1672, %v1802
        %v1805 = vld [vmem:[%s192 + $0x120] sm:$0xff]
        %v1806 = vld [vmem:[%s192 + $0x128] sm:$0xff]
        %v1807 = vld [vmem:[%s192 + $0x130] sm:$0xff]
        %v1808 = vld [vmem:[%s192 + $0x648] sm:$0x33]
        %v1809 = vld [vmem:[%s192 + $0x650] sm:$0x33]
        %v1810 = vld [vmem:[%s192 + $0x658] sm:$0x33]
        %v1811 = vunpack.c.l.bf16 %v1805
        %v1812 = vunpack.c.h.bf16 %v1805
        %v1813 = vunpack.c.l.bf16 %v1806
        %v1814 = vunpack.c.h.bf16 %v1806
        %v1815 = vunpack.c.l.bf16 %v1807
        %v1816 = vunpack.c.h.bf16 %v1807
        %v1817 = vunpack.c.l.bf16 %v1808
        %v1818 = vunpack.c.h.bf16 %v1808
        %v1819 = vunpack.c.l.bf16 %v1809
        %v1820 = vunpack.c.h.bf16 %v1809
        %v1821 = vunpack.c.l.bf16 %v1810
        %v1822 = vunpack.c.h.bf16 %v1810
        %s1823 = scalar_lea.vmem %s183, 144 [#allocation2]
        %v1824 = vld [vmem:[%s1823] ss:$2 sm:$0x3f]
        %v1826 = vlaneseq
        %v1827 = vshrl.u32 %v1826, 7
        %v1828 = vsub.s32 0, %v1827
        %v1829 = vrot.slane %v1824, %v1828
        %v1830 = vlaneseq
        %v1831 = vshrl.u32 %v1830, 7
        %v1832 = vsub.s32 1, %v1831
        %v1833 = vrot.slane %v1824, %v1832
        %v1834 = vlaneseq
        %v1835 = vshrl.u32 %v1834, 7
        %v1836 = vsub.s32 2, %v1835
        %v1837 = vrot.slane %v1824, %v1836
        %v1838 = vlaneseq
        %v1839 = vshrl.u32 %v1838, 7
        %v1840 = vsub.s32 3, %v1839
        %v1841 = vrot.slane %v1824, %v1840
        %v1842 = vlaneseq
        %v1843 = vshrl.u32 %v1842, 7
        %v1844 = vsub.s32 4, %v1843
        %v1845 = vrot.slane %v1824, %v1844
        %v1846 = vlaneseq
        %v1847 = vshrl.u32 %v1846, 7
        %v1848 = vsub.s32 5, %v1847
        %v1849 = vrot.slane %v1824, %v1848
        %v1856 = vmul.f32 %v1829, %v1811
        %v1857 = vmul.f32 %v1833, %v1812
        %v1858 = vmul.f32 %v1837, %v1813
        %v1859 = vmul.f32 %v1841, %v1814
        %v1860 = vmul.f32 %v1845, %v1815
        %v1861 = vmul.f32 %v1849, %v1816
        %v1862 = vmul.f32 %v1829, %v1817
        %v1863 = vmul.f32 %v1833, %v1818
        %v1864 = vmul.f32 %v1837, %v1819
        %v1865 = vmul.f32 %v1841, %v1820
        %v1866 = vmul.f32 %v1845, %v1821
        %v1867 = vmul.f32 %v1849, %v1822
        %v1868 = vadd.f32 %v1856, %v1857
        %v1869 = vadd.f32 %v1862, %v1863
        %v1870 = vadd.f32 %v1868, %v1858
        %v1871 = vadd.f32 %v1869, %v1864
        %v1872 = vadd.f32 %v1870, %v1859
        %v1873 = vadd.f32 %v1871, %v1865
        %v1874 = vadd.f32 %v1872, %v1860
        %v1875 = vadd.f32 %v1873, %v1866
        %v1876 = vadd.f32 %v1874, %v1861
        %v1877 = vadd.f32 %v1875, %v1867
        %v1878 = vadd.f32 %v1746, %v1876
        %v1879 = vadd.f32 %v1747, %v1877
        %s1880 = scalar_lea.vmem %s183, 145 [#allocation2]
        %v1881 = vld [vmem:[%s1880] ss:$2 sm:$0x3f]
        %v1883 = vlaneseq
        %v1884 = vshrl.u32 %v1883, 7
        %v1885 = vsub.s32 0, %v1884
        %v1886 = vrot.slane %v1881, %v1885
        %v1887 = vlaneseq
        %v1888 = vshrl.u32 %v1887, 7
        %v1889 = vsub.s32 1, %v1888
        %v1890 = vrot.slane %v1881, %v1889
        %v1891 = vlaneseq
        %v1892 = vshrl.u32 %v1891, 7
        %v1893 = vsub.s32 2, %v1892
        %v1894 = vrot.slane %v1881, %v1893
        %v1895 = vlaneseq
        %v1896 = vshrl.u32 %v1895, 7
        %v1897 = vsub.s32 3, %v1896
        %v1898 = vrot.slane %v1881, %v1897
        %v1899 = vlaneseq
        %v1900 = vshrl.u32 %v1899, 7
        %v1901 = vsub.s32 4, %v1900
        %v1902 = vrot.slane %v1881, %v1901
        %v1903 = vlaneseq
        %v1904 = vshrl.u32 %v1903, 7
        %v1905 = vsub.s32 5, %v1904
        %v1906 = vrot.slane %v1881, %v1905
        %v1913 = vmul.f32 %v1886, %v1811
        %v1914 = vmul.f32 %v1890, %v1812
        %v1915 = vmul.f32 %v1894, %v1813
        %v1916 = vmul.f32 %v1898, %v1814
        %v1917 = vmul.f32 %v1902, %v1815
        %v1918 = vmul.f32 %v1906, %v1816
        %v1919 = vmul.f32 %v1886, %v1817
        %v1920 = vmul.f32 %v1890, %v1818
        %v1921 = vmul.f32 %v1894, %v1819
        %v1922 = vmul.f32 %v1898, %v1820
        %v1923 = vmul.f32 %v1902, %v1821
        %v1924 = vmul.f32 %v1906, %v1822
        %v1925 = vadd.f32 %v1913, %v1914
        %v1926 = vadd.f32 %v1919, %v1920
        %v1927 = vadd.f32 %v1925, %v1915
        %v1928 = vadd.f32 %v1926, %v1921
        %v1929 = vadd.f32 %v1927, %v1916
        %v1930 = vadd.f32 %v1928, %v1922
        %v1931 = vadd.f32 %v1929, %v1917
        %v1932 = vadd.f32 %v1930, %v1923
        %v1933 = vadd.f32 %v1931, %v1918
        %v1934 = vadd.f32 %v1932, %v1924
        %v1935 = vadd.f32 %v1803, %v1933
        %v1936 = vadd.f32 %v1804, %v1934
        %v1937 = vld [vmem:[%s192 + $0x138] sm:$0xff]
        %v1938 = vld [vmem:[%s192 + $0x140] sm:$0xff]
        %v1939 = vld [vmem:[%s192 + $0x148] sm:$0xff]
        %v1940 = vld [vmem:[%s192 + $0x660] sm:$0x33]
        %v1941 = vld [vmem:[%s192 + $0x668] sm:$0x33]
        %v1942 = vld [vmem:[%s192 + $0x670] sm:$0x33]
        %v1943 = vunpack.c.l.bf16 %v1937
        %v1944 = vunpack.c.h.bf16 %v1937
        %v1945 = vunpack.c.l.bf16 %v1938
        %v1946 = vunpack.c.h.bf16 %v1938
        %v1947 = vunpack.c.l.bf16 %v1939
        %v1948 = vunpack.c.h.bf16 %v1939
        %v1949 = vunpack.c.l.bf16 %v1940
        %v1950 = vunpack.c.h.bf16 %v1940
        %v1951 = vunpack.c.l.bf16 %v1941
        %v1952 = vunpack.c.h.bf16 %v1941
        %v1953 = vunpack.c.l.bf16 %v1942
        %v1954 = vunpack.c.h.bf16 %v1942
        %s1955 = scalar_lea.vmem %s183, 156 [#allocation2]
        %v1956 = vld [vmem:[%s1955] ss:$2 sm:$0x3f]
        %v1958 = vlaneseq
        %v1959 = vshrl.u32 %v1958, 7
        %v1960 = vsub.s32 0, %v1959
        %v1961 = vrot.slane %v1956, %v1960
        %v1962 = vlaneseq
        %v1963 = vshrl.u32 %v1962, 7
        %v1964 = vsub.s32 1, %v1963
        %v1965 = vrot.slane %v1956, %v1964
        %v1966 = vlaneseq
        %v1967 = vshrl.u32 %v1966, 7
        %v1968 = vsub.s32 2, %v1967
        %v1969 = vrot.slane %v1956, %v1968
        %v1970 = vlaneseq
        %v1971 = vshrl.u32 %v1970, 7
        %v1972 = vsub.s32 3, %v1971
        %v1973 = vrot.slane %v1956, %v1972
        %v1974 = vlaneseq
        %v1975 = vshrl.u32 %v1974, 7
        %v1976 = vsub.s32 4, %v1975
        %v1977 = vrot.slane %v1956, %v1976
        %v1978 = vlaneseq
        %v1979 = vshrl.u32 %v1978, 7
        %v1980 = vsub.s32 5, %v1979
        %v1981 = vrot.slane %v1956, %v1980
        %v1988 = vmul.f32 %v1961, %v1943
        %v1989 = vmul.f32 %v1965, %v1944
        %v1990 = vmul.f32 %v1969, %v1945
        %v1991 = vmul.f32 %v1973, %v1946
        %v1992 = vmul.f32 %v1977, %v1947
        %v1993 = vmul.f32 %v1981, %v1948
        %v1994 = vmul.f32 %v1961, %v1949
        %v1995 = vmul.f32 %v1965, %v1950
        %v1996 = vmul.f32 %v1969, %v1951
        %v1997 = vmul.f32 %v1973, %v1952
        %v1998 = vmul.f32 %v1977, %v1953
        %v1999 = vmul.f32 %v1981, %v1954
        %v2000 = vadd.f32 %v1988, %v1989
        %v2001 = vadd.f32 %v1994, %v1995
        %v2002 = vadd.f32 %v2000, %v1990
        %v2003 = vadd.f32 %v2001, %v1996
        %v2004 = vadd.f32 %v2002, %v1991
        %v2005 = vadd.f32 %v2003, %v1997
        %v2006 = vadd.f32 %v2004, %v1992
        %v2007 = vadd.f32 %v2005, %v1998
        %v2008 = vadd.f32 %v2006, %v1993
        %v2009 = vadd.f32 %v2007, %v1999
        %v2010 = vadd.f32 %v1878, %v2008
        %v2011 = vadd.f32 %v1879, %v2009
        %s2012 = scalar_lea.vmem %s183, 157 [#allocation2]
        %v2013 = vld [vmem:[%s2012] ss:$2 sm:$0x3f]
        %v2015 = vlaneseq
        %v2016 = vshrl.u32 %v2015, 7
        %v2017 = vsub.s32 0, %v2016
        %v2018 = vrot.slane %v2013, %v2017
        %v2019 = vlaneseq
        %v2020 = vshrl.u32 %v2019, 7
        %v2021 = vsub.s32 1, %v2020
        %v2022 = vrot.slane %v2013, %v2021
        %v2023 = vlaneseq
        %v2024 = vshrl.u32 %v2023, 7
        %v2025 = vsub.s32 2, %v2024
        %v2026 = vrot.slane %v2013, %v2025
        %v2027 = vlaneseq
        %v2028 = vshrl.u32 %v2027, 7
        %v2029 = vsub.s32 3, %v2028
        %v2030 = vrot.slane %v2013, %v2029
        %v2031 = vlaneseq
        %v2032 = vshrl.u32 %v2031, 7
        %v2033 = vsub.s32 4, %v2032
        %v2034 = vrot.slane %v2013, %v2033
        %v2035 = vlaneseq
        %v2036 = vshrl.u32 %v2035, 7
        %v2037 = vsub.s32 5, %v2036
        %v2038 = vrot.slane %v2013, %v2037
        %v2045 = vmul.f32 %v2018, %v1943
        %v2046 = vmul.f32 %v2022, %v1944
        %v2047 = vmul.f32 %v2026, %v1945
        %v2048 = vmul.f32 %v2030, %v1946
        %v2049 = vmul.f32 %v2034, %v1947
        %v2050 = vmul.f32 %v2038, %v1948
        %v2051 = vmul.f32 %v2018, %v1949
        %v2052 = vmul.f32 %v2022, %v1950
        %v2053 = vmul.f32 %v2026, %v1951
        %v2054 = vmul.f32 %v2030, %v1952
        %v2055 = vmul.f32 %v2034, %v1953
        %v2056 = vmul.f32 %v2038, %v1954
        %v2057 = vadd.f32 %v2045, %v2046
        %v2058 = vadd.f32 %v2051, %v2052
        %v2059 = vadd.f32 %v2057, %v2047
        %v2060 = vadd.f32 %v2058, %v2053
        %v2061 = vadd.f32 %v2059, %v2048
        %v2062 = vadd.f32 %v2060, %v2054
        %v2063 = vadd.f32 %v2061, %v2049
        %v2064 = vadd.f32 %v2062, %v2055
        %v2065 = vadd.f32 %v2063, %v2050
        %v2066 = vadd.f32 %v2064, %v2056
        %v2067 = vadd.f32 %v1935, %v2065
        %v2068 = vadd.f32 %v1936, %v2066
        %v2069 = vld [vmem:[%s192 + $0x150] sm:$0xff]
        %v2070 = vld [vmem:[%s192 + $0x158] sm:$0xff]
        %v2071 = vld [vmem:[%s192 + $0x160] sm:$0xff]
        %v2072 = vld [vmem:[%s192 + $0x678] sm:$0x33]
        %v2073 = vld [vmem:[%s192 + $0x680] sm:$0x33]
        %v2074 = vld [vmem:[%s192 + $0x688] sm:$0x33]
        %v2075 = vunpack.c.l.bf16 %v2069
        %v2076 = vunpack.c.h.bf16 %v2069
        %v2077 = vunpack.c.l.bf16 %v2070
        %v2078 = vunpack.c.h.bf16 %v2070
        %v2079 = vunpack.c.l.bf16 %v2071
        %v2080 = vunpack.c.h.bf16 %v2071
        %v2081 = vunpack.c.l.bf16 %v2072
        %v2082 = vunpack.c.h.bf16 %v2072
        %v2083 = vunpack.c.l.bf16 %v2073
        %v2084 = vunpack.c.h.bf16 %v2073
        %v2085 = vunpack.c.l.bf16 %v2074
        %v2086 = vunpack.c.h.bf16 %v2074
        %s2087 = scalar_lea.vmem %s183, 168 [#allocation2]
        %v2088 = vld [vmem:[%s2087] ss:$2 sm:$0x3f]
        %v2090 = vlaneseq
        %v2091 = vshrl.u32 %v2090, 7
        %v2092 = vsub.s32 0, %v2091
        %v2093 = vrot.slane %v2088, %v2092
        %v2094 = vlaneseq
        %v2095 = vshrl.u32 %v2094, 7
        %v2096 = vsub.s32 1, %v2095
        %v2097 = vrot.slane %v2088, %v2096
        %v2098 = vlaneseq
        %v2099 = vshrl.u32 %v2098, 7
        %v2100 = vsub.s32 2, %v2099
        %v2101 = vrot.slane %v2088, %v2100
        %v2102 = vlaneseq
        %v2103 = vshrl.u32 %v2102, 7
        %v2104 = vsub.s32 3, %v2103
        %v2105 = vrot.slane %v2088, %v2104
        %v2106 = vlaneseq
        %v2107 = vshrl.u32 %v2106, 7
        %v2108 = vsub.s32 4, %v2107
        %v2109 = vrot.slane %v2088, %v2108
        %v2110 = vlaneseq
        %v2111 = vshrl.u32 %v2110, 7
        %v2112 = vsub.s32 5, %v2111
        %v2113 = vrot.slane %v2088, %v2112
        %v2120 = vmul.f32 %v2093, %v2075
        %v2121 = vmul.f32 %v2097, %v2076
        %v2122 = vmul.f32 %v2101, %v2077
        %v2123 = vmul.f32 %v2105, %v2078
        %v2124 = vmul.f32 %v2109, %v2079
        %v2125 = vmul.f32 %v2113, %v2080
        %v2126 = vmul.f32 %v2093, %v2081
        %v2127 = vmul.f32 %v2097, %v2082
        %v2128 = vmul.f32 %v2101, %v2083
        %v2129 = vmul.f32 %v2105, %v2084
        %v2130 = vmul.f32 %v2109, %v2085
        %v2131 = vmul.f32 %v2113, %v2086
        %v2132 = vadd.f32 %v2120, %v2121
        %v2133 = vadd.f32 %v2126, %v2127
        %v2134 = vadd.f32 %v2132, %v2122
        %v2135 = vadd.f32 %v2133, %v2128
        %v2136 = vadd.f32 %v2134, %v2123
        %v2137 = vadd.f32 %v2135, %v2129
        %v2138 = vadd.f32 %v2136, %v2124
        %v2139 = vadd.f32 %v2137, %v2130
        %v2140 = vadd.f32 %v2138, %v2125
        %v2141 = vadd.f32 %v2139, %v2131
        %v2142 = vadd.f32 %v2010, %v2140
        %v2143 = vadd.f32 %v2011, %v2141
        %s2144 = scalar_lea.vmem %s183, 169 [#allocation2]
        %v2145 = vld [vmem:[%s2144] ss:$2 sm:$0x3f]
        %v2147 = vlaneseq
        %v2148 = vshrl.u32 %v2147, 7
        %v2149 = vsub.s32 0, %v2148
        %v2150 = vrot.slane %v2145, %v2149
        %v2151 = vlaneseq
        %v2152 = vshrl.u32 %v2151, 7
        %v2153 = vsub.s32 1, %v2152
        %v2154 = vrot.slane %v2145, %v2153
        %v2155 = vlaneseq
        %v2156 = vshrl.u32 %v2155, 7
        %v2157 = vsub.s32 2, %v2156
        %v2158 = vrot.slane %v2145, %v2157
        %v2159 = vlaneseq
        %v2160 = vshrl.u32 %v2159, 7
        %v2161 = vsub.s32 3, %v2160
        %v2162 = vrot.slane %v2145, %v2161
        %v2163 = vlaneseq
        %v2164 = vshrl.u32 %v2163, 7
        %v2165 = vsub.s32 4, %v2164
        %v2166 = vrot.slane %v2145, %v2165
        %v2167 = vlaneseq
        %v2168 = vshrl.u32 %v2167, 7
        %v2169 = vsub.s32 5, %v2168
        %v2170 = vrot.slane %v2145, %v2169
        %v2177 = vmul.f32 %v2150, %v2075
        %v2178 = vmul.f32 %v2154, %v2076
        %v2179 = vmul.f32 %v2158, %v2077
        %v2180 = vmul.f32 %v2162, %v2078
        %v2181 = vmul.f32 %v2166, %v2079
        %v2182 = vmul.f32 %v2170, %v2080
        %v2183 = vmul.f32 %v2150, %v2081
        %v2184 = vmul.f32 %v2154, %v2082
        %v2185 = vmul.f32 %v2158, %v2083
        %v2186 = vmul.f32 %v2162, %v2084
        %v2187 = vmul.f32 %v2166, %v2085
        %v2188 = vmul.f32 %v2170, %v2086
        %v2189 = vadd.f32 %v2177, %v2178
        %v2190 = vadd.f32 %v2183, %v2184
        %v2191 = vadd.f32 %v2189, %v2179
        %v2192 = vadd.f32 %v2190, %v2185
        %v2193 = vadd.f32 %v2191, %v2180
        %v2194 = vadd.f32 %v2192, %v2186
        %v2195 = vadd.f32 %v2193, %v2181
        %v2196 = vadd.f32 %v2194, %v2187
        %v2197 = vadd.f32 %v2195, %v2182
        %v2198 = vadd.f32 %v2196, %v2188
        %v2199 = vadd.f32 %v2067, %v2197
        %v2200 = vadd.f32 %v2068, %v2198
        %v2201 = vld [vmem:[%s192 + $0x168] sm:$0xff]
        %v2202 = vld [vmem:[%s192 + $0x170] sm:$0xff]
        %v2203 = vld [vmem:[%s192 + $0x178] sm:$0xff]
        %v2204 = vld [vmem:[%s192 + $0x690] sm:$0x33]
        %v2205 = vld [vmem:[%s192 + $0x698] sm:$0x33]
        %v2206 = vld [vmem:[%s192 + $0x6a0] sm:$0x33]
        %v2207 = vunpack.c.l.bf16 %v2201
        %v2208 = vunpack.c.h.bf16 %v2201
        %v2209 = vunpack.c.l.bf16 %v2202
        %v2210 = vunpack.c.h.bf16 %v2202
        %v2211 = vunpack.c.l.bf16 %v2203
        %v2212 = vunpack.c.h.bf16 %v2203
        %v2213 = vunpack.c.l.bf16 %v2204
        %v2214 = vunpack.c.h.bf16 %v2204
        %v2215 = vunpack.c.l.bf16 %v2205
        %v2216 = vunpack.c.h.bf16 %v2205
        %v2217 = vunpack.c.l.bf16 %v2206
        %v2218 = vunpack.c.h.bf16 %v2206
        %s2219 = scalar_lea.vmem %s183, 180 [#allocation2]
        %v2220 = vld [vmem:[%s2219] ss:$2 sm:$0x3f]
        %v2222 = vlaneseq
        %v2223 = vshrl.u32 %v2222, 7
        %v2224 = vsub.s32 0, %v2223
        %v2225 = vrot.slane %v2220, %v2224
        %v2226 = vlaneseq
        %v2227 = vshrl.u32 %v2226, 7
        %v2228 = vsub.s32 1, %v2227
        %v2229 = vrot.slane %v2220, %v2228
        %v2230 = vlaneseq
        %v2231 = vshrl.u32 %v2230, 7
        %v2232 = vsub.s32 2, %v2231
        %v2233 = vrot.slane %v2220, %v2232
        %v2234 = vlaneseq
        %v2235 = vshrl.u32 %v2234, 7
        %v2236 = vsub.s32 3, %v2235
        %v2237 = vrot.slane %v2220, %v2236
        %v2238 = vlaneseq
        %v2239 = vshrl.u32 %v2238, 7
        %v2240 = vsub.s32 4, %v2239
        %v2241 = vrot.slane %v2220, %v2240
        %v2242 = vlaneseq
        %v2243 = vshrl.u32 %v2242, 7
        %v2244 = vsub.s32 5, %v2243
        %v2245 = vrot.slane %v2220, %v2244
        %v2252 = vmul.f32 %v2225, %v2207
        %v2253 = vmul.f32 %v2229, %v2208
        %v2254 = vmul.f32 %v2233, %v2209
        %v2255 = vmul.f32 %v2237, %v2210
        %v2256 = vmul.f32 %v2241, %v2211
        %v2257 = vmul.f32 %v2245, %v2212
        %v2258 = vmul.f32 %v2225, %v2213
        %v2259 = vmul.f32 %v2229, %v2214
        %v2260 = vmul.f32 %v2233, %v2215
        %v2261 = vmul.f32 %v2237, %v2216
        %v2262 = vmul.f32 %v2241, %v2217
        %v2263 = vmul.f32 %v2245, %v2218
        %v2264 = vadd.f32 %v2252, %v2253
        %v2265 = vadd.f32 %v2258, %v2259
        %v2266 = vadd.f32 %v2264, %v2254
        %v2267 = vadd.f32 %v2265, %v2260
        %v2268 = vadd.f32 %v2266, %v2255
        %v2269 = vadd.f32 %v2267, %v2261
        %v2270 = vadd.f32 %v2268, %v2256
        %v2271 = vadd.f32 %v2269, %v2262
        %v2272 = vadd.f32 %v2270, %v2257
        %v2273 = vadd.f32 %v2271, %v2263
        %v2274 = vadd.f32 %v2142, %v2272
        %v2275 = vadd.f32 %v2143, %v2273
        %s2276 = scalar_lea.vmem %s183, 181 [#allocation2]
        %v2277 = vld [vmem:[%s2276] ss:$2 sm:$0x3f]
        %v2279 = vlaneseq
        %v2280 = vshrl.u32 %v2279, 7
        %v2281 = vsub.s32 0, %v2280
        %v2282 = vrot.slane %v2277, %v2281
        %v2283 = vlaneseq
        %v2284 = vshrl.u32 %v2283, 7
        %v2285 = vsub.s32 1, %v2284
        %v2286 = vrot.slane %v2277, %v2285
        %v2287 = vlaneseq
        %v2288 = vshrl.u32 %v2287, 7
        %v2289 = vsub.s32 2, %v2288
        %v2290 = vrot.slane %v2277, %v2289
        %v2291 = vlaneseq
        %v2292 = vshrl.u32 %v2291, 7
        %v2293 = vsub.s32 3, %v2292
        %v2294 = vrot.slane %v2277, %v2293
        %v2295 = vlaneseq
        %v2296 = vshrl.u32 %v2295, 7
        %v2297 = vsub.s32 4, %v2296
        %v2298 = vrot.slane %v2277, %v2297
        %v2299 = vlaneseq
        %v2300 = vshrl.u32 %v2299, 7
        %v2301 = vsub.s32 5, %v2300
        %v2302 = vrot.slane %v2277, %v2301
        %v2309 = vmul.f32 %v2282, %v2207
        %v2310 = vmul.f32 %v2286, %v2208
        %v2311 = vmul.f32 %v2290, %v2209
        %v2312 = vmul.f32 %v2294, %v2210
        %v2313 = vmul.f32 %v2298, %v2211
        %v2314 = vmul.f32 %v2302, %v2212
        %v2315 = vmul.f32 %v2282, %v2213
        %v2316 = vmul.f32 %v2286, %v2214
        %v2317 = vmul.f32 %v2290, %v2215
        %v2318 = vmul.f32 %v2294, %v2216
        %v2319 = vmul.f32 %v2298, %v2217
        %v2320 = vmul.f32 %v2302, %v2218
        %v2321 = vadd.f32 %v2309, %v2310
        %v2322 = vadd.f32 %v2315, %v2316
        %v2323 = vadd.f32 %v2321, %v2311
        %v2324 = vadd.f32 %v2322, %v2317
        %v2325 = vadd.f32 %v2323, %v2312
        %v2326 = vadd.f32 %v2324, %v2318
        %v2327 = vadd.f32 %v2325, %v2313
        %v2328 = vadd.f32 %v2326, %v2319
        %v2329 = vadd.f32 %v2327, %v2314
        %v2330 = vadd.f32 %v2328, %v2320
        %v2331 = vadd.f32 %v2199, %v2329
        %v2332 = vadd.f32 %v2200, %v2330
        %v2333 = vld [vmem:[%s192 + $0x180] sm:$0xff]
        %v2334 = vld [vmem:[%s192 + $0x188] sm:$0xff]
        %v2335 = vld [vmem:[%s192 + $0x190] sm:$0xff]
        %v2336 = vld [vmem:[%s192 + $0x6a8] sm:$0x33]
        %v2337 = vld [vmem:[%s192 + $0x6b0] sm:$0x33]
        %v2338 = vld [vmem:[%s192 + $0x6b8] sm:$0x33]
        %v2339 = vunpack.c.l.bf16 %v2333
        %v2340 = vunpack.c.h.bf16 %v2333
        %v2341 = vunpack.c.l.bf16 %v2334
        %v2342 = vunpack.c.h.bf16 %v2334
        %v2343 = vunpack.c.l.bf16 %v2335
        %v2344 = vunpack.c.h.bf16 %v2335
        %v2345 = vunpack.c.l.bf16 %v2336
        %v2346 = vunpack.c.h.bf16 %v2336
        %v2347 = vunpack.c.l.bf16 %v2337
        %v2348 = vunpack.c.h.bf16 %v2337
        %v2349 = vunpack.c.l.bf16 %v2338
        %v2350 = vunpack.c.h.bf16 %v2338
        %s2351 = scalar_lea.vmem %s183, 192 [#allocation2]
        %v2352 = vld [vmem:[%s2351] ss:$2 sm:$0x3f]
        %v2354 = vlaneseq
        %v2355 = vshrl.u32 %v2354, 7
        %v2356 = vsub.s32 0, %v2355
        %v2357 = vrot.slane %v2352, %v2356
        %v2358 = vlaneseq
        %v2359 = vshrl.u32 %v2358, 7
        %v2360 = vsub.s32 1, %v2359
        %v2361 = vrot.slane %v2352, %v2360
        %v2362 = vlaneseq
        %v2363 = vshrl.u32 %v2362, 7
        %v2364 = vsub.s32 2, %v2363
        %v2365 = vrot.slane %v2352, %v2364
        %v2366 = vlaneseq
        %v2367 = vshrl.u32 %v2366, 7
        %v2368 = vsub.s32 3, %v2367
        %v2369 = vrot.slane %v2352, %v2368
        %v2370 = vlaneseq
        %v2371 = vshrl.u32 %v2370, 7
        %v2372 = vsub.s32 4, %v2371
        %v2373 = vrot.slane %v2352, %v2372
        %v2374 = vlaneseq
        %v2375 = vshrl.u32 %v2374, 7
        %v2376 = vsub.s32 5, %v2375
        %v2377 = vrot.slane %v2352, %v2376
        %v2384 = vmul.f32 %v2357, %v2339
        %v2385 = vmul.f32 %v2361, %v2340
        %v2386 = vmul.f32 %v2365, %v2341
        %v2387 = vmul.f32 %v2369, %v2342
        %v2388 = vmul.f32 %v2373, %v2343
        %v2389 = vmul.f32 %v2377, %v2344
        %v2390 = vmul.f32 %v2357, %v2345
        %v2391 = vmul.f32 %v2361, %v2346
        %v2392 = vmul.f32 %v2365, %v2347
        %v2393 = vmul.f32 %v2369, %v2348
        %v2394 = vmul.f32 %v2373, %v2349
        %v2395 = vmul.f32 %v2377, %v2350
        %v2396 = vadd.f32 %v2384, %v2385
        %v2397 = vadd.f32 %v2390, %v2391
        %v2398 = vadd.f32 %v2396, %v2386
        %v2399 = vadd.f32 %v2397, %v2392
        %v2400 = vadd.f32 %v2398, %v2387
        %v2401 = vadd.f32 %v2399, %v2393
        %v2402 = vadd.f32 %v2400, %v2388
        %v2403 = vadd.f32 %v2401, %v2394
        %v2404 = vadd.f32 %v2402, %v2389
        %v2405 = vadd.f32 %v2403, %v2395
        %v2406 = vadd.f32 %v2274, %v2404
        %v2407 = vadd.f32 %v2275, %v2405
        %s2408 = scalar_lea.vmem %s183, 193 [#allocation2]
        %v2409 = vld [vmem:[%s2408] ss:$2 sm:$0x3f]
        %v2411 = vlaneseq
        %v2412 = vshrl.u32 %v2411, 7
        %v2413 = vsub.s32 0, %v2412
        %v2414 = vrot.slane %v2409, %v2413
        %v2415 = vlaneseq
        %v2416 = vshrl.u32 %v2415, 7
        %v2417 = vsub.s32 1, %v2416
        %v2418 = vrot.slane %v2409, %v2417
        %v2419 = vlaneseq
        %v2420 = vshrl.u32 %v2419, 7
        %v2421 = vsub.s32 2, %v2420
        %v2422 = vrot.slane %v2409, %v2421
        %v2423 = vlaneseq
        %v2424 = vshrl.u32 %v2423, 7
        %v2425 = vsub.s32 3, %v2424
        %v2426 = vrot.slane %v2409, %v2425
        %v2427 = vlaneseq
        %v2428 = vshrl.u32 %v2427, 7
        %v2429 = vsub.s32 4, %v2428
        %v2430 = vrot.slane %v2409, %v2429
        %v2431 = vlaneseq
        %v2432 = vshrl.u32 %v2431, 7
        %v2433 = vsub.s32 5, %v2432
        %v2434 = vrot.slane %v2409, %v2433
        %v2441 = vmul.f32 %v2414, %v2339
        %v2442 = vmul.f32 %v2418, %v2340
        %v2443 = vmul.f32 %v2422, %v2341
        %v2444 = vmul.f32 %v2426, %v2342
        %v2445 = vmul.f32 %v2430, %v2343
        %v2446 = vmul.f32 %v2434, %v2344
        %v2447 = vmul.f32 %v2414, %v2345
        %v2448 = vmul.f32 %v2418, %v2346
        %v2449 = vmul.f32 %v2422, %v2347
        %v2450 = vmul.f32 %v2426, %v2348
        %v2451 = vmul.f32 %v2430, %v2349
        %v2452 = vmul.f32 %v2434, %v2350
        %v2453 = vadd.f32 %v2441, %v2442
        %v2454 = vadd.f32 %v2447, %v2448
        %v2455 = vadd.f32 %v2453, %v2443
        %v2456 = vadd.f32 %v2454, %v2449
        %v2457 = vadd.f32 %v2455, %v2444
        %v2458 = vadd.f32 %v2456, %v2450
        %v2459 = vadd.f32 %v2457, %v2445
        %v2460 = vadd.f32 %v2458, %v2451
        %v2461 = vadd.f32 %v2459, %v2446
        %v2462 = vadd.f32 %v2460, %v2452
        %v2463 = vadd.f32 %v2331, %v2461
        %v2464 = vadd.f32 %v2332, %v2462
        %v2465 = vld [vmem:[%s192 + $0x198] sm:$0xff]
        %v2466 = vld [vmem:[%s192 + $0x1a0] sm:$0xff]
        %v2467 = vld [vmem:[%s192 + $0x1a8] sm:$0xff]
        %v2468 = vld [vmem:[%s192 + $0x6c0] sm:$0x33]
        %v2469 = vld [vmem:[%s192 + $0x6c8] sm:$0x33]
        %v2470 = vld [vmem:[%s192 + $0x6d0] sm:$0x33]
        %v2471 = vunpack.c.l.bf16 %v2465
        %v2472 = vunpack.c.h.bf16 %v2465
        %v2473 = vunpack.c.l.bf16 %v2466
        %v2474 = vunpack.c.h.bf16 %v2466
        %v2475 = vunpack.c.l.bf16 %v2467
        %v2476 = vunpack.c.h.bf16 %v2467
        %v2477 = vunpack.c.l.bf16 %v2468
        %v2478 = vunpack.c.h.bf16 %v2468
        %v2479 = vunpack.c.l.bf16 %v2469
        %v2480 = vunpack.c.h.bf16 %v2469
        %v2481 = vunpack.c.l.bf16 %v2470
        %v2482 = vunpack.c.h.bf16 %v2470
        %s2483 = scalar_lea.vmem %s183, 204 [#allocation2]
        %v2484 = vld [vmem:[%s2483] ss:$2 sm:$0x3f]
        %v2486 = vlaneseq
        %v2487 = vshrl.u32 %v2486, 7
        %v2488 = vsub.s32 0, %v2487
        %v2489 = vrot.slane %v2484, %v2488
        %v2490 = vlaneseq
        %v2491 = vshrl.u32 %v2490, 7
        %v2492 = vsub.s32 1, %v2491
        %v2493 = vrot.slane %v2484, %v2492
        %v2494 = vlaneseq
        %v2495 = vshrl.u32 %v2494, 7
        %v2496 = vsub.s32 2, %v2495
        %v2497 = vrot.slane %v2484, %v2496
        %v2498 = vlaneseq
        %v2499 = vshrl.u32 %v2498, 7
        %v2500 = vsub.s32 3, %v2499
        %v2501 = vrot.slane %v2484, %v2500
        %v2502 = vlaneseq
        %v2503 = vshrl.u32 %v2502, 7
        %v2504 = vsub.s32 4, %v2503
        %v2505 = vrot.slane %v2484, %v2504
        %v2506 = vlaneseq
        %v2507 = vshrl.u32 %v2506, 7
        %v2508 = vsub.s32 5, %v2507
        %v2509 = vrot.slane %v2484, %v2508
        %v2516 = vmul.f32 %v2489, %v2471
        %v2517 = vmul.f32 %v2493, %v2472
        %v2518 = vmul.f32 %v2497, %v2473
        %v2519 = vmul.f32 %v2501, %v2474
        %v2520 = vmul.f32 %v2505, %v2475
        %v2521 = vmul.f32 %v2509, %v2476
        %v2522 = vmul.f32 %v2489, %v2477
        %v2523 = vmul.f32 %v2493, %v2478
        %v2524 = vmul.f32 %v2497, %v2479
        %v2525 = vmul.f32 %v2501, %v2480
        %v2526 = vmul.f32 %v2505, %v2481
        %v2527 = vmul.f32 %v2509, %v2482
        %v2528 = vadd.f32 %v2516, %v2517
        %v2529 = vadd.f32 %v2522, %v2523
        %v2530 = vadd.f32 %v2528, %v2518
        %v2531 = vadd.f32 %v2529, %v2524
        %v2532 = vadd.f32 %v2530, %v2519
        %v2533 = vadd.f32 %v2531, %v2525
        %v2534 = vadd.f32 %v2532, %v2520
        %v2535 = vadd.f32 %v2533, %v2526
        %v2536 = vadd.f32 %v2534, %v2521
        %v2537 = vadd.f32 %v2535, %v2527
        %v2538 = vadd.f32 %v2406, %v2536
        %v2539 = vadd.f32 %v2407, %v2537
        %s2540 = scalar_lea.vmem %s183, 205 [#allocation2]
        %v2541 = vld [vmem:[%s2540] ss:$2 sm:$0x3f]
        %v2543 = vlaneseq
        %v2544 = vshrl.u32 %v2543, 7
        %v2545 = vsub.s32 0, %v2544
        %v2546 = vrot.slane %v2541, %v2545
        %v2547 = vlaneseq
        %v2548 = vshrl.u32 %v2547, 7
        %v2549 = vsub.s32 1, %v2548
        %v2550 = vrot.slane %v2541, %v2549
        %v2551 = vlaneseq
        %v2552 = vshrl.u32 %v2551, 7
        %v2553 = vsub.s32 2, %v2552
        %v2554 = vrot.slane %v2541, %v2553
        %v2555 = vlaneseq
        %v2556 = vshrl.u32 %v2555, 7
        %v2557 = vsub.s32 3, %v2556
        %v2558 = vrot.slane %v2541, %v2557
        %v2559 = vlaneseq
        %v2560 = vshrl.u32 %v2559, 7
        %v2561 = vsub.s32 4, %v2560
        %v2562 = vrot.slane %v2541, %v2561
        %v2563 = vlaneseq
        %v2564 = vshrl.u32 %v2563, 7
        %v2565 = vsub.s32 5, %v2564
        %v2566 = vrot.slane %v2541, %v2565
        %v2573 = vmul.f32 %v2546, %v2471
        %v2574 = vmul.f32 %v2550, %v2472
        %v2575 = vmul.f32 %v2554, %v2473
        %v2576 = vmul.f32 %v2558, %v2474
        %v2577 = vmul.f32 %v2562, %v2475
        %v2578 = vmul.f32 %v2566, %v2476
        %v2579 = vmul.f32 %v2546, %v2477
        %v2580 = vmul.f32 %v2550, %v2478
        %v2581 = vmul.f32 %v2554, %v2479
        %v2582 = vmul.f32 %v2558, %v2480
        %v2583 = vmul.f32 %v2562, %v2481
        %v2584 = vmul.f32 %v2566, %v2482
        %v2585 = vadd.f32 %v2573, %v2574
        %v2586 = vadd.f32 %v2579, %v2580
        %v2587 = vadd.f32 %v2585, %v2575
        %v2588 = vadd.f32 %v2586, %v2581
        %v2589 = vadd.f32 %v2587, %v2576
        %v2590 = vadd.f32 %v2588, %v2582
        %v2591 = vadd.f32 %v2589, %v2577
        %v2592 = vadd.f32 %v2590, %v2583
        %v2593 = vadd.f32 %v2591, %v2578
        %v2594 = vadd.f32 %v2592, %v2584
        %v2595 = vadd.f32 %v2463, %v2593
        %v2596 = vadd.f32 %v2464, %v2594
        %v2597 = vld [vmem:[%s192 + $0x1b0] sm:$0xff]
        %v2598 = vld [vmem:[%s192 + $0x1b8] sm:$0xff]
        %v2599 = vld [vmem:[%s192 + $0x1c0] sm:$0xff]
        %v2600 = vld [vmem:[%s192 + $0x6d8] sm:$0x33]
        %v2601 = vld [vmem:[%s192 + $0x6e0] sm:$0x33]
        %v2602 = vld [vmem:[%s192 + $0x6e8] sm:$0x33]
        %v2603 = vunpack.c.l.bf16 %v2597
        %v2604 = vunpack.c.h.bf16 %v2597
        %v2605 = vunpack.c.l.bf16 %v2598
        %v2606 = vunpack.c.h.bf16 %v2598
        %v2607 = vunpack.c.l.bf16 %v2599
        %v2608 = vunpack.c.h.bf16 %v2599
        %v2609 = vunpack.c.l.bf16 %v2600
        %v2610 = vunpack.c.h.bf16 %v2600
        %v2611 = vunpack.c.l.bf16 %v2601
        %v2612 = vunpack.c.h.bf16 %v2601
        %v2613 = vunpack.c.l.bf16 %v2602
        %v2614 = vunpack.c.h.bf16 %v2602
        %s2615 = scalar_lea.vmem %s183, 216 [#allocation2]
        %v2616 = vld [vmem:[%s2615] ss:$2 sm:$0x3f]
        %v2618 = vlaneseq
        %v2619 = vshrl.u32 %v2618, 7
        %v2620 = vsub.s32 0, %v2619
        %v2621 = vrot.slane %v2616, %v2620
        %v2622 = vlaneseq
        %v2623 = vshrl.u32 %v2622, 7
        %v2624 = vsub.s32 1, %v2623
        %v2625 = vrot.slane %v2616, %v2624
        %v2626 = vlaneseq
        %v2627 = vshrl.u32 %v2626, 7
        %v2628 = vsub.s32 2, %v2627
        %v2629 = vrot.slane %v2616, %v2628
        %v2630 = vlaneseq
        %v2631 = vshrl.u32 %v2630, 7
        %v2632 = vsub.s32 3, %v2631
        %v2633 = vrot.slane %v2616, %v2632
        %v2634 = vlaneseq
        %v2635 = vshrl.u32 %v2634, 7
        %v2636 = vsub.s32 4, %v2635
        %v2637 = vrot.slane %v2616, %v2636
        %v2638 = vlaneseq
        %v2639 = vshrl.u32 %v2638, 7
        %v2640 = vsub.s32 5, %v2639
        %v2641 = vrot.slane %v2616, %v2640
        %v2648 = vmul.f32 %v2621, %v2603
        %v2649 = vmul.f32 %v2625, %v2604
        %v2650 = vmul.f32 %v2629, %v2605
        %v2651 = vmul.f32 %v2633, %v2606
        %v2652 = vmul.f32 %v2637, %v2607
        %v2653 = vmul.f32 %v2641, %v2608
        %v2654 = vmul.f32 %v2621, %v2609
        %v2655 = vmul.f32 %v2625, %v2610
        %v2656 = vmul.f32 %v2629, %v2611
        %v2657 = vmul.f32 %v2633, %v2612
        %v2658 = vmul.f32 %v2637, %v2613
        %v2659 = vmul.f32 %v2641, %v2614
        %v2660 = vadd.f32 %v2648, %v2649
        %v2661 = vadd.f32 %v2654, %v2655
        %v2662 = vadd.f32 %v2660, %v2650
        %v2663 = vadd.f32 %v2661, %v2656
        %v2664 = vadd.f32 %v2662, %v2651
        %v2665 = vadd.f32 %v2663, %v2657
        %v2666 = vadd.f32 %v2664, %v2652
        %v2667 = vadd.f32 %v2665, %v2658
        %v2668 = vadd.f32 %v2666, %v2653
        %v2669 = vadd.f32 %v2667, %v2659
        %v2670 = vadd.f32 %v2538, %v2668
        %v2671 = vadd.f32 %v2539, %v2669
        %s2672 = scalar_lea.vmem %s183, 217 [#allocation2]
        %v2673 = vld [vmem:[%s2672] ss:$2 sm:$0x3f]
        %v2675 = vlaneseq
        %v2676 = vshrl.u32 %v2675, 7
        %v2677 = vsub.s32 0, %v2676
        %v2678 = vrot.slane %v2673, %v2677
        %v2679 = vlaneseq
        %v2680 = vshrl.u32 %v2679, 7
        %v2681 = vsub.s32 1, %v2680
        %v2682 = vrot.slane %v2673, %v2681
        %v2683 = vlaneseq
        %v2684 = vshrl.u32 %v2683, 7
        %v2685 = vsub.s32 2, %v2684
        %v2686 = vrot.slane %v2673, %v2685
        %v2687 = vlaneseq
        %v2688 = vshrl.u32 %v2687, 7
        %v2689 = vsub.s32 3, %v2688
        %v2690 = vrot.slane %v2673, %v2689
        %v2691 = vlaneseq
        %v2692 = vshrl.u32 %v2691, 7
        %v2693 = vsub.s32 4, %v2692
        %v2694 = vrot.slane %v2673, %v2693
        %v2695 = vlaneseq
        %v2696 = vshrl.u32 %v2695, 7
        %v2697 = vsub.s32 5, %v2696
        %v2698 = vrot.slane %v2673, %v2697
        %v2705 = vmul.f32 %v2678, %v2603
        %v2706 = vmul.f32 %v2682, %v2604
        %v2707 = vmul.f32 %v2686, %v2605
        %v2708 = vmul.f32 %v2690, %v2606
        %v2709 = vmul.f32 %v2694, %v2607
        %v2710 = vmul.f32 %v2698, %v2608
        %v2711 = vmul.f32 %v2678, %v2609
        %v2712 = vmul.f32 %v2682, %v2610
        %v2713 = vmul.f32 %v2686, %v2611
        %v2714 = vmul.f32 %v2690, %v2612
        %v2715 = vmul.f32 %v2694, %v2613
        %v2716 = vmul.f32 %v2698, %v2614
        %v2717 = vadd.f32 %v2705, %v2706
        %v2718 = vadd.f32 %v2711, %v2712
        %v2719 = vadd.f32 %v2717, %v2707
        %v2720 = vadd.f32 %v2718, %v2713
        %v2721 = vadd.f32 %v2719, %v2708
        %v2722 = vadd.f32 %v2720, %v2714
        %v2723 = vadd.f32 %v2721, %v2709
        %v2724 = vadd.f32 %v2722, %v2715
        %v2725 = vadd.f32 %v2723, %v2710
        %v2726 = vadd.f32 %v2724, %v2716
        %v2727 = vadd.f32 %v2595, %v2725
        %v2728 = vadd.f32 %v2596, %v2726
        %v2729 = vld [vmem:[%s192 + $0x1c8] sm:$0xff]
        %v2730 = vld [vmem:[%s192 + $0x1d0] sm:$0xff]
        %v2731 = vld [vmem:[%s192 + $0x1d8] sm:$0xff]
        %v2732 = vld [vmem:[%s192 + $0x6f0] sm:$0x33]
        %v2733 = vld [vmem:[%s192 + $0x6f8] sm:$0x33]
        %v2734 = vld [vmem:[%s192 + $0x700] sm:$0x33]
        %v2735 = vunpack.c.l.bf16 %v2729
        %v2736 = vunpack.c.h.bf16 %v2729
        %v2737 = vunpack.c.l.bf16 %v2730
        %v2738 = vunpack.c.h.bf16 %v2730
        %v2739 = vunpack.c.l.bf16 %v2731
        %v2740 = vunpack.c.h.bf16 %v2731
        %v2741 = vunpack.c.l.bf16 %v2732
        %v2742 = vunpack.c.h.bf16 %v2732
        %v2743 = vunpack.c.l.bf16 %v2733
        %v2744 = vunpack.c.h.bf16 %v2733
        %v2745 = vunpack.c.l.bf16 %v2734
        %v2746 = vunpack.c.h.bf16 %v2734
        %s2747 = scalar_lea.vmem %s183, 228 [#allocation2]
        %v2748 = vld [vmem:[%s2747] ss:$2 sm:$0x3f]
        %v2750 = vlaneseq
        %v2751 = vshrl.u32 %v2750, 7
        %v2752 = vsub.s32 0, %v2751
        %v2753 = vrot.slane %v2748, %v2752
        %v2754 = vlaneseq
        %v2755 = vshrl.u32 %v2754, 7
        %v2756 = vsub.s32 1, %v2755
        %v2757 = vrot.slane %v2748, %v2756
        %v2758 = vlaneseq
        %v2759 = vshrl.u32 %v2758, 7
        %v2760 = vsub.s32 2, %v2759
        %v2761 = vrot.slane %v2748, %v2760
        %v2762 = vlaneseq
        %v2763 = vshrl.u32 %v2762, 7
        %v2764 = vsub.s32 3, %v2763
        %v2765 = vrot.slane %v2748, %v2764
        %v2766 = vlaneseq
        %v2767 = vshrl.u32 %v2766, 7
        %v2768 = vsub.s32 4, %v2767
        %v2769 = vrot.slane %v2748, %v2768
        %v2770 = vlaneseq
        %v2771 = vshrl.u32 %v2770, 7
        %v2772 = vsub.s32 5, %v2771
        %v2773 = vrot.slane %v2748, %v2772
        %v2780 = vmul.f32 %v2753, %v2735
        %v2781 = vmul.f32 %v2757, %v2736
        %v2782 = vmul.f32 %v2761, %v2737
        %v2783 = vmul.f32 %v2765, %v2738
        %v2784 = vmul.f32 %v2769, %v2739
        %v2785 = vmul.f32 %v2773, %v2740
        %v2786 = vmul.f32 %v2753, %v2741
        %v2787 = vmul.f32 %v2757, %v2742
        %v2788 = vmul.f32 %v2761, %v2743
        %v2789 = vmul.f32 %v2765, %v2744
        %v2790 = vmul.f32 %v2769, %v2745
        %v2791 = vmul.f32 %v2773, %v2746
        %v2792 = vadd.f32 %v2780, %v2781
        %v2793 = vadd.f32 %v2786, %v2787
        %v2794 = vadd.f32 %v2792, %v2782
        %v2795 = vadd.f32 %v2793, %v2788
        %v2796 = vadd.f32 %v2794, %v2783
        %v2797 = vadd.f32 %v2795, %v2789
        %v2798 = vadd.f32 %v2796, %v2784
        %v2799 = vadd.f32 %v2797, %v2790
        %v2800 = vadd.f32 %v2798, %v2785
        %v2801 = vadd.f32 %v2799, %v2791
        %v2802 = vadd.f32 %v2670, %v2800
        %v2803 = vadd.f32 %v2671, %v2801
        %s2804 = scalar_lea.vmem %s183, 229 [#allocation2]
        %v2805 = vld [vmem:[%s2804] ss:$2 sm:$0x3f]
        %v2807 = vlaneseq
        %v2808 = vshrl.u32 %v2807, 7
        %v2809 = vsub.s32 0, %v2808
        %v2810 = vrot.slane %v2805, %v2809
        %v2811 = vlaneseq
        %v2812 = vshrl.u32 %v2811, 7
        %v2813 = vsub.s32 1, %v2812
        %v2814 = vrot.slane %v2805, %v2813
        %v2815 = vlaneseq
        %v2816 = vshrl.u32 %v2815, 7
        %v2817 = vsub.s32 2, %v2816
        %v2818 = vrot.slane %v2805, %v2817
        %v2819 = vlaneseq
        %v2820 = vshrl.u32 %v2819, 7
        %v2821 = vsub.s32 3, %v2820
        %v2822 = vrot.slane %v2805, %v2821
        %v2823 = vlaneseq
        %v2824 = vshrl.u32 %v2823, 7
        %v2825 = vsub.s32 4, %v2824
        %v2826 = vrot.slane %v2805, %v2825
        %v2827 = vlaneseq
        %v2828 = vshrl.u32 %v2827, 7
        %v2829 = vsub.s32 5, %v2828
        %v2830 = vrot.slane %v2805, %v2829
        %v2837 = vmul.f32 %v2810, %v2735
        %v2838 = vmul.f32 %v2814, %v2736
        %v2839 = vmul.f32 %v2818, %v2737
        %v2840 = vmul.f32 %v2822, %v2738
        %v2841 = vmul.f32 %v2826, %v2739
        %v2842 = vmul.f32 %v2830, %v2740
        %v2843 = vmul.f32 %v2810, %v2741
        %v2844 = vmul.f32 %v2814, %v2742
        %v2845 = vmul.f32 %v2818, %v2743
        %v2846 = vmul.f32 %v2822, %v2744
        %v2847 = vmul.f32 %v2826, %v2745
        %v2848 = vmul.f32 %v2830, %v2746
        %v2849 = vadd.f32 %v2837, %v2838
        %v2850 = vadd.f32 %v2843, %v2844
        %v2851 = vadd.f32 %v2849, %v2839
        %v2852 = vadd.f32 %v2850, %v2845
        %v2853 = vadd.f32 %v2851, %v2840
        %v2854 = vadd.f32 %v2852, %v2846
        %v2855 = vadd.f32 %v2853, %v2841
        %v2856 = vadd.f32 %v2854, %v2847
        %v2857 = vadd.f32 %v2855, %v2842
        %v2858 = vadd.f32 %v2856, %v2848
        %v2859 = vadd.f32 %v2727, %v2857
        %v2860 = vadd.f32 %v2728, %v2858
        %v2861 = vld [vmem:[%s192 + $0x1e0] sm:$0xff]
        %v2862 = vld [vmem:[%s192 + $0x1e8] sm:$0xff]
        %v2863 = vld [vmem:[%s192 + $0x1f0] sm:$0xff]
        %v2864 = vld [vmem:[%s192 + $0x708] sm:$0x33]
        %v2865 = vld [vmem:[%s192 + $0x710] sm:$0x33]
        %v2866 = vld [vmem:[%s192 + $0x718] sm:$0x33]
        %v2867 = vunpack.c.l.bf16 %v2861
        %v2868 = vunpack.c.h.bf16 %v2861
        %v2869 = vunpack.c.l.bf16 %v2862
        %v2870 = vunpack.c.h.bf16 %v2862
        %v2871 = vunpack.c.l.bf16 %v2863
        %v2872 = vunpack.c.h.bf16 %v2863
        %v2873 = vunpack.c.l.bf16 %v2864
        %v2874 = vunpack.c.h.bf16 %v2864
        %v2875 = vunpack.c.l.bf16 %v2865
        %v2876 = vunpack.c.h.bf16 %v2865
        %v2877 = vunpack.c.l.bf16 %v2866
        %v2878 = vunpack.c.h.bf16 %v2866
        %s2879 = scalar_lea.vmem %s183, 240 [#allocation2]
        %v2880 = vld [vmem:[%s2879] ss:$2 sm:$0x3f]
        %v2882 = vlaneseq
        %v2883 = vshrl.u32 %v2882, 7
        %v2884 = vsub.s32 0, %v2883
        %v2885 = vrot.slane %v2880, %v2884
        %v2886 = vlaneseq
        %v2887 = vshrl.u32 %v2886, 7
        %v2888 = vsub.s32 1, %v2887
        %v2889 = vrot.slane %v2880, %v2888
        %v2890 = vlaneseq
        %v2891 = vshrl.u32 %v2890, 7
        %v2892 = vsub.s32 2, %v2891
        %v2893 = vrot.slane %v2880, %v2892
        %v2894 = vlaneseq
        %v2895 = vshrl.u32 %v2894, 7
        %v2896 = vsub.s32 3, %v2895
        %v2897 = vrot.slane %v2880, %v2896
        %v2898 = vlaneseq
        %v2899 = vshrl.u32 %v2898, 7
        %v2900 = vsub.s32 4, %v2899
        %v2901 = vrot.slane %v2880, %v2900
        %v2902 = vlaneseq
        %v2903 = vshrl.u32 %v2902, 7
        %v2904 = vsub.s32 5, %v2903
        %v2905 = vrot.slane %v2880, %v2904
        %v2912 = vmul.f32 %v2885, %v2867
        %v2913 = vmul.f32 %v2889, %v2868
        %v2914 = vmul.f32 %v2893, %v2869
        %v2915 = vmul.f32 %v2897, %v2870
        %v2916 = vmul.f32 %v2901, %v2871
        %v2917 = vmul.f32 %v2905, %v2872
        %v2918 = vmul.f32 %v2885, %v2873
        %v2919 = vmul.f32 %v2889, %v2874
        %v2920 = vmul.f32 %v2893, %v2875
        %v2921 = vmul.f32 %v2897, %v2876
        %v2922 = vmul.f32 %v2901, %v2877
        %v2923 = vmul.f32 %v2905, %v2878
        %v2924 = vadd.f32 %v2912, %v2913
        %v2925 = vadd.f32 %v2918, %v2919
        %v2926 = vadd.f32 %v2924, %v2914
        %v2927 = vadd.f32 %v2925, %v2920
        %v2928 = vadd.f32 %v2926, %v2915
        %v2929 = vadd.f32 %v2927, %v2921
        %v2930 = vadd.f32 %v2928, %v2916
        %v2931 = vadd.f32 %v2929, %v2922
        %v2932 = vadd.f32 %v2930, %v2917
        %v2933 = vadd.f32 %v2931, %v2923
        %v2934 = vadd.f32 %v2802, %v2932
        %v2935 = vadd.f32 %v2803, %v2933
        %s2936 = scalar_lea.vmem %s183, 241 [#allocation2]
        %v2937 = vld [vmem:[%s2936] ss:$2 sm:$0x3f]
        %v2939 = vlaneseq
        %v2940 = vshrl.u32 %v2939, 7
        %v2941 = vsub.s32 0, %v2940
        %v2942 = vrot.slane %v2937, %v2941
        %v2943 = vlaneseq
        %v2944 = vshrl.u32 %v2943, 7
        %v2945 = vsub.s32 1, %v2944
        %v2946 = vrot.slane %v2937, %v2945
        %v2947 = vlaneseq
        %v2948 = vshrl.u32 %v2947, 7
        %v2949 = vsub.s32 2, %v2948
        %v2950 = vrot.slane %v2937, %v2949
        %v2951 = vlaneseq
        %v2952 = vshrl.u32 %v2951, 7
        %v2953 = vsub.s32 3, %v2952
        %v2954 = vrot.slane %v2937, %v2953
        %v2955 = vlaneseq
        %v2956 = vshrl.u32 %v2955, 7
        %v2957 = vsub.s32 4, %v2956
        %v2958 = vrot.slane %v2937, %v2957
        %v2959 = vlaneseq
        %v2960 = vshrl.u32 %v2959, 7
        %v2961 = vsub.s32 5, %v2960
        %v2962 = vrot.slane %v2937, %v2961
        %v2969 = vmul.f32 %v2942, %v2867
        %v2970 = vmul.f32 %v2946, %v2868
        %v2971 = vmul.f32 %v2950, %v2869
        %v2972 = vmul.f32 %v2954, %v2870
        %v2973 = vmul.f32 %v2958, %v2871
        %v2974 = vmul.f32 %v2962, %v2872
        %v2975 = vmul.f32 %v2942, %v2873
        %v2976 = vmul.f32 %v2946, %v2874
        %v2977 = vmul.f32 %v2950, %v2875
        %v2978 = vmul.f32 %v2954, %v2876
        %v2979 = vmul.f32 %v2958, %v2877
        %v2980 = vmul.f32 %v2962, %v2878
        %v2981 = vadd.f32 %v2969, %v2970
        %v2982 = vadd.f32 %v2975, %v2976
        %v2983 = vadd.f32 %v2981, %v2971
        %v2984 = vadd.f32 %v2982, %v2977
        %v2985 = vadd.f32 %v2983, %v2972
        %v2986 = vadd.f32 %v2984, %v2978
        %v2987 = vadd.f32 %v2985, %v2973
        %v2988 = vadd.f32 %v2986, %v2979
        %v2989 = vadd.f32 %v2987, %v2974
        %v2990 = vadd.f32 %v2988, %v2980
        %v2991 = vadd.f32 %v2859, %v2989
        %v2992 = vadd.f32 %v2860, %v2990
        %v2993 = vld [vmem:[%s192 + $0x1f8] sm:$0xff]
        %v2994 = vld [vmem:[%s192 + $0x200] sm:$0xff]
        %v2995 = vld [vmem:[%s192 + $0x208] sm:$0xff]
        %v2996 = vld [vmem:[%s192 + $0x720] sm:$0x33]
        %v2997 = vld [vmem:[%s192 + $0x728] sm:$0x33]
        %v2998 = vld [vmem:[%s192 + $0x730] sm:$0x33]
        %v2999 = vunpack.c.l.bf16 %v2993
        %v3000 = vunpack.c.h.bf16 %v2993
        %v3001 = vunpack.c.l.bf16 %v2994
        %v3002 = vunpack.c.h.bf16 %v2994
        %v3003 = vunpack.c.l.bf16 %v2995
        %v3004 = vunpack.c.h.bf16 %v2995
        %v3005 = vunpack.c.l.bf16 %v2996
        %v3006 = vunpack.c.h.bf16 %v2996
        %v3007 = vunpack.c.l.bf16 %v2997
        %v3008 = vunpack.c.h.bf16 %v2997
        %v3009 = vunpack.c.l.bf16 %v2998
        %v3010 = vunpack.c.h.bf16 %v2998
        %s3011 = scalar_lea.vmem %s183, 252 [#allocation2]
        %v3012 = vld [vmem:[%s3011] ss:$2 sm:$0x3f]
        %v3014 = vlaneseq
        %v3015 = vshrl.u32 %v3014, 7
        %v3016 = vsub.s32 0, %v3015
        %v3017 = vrot.slane %v3012, %v3016
        %v3018 = vlaneseq
        %v3019 = vshrl.u32 %v3018, 7
        %v3020 = vsub.s32 1, %v3019
        %v3021 = vrot.slane %v3012, %v3020
        %v3022 = vlaneseq
        %v3023 = vshrl.u32 %v3022, 7
        %v3024 = vsub.s32 2, %v3023
        %v3025 = vrot.slane %v3012, %v3024
        %v3026 = vlaneseq
        %v3027 = vshrl.u32 %v3026, 7
        %v3028 = vsub.s32 3, %v3027
        %v3029 = vrot.slane %v3012, %v3028
        %v3030 = vlaneseq
        %v3031 = vshrl.u32 %v3030, 7
        %v3032 = vsub.s32 4, %v3031
        %v3033 = vrot.slane %v3012, %v3032
        %v3034 = vlaneseq
        %v3035 = vshrl.u32 %v3034, 7
        %v3036 = vsub.s32 5, %v3035
        %v3037 = vrot.slane %v3012, %v3036
        %v3044 = vmul.f32 %v3017, %v2999
        %v3045 = vmul.f32 %v3021, %v3000
        %v3046 = vmul.f32 %v3025, %v3001
        %v3047 = vmul.f32 %v3029, %v3002
        %v3048 = vmul.f32 %v3033, %v3003
        %v3049 = vmul.f32 %v3037, %v3004
        %v3050 = vmul.f32 %v3017, %v3005
        %v3051 = vmul.f32 %v3021, %v3006
        %v3052 = vmul.f32 %v3025, %v3007
        %v3053 = vmul.f32 %v3029, %v3008
        %v3054 = vmul.f32 %v3033, %v3009
        %v3055 = vmul.f32 %v3037, %v3010
        %v3056 = vadd.f32 %v3044, %v3045
        %v3057 = vadd.f32 %v3050, %v3051
        %v3058 = vadd.f32 %v3056, %v3046
        %v3059 = vadd.f32 %v3057, %v3052
        %v3060 = vadd.f32 %v3058, %v3047
        %v3061 = vadd.f32 %v3059, %v3053
        %v3062 = vadd.f32 %v3060, %v3048
        %v3063 = vadd.f32 %v3061, %v3054
        %v3064 = vadd.f32 %v3062, %v3049
        %v3065 = vadd.f32 %v3063, %v3055
        %v3066 = vadd.f32 %v2934, %v3064
        %v3067 = vadd.f32 %v2935, %v3065
        %s3068 = scalar_lea.vmem %s183, 253 [#allocation2]
        %v3069 = vld [vmem:[%s3068] ss:$2 sm:$0x3f]
        %v3071 = vlaneseq
        %v3072 = vshrl.u32 %v3071, 7
        %v3073 = vsub.s32 0, %v3072
        %v3074 = vrot.slane %v3069, %v3073
        %v3075 = vlaneseq
        %v3076 = vshrl.u32 %v3075, 7
        %v3077 = vsub.s32 1, %v3076
        %v3078 = vrot.slane %v3069, %v3077
        %v3079 = vlaneseq
        %v3080 = vshrl.u32 %v3079, 7
        %v3081 = vsub.s32 2, %v3080
        %v3082 = vrot.slane %v3069, %v3081
        %v3083 = vlaneseq
        %v3084 = vshrl.u32 %v3083, 7
        %v3085 = vsub.s32 3, %v3084
        %v3086 = vrot.slane %v3069, %v3085
        %v3087 = vlaneseq
        %v3088 = vshrl.u32 %v3087, 7
        %v3089 = vsub.s32 4, %v3088
        %v3090 = vrot.slane %v3069, %v3089
        %v3091 = vlaneseq
        %v3092 = vshrl.u32 %v3091, 7
        %v3093 = vsub.s32 5, %v3092
        %v3094 = vrot.slane %v3069, %v3093
        %v3101 = vmul.f32 %v3074, %v2999
        %v3102 = vmul.f32 %v3078, %v3000
        %v3103 = vmul.f32 %v3082, %v3001
        %v3104 = vmul.f32 %v3086, %v3002
        %v3105 = vmul.f32 %v3090, %v3003
        %v3106 = vmul.f32 %v3094, %v3004
        %v3107 = vmul.f32 %v3074, %v3005
        %v3108 = vmul.f32 %v3078, %v3006
        %v3109 = vmul.f32 %v3082, %v3007
        %v3110 = vmul.f32 %v3086, %v3008
        %v3111 = vmul.f32 %v3090, %v3009
        %v3112 = vmul.f32 %v3094, %v3010
        %v3113 = vadd.f32 %v3101, %v3102
        %v3114 = vadd.f32 %v3107, %v3108
        %v3115 = vadd.f32 %v3113, %v3103
        %v3116 = vadd.f32 %v3114, %v3109
        %v3117 = vadd.f32 %v3115, %v3104
        %v3118 = vadd.f32 %v3116, %v3110
        %v3119 = vadd.f32 %v3117, %v3105
        %v3120 = vadd.f32 %v3118, %v3111
        %v3121 = vadd.f32 %v3119, %v3106
        %v3122 = vadd.f32 %v3120, %v3112
        %v3123 = vadd.f32 %v2991, %v3121
        %v3124 = vadd.f32 %v2992, %v3122
        %v3125 = vld [vmem:[%s192 + $0x210] sm:$0xff]
        %v3126 = vld [vmem:[%s192 + $0x218] sm:$0xff]
        %v3127 = vld [vmem:[%s192 + $0x220] sm:$0xff]
        %v3128 = vld [vmem:[%s192 + $0x738] sm:$0x33]
        %v3129 = vld [vmem:[%s192 + $0x740] sm:$0x33]
        %v3130 = vld [vmem:[%s192 + $0x748] sm:$0x33]
        %v3131 = vunpack.c.l.bf16 %v3125
        %v3132 = vunpack.c.h.bf16 %v3125
        %v3133 = vunpack.c.l.bf16 %v3126
        %v3134 = vunpack.c.h.bf16 %v3126
        %v3135 = vunpack.c.l.bf16 %v3127
        %v3136 = vunpack.c.h.bf16 %v3127
        %v3137 = vunpack.c.l.bf16 %v3128
        %v3138 = vunpack.c.h.bf16 %v3128
        %v3139 = vunpack.c.l.bf16 %v3129
        %v3140 = vunpack.c.h.bf16 %v3129
        %v3141 = vunpack.c.l.bf16 %v3130
        %v3142 = vunpack.c.h.bf16 %v3130
        %s3143 = scalar_lea.vmem %s183, 264 [#allocation2]
        %v3144 = vld [vmem:[%s3143] ss:$2 sm:$0x3f]
        %v3146 = vlaneseq
        %v3147 = vshrl.u32 %v3146, 7
        %v3148 = vsub.s32 0, %v3147
        %v3149 = vrot.slane %v3144, %v3148
        %v3150 = vlaneseq
        %v3151 = vshrl.u32 %v3150, 7
        %v3152 = vsub.s32 1, %v3151
        %v3153 = vrot.slane %v3144, %v3152
        %v3154 = vlaneseq
        %v3155 = vshrl.u32 %v3154, 7
        %v3156 = vsub.s32 2, %v3155
        %v3157 = vrot.slane %v3144, %v3156
        %v3158 = vlaneseq
        %v3159 = vshrl.u32 %v3158, 7
        %v3160 = vsub.s32 3, %v3159
        %v3161 = vrot.slane %v3144, %v3160
        %v3162 = vlaneseq
        %v3163 = vshrl.u32 %v3162, 7
        %v3164 = vsub.s32 4, %v3163
        %v3165 = vrot.slane %v3144, %v3164
        %v3166 = vlaneseq
        %v3167 = vshrl.u32 %v3166, 7
        %v3168 = vsub.s32 5, %v3167
        %v3169 = vrot.slane %v3144, %v3168
        %v3176 = vmul.f32 %v3149, %v3131
        %v3177 = vmul.f32 %v3153, %v3132
        %v3178 = vmul.f32 %v3157, %v3133
        %v3179 = vmul.f32 %v3161, %v3134
        %v3180 = vmul.f32 %v3165, %v3135
        %v3181 = vmul.f32 %v3169, %v3136
        %v3182 = vmul.f32 %v3149, %v3137
        %v3183 = vmul.f32 %v3153, %v3138
        %v3184 = vmul.f32 %v3157, %v3139
        %v3185 = vmul.f32 %v3161, %v3140
        %v3186 = vmul.f32 %v3165, %v3141
        %v3187 = vmul.f32 %v3169, %v3142
        %v3188 = vadd.f32 %v3176, %v3177
        %v3189 = vadd.f32 %v3182, %v3183
        %v3190 = vadd.f32 %v3188, %v3178
        %v3191 = vadd.f32 %v3189, %v3184
        %v3192 = vadd.f32 %v3190, %v3179
        %v3193 = vadd.f32 %v3191, %v3185
        %v3194 = vadd.f32 %v3192, %v3180
        %v3195 = vadd.f32 %v3193, %v3186
        %v3196 = vadd.f32 %v3194, %v3181
        %v3197 = vadd.f32 %v3195, %v3187
        %v3198 = vadd.f32 %v3066, %v3196
        %v3199 = vadd.f32 %v3067, %v3197
        %s3200 = scalar_lea.vmem %s183, 265 [#allocation2]
        %v3201 = vld [vmem:[%s3200] ss:$2 sm:$0x3f]
        %v3203 = vlaneseq
        %v3204 = vshrl.u32 %v3203, 7
        %v3205 = vsub.s32 0, %v3204
        %v3206 = vrot.slane %v3201, %v3205
        %v3207 = vlaneseq
        %v3208 = vshrl.u32 %v3207, 7
        %v3209 = vsub.s32 1, %v3208
        %v3210 = vrot.slane %v3201, %v3209
        %v3211 = vlaneseq
        %v3212 = vshrl.u32 %v3211, 7
        %v3213 = vsub.s32 2, %v3212
        %v3214 = vrot.slane %v3201, %v3213
        %v3215 = vlaneseq
        %v3216 = vshrl.u32 %v3215, 7
        %v3217 = vsub.s32 3, %v3216
        %v3218 = vrot.slane %v3201, %v3217
        %v3219 = vlaneseq
        %v3220 = vshrl.u32 %v3219, 7
        %v3221 = vsub.s32 4, %v3220
        %v3222 = vrot.slane %v3201, %v3221
        %v3223 = vlaneseq
        %v3224 = vshrl.u32 %v3223, 7
        %v3225 = vsub.s32 5, %v3224
        %v3226 = vrot.slane %v3201, %v3225
        %v3233 = vmul.f32 %v3206, %v3131
        %v3234 = vmul.f32 %v3210, %v3132
        %v3235 = vmul.f32 %v3214, %v3133
        %v3236 = vmul.f32 %v3218, %v3134
        %v3237 = vmul.f32 %v3222, %v3135
        %v3238 = vmul.f32 %v3226, %v3136
        %v3239 = vmul.f32 %v3206, %v3137
        %v3240 = vmul.f32 %v3210, %v3138
        %v3241 = vmul.f32 %v3214, %v3139
        %v3242 = vmul.f32 %v3218, %v3140
        %v3243 = vmul.f32 %v3222, %v3141
        %v3244 = vmul.f32 %v3226, %v3142
        %v3245 = vadd.f32 %v3233, %v3234
        %v3246 = vadd.f32 %v3239, %v3240
        %v3247 = vadd.f32 %v3245, %v3235
        %v3248 = vadd.f32 %v3246, %v3241
        %v3249 = vadd.f32 %v3247, %v3236
        %v3250 = vadd.f32 %v3248, %v3242
        %v3251 = vadd.f32 %v3249, %v3237
        %v3252 = vadd.f32 %v3250, %v3243
        %v3253 = vadd.f32 %v3251, %v3238
        %v3254 = vadd.f32 %v3252, %v3244
        %v3255 = vadd.f32 %v3123, %v3253
        %v3256 = vadd.f32 %v3124, %v3254
        %v3257 = vld [vmem:[%s192 + $0x228] sm:$0xff]
        %v3258 = vld [vmem:[%s192 + $0x230] sm:$0xff]
        %v3259 = vld [vmem:[%s192 + $0x238] sm:$0xff]
        %v3260 = vld [vmem:[%s192 + $0x750] sm:$0x33]
        %v3261 = vld [vmem:[%s192 + $0x758] sm:$0x33]
        %v3262 = vld [vmem:[%s192 + $0x760] sm:$0x33]
        %v3263 = vunpack.c.l.bf16 %v3257
        %v3264 = vunpack.c.h.bf16 %v3257
        %v3265 = vunpack.c.l.bf16 %v3258
        %v3266 = vunpack.c.h.bf16 %v3258
        %v3267 = vunpack.c.l.bf16 %v3259
        %v3268 = vunpack.c.h.bf16 %v3259
        %v3269 = vunpack.c.l.bf16 %v3260
        %v3270 = vunpack.c.h.bf16 %v3260
        %v3271 = vunpack.c.l.bf16 %v3261
        %v3272 = vunpack.c.h.bf16 %v3261
        %v3273 = vunpack.c.l.bf16 %v3262
        %v3274 = vunpack.c.h.bf16 %v3262
        %s3275 = scalar_lea.vmem %s183, 276 [#allocation2]
        %v3276 = vld [vmem:[%s3275] ss:$2 sm:$0x3f]
        %v3278 = vlaneseq
        %v3279 = vshrl.u32 %v3278, 7
        %v3280 = vsub.s32 0, %v3279
        %v3281 = vrot.slane %v3276, %v3280
        %v3282 = vlaneseq
        %v3283 = vshrl.u32 %v3282, 7
        %v3284 = vsub.s32 1, %v3283
        %v3285 = vrot.slane %v3276, %v3284
        %v3286 = vlaneseq
        %v3287 = vshrl.u32 %v3286, 7
        %v3288 = vsub.s32 2, %v3287
        %v3289 = vrot.slane %v3276, %v3288
        %v3290 = vlaneseq
        %v3291 = vshrl.u32 %v3290, 7
        %v3292 = vsub.s32 3, %v3291
        %v3293 = vrot.slane %v3276, %v3292
        %v3294 = vlaneseq
        %v3295 = vshrl.u32 %v3294, 7
        %v3296 = vsub.s32 4, %v3295
        %v3297 = vrot.slane %v3276, %v3296
        %v3298 = vlaneseq
        %v3299 = vshrl.u32 %v3298, 7
        %v3300 = vsub.s32 5, %v3299
        %v3301 = vrot.slane %v3276, %v3300
        %v3308 = vmul.f32 %v3281, %v3263
        %v3309 = vmul.f32 %v3285, %v3264
        %v3310 = vmul.f32 %v3289, %v3265
        %v3311 = vmul.f32 %v3293, %v3266
        %v3312 = vmul.f32 %v3297, %v3267
        %v3313 = vmul.f32 %v3301, %v3268
        %v3314 = vmul.f32 %v3281, %v3269
        %v3315 = vmul.f32 %v3285, %v3270
        %v3316 = vmul.f32 %v3289, %v3271
        %v3317 = vmul.f32 %v3293, %v3272
        %v3318 = vmul.f32 %v3297, %v3273
        %v3319 = vmul.f32 %v3301, %v3274
        %v3320 = vadd.f32 %v3308, %v3309
        %v3321 = vadd.f32 %v3314, %v3315
        %v3322 = vadd.f32 %v3320, %v3310
        %v3323 = vadd.f32 %v3321, %v3316
        %v3324 = vadd.f32 %v3322, %v3311
        %v3325 = vadd.f32 %v3323, %v3317
        %v3326 = vadd.f32 %v3324, %v3312
        %v3327 = vadd.f32 %v3325, %v3318
        %v3328 = vadd.f32 %v3326, %v3313
        %v3329 = vadd.f32 %v3327, %v3319
        %v3330 = vadd.f32 %v3198, %v3328
        %v3331 = vadd.f32 %v3199, %v3329
        %s3332 = scalar_lea.vmem %s183, 277 [#allocation2]
        %v3333 = vld [vmem:[%s3332] ss:$2 sm:$0x3f]
        %v3335 = vlaneseq
        %v3336 = vshrl.u32 %v3335, 7
        %v3337 = vsub.s32 0, %v3336
        %v3338 = vrot.slane %v3333, %v3337
        %v3339 = vlaneseq
        %v3340 = vshrl.u32 %v3339, 7
        %v3341 = vsub.s32 1, %v3340
        %v3342 = vrot.slane %v3333, %v3341
        %v3343 = vlaneseq
        %v3344 = vshrl.u32 %v3343, 7
        %v3345 = vsub.s32 2, %v3344
        %v3346 = vrot.slane %v3333, %v3345
        %v3347 = vlaneseq
        %v3348 = vshrl.u32 %v3347, 7
        %v3349 = vsub.s32 3, %v3348
        %v3350 = vrot.slane %v3333, %v3349
        %v3351 = vlaneseq
        %v3352 = vshrl.u32 %v3351, 7
        %v3353 = vsub.s32 4, %v3352
        %v3354 = vrot.slane %v3333, %v3353
        %v3355 = vlaneseq
        %v3356 = vshrl.u32 %v3355, 7
        %v3357 = vsub.s32 5, %v3356
        %v3358 = vrot.slane %v3333, %v3357
        %v3365 = vmul.f32 %v3338, %v3263
        %v3366 = vmul.f32 %v3342, %v3264
        %v3367 = vmul.f32 %v3346, %v3265
        %v3368 = vmul.f32 %v3350, %v3266
        %v3369 = vmul.f32 %v3354, %v3267
        %v3370 = vmul.f32 %v3358, %v3268
        %v3371 = vmul.f32 %v3338, %v3269
        %v3372 = vmul.f32 %v3342, %v3270
        %v3373 = vmul.f32 %v3346, %v3271
        %v3374 = vmul.f32 %v3350, %v3272
        %v3375 = vmul.f32 %v3354, %v3273
        %v3376 = vmul.f32 %v3358, %v3274
        %v3377 = vadd.f32 %v3365, %v3366
        %v3378 = vadd.f32 %v3371, %v3372
        %v3379 = vadd.f32 %v3377, %v3367
        %v3380 = vadd.f32 %v3378, %v3373
        %v3381 = vadd.f32 %v3379, %v3368
        %v3382 = vadd.f32 %v3380, %v3374
        %v3383 = vadd.f32 %v3381, %v3369
        %v3384 = vadd.f32 %v3382, %v3375
        %v3385 = vadd.f32 %v3383, %v3370
        %v3386 = vadd.f32 %v3384, %v3376
        %v3387 = vadd.f32 %v3255, %v3385
        %v3388 = vadd.f32 %v3256, %v3386
        %v3389 = vld [vmem:[%s192 + $0x240] sm:$0xff]
        %v3390 = vld [vmem:[%s192 + $0x248] sm:$0xff]
        %v3391 = vld [vmem:[%s192 + $0x250] sm:$0xff]
        %v3392 = vld [vmem:[%s192 + $0x768] sm:$0x33]
        %v3393 = vld [vmem:[%s192 + $0x770] sm:$0x33]
        %v3394 = vld [vmem:[%s192 + $0x778] sm:$0x33]
        %v3395 = vunpack.c.l.bf16 %v3389
        %v3396 = vunpack.c.h.bf16 %v3389
        %v3397 = vunpack.c.l.bf16 %v3390
        %v3398 = vunpack.c.h.bf16 %v3390
        %v3399 = vunpack.c.l.bf16 %v3391
        %v3400 = vunpack.c.h.bf16 %v3391
        %v3401 = vunpack.c.l.bf16 %v3392
        %v3402 = vunpack.c.h.bf16 %v3392
        %v3403 = vunpack.c.l.bf16 %v3393
        %v3404 = vunpack.c.h.bf16 %v3393
        %v3405 = vunpack.c.l.bf16 %v3394
        %v3406 = vunpack.c.h.bf16 %v3394
        %s3407 = scalar_lea.vmem %s183, 288 [#allocation2]
        %v3408 = vld [vmem:[%s3407] ss:$2 sm:$0x3f]
        %v3410 = vlaneseq
        %v3411 = vshrl.u32 %v3410, 7
        %v3412 = vsub.s32 0, %v3411
        %v3413 = vrot.slane %v3408, %v3412
        %v3414 = vlaneseq
        %v3415 = vshrl.u32 %v3414, 7
        %v3416 = vsub.s32 1, %v3415
        %v3417 = vrot.slane %v3408, %v3416
        %v3418 = vlaneseq
        %v3419 = vshrl.u32 %v3418, 7
        %v3420 = vsub.s32 2, %v3419
        %v3421 = vrot.slane %v3408, %v3420
        %v3422 = vlaneseq
        %v3423 = vshrl.u32 %v3422, 7
        %v3424 = vsub.s32 3, %v3423
        %v3425 = vrot.slane %v3408, %v3424
        %v3426 = vlaneseq
        %v3427 = vshrl.u32 %v3426, 7
        %v3428 = vsub.s32 4, %v3427
        %v3429 = vrot.slane %v3408, %v3428
        %v3430 = vlaneseq
        %v3431 = vshrl.u32 %v3430, 7
        %v3432 = vsub.s32 5, %v3431
        %v3433 = vrot.slane %v3408, %v3432
        %v3440 = vmul.f32 %v3413, %v3395
        %v3441 = vmul.f32 %v3417, %v3396
        %v3442 = vmul.f32 %v3421, %v3397
        %v3443 = vmul.f32 %v3425, %v3398
        %v3444 = vmul.f32 %v3429, %v3399
        %v3445 = vmul.f32 %v3433, %v3400
        %v3446 = vmul.f32 %v3413, %v3401
        %v3447 = vmul.f32 %v3417, %v3402
        %v3448 = vmul.f32 %v3421, %v3403
        %v3449 = vmul.f32 %v3425, %v3404
        %v3450 = vmul.f32 %v3429, %v3405
        %v3451 = vmul.f32 %v3433, %v3406
        %v3452 = vadd.f32 %v3440, %v3441
        %v3453 = vadd.f32 %v3446, %v3447
        %v3454 = vadd.f32 %v3452, %v3442
        %v3455 = vadd.f32 %v3453, %v3448
        %v3456 = vadd.f32 %v3454, %v3443
        %v3457 = vadd.f32 %v3455, %v3449
        %v3458 = vadd.f32 %v3456, %v3444
        %v3459 = vadd.f32 %v3457, %v3450
        %v3460 = vadd.f32 %v3458, %v3445
        %v3461 = vadd.f32 %v3459, %v3451
        %v3462 = vadd.f32 %v3330, %v3460
        %v3463 = vadd.f32 %v3331, %v3461
        %s3464 = scalar_lea.vmem %s183, 289 [#allocation2]
        %v3465 = vld [vmem:[%s3464] ss:$2 sm:$0x3f]
        %v3467 = vlaneseq
        %v3468 = vshrl.u32 %v3467, 7
        %v3469 = vsub.s32 0, %v3468
        %v3470 = vrot.slane %v3465, %v3469
        %v3471 = vlaneseq
        %v3472 = vshrl.u32 %v3471, 7
        %v3473 = vsub.s32 1, %v3472
        %v3474 = vrot.slane %v3465, %v3473
        %v3475 = vlaneseq
        %v3476 = vshrl.u32 %v3475, 7
        %v3477 = vsub.s32 2, %v3476
        %v3478 = vrot.slane %v3465, %v3477
        %v3479 = vlaneseq
        %v3480 = vshrl.u32 %v3479, 7
        %v3481 = vsub.s32 3, %v3480
        %v3482 = vrot.slane %v3465, %v3481
        %v3483 = vlaneseq
        %v3484 = vshrl.u32 %v3483, 7
        %v3485 = vsub.s32 4, %v3484
        %v3486 = vrot.slane %v3465, %v3485
        %v3487 = vlaneseq
        %v3488 = vshrl.u32 %v3487, 7
        %v3489 = vsub.s32 5, %v3488
        %v3490 = vrot.slane %v3465, %v3489
        %v3497 = vmul.f32 %v3470, %v3395
        %v3498 = vmul.f32 %v3474, %v3396
        %v3499 = vmul.f32 %v3478, %v3397
        %v3500 = vmul.f32 %v3482, %v3398
        %v3501 = vmul.f32 %v3486, %v3399
        %v3502 = vmul.f32 %v3490, %v3400
        %v3503 = vmul.f32 %v3470, %v3401
        %v3504 = vmul.f32 %v3474, %v3402
        %v3505 = vmul.f32 %v3478, %v3403
        %v3506 = vmul.f32 %v3482, %v3404
        %v3507 = vmul.f32 %v3486, %v3405
        %v3508 = vmul.f32 %v3490, %v3406
        %v3509 = vadd.f32 %v3497, %v3498
        %v3510 = vadd.f32 %v3503, %v3504
        %v3511 = vadd.f32 %v3509, %v3499
        %v3512 = vadd.f32 %v3510, %v3505
        %v3513 = vadd.f32 %v3511, %v3500
        %v3514 = vadd.f32 %v3512, %v3506
        %v3515 = vadd.f32 %v3513, %v3501
        %v3516 = vadd.f32 %v3514, %v3507
        %v3517 = vadd.f32 %v3515, %v3502
        %v3518 = vadd.f32 %v3516, %v3508
        %v3519 = vadd.f32 %v3387, %v3517
        %v3520 = vadd.f32 %v3388, %v3518
        %v3521 = vld [vmem:[%s192 + $0x258] sm:$0xff]
        %v3522 = vld [vmem:[%s192 + $0x260] sm:$0xff]
        %v3523 = vld [vmem:[%s192 + $0x268] sm:$0xff]
        %v3524 = vld [vmem:[%s192 + $0x780] sm:$0x33]
        %v3525 = vld [vmem:[%s192 + $0x788] sm:$0x33]
        %v3526 = vld [vmem:[%s192 + $0x790] sm:$0x33]
        %v3527 = vunpack.c.l.bf16 %v3521
        %v3528 = vunpack.c.h.bf16 %v3521
        %v3529 = vunpack.c.l.bf16 %v3522
        %v3530 = vunpack.c.h.bf16 %v3522
        %v3531 = vunpack.c.l.bf16 %v3523
        %v3532 = vunpack.c.h.bf16 %v3523
        %v3533 = vunpack.c.l.bf16 %v3524
        %v3534 = vunpack.c.h.bf16 %v3524
        %v3535 = vunpack.c.l.bf16 %v3525
        %v3536 = vunpack.c.h.bf16 %v3525
        %v3537 = vunpack.c.l.bf16 %v3526
        %v3538 = vunpack.c.h.bf16 %v3526
        %s3539 = scalar_lea.vmem %s183, 300 [#allocation2]
        %v3540 = vld [vmem:[%s3539] ss:$2 sm:$0x3f]
        %v3542 = vlaneseq
        %v3543 = vshrl.u32 %v3542, 7
        %v3544 = vsub.s32 0, %v3543
        %v3545 = vrot.slane %v3540, %v3544
        %v3546 = vlaneseq
        %v3547 = vshrl.u32 %v3546, 7
        %v3548 = vsub.s32 1, %v3547
        %v3549 = vrot.slane %v3540, %v3548
        %v3550 = vlaneseq
        %v3551 = vshrl.u32 %v3550, 7
        %v3552 = vsub.s32 2, %v3551
        %v3553 = vrot.slane %v3540, %v3552
        %v3554 = vlaneseq
        %v3555 = vshrl.u32 %v3554, 7
        %v3556 = vsub.s32 3, %v3555
        %v3557 = vrot.slane %v3540, %v3556
        %v3558 = vlaneseq
        %v3559 = vshrl.u32 %v3558, 7
        %v3560 = vsub.s32 4, %v3559
        %v3561 = vrot.slane %v3540, %v3560
        %v3562 = vlaneseq
        %v3563 = vshrl.u32 %v3562, 7
        %v3564 = vsub.s32 5, %v3563
        %v3565 = vrot.slane %v3540, %v3564
        %v3572 = vmul.f32 %v3545, %v3527
        %v3573 = vmul.f32 %v3549, %v3528
        %v3574 = vmul.f32 %v3553, %v3529
        %v3575 = vmul.f32 %v3557, %v3530
        %v3576 = vmul.f32 %v3561, %v3531
        %v3577 = vmul.f32 %v3565, %v3532
        %v3578 = vmul.f32 %v3545, %v3533
        %v3579 = vmul.f32 %v3549, %v3534
        %v3580 = vmul.f32 %v3553, %v3535
        %v3581 = vmul.f32 %v3557, %v3536
        %v3582 = vmul.f32 %v3561, %v3537
        %v3583 = vmul.f32 %v3565, %v3538
        %v3584 = vadd.f32 %v3572, %v3573
        %v3585 = vadd.f32 %v3578, %v3579
        %v3586 = vadd.f32 %v3584, %v3574
        %v3587 = vadd.f32 %v3585, %v3580
        %v3588 = vadd.f32 %v3586, %v3575
        %v3589 = vadd.f32 %v3587, %v3581
        %v3590 = vadd.f32 %v3588, %v3576
        %v3591 = vadd.f32 %v3589, %v3582
        %v3592 = vadd.f32 %v3590, %v3577
        %v3593 = vadd.f32 %v3591, %v3583
        %v3594 = vadd.f32 %v3462, %v3592
        %v3595 = vadd.f32 %v3463, %v3593
        %s3596 = scalar_lea.vmem %s183, 301 [#allocation2]
        %v3597 = vld [vmem:[%s3596] ss:$2 sm:$0x3f]
        %v3599 = vlaneseq
        %v3600 = vshrl.u32 %v3599, 7
        %v3601 = vsub.s32 0, %v3600
        %v3602 = vrot.slane %v3597, %v3601
        %v3603 = vlaneseq
        %v3604 = vshrl.u32 %v3603, 7
        %v3605 = vsub.s32 1, %v3604
        %v3606 = vrot.slane %v3597, %v3605
        %v3607 = vlaneseq
        %v3608 = vshrl.u32 %v3607, 7
        %v3609 = vsub.s32 2, %v3608
        %v3610 = vrot.slane %v3597, %v3609
        %v3611 = vlaneseq
        %v3612 = vshrl.u32 %v3611, 7
        %v3613 = vsub.s32 3, %v3612
        %v3614 = vrot.slane %v3597, %v3613
        %v3615 = vlaneseq
        %v3616 = vshrl.u32 %v3615, 7
        %v3617 = vsub.s32 4, %v3616
        %v3618 = vrot.slane %v3597, %v3617
        %v3619 = vlaneseq
        %v3620 = vshrl.u32 %v3619, 7
        %v3621 = vsub.s32 5, %v3620
        %v3622 = vrot.slane %v3597, %v3621
        %v3629 = vmul.f32 %v3602, %v3527
        %v3630 = vmul.f32 %v3606, %v3528
        %v3631 = vmul.f32 %v3610, %v3529
        %v3632 = vmul.f32 %v3614, %v3530
        %v3633 = vmul.f32 %v3618, %v3531
        %v3634 = vmul.f32 %v3622, %v3532
        %v3635 = vmul.f32 %v3602, %v3533
        %v3636 = vmul.f32 %v3606, %v3534
        %v3637 = vmul.f32 %v3610, %v3535
        %v3638 = vmul.f32 %v3614, %v3536
        %v3639 = vmul.f32 %v3618, %v3537
        %v3640 = vmul.f32 %v3622, %v3538
        %v3641 = vadd.f32 %v3629, %v3630
        %v3642 = vadd.f32 %v3635, %v3636
        %v3643 = vadd.f32 %v3641, %v3631
        %v3644 = vadd.f32 %v3642, %v3637
        %v3645 = vadd.f32 %v3643, %v3632
        %v3646 = vadd.f32 %v3644, %v3638
        %v3647 = vadd.f32 %v3645, %v3633
        %v3648 = vadd.f32 %v3646, %v3639
        %v3649 = vadd.f32 %v3647, %v3634
        %v3650 = vadd.f32 %v3648, %v3640
        %v3651 = vadd.f32 %v3519, %v3649
        %v3652 = vadd.f32 %v3520, %v3650
        %v3653 = vld [vmem:[%s192 + $0x270] sm:$0xff]
        %v3654 = vld [vmem:[%s192 + $0x278] sm:$0xff]
        %v3655 = vld [vmem:[%s192 + $0x280] sm:$0xff]
        %v3656 = vld [vmem:[%s192 + $0x798] sm:$0x33]
        %v3657 = vld [vmem:[%s192 + $0x7a0] sm:$0x33]
        %v3658 = vld [vmem:[%s192 + $0x7a8] sm:$0x33]
        %v3659 = vunpack.c.l.bf16 %v3653
        %v3660 = vunpack.c.h.bf16 %v3653
        %v3661 = vunpack.c.l.bf16 %v3654
        %v3662 = vunpack.c.h.bf16 %v3654
        %v3663 = vunpack.c.l.bf16 %v3655
        %v3664 = vunpack.c.h.bf16 %v3655
        %v3665 = vunpack.c.l.bf16 %v3656
        %v3666 = vunpack.c.h.bf16 %v3656
        %v3667 = vunpack.c.l.bf16 %v3657
        %v3668 = vunpack.c.h.bf16 %v3657
        %v3669 = vunpack.c.l.bf16 %v3658
        %v3670 = vunpack.c.h.bf16 %v3658
        %s3671 = scalar_lea.vmem %s183, 312 [#allocation2]
        %v3672 = vld [vmem:[%s3671] ss:$2 sm:$0x3f]
        %v3674 = vlaneseq
        %v3675 = vshrl.u32 %v3674, 7
        %v3676 = vsub.s32 0, %v3675
        %v3677 = vrot.slane %v3672, %v3676
        %v3678 = vlaneseq
        %v3679 = vshrl.u32 %v3678, 7
        %v3680 = vsub.s32 1, %v3679
        %v3681 = vrot.slane %v3672, %v3680
        %v3682 = vlaneseq
        %v3683 = vshrl.u32 %v3682, 7
        %v3684 = vsub.s32 2, %v3683
        %v3685 = vrot.slane %v3672, %v3684
        %v3686 = vlaneseq
        %v3687 = vshrl.u32 %v3686, 7
        %v3688 = vsub.s32 3, %v3687
        %v3689 = vrot.slane %v3672, %v3688
        %v3690 = vlaneseq
        %v3691 = vshrl.u32 %v3690, 7
        %v3692 = vsub.s32 4, %v3691
        %v3693 = vrot.slane %v3672, %v3692
        %v3694 = vlaneseq
        %v3695 = vshrl.u32 %v3694, 7
        %v3696 = vsub.s32 5, %v3695
        %v3697 = vrot.slane %v3672, %v3696
        %v3704 = vmul.f32 %v3677, %v3659
        %v3705 = vmul.f32 %v3681, %v3660
        %v3706 = vmul.f32 %v3685, %v3661
        %v3707 = vmul.f32 %v3689, %v3662
        %v3708 = vmul.f32 %v3693, %v3663
        %v3709 = vmul.f32 %v3697, %v3664
        %v3710 = vmul.f32 %v3677, %v3665
        %v3711 = vmul.f32 %v3681, %v3666
        %v3712 = vmul.f32 %v3685, %v3667
        %v3713 = vmul.f32 %v3689, %v3668
        %v3714 = vmul.f32 %v3693, %v3669
        %v3715 = vmul.f32 %v3697, %v3670
        %v3716 = vadd.f32 %v3704, %v3705
        %v3717 = vadd.f32 %v3710, %v3711
        %v3718 = vadd.f32 %v3716, %v3706
        %v3719 = vadd.f32 %v3717, %v3712
        %v3720 = vadd.f32 %v3718, %v3707
        %v3721 = vadd.f32 %v3719, %v3713
        %v3722 = vadd.f32 %v3720, %v3708
        %v3723 = vadd.f32 %v3721, %v3714
        %v3724 = vadd.f32 %v3722, %v3709
        %v3725 = vadd.f32 %v3723, %v3715
        %v3726 = vadd.f32 %v3594, %v3724
        %v3727 = vadd.f32 %v3595, %v3725
        %s3728 = scalar_lea.vmem %s183, 313 [#allocation2]
        %v3729 = vld [vmem:[%s3728] ss:$2 sm:$0x3f]
        %v3731 = vlaneseq
        %v3732 = vshrl.u32 %v3731, 7
        %v3733 = vsub.s32 0, %v3732
        %v3734 = vrot.slane %v3729, %v3733
        %v3735 = vlaneseq
        %v3736 = vshrl.u32 %v3735, 7
        %v3737 = vsub.s32 1, %v3736
        %v3738 = vrot.slane %v3729, %v3737
        %v3739 = vlaneseq
        %v3740 = vshrl.u32 %v3739, 7
        %v3741 = vsub.s32 2, %v3740
        %v3742 = vrot.slane %v3729, %v3741
        %v3743 = vlaneseq
        %v3744 = vshrl.u32 %v3743, 7
        %v3745 = vsub.s32 3, %v3744
        %v3746 = vrot.slane %v3729, %v3745
        %v3747 = vlaneseq
        %v3748 = vshrl.u32 %v3747, 7
        %v3749 = vsub.s32 4, %v3748
        %v3750 = vrot.slane %v3729, %v3749
        %v3751 = vlaneseq
        %v3752 = vshrl.u32 %v3751, 7
        %v3753 = vsub.s32 5, %v3752
        %v3754 = vrot.slane %v3729, %v3753
        %v3761 = vmul.f32 %v3734, %v3659
        %v3762 = vmul.f32 %v3738, %v3660
        %v3763 = vmul.f32 %v3742, %v3661
        %v3764 = vmul.f32 %v3746, %v3662
        %v3765 = vmul.f32 %v3750, %v3663
        %v3766 = vmul.f32 %v3754, %v3664
        %v3767 = vmul.f32 %v3734, %v3665
        %v3768 = vmul.f32 %v3738, %v3666
        %v3769 = vmul.f32 %v3742, %v3667
        %v3770 = vmul.f32 %v3746, %v3668
        %v3771 = vmul.f32 %v3750, %v3669
        %v3772 = vmul.f32 %v3754, %v3670
        %v3773 = vadd.f32 %v3761, %v3762
        %v3774 = vadd.f32 %v3767, %v3768
        %v3775 = vadd.f32 %v3773, %v3763
        %v3776 = vadd.f32 %v3774, %v3769
        %v3777 = vadd.f32 %v3775, %v3764
        %v3778 = vadd.f32 %v3776, %v3770
        %v3779 = vadd.f32 %v3777, %v3765
        %v3780 = vadd.f32 %v3778, %v3771
        %v3781 = vadd.f32 %v3779, %v3766
        %v3782 = vadd.f32 %v3780, %v3772
        %v3783 = vadd.f32 %v3651, %v3781
        %v3784 = vadd.f32 %v3652, %v3782
        %v3785 = vld [vmem:[%s192 + $0x288] sm:$0xff]
        %v3786 = vld [vmem:[%s192 + $0x290] sm:$0xff]
        %v3787 = vld [vmem:[%s192 + $0x298] sm:$0xff]
        %v3788 = vld [vmem:[%s192 + $0x7b0] sm:$0x33]
        %v3789 = vld [vmem:[%s192 + $0x7b8] sm:$0x33]
        %v3790 = vld [vmem:[%s192 + $0x7c0] sm:$0x33]
        %v3791 = vunpack.c.l.bf16 %v3785
        %v3792 = vunpack.c.h.bf16 %v3785
        %v3793 = vunpack.c.l.bf16 %v3786
        %v3794 = vunpack.c.h.bf16 %v3786
        %v3795 = vunpack.c.l.bf16 %v3787
        %v3796 = vunpack.c.h.bf16 %v3787
        %v3797 = vunpack.c.l.bf16 %v3788
        %v3798 = vunpack.c.h.bf16 %v3788
        %v3799 = vunpack.c.l.bf16 %v3789
        %v3800 = vunpack.c.h.bf16 %v3789
        %v3801 = vunpack.c.l.bf16 %v3790
        %v3802 = vunpack.c.h.bf16 %v3790
        %s3803 = scalar_lea.vmem %s183, 324 [#allocation2]
        %v3804 = vld [vmem:[%s3803] ss:$2 sm:$0x3f]
        %v3806 = vlaneseq
        %v3807 = vshrl.u32 %v3806, 7
        %v3808 = vsub.s32 0, %v3807
        %v3809 = vrot.slane %v3804, %v3808
        %v3810 = vlaneseq
        %v3811 = vshrl.u32 %v3810, 7
        %v3812 = vsub.s32 1, %v3811
        %v3813 = vrot.slane %v3804, %v3812
        %v3814 = vlaneseq
        %v3815 = vshrl.u32 %v3814, 7
        %v3816 = vsub.s32 2, %v3815
        %v3817 = vrot.slane %v3804, %v3816
        %v3818 = vlaneseq
        %v3819 = vshrl.u32 %v3818, 7
        %v3820 = vsub.s32 3, %v3819
        %v3821 = vrot.slane %v3804, %v3820
        %v3822 = vlaneseq
        %v3823 = vshrl.u32 %v3822, 7
        %v3824 = vsub.s32 4, %v3823
        %v3825 = vrot.slane %v3804, %v3824
        %v3826 = vlaneseq
        %v3827 = vshrl.u32 %v3826, 7
        %v3828 = vsub.s32 5, %v3827
        %v3829 = vrot.slane %v3804, %v3828
        %v3836 = vmul.f32 %v3809, %v3791
        %v3837 = vmul.f32 %v3813, %v3792
        %v3838 = vmul.f32 %v3817, %v3793
        %v3839 = vmul.f32 %v3821, %v3794
        %v3840 = vmul.f32 %v3825, %v3795
        %v3841 = vmul.f32 %v3829, %v3796
        %v3842 = vmul.f32 %v3809, %v3797
        %v3843 = vmul.f32 %v3813, %v3798
        %v3844 = vmul.f32 %v3817, %v3799
        %v3845 = vmul.f32 %v3821, %v3800
        %v3846 = vmul.f32 %v3825, %v3801
        %v3847 = vmul.f32 %v3829, %v3802
        %v3848 = vadd.f32 %v3836, %v3837
        %v3849 = vadd.f32 %v3842, %v3843
        %v3850 = vadd.f32 %v3848, %v3838
        %v3851 = vadd.f32 %v3849, %v3844
        %v3852 = vadd.f32 %v3850, %v3839
        %v3853 = vadd.f32 %v3851, %v3845
        %v3854 = vadd.f32 %v3852, %v3840
        %v3855 = vadd.f32 %v3853, %v3846
        %v3856 = vadd.f32 %v3854, %v3841
        %v3857 = vadd.f32 %v3855, %v3847
        %v3858 = vadd.f32 %v3726, %v3856
        %v3859 = vadd.f32 %v3727, %v3857
        %s3860 = scalar_lea.vmem %s183, 325 [#allocation2]
        %v3861 = vld [vmem:[%s3860] ss:$2 sm:$0x3f]
        %v3863 = vlaneseq
        %v3864 = vshrl.u32 %v3863, 7
        %v3865 = vsub.s32 0, %v3864
        %v3866 = vrot.slane %v3861, %v3865
        %v3867 = vlaneseq
        %v3868 = vshrl.u32 %v3867, 7
        %v3869 = vsub.s32 1, %v3868
        %v3870 = vrot.slane %v3861, %v3869
        %v3871 = vlaneseq
        %v3872 = vshrl.u32 %v3871, 7
        %v3873 = vsub.s32 2, %v3872
        %v3874 = vrot.slane %v3861, %v3873
        %v3875 = vlaneseq
        %v3876 = vshrl.u32 %v3875, 7
        %v3877 = vsub.s32 3, %v3876
        %v3878 = vrot.slane %v3861, %v3877
        %v3879 = vlaneseq
        %v3880 = vshrl.u32 %v3879, 7
        %v3881 = vsub.s32 4, %v3880
        %v3882 = vrot.slane %v3861, %v3881
        %v3883 = vlaneseq
        %v3884 = vshrl.u32 %v3883, 7
        %v3885 = vsub.s32 5, %v3884
        %v3886 = vrot.slane %v3861, %v3885
        %v3893 = vmul.f32 %v3866, %v3791
        %v3894 = vmul.f32 %v3870, %v3792
        %v3895 = vmul.f32 %v3874, %v3793
        %v3896 = vmul.f32 %v3878, %v3794
        %v3897 = vmul.f32 %v3882, %v3795
        %v3898 = vmul.f32 %v3886, %v3796
        %v3899 = vmul.f32 %v3866, %v3797
        %v3900 = vmul.f32 %v3870, %v3798
        %v3901 = vmul.f32 %v3874, %v3799
        %v3902 = vmul.f32 %v3878, %v3800
        %v3903 = vmul.f32 %v3882, %v3801
        %v3904 = vmul.f32 %v3886, %v3802
        %v3905 = vadd.f32 %v3893, %v3894
        %v3906 = vadd.f32 %v3899, %v3900
        %v3907 = vadd.f32 %v3905, %v3895
        %v3908 = vadd.f32 %v3906, %v3901
        %v3909 = vadd.f32 %v3907, %v3896
        %v3910 = vadd.f32 %v3908, %v3902
        %v3911 = vadd.f32 %v3909, %v3897
        %v3912 = vadd.f32 %v3910, %v3903
        %v3913 = vadd.f32 %v3911, %v3898
        %v3914 = vadd.f32 %v3912, %v3904
        %v3915 = vadd.f32 %v3783, %v3913
        %v3916 = vadd.f32 %v3784, %v3914
        %v3917 = vld [vmem:[%s192 + $0x2a0] sm:$0xff]
        %v3918 = vld [vmem:[%s192 + $0x2a8] sm:$0xff]
        %v3919 = vld [vmem:[%s192 + $0x2b0] sm:$0xff]
        %v3920 = vld [vmem:[%s192 + $0x7c8] sm:$0x33]
        %v3921 = vld [vmem:[%s192 + $0x7d0] sm:$0x33]
        %v3922 = vld [vmem:[%s192 + $0x7d8] sm:$0x33]
        %v3923 = vunpack.c.l.bf16 %v3917
        %v3924 = vunpack.c.h.bf16 %v3917
        %v3925 = vunpack.c.l.bf16 %v3918
        %v3926 = vunpack.c.h.bf16 %v3918
        %v3927 = vunpack.c.l.bf16 %v3919
        %v3928 = vunpack.c.h.bf16 %v3919
        %v3929 = vunpack.c.l.bf16 %v3920
        %v3930 = vunpack.c.h.bf16 %v3920
        %v3931 = vunpack.c.l.bf16 %v3921
        %v3932 = vunpack.c.h.bf16 %v3921
        %v3933 = vunpack.c.l.bf16 %v3922
        %v3934 = vunpack.c.h.bf16 %v3922
        %s3935 = scalar_lea.vmem %s183, 336 [#allocation2]
        %v3936 = vld [vmem:[%s3935] ss:$2 sm:$0x3f]
        %v3938 = vlaneseq
        %v3939 = vshrl.u32 %v3938, 7
        %v3940 = vsub.s32 0, %v3939
        %v3941 = vrot.slane %v3936, %v3940
        %v3942 = vlaneseq
        %v3943 = vshrl.u32 %v3942, 7
        %v3944 = vsub.s32 1, %v3943
        %v3945 = vrot.slane %v3936, %v3944
        %v3946 = vlaneseq
        %v3947 = vshrl.u32 %v3946, 7
        %v3948 = vsub.s32 2, %v3947
        %v3949 = vrot.slane %v3936, %v3948
        %v3950 = vlaneseq
        %v3951 = vshrl.u32 %v3950, 7
        %v3952 = vsub.s32 3, %v3951
        %v3953 = vrot.slane %v3936, %v3952
        %v3954 = vlaneseq
        %v3955 = vshrl.u32 %v3954, 7
        %v3956 = vsub.s32 4, %v3955
        %v3957 = vrot.slane %v3936, %v3956
        %v3958 = vlaneseq
        %v3959 = vshrl.u32 %v3958, 7
        %v3960 = vsub.s32 5, %v3959
        %v3961 = vrot.slane %v3936, %v3960
        %v3968 = vmul.f32 %v3941, %v3923
        %v3969 = vmul.f32 %v3945, %v3924
        %v3970 = vmul.f32 %v3949, %v3925
        %v3971 = vmul.f32 %v3953, %v3926
        %v3972 = vmul.f32 %v3957, %v3927
        %v3973 = vmul.f32 %v3961, %v3928
        %v3974 = vmul.f32 %v3941, %v3929
        %v3975 = vmul.f32 %v3945, %v3930
        %v3976 = vmul.f32 %v3949, %v3931
        %v3977 = vmul.f32 %v3953, %v3932
        %v3978 = vmul.f32 %v3957, %v3933
        %v3979 = vmul.f32 %v3961, %v3934
        %v3980 = vadd.f32 %v3968, %v3969
        %v3981 = vadd.f32 %v3974, %v3975
        %v3982 = vadd.f32 %v3980, %v3970
        %v3983 = vadd.f32 %v3981, %v3976
        %v3984 = vadd.f32 %v3982, %v3971
        %v3985 = vadd.f32 %v3983, %v3977
        %v3986 = vadd.f32 %v3984, %v3972
        %v3987 = vadd.f32 %v3985, %v3978
        %v3988 = vadd.f32 %v3986, %v3973
        %v3989 = vadd.f32 %v3987, %v3979
        %v3990 = vadd.f32 %v3858, %v3988
        %v3991 = vadd.f32 %v3859, %v3989
        %s3992 = scalar_lea.vmem %s183, 337 [#allocation2]
        %v3993 = vld [vmem:[%s3992] ss:$2 sm:$0x3f]
        %v3995 = vlaneseq
        %v3996 = vshrl.u32 %v3995, 7
        %v3997 = vsub.s32 0, %v3996
        %v3998 = vrot.slane %v3993, %v3997
        %v3999 = vlaneseq
        %v4000 = vshrl.u32 %v3999, 7
        %v4001 = vsub.s32 1, %v4000
        %v4002 = vrot.slane %v3993, %v4001
        %v4003 = vlaneseq
        %v4004 = vshrl.u32 %v4003, 7
        %v4005 = vsub.s32 2, %v4004
        %v4006 = vrot.slane %v3993, %v4005
        %v4007 = vlaneseq
        %v4008 = vshrl.u32 %v4007, 7
        %v4009 = vsub.s32 3, %v4008
        %v4010 = vrot.slane %v3993, %v4009
        %v4011 = vlaneseq
        %v4012 = vshrl.u32 %v4011, 7
        %v4013 = vsub.s32 4, %v4012
        %v4014 = vrot.slane %v3993, %v4013
        %v4015 = vlaneseq
        %v4016 = vshrl.u32 %v4015, 7
        %v4017 = vsub.s32 5, %v4016
        %v4018 = vrot.slane %v3993, %v4017
        %v4025 = vmul.f32 %v3998, %v3923
        %v4026 = vmul.f32 %v4002, %v3924
        %v4027 = vmul.f32 %v4006, %v3925
        %v4028 = vmul.f32 %v4010, %v3926
        %v4029 = vmul.f32 %v4014, %v3927
        %v4030 = vmul.f32 %v4018, %v3928
        %v4031 = vmul.f32 %v3998, %v3929
        %v4032 = vmul.f32 %v4002, %v3930
        %v4033 = vmul.f32 %v4006, %v3931
        %v4034 = vmul.f32 %v4010, %v3932
        %v4035 = vmul.f32 %v4014, %v3933
        %v4036 = vmul.f32 %v4018, %v3934
        %v4037 = vadd.f32 %v4025, %v4026
        %v4038 = vadd.f32 %v4031, %v4032
        %v4039 = vadd.f32 %v4037, %v4027
        %v4040 = vadd.f32 %v4038, %v4033
        %v4041 = vadd.f32 %v4039, %v4028
        %v4042 = vadd.f32 %v4040, %v4034
        %v4043 = vadd.f32 %v4041, %v4029
        %v4044 = vadd.f32 %v4042, %v4035
        %v4045 = vadd.f32 %v4043, %v4030
        %v4046 = vadd.f32 %v4044, %v4036
        %v4047 = vadd.f32 %v3915, %v4045
        %v4048 = vadd.f32 %v3916, %v4046
        %v4049 = vld [vmem:[%s192 + $0x2b8] sm:$0xff]
        %v4050 = vld [vmem:[%s192 + $0x2c0] sm:$0xff]
        %v4051 = vld [vmem:[%s192 + $0x2c8] sm:$0xff]
        %v4052 = vld [vmem:[%s192 + $0x7e0] sm:$0x33]
        %v4053 = vld [vmem:[%s192 + $0x7e8] sm:$0x33]
        %v4054 = vld [vmem:[%s192 + $0x7f0] sm:$0x33]
        %v4055 = vunpack.c.l.bf16 %v4049
        %v4056 = vunpack.c.h.bf16 %v4049
        %v4057 = vunpack.c.l.bf16 %v4050
        %v4058 = vunpack.c.h.bf16 %v4050
        %v4059 = vunpack.c.l.bf16 %v4051
        %v4060 = vunpack.c.h.bf16 %v4051
        %v4061 = vunpack.c.l.bf16 %v4052
        %v4062 = vunpack.c.h.bf16 %v4052
        %v4063 = vunpack.c.l.bf16 %v4053
        %v4064 = vunpack.c.h.bf16 %v4053
        %v4065 = vunpack.c.l.bf16 %v4054
        %v4066 = vunpack.c.h.bf16 %v4054
        %s4067 = scalar_lea.vmem %s183, 348 [#allocation2]
        %v4068 = vld [vmem:[%s4067] ss:$2 sm:$0x3f]
        %v4070 = vlaneseq
        %v4071 = vshrl.u32 %v4070, 7
        %v4072 = vsub.s32 0, %v4071
        %v4073 = vrot.slane %v4068, %v4072
        %v4074 = vlaneseq
        %v4075 = vshrl.u32 %v4074, 7
        %v4076 = vsub.s32 1, %v4075
        %v4077 = vrot.slane %v4068, %v4076
        %v4078 = vlaneseq
        %v4079 = vshrl.u32 %v4078, 7
        %v4080 = vsub.s32 2, %v4079
        %v4081 = vrot.slane %v4068, %v4080
        %v4082 = vlaneseq
        %v4083 = vshrl.u32 %v4082, 7
        %v4084 = vsub.s32 3, %v4083
        %v4085 = vrot.slane %v4068, %v4084
        %v4086 = vlaneseq
        %v4087 = vshrl.u32 %v4086, 7
        %v4088 = vsub.s32 4, %v4087
        %v4089 = vrot.slane %v4068, %v4088
        %v4090 = vlaneseq
        %v4091 = vshrl.u32 %v4090, 7
        %v4092 = vsub.s32 5, %v4091
        %v4093 = vrot.slane %v4068, %v4092
        %v4100 = vmul.f32 %v4073, %v4055
        %v4101 = vmul.f32 %v4077, %v4056
        %v4102 = vmul.f32 %v4081, %v4057
        %v4103 = vmul.f32 %v4085, %v4058
        %v4104 = vmul.f32 %v4089, %v4059
        %v4105 = vmul.f32 %v4093, %v4060
        %v4106 = vmul.f32 %v4073, %v4061
        %v4107 = vmul.f32 %v4077, %v4062
        %v4108 = vmul.f32 %v4081, %v4063
        %v4109 = vmul.f32 %v4085, %v4064
        %v4110 = vmul.f32 %v4089, %v4065
        %v4111 = vmul.f32 %v4093, %v4066
        %v4112 = vadd.f32 %v4100, %v4101
        %v4113 = vadd.f32 %v4106, %v4107
        %v4114 = vadd.f32 %v4112, %v4102
        %v4115 = vadd.f32 %v4113, %v4108
        %v4116 = vadd.f32 %v4114, %v4103
        %v4117 = vadd.f32 %v4115, %v4109
        %v4118 = vadd.f32 %v4116, %v4104
        %v4119 = vadd.f32 %v4117, %v4110
        %v4120 = vadd.f32 %v4118, %v4105
        %v4121 = vadd.f32 %v4119, %v4111
        %v4122 = vadd.f32 %v3990, %v4120
        %v4123 = vadd.f32 %v3991, %v4121
        %s4124 = scalar_lea.vmem %s183, 349 [#allocation2]
        %v4125 = vld [vmem:[%s4124] ss:$2 sm:$0x3f]
        %v4127 = vlaneseq
        %v4128 = vshrl.u32 %v4127, 7
        %v4129 = vsub.s32 0, %v4128
        %v4130 = vrot.slane %v4125, %v4129
        %v4131 = vlaneseq
        %v4132 = vshrl.u32 %v4131, 7
        %v4133 = vsub.s32 1, %v4132
        %v4134 = vrot.slane %v4125, %v4133
        %v4135 = vlaneseq
        %v4136 = vshrl.u32 %v4135, 7
        %v4137 = vsub.s32 2, %v4136
        %v4138 = vrot.slane %v4125, %v4137
        %v4139 = vlaneseq
        %v4140 = vshrl.u32 %v4139, 7
        %v4141 = vsub.s32 3, %v4140
        %v4142 = vrot.slane %v4125, %v4141
        %v4143 = vlaneseq
        %v4144 = vshrl.u32 %v4143, 7
        %v4145 = vsub.s32 4, %v4144
        %v4146 = vrot.slane %v4125, %v4145
        %v4147 = vlaneseq
        %v4148 = vshrl.u32 %v4147, 7
        %v4149 = vsub.s32 5, %v4148
        %v4150 = vrot.slane %v4125, %v4149
        %v4157 = vmul.f32 %v4130, %v4055
        %v4158 = vmul.f32 %v4134, %v4056
        %v4159 = vmul.f32 %v4138, %v4057
        %v4160 = vmul.f32 %v4142, %v4058
        %v4161 = vmul.f32 %v4146, %v4059
        %v4162 = vmul.f32 %v4150, %v4060
        %v4163 = vmul.f32 %v4130, %v4061
        %v4164 = vmul.f32 %v4134, %v4062
        %v4165 = vmul.f32 %v4138, %v4063
        %v4166 = vmul.f32 %v4142, %v4064
        %v4167 = vmul.f32 %v4146, %v4065
        %v4168 = vmul.f32 %v4150, %v4066
        %v4169 = vadd.f32 %v4157, %v4158
        %v4170 = vadd.f32 %v4163, %v4164
        %v4171 = vadd.f32 %v4169, %v4159
        %v4172 = vadd.f32 %v4170, %v4165
        %v4173 = vadd.f32 %v4171, %v4160
        %v4174 = vadd.f32 %v4172, %v4166
        %v4175 = vadd.f32 %v4173, %v4161
        %v4176 = vadd.f32 %v4174, %v4167
        %v4177 = vadd.f32 %v4175, %v4162
        %v4178 = vadd.f32 %v4176, %v4168
        %v4179 = vadd.f32 %v4047, %v4177
        %v4180 = vadd.f32 %v4048, %v4178
        %v4181 = vld [vmem:[%s192 + $0x2d0] sm:$0xff]
        %v4182 = vld [vmem:[%s192 + $0x2d8] sm:$0xff]
        %v4183 = vld [vmem:[%s192 + $0x2e0] sm:$0xff]
        %v4184 = vld [vmem:[%s192 + $0x7f8] sm:$0x33]
        %v4185 = vld [vmem:[%s192 + $0x800] sm:$0x33]
        %v4186 = vld [vmem:[%s192 + $0x808] sm:$0x33]
        %v4187 = vunpack.c.l.bf16 %v4181
        %v4188 = vunpack.c.h.bf16 %v4181
        %v4189 = vunpack.c.l.bf16 %v4182
        %v4190 = vunpack.c.h.bf16 %v4182
        %v4191 = vunpack.c.l.bf16 %v4183
        %v4192 = vunpack.c.h.bf16 %v4183
        %v4193 = vunpack.c.l.bf16 %v4184
        %v4194 = vunpack.c.h.bf16 %v4184
        %v4195 = vunpack.c.l.bf16 %v4185
        %v4196 = vunpack.c.h.bf16 %v4185
        %v4197 = vunpack.c.l.bf16 %v4186
        %v4198 = vunpack.c.h.bf16 %v4186
        %s4199 = scalar_lea.vmem %s183, 360 [#allocation2]
        %v4200 = vld [vmem:[%s4199] ss:$2 sm:$0x3f]
        %v4202 = vlaneseq
        %v4203 = vshrl.u32 %v4202, 7
        %v4204 = vsub.s32 0, %v4203
        %v4205 = vrot.slane %v4200, %v4204
        %v4206 = vlaneseq
        %v4207 = vshrl.u32 %v4206, 7
        %v4208 = vsub.s32 1, %v4207
        %v4209 = vrot.slane %v4200, %v4208
        %v4210 = vlaneseq
        %v4211 = vshrl.u32 %v4210, 7
        %v4212 = vsub.s32 2, %v4211
        %v4213 = vrot.slane %v4200, %v4212
        %v4214 = vlaneseq
        %v4215 = vshrl.u32 %v4214, 7
        %v4216 = vsub.s32 3, %v4215
        %v4217 = vrot.slane %v4200, %v4216
        %v4218 = vlaneseq
        %v4219 = vshrl.u32 %v4218, 7
        %v4220 = vsub.s32 4, %v4219
        %v4221 = vrot.slane %v4200, %v4220
        %v4222 = vlaneseq
        %v4223 = vshrl.u32 %v4222, 7
        %v4224 = vsub.s32 5, %v4223
        %v4225 = vrot.slane %v4200, %v4224
        %v4232 = vmul.f32 %v4205, %v4187
        %v4233 = vmul.f32 %v4209, %v4188
        %v4234 = vmul.f32 %v4213, %v4189
        %v4235 = vmul.f32 %v4217, %v4190
        %v4236 = vmul.f32 %v4221, %v4191
        %v4237 = vmul.f32 %v4225, %v4192
        %v4238 = vmul.f32 %v4205, %v4193
        %v4239 = vmul.f32 %v4209, %v4194
        %v4240 = vmul.f32 %v4213, %v4195
        %v4241 = vmul.f32 %v4217, %v4196
        %v4242 = vmul.f32 %v4221, %v4197
        %v4243 = vmul.f32 %v4225, %v4198
        %v4244 = vadd.f32 %v4232, %v4233
        %v4245 = vadd.f32 %v4238, %v4239
        %v4246 = vadd.f32 %v4244, %v4234
        %v4247 = vadd.f32 %v4245, %v4240
        %v4248 = vadd.f32 %v4246, %v4235
        %v4249 = vadd.f32 %v4247, %v4241
        %v4250 = vadd.f32 %v4248, %v4236
        %v4251 = vadd.f32 %v4249, %v4242
        %v4252 = vadd.f32 %v4250, %v4237
        %v4253 = vadd.f32 %v4251, %v4243
        %v4254 = vadd.f32 %v4122, %v4252
        %v4255 = vadd.f32 %v4123, %v4253
        %s4256 = scalar_lea.vmem %s183, 361 [#allocation2]
        %v4257 = vld [vmem:[%s4256] ss:$2 sm:$0x3f]
        %v4259 = vlaneseq
        %v4260 = vshrl.u32 %v4259, 7
        %v4261 = vsub.s32 0, %v4260
        %v4262 = vrot.slane %v4257, %v4261
        %v4263 = vlaneseq
        %v4264 = vshrl.u32 %v4263, 7
        %v4265 = vsub.s32 1, %v4264
        %v4266 = vrot.slane %v4257, %v4265
        %v4267 = vlaneseq
        %v4268 = vshrl.u32 %v4267, 7
        %v4269 = vsub.s32 2, %v4268
        %v4270 = vrot.slane %v4257, %v4269
        %v4271 = vlaneseq
        %v4272 = vshrl.u32 %v4271, 7
        %v4273 = vsub.s32 3, %v4272
        %v4274 = vrot.slane %v4257, %v4273
        %v4275 = vlaneseq
        %v4276 = vshrl.u32 %v4275, 7
        %v4277 = vsub.s32 4, %v4276
        %v4278 = vrot.slane %v4257, %v4277
        %v4279 = vlaneseq
        %v4280 = vshrl.u32 %v4279, 7
        %v4281 = vsub.s32 5, %v4280
        %v4282 = vrot.slane %v4257, %v4281
        %v4289 = vmul.f32 %v4262, %v4187
        %v4290 = vmul.f32 %v4266, %v4188
        %v4291 = vmul.f32 %v4270, %v4189
        %v4292 = vmul.f32 %v4274, %v4190
        %v4293 = vmul.f32 %v4278, %v4191
        %v4294 = vmul.f32 %v4282, %v4192
        %v4295 = vmul.f32 %v4262, %v4193
        %v4296 = vmul.f32 %v4266, %v4194
        %v4297 = vmul.f32 %v4270, %v4195
        %v4298 = vmul.f32 %v4274, %v4196
        %v4299 = vmul.f32 %v4278, %v4197
        %v4300 = vmul.f32 %v4282, %v4198
        %v4301 = vadd.f32 %v4289, %v4290
        %v4302 = vadd.f32 %v4295, %v4296
        %v4303 = vadd.f32 %v4301, %v4291
        %v4304 = vadd.f32 %v4302, %v4297
        %v4305 = vadd.f32 %v4303, %v4292
        %v4306 = vadd.f32 %v4304, %v4298
        %v4307 = vadd.f32 %v4305, %v4293
        %v4308 = vadd.f32 %v4306, %v4299
        %v4309 = vadd.f32 %v4307, %v4294
        %v4310 = vadd.f32 %v4308, %v4300
        %v4311 = vadd.f32 %v4179, %v4309
        %v4312 = vadd.f32 %v4180, %v4310
        %v4313 = vld [vmem:[%s192 + $0x2e8] sm:$0xff]
        %v4314 = vld [vmem:[%s192 + $0x2f0] sm:$0xff]
        %v4315 = vld [vmem:[%s192 + $0x2f8] sm:$0xff]
        %v4316 = vld [vmem:[%s192 + $0x810] sm:$0x33]
        %v4317 = vld [vmem:[%s192 + $0x818] sm:$0x33]
        %v4318 = vld [vmem:[%s192 + $0x820] sm:$0x33]
        %v4319 = vunpack.c.l.bf16 %v4313
        %v4320 = vunpack.c.h.bf16 %v4313
        %v4321 = vunpack.c.l.bf16 %v4314
        %v4322 = vunpack.c.h.bf16 %v4314
        %v4323 = vunpack.c.l.bf16 %v4315
        %v4324 = vunpack.c.h.bf16 %v4315
        %v4325 = vunpack.c.l.bf16 %v4316
        %v4326 = vunpack.c.h.bf16 %v4316
        %v4327 = vunpack.c.l.bf16 %v4317
        %v4328 = vunpack.c.h.bf16 %v4317
        %v4329 = vunpack.c.l.bf16 %v4318
        %v4330 = vunpack.c.h.bf16 %v4318
        %s4331 = scalar_lea.vmem %s183, 372 [#allocation2]
        %v4332 = vld [vmem:[%s4331] ss:$2 sm:$0x3f]
        %v4334 = vlaneseq
        %v4335 = vshrl.u32 %v4334, 7
        %v4336 = vsub.s32 0, %v4335
        %v4337 = vrot.slane %v4332, %v4336
        %v4338 = vlaneseq
        %v4339 = vshrl.u32 %v4338, 7
        %v4340 = vsub.s32 1, %v4339
        %v4341 = vrot.slane %v4332, %v4340
        %v4342 = vlaneseq
        %v4343 = vshrl.u32 %v4342, 7
        %v4344 = vsub.s32 2, %v4343
        %v4345 = vrot.slane %v4332, %v4344
        %v4346 = vlaneseq
        %v4347 = vshrl.u32 %v4346, 7
        %v4348 = vsub.s32 3, %v4347
        %v4349 = vrot.slane %v4332, %v4348
        %v4350 = vlaneseq
        %v4351 = vshrl.u32 %v4350, 7
        %v4352 = vsub.s32 4, %v4351
        %v4353 = vrot.slane %v4332, %v4352
        %v4354 = vlaneseq
        %v4355 = vshrl.u32 %v4354, 7
        %v4356 = vsub.s32 5, %v4355
        %v4357 = vrot.slane %v4332, %v4356
        %v4364 = vmul.f32 %v4337, %v4319
        %v4365 = vmul.f32 %v4341, %v4320
        %v4366 = vmul.f32 %v4345, %v4321
        %v4367 = vmul.f32 %v4349, %v4322
        %v4368 = vmul.f32 %v4353, %v4323
        %v4369 = vmul.f32 %v4357, %v4324
        %v4370 = vmul.f32 %v4337, %v4325
        %v4371 = vmul.f32 %v4341, %v4326
        %v4372 = vmul.f32 %v4345, %v4327
        %v4373 = vmul.f32 %v4349, %v4328
        %v4374 = vmul.f32 %v4353, %v4329
        %v4375 = vmul.f32 %v4357, %v4330
        %v4376 = vadd.f32 %v4364, %v4365
        %v4377 = vadd.f32 %v4370, %v4371
        %v4378 = vadd.f32 %v4376, %v4366
        %v4379 = vadd.f32 %v4377, %v4372
        %v4380 = vadd.f32 %v4378, %v4367
        %v4381 = vadd.f32 %v4379, %v4373
        %v4382 = vadd.f32 %v4380, %v4368
        %v4383 = vadd.f32 %v4381, %v4374
        %v4384 = vadd.f32 %v4382, %v4369
        %v4385 = vadd.f32 %v4383, %v4375
        %v4386 = vadd.f32 %v4254, %v4384
        %v4387 = vadd.f32 %v4255, %v4385
        %s4388 = scalar_lea.vmem %s183, 373 [#allocation2]
        %v4389 = vld [vmem:[%s4388] ss:$2 sm:$0x3f]
        %v4391 = vlaneseq
        %v4392 = vshrl.u32 %v4391, 7
        %v4393 = vsub.s32 0, %v4392
        %v4394 = vrot.slane %v4389, %v4393
        %v4395 = vlaneseq
        %v4396 = vshrl.u32 %v4395, 7
        %v4397 = vsub.s32 1, %v4396
        %v4398 = vrot.slane %v4389, %v4397
        %v4399 = vlaneseq
        %v4400 = vshrl.u32 %v4399, 7
        %v4401 = vsub.s32 2, %v4400
        %v4402 = vrot.slane %v4389, %v4401
        %v4403 = vlaneseq
        %v4404 = vshrl.u32 %v4403, 7
        %v4405 = vsub.s32 3, %v4404
        %v4406 = vrot.slane %v4389, %v4405
        %v4407 = vlaneseq
        %v4408 = vshrl.u32 %v4407, 7
        %v4409 = vsub.s32 4, %v4408
        %v4410 = vrot.slane %v4389, %v4409
        %v4411 = vlaneseq
        %v4412 = vshrl.u32 %v4411, 7
        %v4413 = vsub.s32 5, %v4412
        %v4414 = vrot.slane %v4389, %v4413
        %v4421 = vmul.f32 %v4394, %v4319
        %v4422 = vmul.f32 %v4398, %v4320
        %v4423 = vmul.f32 %v4402, %v4321
        %v4424 = vmul.f32 %v4406, %v4322
        %v4425 = vmul.f32 %v4410, %v4323
        %v4426 = vmul.f32 %v4414, %v4324
        %v4427 = vmul.f32 %v4394, %v4325
        %v4428 = vmul.f32 %v4398, %v4326
        %v4429 = vmul.f32 %v4402, %v4327
        %v4430 = vmul.f32 %v4406, %v4328
        %v4431 = vmul.f32 %v4410, %v4329
        %v4432 = vmul.f32 %v4414, %v4330
        %v4433 = vadd.f32 %v4421, %v4422
        %v4434 = vadd.f32 %v4427, %v4428
        %v4435 = vadd.f32 %v4433, %v4423
        %v4436 = vadd.f32 %v4434, %v4429
        %v4437 = vadd.f32 %v4435, %v4424
        %v4438 = vadd.f32 %v4436, %v4430
        %v4439 = vadd.f32 %v4437, %v4425
        %v4440 = vadd.f32 %v4438, %v4431
        %v4441 = vadd.f32 %v4439, %v4426
        %v4442 = vadd.f32 %v4440, %v4432
        %v4443 = vadd.f32 %v4311, %v4441
        %v4444 = vadd.f32 %v4312, %v4442
        %v4445 = vld [vmem:[%s192 + $0x300] sm:$0xff]
        %v4446 = vld [vmem:[%s192 + $0x308] sm:$0xff]
        %v4447 = vld [vmem:[%s192 + $0x310] sm:$0xff]
        %v4448 = vld [vmem:[%s192 + $0x828] sm:$0x33]
        %v4449 = vld [vmem:[%s192 + $0x830] sm:$0x33]
        %v4450 = vld [vmem:[%s192 + $0x838] sm:$0x33]
        %v4451 = vunpack.c.l.bf16 %v4445
        %v4452 = vunpack.c.h.bf16 %v4445
        %v4453 = vunpack.c.l.bf16 %v4446
        %v4454 = vunpack.c.h.bf16 %v4446
        %v4455 = vunpack.c.l.bf16 %v4447
        %v4456 = vunpack.c.h.bf16 %v4447
        %v4457 = vunpack.c.l.bf16 %v4448
        %v4458 = vunpack.c.h.bf16 %v4448
        %v4459 = vunpack.c.l.bf16 %v4449
        %v4460 = vunpack.c.h.bf16 %v4449
        %v4461 = vunpack.c.l.bf16 %v4450
        %v4462 = vunpack.c.h.bf16 %v4450
        %s4463 = scalar_lea.vmem %s183, 384 [#allocation2]
        %v4464 = vld [vmem:[%s4463] ss:$2 sm:$0x3f]
        %v4466 = vlaneseq
        %v4467 = vshrl.u32 %v4466, 7
        %v4468 = vsub.s32 0, %v4467
        %v4469 = vrot.slane %v4464, %v4468
        %v4470 = vlaneseq
        %v4471 = vshrl.u32 %v4470, 7
        %v4472 = vsub.s32 1, %v4471
        %v4473 = vrot.slane %v4464, %v4472
        %v4474 = vlaneseq
        %v4475 = vshrl.u32 %v4474, 7
        %v4476 = vsub.s32 2, %v4475
        %v4477 = vrot.slane %v4464, %v4476
        %v4478 = vlaneseq
        %v4479 = vshrl.u32 %v4478, 7
        %v4480 = vsub.s32 3, %v4479
        %v4481 = vrot.slane %v4464, %v4480
        %v4482 = vlaneseq
        %v4483 = vshrl.u32 %v4482, 7
        %v4484 = vsub.s32 4, %v4483
        %v4485 = vrot.slane %v4464, %v4484
        %v4486 = vlaneseq
        %v4487 = vshrl.u32 %v4486, 7
        %v4488 = vsub.s32 5, %v4487
        %v4489 = vrot.slane %v4464, %v4488
        %v4496 = vmul.f32 %v4469, %v4451
        %v4497 = vmul.f32 %v4473, %v4452
        %v4498 = vmul.f32 %v4477, %v4453
        %v4499 = vmul.f32 %v4481, %v4454
        %v4500 = vmul.f32 %v4485, %v4455
        %v4501 = vmul.f32 %v4489, %v4456
        %v4502 = vmul.f32 %v4469, %v4457
        %v4503 = vmul.f32 %v4473, %v4458
        %v4504 = vmul.f32 %v4477, %v4459
        %v4505 = vmul.f32 %v4481, %v4460
        %v4506 = vmul.f32 %v4485, %v4461
        %v4507 = vmul.f32 %v4489, %v4462
        %v4508 = vadd.f32 %v4496, %v4497
        %v4509 = vadd.f32 %v4502, %v4503
        %v4510 = vadd.f32 %v4508, %v4498
        %v4511 = vadd.f32 %v4509, %v4504
        %v4512 = vadd.f32 %v4510, %v4499
        %v4513 = vadd.f32 %v4511, %v4505
        %v4514 = vadd.f32 %v4512, %v4500
        %v4515 = vadd.f32 %v4513, %v4506
        %v4516 = vadd.f32 %v4514, %v4501
        %v4517 = vadd.f32 %v4515, %v4507
        %v4518 = vadd.f32 %v4386, %v4516
        %v4519 = vadd.f32 %v4387, %v4517
        %s4520 = scalar_lea.vmem %s183, 385 [#allocation2]
        %v4521 = vld [vmem:[%s4520] ss:$2 sm:$0x3f]
        %v4523 = vlaneseq
        %v4524 = vshrl.u32 %v4523, 7
        %v4525 = vsub.s32 0, %v4524
        %v4526 = vrot.slane %v4521, %v4525
        %v4527 = vlaneseq
        %v4528 = vshrl.u32 %v4527, 7
        %v4529 = vsub.s32 1, %v4528
        %v4530 = vrot.slane %v4521, %v4529
        %v4531 = vlaneseq
        %v4532 = vshrl.u32 %v4531, 7
        %v4533 = vsub.s32 2, %v4532
        %v4534 = vrot.slane %v4521, %v4533
        %v4535 = vlaneseq
        %v4536 = vshrl.u32 %v4535, 7
        %v4537 = vsub.s32 3, %v4536
        %v4538 = vrot.slane %v4521, %v4537
        %v4539 = vlaneseq
        %v4540 = vshrl.u32 %v4539, 7
        %v4541 = vsub.s32 4, %v4540
        %v4542 = vrot.slane %v4521, %v4541
        %v4543 = vlaneseq
        %v4544 = vshrl.u32 %v4543, 7
        %v4545 = vsub.s32 5, %v4544
        %v4546 = vrot.slane %v4521, %v4545
        %v4553 = vmul.f32 %v4526, %v4451
        %v4554 = vmul.f32 %v4530, %v4452
        %v4555 = vmul.f32 %v4534, %v4453
        %v4556 = vmul.f32 %v4538, %v4454
        %v4557 = vmul.f32 %v4542, %v4455
        %v4558 = vmul.f32 %v4546, %v4456
        %v4559 = vmul.f32 %v4526, %v4457
        %v4560 = vmul.f32 %v4530, %v4458
        %v4561 = vmul.f32 %v4534, %v4459
        %v4562 = vmul.f32 %v4538, %v4460
        %v4563 = vmul.f32 %v4542, %v4461
        %v4564 = vmul.f32 %v4546, %v4462
        %v4565 = vadd.f32 %v4553, %v4554
        %v4566 = vadd.f32 %v4559, %v4560
        %v4567 = vadd.f32 %v4565, %v4555
        %v4568 = vadd.f32 %v4566, %v4561
        %v4569 = vadd.f32 %v4567, %v4556
        %v4570 = vadd.f32 %v4568, %v4562
        %v4571 = vadd.f32 %v4569, %v4557
        %v4572 = vadd.f32 %v4570, %v4563
        %v4573 = vadd.f32 %v4571, %v4558
        %v4574 = vadd.f32 %v4572, %v4564
        %v4575 = vadd.f32 %v4443, %v4573
        %v4576 = vadd.f32 %v4444, %v4574
        %v4577 = vld [vmem:[%s192 + $0x318] sm:$0xff]
        %v4578 = vld [vmem:[%s192 + $0x320] sm:$0xff]
        %v4579 = vld [vmem:[%s192 + $0x328] sm:$0xff]
        %v4580 = vld [vmem:[%s192 + $0x840] sm:$0x33]
        %v4581 = vld [vmem:[%s192 + $0x848] sm:$0x33]
        %v4582 = vld [vmem:[%s192 + $0x850] sm:$0x33]
        %v4583 = vunpack.c.l.bf16 %v4577
        %v4584 = vunpack.c.h.bf16 %v4577
        %v4585 = vunpack.c.l.bf16 %v4578
        %v4586 = vunpack.c.h.bf16 %v4578
        %v4587 = vunpack.c.l.bf16 %v4579
        %v4588 = vunpack.c.h.bf16 %v4579
        %v4589 = vunpack.c.l.bf16 %v4580
        %v4590 = vunpack.c.h.bf16 %v4580
        %v4591 = vunpack.c.l.bf16 %v4581
        %v4592 = vunpack.c.h.bf16 %v4581
        %v4593 = vunpack.c.l.bf16 %v4582
        %v4594 = vunpack.c.h.bf16 %v4582
        %s4595 = scalar_lea.vmem %s183, 396 [#allocation2]
        %v4596 = vld [vmem:[%s4595] ss:$2 sm:$0x3f]
        %v4598 = vlaneseq
        %v4599 = vshrl.u32 %v4598, 7
        %v4600 = vsub.s32 0, %v4599
        %v4601 = vrot.slane %v4596, %v4600
        %v4602 = vlaneseq
        %v4603 = vshrl.u32 %v4602, 7
        %v4604 = vsub.s32 1, %v4603
        %v4605 = vrot.slane %v4596, %v4604
        %v4606 = vlaneseq
        %v4607 = vshrl.u32 %v4606, 7
        %v4608 = vsub.s32 2, %v4607
        %v4609 = vrot.slane %v4596, %v4608
        %v4610 = vlaneseq
        %v4611 = vshrl.u32 %v4610, 7
        %v4612 = vsub.s32 3, %v4611
        %v4613 = vrot.slane %v4596, %v4612
        %v4614 = vlaneseq
        %v4615 = vshrl.u32 %v4614, 7
        %v4616 = vsub.s32 4, %v4615
        %v4617 = vrot.slane %v4596, %v4616
        %v4618 = vlaneseq
        %v4619 = vshrl.u32 %v4618, 7
        %v4620 = vsub.s32 5, %v4619
        %v4621 = vrot.slane %v4596, %v4620
        %v4628 = vmul.f32 %v4601, %v4583
        %v4629 = vmul.f32 %v4605, %v4584
        %v4630 = vmul.f32 %v4609, %v4585
        %v4631 = vmul.f32 %v4613, %v4586
        %v4632 = vmul.f32 %v4617, %v4587
        %v4633 = vmul.f32 %v4621, %v4588
        %v4634 = vmul.f32 %v4601, %v4589
        %v4635 = vmul.f32 %v4605, %v4590
        %v4636 = vmul.f32 %v4609, %v4591
        %v4637 = vmul.f32 %v4613, %v4592
        %v4638 = vmul.f32 %v4617, %v4593
        %v4639 = vmul.f32 %v4621, %v4594
        %v4640 = vadd.f32 %v4628, %v4629
        %v4641 = vadd.f32 %v4634, %v4635
        %v4642 = vadd.f32 %v4640, %v4630
        %v4643 = vadd.f32 %v4641, %v4636
        %v4644 = vadd.f32 %v4642, %v4631
        %v4645 = vadd.f32 %v4643, %v4637
        %v4646 = vadd.f32 %v4644, %v4632
        %v4647 = vadd.f32 %v4645, %v4638
        %v4648 = vadd.f32 %v4646, %v4633
        %v4649 = vadd.f32 %v4647, %v4639
        %v4650 = vadd.f32 %v4518, %v4648
        %v4651 = vadd.f32 %v4519, %v4649
        %s4652 = scalar_lea.vmem %s183, 397 [#allocation2]
        %v4653 = vld [vmem:[%s4652] ss:$2 sm:$0x3f]
        %v4655 = vlaneseq
        %v4656 = vshrl.u32 %v4655, 7
        %v4657 = vsub.s32 0, %v4656
        %v4658 = vrot.slane %v4653, %v4657
        %v4659 = vlaneseq
        %v4660 = vshrl.u32 %v4659, 7
        %v4661 = vsub.s32 1, %v4660
        %v4662 = vrot.slane %v4653, %v4661
        %v4663 = vlaneseq
        %v4664 = vshrl.u32 %v4663, 7
        %v4665 = vsub.s32 2, %v4664
        %v4666 = vrot.slane %v4653, %v4665
        %v4667 = vlaneseq
        %v4668 = vshrl.u32 %v4667, 7
        %v4669 = vsub.s32 3, %v4668
        %v4670 = vrot.slane %v4653, %v4669
        %v4671 = vlaneseq
        %v4672 = vshrl.u32 %v4671, 7
        %v4673 = vsub.s32 4, %v4672
        %v4674 = vrot.slane %v4653, %v4673
        %v4675 = vlaneseq
        %v4676 = vshrl.u32 %v4675, 7
        %v4677 = vsub.s32 5, %v4676
        %v4678 = vrot.slane %v4653, %v4677
        %v4685 = vmul.f32 %v4658, %v4583
        %v4686 = vmul.f32 %v4662, %v4584
        %v4687 = vmul.f32 %v4666, %v4585
        %v4688 = vmul.f32 %v4670, %v4586
        %v4689 = vmul.f32 %v4674, %v4587
        %v4690 = vmul.f32 %v4678, %v4588
        %v4691 = vmul.f32 %v4658, %v4589
        %v4692 = vmul.f32 %v4662, %v4590
        %v4693 = vmul.f32 %v4666, %v4591
        %v4694 = vmul.f32 %v4670, %v4592
        %v4695 = vmul.f32 %v4674, %v4593
        %v4696 = vmul.f32 %v4678, %v4594
        %v4697 = vadd.f32 %v4685, %v4686
        %v4698 = vadd.f32 %v4691, %v4692
        %v4699 = vadd.f32 %v4697, %v4687
        %v4700 = vadd.f32 %v4698, %v4693
        %v4701 = vadd.f32 %v4699, %v4688
        %v4702 = vadd.f32 %v4700, %v4694
        %v4703 = vadd.f32 %v4701, %v4689
        %v4704 = vadd.f32 %v4702, %v4695
        %v4705 = vadd.f32 %v4703, %v4690
        %v4706 = vadd.f32 %v4704, %v4696
        %v4707 = vadd.f32 %v4575, %v4705
        %v4708 = vadd.f32 %v4576, %v4706
        %v4709 = vld [vmem:[%s192 + $0x330] sm:$0xff]
        %v4710 = vld [vmem:[%s192 + $0x338] sm:$0xff]
        %v4711 = vld [vmem:[%s192 + $0x340] sm:$0xff]
        %v4712 = vld [vmem:[%s192 + $0x858] sm:$0x33]
        %v4713 = vld [vmem:[%s192 + $0x860] sm:$0x33]
        %v4714 = vld [vmem:[%s192 + $0x868] sm:$0x33]
        %v4715 = vunpack.c.l.bf16 %v4709
        %v4716 = vunpack.c.h.bf16 %v4709
        %v4717 = vunpack.c.l.bf16 %v4710
        %v4718 = vunpack.c.h.bf16 %v4710
        %v4719 = vunpack.c.l.bf16 %v4711
        %v4720 = vunpack.c.h.bf16 %v4711
        %v4721 = vunpack.c.l.bf16 %v4712
        %v4722 = vunpack.c.h.bf16 %v4712
        %v4723 = vunpack.c.l.bf16 %v4713
        %v4724 = vunpack.c.h.bf16 %v4713
        %v4725 = vunpack.c.l.bf16 %v4714
        %v4726 = vunpack.c.h.bf16 %v4714
        %s4727 = scalar_lea.vmem %s183, 408 [#allocation2]
        %v4728 = vld [vmem:[%s4727] ss:$2 sm:$0x3f]
        %v4730 = vlaneseq
        %v4731 = vshrl.u32 %v4730, 7
        %v4732 = vsub.s32 0, %v4731
        %v4733 = vrot.slane %v4728, %v4732
        %v4734 = vlaneseq
        %v4735 = vshrl.u32 %v4734, 7
        %v4736 = vsub.s32 1, %v4735
        %v4737 = vrot.slane %v4728, %v4736
        %v4738 = vlaneseq
        %v4739 = vshrl.u32 %v4738, 7
        %v4740 = vsub.s32 2, %v4739
        %v4741 = vrot.slane %v4728, %v4740
        %v4742 = vlaneseq
        %v4743 = vshrl.u32 %v4742, 7
        %v4744 = vsub.s32 3, %v4743
        %v4745 = vrot.slane %v4728, %v4744
        %v4746 = vlaneseq
        %v4747 = vshrl.u32 %v4746, 7
        %v4748 = vsub.s32 4, %v4747
        %v4749 = vrot.slane %v4728, %v4748
        %v4750 = vlaneseq
        %v4751 = vshrl.u32 %v4750, 7
        %v4752 = vsub.s32 5, %v4751
        %v4753 = vrot.slane %v4728, %v4752
        %v4760 = vmul.f32 %v4733, %v4715
        %v4761 = vmul.f32 %v4737, %v4716
        %v4762 = vmul.f32 %v4741, %v4717
        %v4763 = vmul.f32 %v4745, %v4718
        %v4764 = vmul.f32 %v4749, %v4719
        %v4765 = vmul.f32 %v4753, %v4720
        %v4766 = vmul.f32 %v4733, %v4721
        %v4767 = vmul.f32 %v4737, %v4722
        %v4768 = vmul.f32 %v4741, %v4723
        %v4769 = vmul.f32 %v4745, %v4724
        %v4770 = vmul.f32 %v4749, %v4725
        %v4771 = vmul.f32 %v4753, %v4726
        %v4772 = vadd.f32 %v4760, %v4761
        %v4773 = vadd.f32 %v4766, %v4767
        %v4774 = vadd.f32 %v4772, %v4762
        %v4775 = vadd.f32 %v4773, %v4768
        %v4776 = vadd.f32 %v4774, %v4763
        %v4777 = vadd.f32 %v4775, %v4769
        %v4778 = vadd.f32 %v4776, %v4764
        %v4779 = vadd.f32 %v4777, %v4770
        %v4780 = vadd.f32 %v4778, %v4765
        %v4781 = vadd.f32 %v4779, %v4771
        %v4782 = vadd.f32 %v4650, %v4780
        %v4783 = vadd.f32 %v4651, %v4781
        %s4784 = scalar_lea.vmem %s183, 409 [#allocation2]
        %v4785 = vld [vmem:[%s4784] ss:$2 sm:$0x3f]
        %v4787 = vlaneseq
        %v4788 = vshrl.u32 %v4787, 7
        %v4789 = vsub.s32 0, %v4788
        %v4790 = vrot.slane %v4785, %v4789
        %v4791 = vlaneseq
        %v4792 = vshrl.u32 %v4791, 7
        %v4793 = vsub.s32 1, %v4792
        %v4794 = vrot.slane %v4785, %v4793
        %v4795 = vlaneseq
        %v4796 = vshrl.u32 %v4795, 7
        %v4797 = vsub.s32 2, %v4796
        %v4798 = vrot.slane %v4785, %v4797
        %v4799 = vlaneseq
        %v4800 = vshrl.u32 %v4799, 7
        %v4801 = vsub.s32 3, %v4800
        %v4802 = vrot.slane %v4785, %v4801
        %v4803 = vlaneseq
        %v4804 = vshrl.u32 %v4803, 7
        %v4805 = vsub.s32 4, %v4804
        %v4806 = vrot.slane %v4785, %v4805
        %v4807 = vlaneseq
        %v4808 = vshrl.u32 %v4807, 7
        %v4809 = vsub.s32 5, %v4808
        %v4810 = vrot.slane %v4785, %v4809
        %v4817 = vmul.f32 %v4790, %v4715
        %v4818 = vmul.f32 %v4794, %v4716
        %v4819 = vmul.f32 %v4798, %v4717
        %v4820 = vmul.f32 %v4802, %v4718
        %v4821 = vmul.f32 %v4806, %v4719
        %v4822 = vmul.f32 %v4810, %v4720
        %v4823 = vmul.f32 %v4790, %v4721
        %v4824 = vmul.f32 %v4794, %v4722
        %v4825 = vmul.f32 %v4798, %v4723
        %v4826 = vmul.f32 %v4802, %v4724
        %v4827 = vmul.f32 %v4806, %v4725
        %v4828 = vmul.f32 %v4810, %v4726
        %v4829 = vadd.f32 %v4817, %v4818
        %v4830 = vadd.f32 %v4823, %v4824
        %v4831 = vadd.f32 %v4829, %v4819
        %v4832 = vadd.f32 %v4830, %v4825
        %v4833 = vadd.f32 %v4831, %v4820
        %v4834 = vadd.f32 %v4832, %v4826
        %v4835 = vadd.f32 %v4833, %v4821
        %v4836 = vadd.f32 %v4834, %v4827
        %v4837 = vadd.f32 %v4835, %v4822
        %v4838 = vadd.f32 %v4836, %v4828
        %v4839 = vadd.f32 %v4707, %v4837
        %v4840 = vadd.f32 %v4708, %v4838
        %v4841 = vld [vmem:[%s192 + $0x348] sm:$0xff]
        %v4842 = vld [vmem:[%s192 + $0x350] sm:$0xff]
        %v4843 = vld [vmem:[%s192 + $0x358] sm:$0xff]
        %v4844 = vld [vmem:[%s192 + $0x870] sm:$0x33]
        %v4845 = vld [vmem:[%s192 + $0x878] sm:$0x33]
        %v4846 = vld [vmem:[%s192 + $0x880] sm:$0x33]
        %v4847 = vunpack.c.l.bf16 %v4841
        %v4848 = vunpack.c.h.bf16 %v4841
        %v4849 = vunpack.c.l.bf16 %v4842
        %v4850 = vunpack.c.h.bf16 %v4842
        %v4851 = vunpack.c.l.bf16 %v4843
        %v4852 = vunpack.c.h.bf16 %v4843
        %v4853 = vunpack.c.l.bf16 %v4844
        %v4854 = vunpack.c.h.bf16 %v4844
        %v4855 = vunpack.c.l.bf16 %v4845
        %v4856 = vunpack.c.h.bf16 %v4845
        %v4857 = vunpack.c.l.bf16 %v4846
        %v4858 = vunpack.c.h.bf16 %v4846
        %s4859 = scalar_lea.vmem %s183, 420 [#allocation2]
        %v4860 = vld [vmem:[%s4859] ss:$2 sm:$0x3f]
        %v4862 = vlaneseq
        %v4863 = vshrl.u32 %v4862, 7
        %v4864 = vsub.s32 0, %v4863
        %v4865 = vrot.slane %v4860, %v4864
        %v4866 = vlaneseq
        %v4867 = vshrl.u32 %v4866, 7
        %v4868 = vsub.s32 1, %v4867
        %v4869 = vrot.slane %v4860, %v4868
        %v4870 = vlaneseq
        %v4871 = vshrl.u32 %v4870, 7
        %v4872 = vsub.s32 2, %v4871
        %v4873 = vrot.slane %v4860, %v4872
        %v4874 = vlaneseq
        %v4875 = vshrl.u32 %v4874, 7
        %v4876 = vsub.s32 3, %v4875
        %v4877 = vrot.slane %v4860, %v4876
        %v4878 = vlaneseq
        %v4879 = vshrl.u32 %v4878, 7
        %v4880 = vsub.s32 4, %v4879
        %v4881 = vrot.slane %v4860, %v4880
        %v4882 = vlaneseq
        %v4883 = vshrl.u32 %v4882, 7
        %v4884 = vsub.s32 5, %v4883
        %v4885 = vrot.slane %v4860, %v4884
        %v4892 = vmul.f32 %v4865, %v4847
        %v4893 = vmul.f32 %v4869, %v4848
        %v4894 = vmul.f32 %v4873, %v4849
        %v4895 = vmul.f32 %v4877, %v4850
        %v4896 = vmul.f32 %v4881, %v4851
        %v4897 = vmul.f32 %v4885, %v4852
        %v4898 = vmul.f32 %v4865, %v4853
        %v4899 = vmul.f32 %v4869, %v4854
        %v4900 = vmul.f32 %v4873, %v4855
        %v4901 = vmul.f32 %v4877, %v4856
        %v4902 = vmul.f32 %v4881, %v4857
        %v4903 = vmul.f32 %v4885, %v4858
        %v4904 = vadd.f32 %v4892, %v4893
        %v4905 = vadd.f32 %v4898, %v4899
        %v4906 = vadd.f32 %v4904, %v4894
        %v4907 = vadd.f32 %v4905, %v4900
        %v4908 = vadd.f32 %v4906, %v4895
        %v4909 = vadd.f32 %v4907, %v4901
        %v4910 = vadd.f32 %v4908, %v4896
        %v4911 = vadd.f32 %v4909, %v4902
        %v4912 = vadd.f32 %v4910, %v4897
        %v4913 = vadd.f32 %v4911, %v4903
        %v4914 = vadd.f32 %v4782, %v4912
        %v4915 = vadd.f32 %v4783, %v4913
        %s4916 = scalar_lea.vmem %s183, 421 [#allocation2]
        %v4917 = vld [vmem:[%s4916] ss:$2 sm:$0x3f]
        %v4919 = vlaneseq
        %v4920 = vshrl.u32 %v4919, 7
        %v4921 = vsub.s32 0, %v4920
        %v4922 = vrot.slane %v4917, %v4921
        %v4923 = vlaneseq
        %v4924 = vshrl.u32 %v4923, 7
        %v4925 = vsub.s32 1, %v4924
        %v4926 = vrot.slane %v4917, %v4925
        %v4927 = vlaneseq
        %v4928 = vshrl.u32 %v4927, 7
        %v4929 = vsub.s32 2, %v4928
        %v4930 = vrot.slane %v4917, %v4929
        %v4931 = vlaneseq
        %v4932 = vshrl.u32 %v4931, 7
        %v4933 = vsub.s32 3, %v4932
        %v4934 = vrot.slane %v4917, %v4933
        %v4935 = vlaneseq
        %v4936 = vshrl.u32 %v4935, 7
        %v4937 = vsub.s32 4, %v4936
        %v4938 = vrot.slane %v4917, %v4937
        %v4939 = vlaneseq
        %v4940 = vshrl.u32 %v4939, 7
        %v4941 = vsub.s32 5, %v4940
        %v4942 = vrot.slane %v4917, %v4941
        %v4949 = vmul.f32 %v4922, %v4847
        %v4950 = vmul.f32 %v4926, %v4848
        %v4951 = vmul.f32 %v4930, %v4849
        %v4952 = vmul.f32 %v4934, %v4850
        %v4953 = vmul.f32 %v4938, %v4851
        %v4954 = vmul.f32 %v4942, %v4852
        %v4955 = vmul.f32 %v4922, %v4853
        %v4956 = vmul.f32 %v4926, %v4854
        %v4957 = vmul.f32 %v4930, %v4855
        %v4958 = vmul.f32 %v4934, %v4856
        %v4959 = vmul.f32 %v4938, %v4857
        %v4960 = vmul.f32 %v4942, %v4858
        %v4961 = vadd.f32 %v4949, %v4950
        %v4962 = vadd.f32 %v4955, %v4956
        %v4963 = vadd.f32 %v4961, %v4951
        %v4964 = vadd.f32 %v4962, %v4957
        %v4965 = vadd.f32 %v4963, %v4952
        %v4966 = vadd.f32 %v4964, %v4958
        %v4967 = vadd.f32 %v4965, %v4953
        %v4968 = vadd.f32 %v4966, %v4959
        %v4969 = vadd.f32 %v4967, %v4954
        %v4970 = vadd.f32 %v4968, %v4960
        %v4971 = vadd.f32 %v4839, %v4969
        %v4972 = vadd.f32 %v4840, %v4970
        %v4973 = vld [vmem:[%s192 + $0x360] sm:$0xff]
        %v4974 = vld [vmem:[%s192 + $0x368] sm:$0xff]
        %v4975 = vld [vmem:[%s192 + $0x370] sm:$0xff]
        %v4976 = vld [vmem:[%s192 + $0x888] sm:$0x33]
        %v4977 = vld [vmem:[%s192 + $0x890] sm:$0x33]
        %v4978 = vld [vmem:[%s192 + $0x898] sm:$0x33]
        %v4979 = vunpack.c.l.bf16 %v4973
        %v4980 = vunpack.c.h.bf16 %v4973
        %v4981 = vunpack.c.l.bf16 %v4974
        %v4982 = vunpack.c.h.bf16 %v4974
        %v4983 = vunpack.c.l.bf16 %v4975
        %v4984 = vunpack.c.h.bf16 %v4975
        %v4985 = vunpack.c.l.bf16 %v4976
        %v4986 = vunpack.c.h.bf16 %v4976
        %v4987 = vunpack.c.l.bf16 %v4977
        %v4988 = vunpack.c.h.bf16 %v4977
        %v4989 = vunpack.c.l.bf16 %v4978
        %v4990 = vunpack.c.h.bf16 %v4978
        %s4991 = scalar_lea.vmem %s183, 432 [#allocation2]
        %v4992 = vld [vmem:[%s4991] ss:$2 sm:$0x3f]
        %v4994 = vlaneseq
        %v4995 = vshrl.u32 %v4994, 7
        %v4996 = vsub.s32 0, %v4995
        %v4997 = vrot.slane %v4992, %v4996
        %v4998 = vlaneseq
        %v4999 = vshrl.u32 %v4998, 7
        %v5000 = vsub.s32 1, %v4999
        %v5001 = vrot.slane %v4992, %v5000
        %v5002 = vlaneseq
        %v5003 = vshrl.u32 %v5002, 7
        %v5004 = vsub.s32 2, %v5003
        %v5005 = vrot.slane %v4992, %v5004
        %v5006 = vlaneseq
        %v5007 = vshrl.u32 %v5006, 7
        %v5008 = vsub.s32 3, %v5007
        %v5009 = vrot.slane %v4992, %v5008
        %v5010 = vlaneseq
        %v5011 = vshrl.u32 %v5010, 7
        %v5012 = vsub.s32 4, %v5011
        %v5013 = vrot.slane %v4992, %v5012
        %v5014 = vlaneseq
        %v5015 = vshrl.u32 %v5014, 7
        %v5016 = vsub.s32 5, %v5015
        %v5017 = vrot.slane %v4992, %v5016
        %v5024 = vmul.f32 %v4997, %v4979
        %v5025 = vmul.f32 %v5001, %v4980
        %v5026 = vmul.f32 %v5005, %v4981
        %v5027 = vmul.f32 %v5009, %v4982
        %v5028 = vmul.f32 %v5013, %v4983
        %v5029 = vmul.f32 %v5017, %v4984
        %v5030 = vmul.f32 %v4997, %v4985
        %v5031 = vmul.f32 %v5001, %v4986
        %v5032 = vmul.f32 %v5005, %v4987
        %v5033 = vmul.f32 %v5009, %v4988
        %v5034 = vmul.f32 %v5013, %v4989
        %v5035 = vmul.f32 %v5017, %v4990
        %v5036 = vadd.f32 %v5024, %v5025
        %v5037 = vadd.f32 %v5030, %v5031
        %v5038 = vadd.f32 %v5036, %v5026
        %v5039 = vadd.f32 %v5037, %v5032
        %v5040 = vadd.f32 %v5038, %v5027
        %v5041 = vadd.f32 %v5039, %v5033
        %v5042 = vadd.f32 %v5040, %v5028
        %v5043 = vadd.f32 %v5041, %v5034
        %v5044 = vadd.f32 %v5042, %v5029
        %v5045 = vadd.f32 %v5043, %v5035
        %v5046 = vadd.f32 %v4914, %v5044
        %v5047 = vadd.f32 %v4915, %v5045
        %s5048 = scalar_lea.vmem %s183, 433 [#allocation2]
        %v5049 = vld [vmem:[%s5048] ss:$2 sm:$0x3f]
        %v5051 = vlaneseq
        %v5052 = vshrl.u32 %v5051, 7
        %v5053 = vsub.s32 0, %v5052
        %v5054 = vrot.slane %v5049, %v5053
        %v5055 = vlaneseq
        %v5056 = vshrl.u32 %v5055, 7
        %v5057 = vsub.s32 1, %v5056
        %v5058 = vrot.slane %v5049, %v5057
        %v5059 = vlaneseq
        %v5060 = vshrl.u32 %v5059, 7
        %v5061 = vsub.s32 2, %v5060
        %v5062 = vrot.slane %v5049, %v5061
        %v5063 = vlaneseq
        %v5064 = vshrl.u32 %v5063, 7
        %v5065 = vsub.s32 3, %v5064
        %v5066 = vrot.slane %v5049, %v5065
        %v5067 = vlaneseq
        %v5068 = vshrl.u32 %v5067, 7
        %v5069 = vsub.s32 4, %v5068
        %v5070 = vrot.slane %v5049, %v5069
        %v5071 = vlaneseq
        %v5072 = vshrl.u32 %v5071, 7
        %v5073 = vsub.s32 5, %v5072
        %v5074 = vrot.slane %v5049, %v5073
        %v5081 = vmul.f32 %v5054, %v4979
        %v5082 = vmul.f32 %v5058, %v4980
        %v5083 = vmul.f32 %v5062, %v4981
        %v5084 = vmul.f32 %v5066, %v4982
        %v5085 = vmul.f32 %v5070, %v4983
        %v5086 = vmul.f32 %v5074, %v4984
        %v5087 = vmul.f32 %v5054, %v4985
        %v5088 = vmul.f32 %v5058, %v4986
        %v5089 = vmul.f32 %v5062, %v4987
        %v5090 = vmul.f32 %v5066, %v4988
        %v5091 = vmul.f32 %v5070, %v4989
        %v5092 = vmul.f32 %v5074, %v4990
        %v5093 = vadd.f32 %v5081, %v5082
        %v5094 = vadd.f32 %v5087, %v5088
        %v5095 = vadd.f32 %v5093, %v5083
        %v5096 = vadd.f32 %v5094, %v5089
        %v5097 = vadd.f32 %v5095, %v5084
        %v5098 = vadd.f32 %v5096, %v5090
        %v5099 = vadd.f32 %v5097, %v5085
        %v5100 = vadd.f32 %v5098, %v5091
        %v5101 = vadd.f32 %v5099, %v5086
        %v5102 = vadd.f32 %v5100, %v5092
        %v5103 = vadd.f32 %v4971, %v5101
        %v5104 = vadd.f32 %v4972, %v5102
        %v5105 = vld [vmem:[%s192 + $0x378] sm:$0xff]
        %v5106 = vld [vmem:[%s192 + $0x380] sm:$0xff]
        %v5107 = vld [vmem:[%s192 + $0x388] sm:$0xff]
        %v5108 = vld [vmem:[%s192 + $0x8a0] sm:$0x33]
        %v5109 = vld [vmem:[%s192 + $0x8a8] sm:$0x33]
        %v5110 = vld [vmem:[%s192 + $0x8b0] sm:$0x33]
        %v5111 = vunpack.c.l.bf16 %v5105
        %v5112 = vunpack.c.h.bf16 %v5105
        %v5113 = vunpack.c.l.bf16 %v5106
        %v5114 = vunpack.c.h.bf16 %v5106
        %v5115 = vunpack.c.l.bf16 %v5107
        %v5116 = vunpack.c.h.bf16 %v5107
        %v5117 = vunpack.c.l.bf16 %v5108
        %v5118 = vunpack.c.h.bf16 %v5108
        %v5119 = vunpack.c.l.bf16 %v5109
        %v5120 = vunpack.c.h.bf16 %v5109
        %v5121 = vunpack.c.l.bf16 %v5110
        %v5122 = vunpack.c.h.bf16 %v5110
        %s5123 = scalar_lea.vmem %s183, 444 [#allocation2]
        %v5124 = vld [vmem:[%s5123] ss:$2 sm:$0x3f]
        %v5126 = vlaneseq
        %v5127 = vshrl.u32 %v5126, 7
        %v5128 = vsub.s32 0, %v5127
        %v5129 = vrot.slane %v5124, %v5128
        %v5130 = vlaneseq
        %v5131 = vshrl.u32 %v5130, 7
        %v5132 = vsub.s32 1, %v5131
        %v5133 = vrot.slane %v5124, %v5132
        %v5134 = vlaneseq
        %v5135 = vshrl.u32 %v5134, 7
        %v5136 = vsub.s32 2, %v5135
        %v5137 = vrot.slane %v5124, %v5136
        %v5138 = vlaneseq
        %v5139 = vshrl.u32 %v5138, 7
        %v5140 = vsub.s32 3, %v5139
        %v5141 = vrot.slane %v5124, %v5140
        %v5142 = vlaneseq
        %v5143 = vshrl.u32 %v5142, 7
        %v5144 = vsub.s32 4, %v5143
        %v5145 = vrot.slane %v5124, %v5144
        %v5146 = vlaneseq
        %v5147 = vshrl.u32 %v5146, 7
        %v5148 = vsub.s32 5, %v5147
        %v5149 = vrot.slane %v5124, %v5148
        %v5156 = vmul.f32 %v5129, %v5111
        %v5157 = vmul.f32 %v5133, %v5112
        %v5158 = vmul.f32 %v5137, %v5113
        %v5159 = vmul.f32 %v5141, %v5114
        %v5160 = vmul.f32 %v5145, %v5115
        %v5161 = vmul.f32 %v5149, %v5116
        %v5162 = vmul.f32 %v5129, %v5117
        %v5163 = vmul.f32 %v5133, %v5118
        %v5164 = vmul.f32 %v5137, %v5119
        %v5165 = vmul.f32 %v5141, %v5120
        %v5166 = vmul.f32 %v5145, %v5121
        %v5167 = vmul.f32 %v5149, %v5122
        %v5168 = vadd.f32 %v5156, %v5157
        %v5169 = vadd.f32 %v5162, %v5163
        %v5170 = vadd.f32 %v5168, %v5158
        %v5171 = vadd.f32 %v5169, %v5164
        %v5172 = vadd.f32 %v5170, %v5159
        %v5173 = vadd.f32 %v5171, %v5165
        %v5174 = vadd.f32 %v5172, %v5160
        %v5175 = vadd.f32 %v5173, %v5166
        %v5176 = vadd.f32 %v5174, %v5161
        %v5177 = vadd.f32 %v5175, %v5167
        %v5178 = vadd.f32 %v5046, %v5176
        %v5179 = vadd.f32 %v5047, %v5177
        %s5180 = scalar_lea.vmem %s183, 445 [#allocation2]
        %v5181 = vld [vmem:[%s5180] ss:$2 sm:$0x3f]
        %v5183 = vlaneseq
        %v5184 = vshrl.u32 %v5183, 7
        %v5185 = vsub.s32 0, %v5184
        %v5186 = vrot.slane %v5181, %v5185
        %v5187 = vlaneseq
        %v5188 = vshrl.u32 %v5187, 7
        %v5189 = vsub.s32 1, %v5188
        %v5190 = vrot.slane %v5181, %v5189
        %v5191 = vlaneseq
        %v5192 = vshrl.u32 %v5191, 7
        %v5193 = vsub.s32 2, %v5192
        %v5194 = vrot.slane %v5181, %v5193
        %v5195 = vlaneseq
        %v5196 = vshrl.u32 %v5195, 7
        %v5197 = vsub.s32 3, %v5196
        %v5198 = vrot.slane %v5181, %v5197
        %v5199 = vlaneseq
        %v5200 = vshrl.u32 %v5199, 7
        %v5201 = vsub.s32 4, %v5200
        %v5202 = vrot.slane %v5181, %v5201
        %v5203 = vlaneseq
        %v5204 = vshrl.u32 %v5203, 7
        %v5205 = vsub.s32 5, %v5204
        %v5206 = vrot.slane %v5181, %v5205
        %v5213 = vmul.f32 %v5186, %v5111
        %v5214 = vmul.f32 %v5190, %v5112
        %v5215 = vmul.f32 %v5194, %v5113
        %v5216 = vmul.f32 %v5198, %v5114
        %v5217 = vmul.f32 %v5202, %v5115
        %v5218 = vmul.f32 %v5206, %v5116
        %v5219 = vmul.f32 %v5186, %v5117
        %v5220 = vmul.f32 %v5190, %v5118
        %v5221 = vmul.f32 %v5194, %v5119
        %v5222 = vmul.f32 %v5198, %v5120
        %v5223 = vmul.f32 %v5202, %v5121
        %v5224 = vmul.f32 %v5206, %v5122
        %v5225 = vadd.f32 %v5213, %v5214
        %v5226 = vadd.f32 %v5219, %v5220
        %v5227 = vadd.f32 %v5225, %v5215
        %v5228 = vadd.f32 %v5226, %v5221
        %v5229 = vadd.f32 %v5227, %v5216
        %v5230 = vadd.f32 %v5228, %v5222
        %v5231 = vadd.f32 %v5229, %v5217
        %v5232 = vadd.f32 %v5230, %v5223
        %v5233 = vadd.f32 %v5231, %v5218
        %v5234 = vadd.f32 %v5232, %v5224
        %v5235 = vadd.f32 %v5103, %v5233
        %v5236 = vadd.f32 %v5104, %v5234
        %v5237 = vld [vmem:[%s192 + $0x390] sm:$0xff]
        %v5238 = vld [vmem:[%s192 + $0x398] sm:$0xff]
        %v5239 = vld [vmem:[%s192 + $0x3a0] sm:$0xff]
        %v5240 = vld [vmem:[%s192 + $0x8b8] sm:$0x33]
        %v5241 = vld [vmem:[%s192 + $0x8c0] sm:$0x33]
        %v5242 = vld [vmem:[%s192 + $0x8c8] sm:$0x33]
        %v5243 = vunpack.c.l.bf16 %v5237
        %v5244 = vunpack.c.h.bf16 %v5237
        %v5245 = vunpack.c.l.bf16 %v5238
        %v5246 = vunpack.c.h.bf16 %v5238
        %v5247 = vunpack.c.l.bf16 %v5239
        %v5248 = vunpack.c.h.bf16 %v5239
        %v5249 = vunpack.c.l.bf16 %v5240
        %v5250 = vunpack.c.h.bf16 %v5240
        %v5251 = vunpack.c.l.bf16 %v5241
        %v5252 = vunpack.c.h.bf16 %v5241
        %v5253 = vunpack.c.l.bf16 %v5242
        %v5254 = vunpack.c.h.bf16 %v5242
        %s5255 = scalar_lea.vmem %s183, 456 [#allocation2]
        %v5256 = vld [vmem:[%s5255] ss:$2 sm:$0x3f]
        %v5258 = vlaneseq
        %v5259 = vshrl.u32 %v5258, 7
        %v5260 = vsub.s32 0, %v5259
        %v5261 = vrot.slane %v5256, %v5260
        %v5262 = vlaneseq
        %v5263 = vshrl.u32 %v5262, 7
        %v5264 = vsub.s32 1, %v5263
        %v5265 = vrot.slane %v5256, %v5264
        %v5266 = vlaneseq
        %v5267 = vshrl.u32 %v5266, 7
        %v5268 = vsub.s32 2, %v5267
        %v5269 = vrot.slane %v5256, %v5268
        %v5270 = vlaneseq
        %v5271 = vshrl.u32 %v5270, 7
        %v5272 = vsub.s32 3, %v5271
        %v5273 = vrot.slane %v5256, %v5272
        %v5274 = vlaneseq
        %v5275 = vshrl.u32 %v5274, 7
        %v5276 = vsub.s32 4, %v5275
        %v5277 = vrot.slane %v5256, %v5276
        %v5278 = vlaneseq
        %v5279 = vshrl.u32 %v5278, 7
        %v5280 = vsub.s32 5, %v5279
        %v5281 = vrot.slane %v5256, %v5280
        %v5288 = vmul.f32 %v5261, %v5243
        %v5289 = vmul.f32 %v5265, %v5244
        %v5290 = vmul.f32 %v5269, %v5245
        %v5291 = vmul.f32 %v5273, %v5246
        %v5292 = vmul.f32 %v5277, %v5247
        %v5293 = vmul.f32 %v5281, %v5248
        %v5294 = vmul.f32 %v5261, %v5249
        %v5295 = vmul.f32 %v5265, %v5250
        %v5296 = vmul.f32 %v5269, %v5251
        %v5297 = vmul.f32 %v5273, %v5252
        %v5298 = vmul.f32 %v5277, %v5253
        %v5299 = vmul.f32 %v5281, %v5254
        %v5300 = vadd.f32 %v5288, %v5289
        %v5301 = vadd.f32 %v5294, %v5295
        %v5302 = vadd.f32 %v5300, %v5290
        %v5303 = vadd.f32 %v5301, %v5296
        %v5304 = vadd.f32 %v5302, %v5291
        %v5305 = vadd.f32 %v5303, %v5297
        %v5306 = vadd.f32 %v5304, %v5292
        %v5307 = vadd.f32 %v5305, %v5298
        %v5308 = vadd.f32 %v5306, %v5293
        %v5309 = vadd.f32 %v5307, %v5299
        %v5310 = vadd.f32 %v5178, %v5308
        %v5311 = vadd.f32 %v5179, %v5309
        %s5312 = scalar_lea.vmem %s183, 457 [#allocation2]
        %v5313 = vld [vmem:[%s5312] ss:$2 sm:$0x3f]
        %v5315 = vlaneseq
        %v5316 = vshrl.u32 %v5315, 7
        %v5317 = vsub.s32 0, %v5316
        %v5318 = vrot.slane %v5313, %v5317
        %v5319 = vlaneseq
        %v5320 = vshrl.u32 %v5319, 7
        %v5321 = vsub.s32 1, %v5320
        %v5322 = vrot.slane %v5313, %v5321
        %v5323 = vlaneseq
        %v5324 = vshrl.u32 %v5323, 7
        %v5325 = vsub.s32 2, %v5324
        %v5326 = vrot.slane %v5313, %v5325
        %v5327 = vlaneseq
        %v5328 = vshrl.u32 %v5327, 7
        %v5329 = vsub.s32 3, %v5328
        %v5330 = vrot.slane %v5313, %v5329
        %v5331 = vlaneseq
        %v5332 = vshrl.u32 %v5331, 7
        %v5333 = vsub.s32 4, %v5332
        %v5334 = vrot.slane %v5313, %v5333
        %v5335 = vlaneseq
        %v5336 = vshrl.u32 %v5335, 7
        %v5337 = vsub.s32 5, %v5336
        %v5338 = vrot.slane %v5313, %v5337
        %v5345 = vmul.f32 %v5318, %v5243
        %v5346 = vmul.f32 %v5322, %v5244
        %v5347 = vmul.f32 %v5326, %v5245
        %v5348 = vmul.f32 %v5330, %v5246
        %v5349 = vmul.f32 %v5334, %v5247
        %v5350 = vmul.f32 %v5338, %v5248
        %v5351 = vmul.f32 %v5318, %v5249
        %v5352 = vmul.f32 %v5322, %v5250
        %v5353 = vmul.f32 %v5326, %v5251
        %v5354 = vmul.f32 %v5330, %v5252
        %v5355 = vmul.f32 %v5334, %v5253
        %v5356 = vmul.f32 %v5338, %v5254
        %v5357 = vadd.f32 %v5345, %v5346
        %v5358 = vadd.f32 %v5351, %v5352
        %v5359 = vadd.f32 %v5357, %v5347
        %v5360 = vadd.f32 %v5358, %v5353
        %v5361 = vadd.f32 %v5359, %v5348
        %v5362 = vadd.f32 %v5360, %v5354
        %v5363 = vadd.f32 %v5361, %v5349
        %v5364 = vadd.f32 %v5362, %v5355
        %v5365 = vadd.f32 %v5363, %v5350
        %v5366 = vadd.f32 %v5364, %v5356
        %v5367 = vadd.f32 %v5235, %v5365
        %v5368 = vadd.f32 %v5236, %v5366
        %v5369 = vld [vmem:[%s192 + $0x3a8] sm:$0xff]
        %v5370 = vld [vmem:[%s192 + $0x3b0] sm:$0xff]
        %v5371 = vld [vmem:[%s192 + $0x3b8] sm:$0xff]
        %v5372 = vld [vmem:[%s192 + $0x8d0] sm:$0x33]
        %v5373 = vld [vmem:[%s192 + $0x8d8] sm:$0x33]
        %v5374 = vld [vmem:[%s192 + $0x8e0] sm:$0x33]
        %v5375 = vunpack.c.l.bf16 %v5369
        %v5376 = vunpack.c.h.bf16 %v5369
        %v5377 = vunpack.c.l.bf16 %v5370
        %v5378 = vunpack.c.h.bf16 %v5370
        %v5379 = vunpack.c.l.bf16 %v5371
        %v5380 = vunpack.c.h.bf16 %v5371
        %v5381 = vunpack.c.l.bf16 %v5372
        %v5382 = vunpack.c.h.bf16 %v5372
        %v5383 = vunpack.c.l.bf16 %v5373
        %v5384 = vunpack.c.h.bf16 %v5373
        %v5385 = vunpack.c.l.bf16 %v5374
        %v5386 = vunpack.c.h.bf16 %v5374
        %s5387 = scalar_lea.vmem %s183, 468 [#allocation2]
        %v5388 = vld [vmem:[%s5387] ss:$2 sm:$0x3f]
        %v5390 = vlaneseq
        %v5391 = vshrl.u32 %v5390, 7
        %v5392 = vsub.s32 0, %v5391
        %v5393 = vrot.slane %v5388, %v5392
        %v5394 = vlaneseq
        %v5395 = vshrl.u32 %v5394, 7
        %v5396 = vsub.s32 1, %v5395
        %v5397 = vrot.slane %v5388, %v5396
        %v5398 = vlaneseq
        %v5399 = vshrl.u32 %v5398, 7
        %v5400 = vsub.s32 2, %v5399
        %v5401 = vrot.slane %v5388, %v5400
        %v5402 = vlaneseq
        %v5403 = vshrl.u32 %v5402, 7
        %v5404 = vsub.s32 3, %v5403
        %v5405 = vrot.slane %v5388, %v5404
        %v5406 = vlaneseq
        %v5407 = vshrl.u32 %v5406, 7
        %v5408 = vsub.s32 4, %v5407
        %v5409 = vrot.slane %v5388, %v5408
        %v5410 = vlaneseq
        %v5411 = vshrl.u32 %v5410, 7
        %v5412 = vsub.s32 5, %v5411
        %v5413 = vrot.slane %v5388, %v5412
        %v5420 = vmul.f32 %v5393, %v5375
        %v5421 = vmul.f32 %v5397, %v5376
        %v5422 = vmul.f32 %v5401, %v5377
        %v5423 = vmul.f32 %v5405, %v5378
        %v5424 = vmul.f32 %v5409, %v5379
        %v5425 = vmul.f32 %v5413, %v5380
        %v5426 = vmul.f32 %v5393, %v5381
        %v5427 = vmul.f32 %v5397, %v5382
        %v5428 = vmul.f32 %v5401, %v5383
        %v5429 = vmul.f32 %v5405, %v5384
        %v5430 = vmul.f32 %v5409, %v5385
        %v5431 = vmul.f32 %v5413, %v5386
        %v5432 = vadd.f32 %v5420, %v5421
        %v5433 = vadd.f32 %v5426, %v5427
        %v5434 = vadd.f32 %v5432, %v5422
        %v5435 = vadd.f32 %v5433, %v5428
        %v5436 = vadd.f32 %v5434, %v5423
        %v5437 = vadd.f32 %v5435, %v5429
        %v5438 = vadd.f32 %v5436, %v5424
        %v5439 = vadd.f32 %v5437, %v5430
        %v5440 = vadd.f32 %v5438, %v5425
        %v5441 = vadd.f32 %v5439, %v5431
        %v5442 = vadd.f32 %v5310, %v5440
        %v5443 = vadd.f32 %v5311, %v5441
        %s5444 = scalar_lea.vmem %s183, 469 [#allocation2]
        %v5445 = vld [vmem:[%s5444] ss:$2 sm:$0x3f]
        %v5447 = vlaneseq
        %v5448 = vshrl.u32 %v5447, 7
        %v5449 = vsub.s32 0, %v5448
        %v5450 = vrot.slane %v5445, %v5449
        %v5451 = vlaneseq
        %v5452 = vshrl.u32 %v5451, 7
        %v5453 = vsub.s32 1, %v5452
        %v5454 = vrot.slane %v5445, %v5453
        %v5455 = vlaneseq
        %v5456 = vshrl.u32 %v5455, 7
        %v5457 = vsub.s32 2, %v5456
        %v5458 = vrot.slane %v5445, %v5457
        %v5459 = vlaneseq
        %v5460 = vshrl.u32 %v5459, 7
        %v5461 = vsub.s32 3, %v5460
        %v5462 = vrot.slane %v5445, %v5461
        %v5463 = vlaneseq
        %v5464 = vshrl.u32 %v5463, 7
        %v5465 = vsub.s32 4, %v5464
        %v5466 = vrot.slane %v5445, %v5465
        %v5467 = vlaneseq
        %v5468 = vshrl.u32 %v5467, 7
        %v5469 = vsub.s32 5, %v5468
        %v5470 = vrot.slane %v5445, %v5469
        %v5477 = vmul.f32 %v5450, %v5375
        %v5478 = vmul.f32 %v5454, %v5376
        %v5479 = vmul.f32 %v5458, %v5377
        %v5480 = vmul.f32 %v5462, %v5378
        %v5481 = vmul.f32 %v5466, %v5379
        %v5482 = vmul.f32 %v5470, %v5380
        %v5483 = vmul.f32 %v5450, %v5381
        %v5484 = vmul.f32 %v5454, %v5382
        %v5485 = vmul.f32 %v5458, %v5383
        %v5486 = vmul.f32 %v5462, %v5384
        %v5487 = vmul.f32 %v5466, %v5385
        %v5488 = vmul.f32 %v5470, %v5386
        %v5489 = vadd.f32 %v5477, %v5478
        %v5490 = vadd.f32 %v5483, %v5484
        %v5491 = vadd.f32 %v5489, %v5479
        %v5492 = vadd.f32 %v5490, %v5485
        %v5493 = vadd.f32 %v5491, %v5480
        %v5494 = vadd.f32 %v5492, %v5486
        %v5495 = vadd.f32 %v5493, %v5481
        %v5496 = vadd.f32 %v5494, %v5487
        %v5497 = vadd.f32 %v5495, %v5482
        %v5498 = vadd.f32 %v5496, %v5488
        %v5499 = vadd.f32 %v5367, %v5497
        %v5500 = vadd.f32 %v5368, %v5498
        %v5501 = vld [vmem:[%s192 + $0x3c0] sm:$0xff]
        %v5502 = vld [vmem:[%s192 + $0x3c8] sm:$0xff]
        %v5503 = vld [vmem:[%s192 + $0x3d0] sm:$0xff]
        %v5504 = vld [vmem:[%s192 + $0x8e8] sm:$0x33]
        %v5505 = vld [vmem:[%s192 + $0x8f0] sm:$0x33]
        %v5506 = vld [vmem:[%s192 + $0x8f8] sm:$0x33]
        %v5507 = vunpack.c.l.bf16 %v5501
        %v5508 = vunpack.c.h.bf16 %v5501
        %v5509 = vunpack.c.l.bf16 %v5502
        %v5510 = vunpack.c.h.bf16 %v5502
        %v5511 = vunpack.c.l.bf16 %v5503
        %v5512 = vunpack.c.h.bf16 %v5503
        %v5513 = vunpack.c.l.bf16 %v5504
        %v5514 = vunpack.c.h.bf16 %v5504
        %v5515 = vunpack.c.l.bf16 %v5505
        %v5516 = vunpack.c.h.bf16 %v5505
        %v5517 = vunpack.c.l.bf16 %v5506
        %v5518 = vunpack.c.h.bf16 %v5506
        %s5519 = scalar_lea.vmem %s183, 480 [#allocation2]
        %v5520 = vld [vmem:[%s5519] ss:$2 sm:$0x3f]
        %v5522 = vlaneseq
        %v5523 = vshrl.u32 %v5522, 7
        %v5524 = vsub.s32 0, %v5523
        %v5525 = vrot.slane %v5520, %v5524
        %v5526 = vlaneseq
        %v5527 = vshrl.u32 %v5526, 7
        %v5528 = vsub.s32 1, %v5527
        %v5529 = vrot.slane %v5520, %v5528
        %v5530 = vlaneseq
        %v5531 = vshrl.u32 %v5530, 7
        %v5532 = vsub.s32 2, %v5531
        %v5533 = vrot.slane %v5520, %v5532
        %v5534 = vlaneseq
        %v5535 = vshrl.u32 %v5534, 7
        %v5536 = vsub.s32 3, %v5535
        %v5537 = vrot.slane %v5520, %v5536
        %v5538 = vlaneseq
        %v5539 = vshrl.u32 %v5538, 7
        %v5540 = vsub.s32 4, %v5539
        %v5541 = vrot.slane %v5520, %v5540
        %v5542 = vlaneseq
        %v5543 = vshrl.u32 %v5542, 7
        %v5544 = vsub.s32 5, %v5543
        %v5545 = vrot.slane %v5520, %v5544
        %v5552 = vmul.f32 %v5525, %v5507
        %v5553 = vmul.f32 %v5529, %v5508
        %v5554 = vmul.f32 %v5533, %v5509
        %v5555 = vmul.f32 %v5537, %v5510
        %v5556 = vmul.f32 %v5541, %v5511
        %v5557 = vmul.f32 %v5545, %v5512
        %v5558 = vmul.f32 %v5525, %v5513
        %v5559 = vmul.f32 %v5529, %v5514
        %v5560 = vmul.f32 %v5533, %v5515
        %v5561 = vmul.f32 %v5537, %v5516
        %v5562 = vmul.f32 %v5541, %v5517
        %v5563 = vmul.f32 %v5545, %v5518
        %v5564 = vadd.f32 %v5552, %v5553
        %v5565 = vadd.f32 %v5558, %v5559
        %v5566 = vadd.f32 %v5564, %v5554
        %v5567 = vadd.f32 %v5565, %v5560
        %v5568 = vadd.f32 %v5566, %v5555
        %v5569 = vadd.f32 %v5567, %v5561
        %v5570 = vadd.f32 %v5568, %v5556
        %v5571 = vadd.f32 %v5569, %v5562
        %v5572 = vadd.f32 %v5570, %v5557
        %v5573 = vadd.f32 %v5571, %v5563
        %v5574 = vadd.f32 %v5442, %v5572
        %v5575 = vadd.f32 %v5443, %v5573
        %s5576 = scalar_lea.vmem %s183, 481 [#allocation2]
        %v5577 = vld [vmem:[%s5576] ss:$2 sm:$0x3f]
        %v5579 = vlaneseq
        %v5580 = vshrl.u32 %v5579, 7
        %v5581 = vsub.s32 0, %v5580
        %v5582 = vrot.slane %v5577, %v5581
        %v5583 = vlaneseq
        %v5584 = vshrl.u32 %v5583, 7
        %v5585 = vsub.s32 1, %v5584
        %v5586 = vrot.slane %v5577, %v5585
        %v5587 = vlaneseq
        %v5588 = vshrl.u32 %v5587, 7
        %v5589 = vsub.s32 2, %v5588
        %v5590 = vrot.slane %v5577, %v5589
        %v5591 = vlaneseq
        %v5592 = vshrl.u32 %v5591, 7
        %v5593 = vsub.s32 3, %v5592
        %v5594 = vrot.slane %v5577, %v5593
        %v5595 = vlaneseq
        %v5596 = vshrl.u32 %v5595, 7
        %v5597 = vsub.s32 4, %v5596
        %v5598 = vrot.slane %v5577, %v5597
        %v5599 = vlaneseq
        %v5600 = vshrl.u32 %v5599, 7
        %v5601 = vsub.s32 5, %v5600
        %v5602 = vrot.slane %v5577, %v5601
        %v5609 = vmul.f32 %v5582, %v5507
        %v5610 = vmul.f32 %v5586, %v5508
        %v5611 = vmul.f32 %v5590, %v5509
        %v5612 = vmul.f32 %v5594, %v5510
        %v5613 = vmul.f32 %v5598, %v5511
        %v5614 = vmul.f32 %v5602, %v5512
        %v5615 = vmul.f32 %v5582, %v5513
        %v5616 = vmul.f32 %v5586, %v5514
        %v5617 = vmul.f32 %v5590, %v5515
        %v5618 = vmul.f32 %v5594, %v5516
        %v5619 = vmul.f32 %v5598, %v5517
        %v5620 = vmul.f32 %v5602, %v5518
        %v5621 = vadd.f32 %v5609, %v5610
        %v5622 = vadd.f32 %v5615, %v5616
        %v5623 = vadd.f32 %v5621, %v5611
        %v5624 = vadd.f32 %v5622, %v5617
        %v5625 = vadd.f32 %v5623, %v5612
        %v5626 = vadd.f32 %v5624, %v5618
        %v5627 = vadd.f32 %v5625, %v5613
        %v5628 = vadd.f32 %v5626, %v5619
        %v5629 = vadd.f32 %v5627, %v5614
        %v5630 = vadd.f32 %v5628, %v5620
        %v5631 = vadd.f32 %v5499, %v5629
        %v5632 = vadd.f32 %v5500, %v5630
        %v5633 = vld [vmem:[%s192 + $0x3d8] sm:$0xff]
        %v5634 = vld [vmem:[%s192 + $0x3e0] sm:$0xff]
        %v5635 = vld [vmem:[%s192 + $0x3e8] sm:$0xff]
        %v5636 = vld [vmem:[%s192 + $0x900] sm:$0x33]
        %v5637 = vld [vmem:[%s192 + $0x908] sm:$0x33]
        %v5638 = vld [vmem:[%s192 + $0x910] sm:$0x33]
        %v5639 = vunpack.c.l.bf16 %v5633
        %v5640 = vunpack.c.h.bf16 %v5633
        %v5641 = vunpack.c.l.bf16 %v5634
        %v5642 = vunpack.c.h.bf16 %v5634
        %v5643 = vunpack.c.l.bf16 %v5635
        %v5644 = vunpack.c.h.bf16 %v5635
        %v5645 = vunpack.c.l.bf16 %v5636
        %v5646 = vunpack.c.h.bf16 %v5636
        %v5647 = vunpack.c.l.bf16 %v5637
        %v5648 = vunpack.c.h.bf16 %v5637
        %v5649 = vunpack.c.l.bf16 %v5638
        %v5650 = vunpack.c.h.bf16 %v5638
        %s5651 = scalar_lea.vmem %s183, 492 [#allocation2]
        %v5652 = vld [vmem:[%s5651] ss:$2 sm:$0x3f]
        %v5654 = vlaneseq
        %v5655 = vshrl.u32 %v5654, 7
        %v5656 = vsub.s32 0, %v5655
        %v5657 = vrot.slane %v5652, %v5656
        %v5658 = vlaneseq
        %v5659 = vshrl.u32 %v5658, 7
        %v5660 = vsub.s32 1, %v5659
        %v5661 = vrot.slane %v5652, %v5660
        %v5662 = vlaneseq
        %v5663 = vshrl.u32 %v5662, 7
        %v5664 = vsub.s32 2, %v5663
        %v5665 = vrot.slane %v5652, %v5664
        %v5666 = vlaneseq
        %v5667 = vshrl.u32 %v5666, 7
        %v5668 = vsub.s32 3, %v5667
        %v5669 = vrot.slane %v5652, %v5668
        %v5670 = vlaneseq
        %v5671 = vshrl.u32 %v5670, 7
        %v5672 = vsub.s32 4, %v5671
        %v5673 = vrot.slane %v5652, %v5672
        %v5674 = vlaneseq
        %v5675 = vshrl.u32 %v5674, 7
        %v5676 = vsub.s32 5, %v5675
        %v5677 = vrot.slane %v5652, %v5676
        %v5684 = vmul.f32 %v5657, %v5639
        %v5685 = vmul.f32 %v5661, %v5640
        %v5686 = vmul.f32 %v5665, %v5641
        %v5687 = vmul.f32 %v5669, %v5642
        %v5688 = vmul.f32 %v5673, %v5643
        %v5689 = vmul.f32 %v5677, %v5644
        %v5690 = vmul.f32 %v5657, %v5645
        %v5691 = vmul.f32 %v5661, %v5646
        %v5692 = vmul.f32 %v5665, %v5647
        %v5693 = vmul.f32 %v5669, %v5648
        %v5694 = vmul.f32 %v5673, %v5649
        %v5695 = vmul.f32 %v5677, %v5650
        %v5696 = vadd.f32 %v5684, %v5685
        %v5697 = vadd.f32 %v5690, %v5691
        %v5698 = vadd.f32 %v5696, %v5686
        %v5699 = vadd.f32 %v5697, %v5692
        %v5700 = vadd.f32 %v5698, %v5687
        %v5701 = vadd.f32 %v5699, %v5693
        %v5702 = vadd.f32 %v5700, %v5688
        %v5703 = vadd.f32 %v5701, %v5694
        %v5704 = vadd.f32 %v5702, %v5689
        %v5705 = vadd.f32 %v5703, %v5695
        %v5706 = vadd.f32 %v5574, %v5704
        %v5707 = vadd.f32 %v5575, %v5705
        %s5708 = scalar_lea.vmem %s183, 493 [#allocation2]
        %v5709 = vld [vmem:[%s5708] ss:$2 sm:$0x3f]
        %v5711 = vlaneseq
        %v5712 = vshrl.u32 %v5711, 7
        %v5713 = vsub.s32 0, %v5712
        %v5714 = vrot.slane %v5709, %v5713
        %v5715 = vlaneseq
        %v5716 = vshrl.u32 %v5715, 7
        %v5717 = vsub.s32 1, %v5716
        %v5718 = vrot.slane %v5709, %v5717
        %v5719 = vlaneseq
        %v5720 = vshrl.u32 %v5719, 7
        %v5721 = vsub.s32 2, %v5720
        %v5722 = vrot.slane %v5709, %v5721
        %v5723 = vlaneseq
        %v5724 = vshrl.u32 %v5723, 7
        %v5725 = vsub.s32 3, %v5724
        %v5726 = vrot.slane %v5709, %v5725
        %v5727 = vlaneseq
        %v5728 = vshrl.u32 %v5727, 7
        %v5729 = vsub.s32 4, %v5728
        %v5730 = vrot.slane %v5709, %v5729
        %v5731 = vlaneseq
        %v5732 = vshrl.u32 %v5731, 7
        %v5733 = vsub.s32 5, %v5732
        %v5734 = vrot.slane %v5709, %v5733
        %v5741 = vmul.f32 %v5714, %v5639
        %v5742 = vmul.f32 %v5718, %v5640
        %v5743 = vmul.f32 %v5722, %v5641
        %v5744 = vmul.f32 %v5726, %v5642
        %v5745 = vmul.f32 %v5730, %v5643
        %v5746 = vmul.f32 %v5734, %v5644
        %v5747 = vmul.f32 %v5714, %v5645
        %v5748 = vmul.f32 %v5718, %v5646
        %v5749 = vmul.f32 %v5722, %v5647
        %v5750 = vmul.f32 %v5726, %v5648
        %v5751 = vmul.f32 %v5730, %v5649
        %v5752 = vmul.f32 %v5734, %v5650
        %v5753 = vadd.f32 %v5741, %v5742
        %v5754 = vadd.f32 %v5747, %v5748
        %v5755 = vadd.f32 %v5753, %v5743
        %v5756 = vadd.f32 %v5754, %v5749
        %v5757 = vadd.f32 %v5755, %v5744
        %v5758 = vadd.f32 %v5756, %v5750
        %v5759 = vadd.f32 %v5757, %v5745
        %v5760 = vadd.f32 %v5758, %v5751
        %v5761 = vadd.f32 %v5759, %v5746
        %v5762 = vadd.f32 %v5760, %v5752
        %v5763 = vadd.f32 %v5631, %v5761
        %v5764 = vadd.f32 %v5632, %v5762
        %v5765 = vld [vmem:[%s192 + $0x3f0] sm:$0xff]
        %v5766 = vld [vmem:[%s192 + $0x3f8] sm:$0xff]
        %v5767 = vld [vmem:[%s192 + $0x400] sm:$0xff]
        %v5768 = vld [vmem:[%s192 + $0x918] sm:$0x33]
        %v5769 = vld [vmem:[%s192 + $0x920] sm:$0x33]
        %v5770 = vld [vmem:[%s192 + $0x928] sm:$0x33]
        %v5771 = vunpack.c.l.bf16 %v5765
        %v5772 = vunpack.c.h.bf16 %v5765
        %v5773 = vunpack.c.l.bf16 %v5766
        %v5774 = vunpack.c.h.bf16 %v5766
        %v5775 = vunpack.c.l.bf16 %v5767
        %v5776 = vunpack.c.h.bf16 %v5767
        %v5777 = vunpack.c.l.bf16 %v5768
        %v5778 = vunpack.c.h.bf16 %v5768
        %v5779 = vunpack.c.l.bf16 %v5769
        %v5780 = vunpack.c.h.bf16 %v5769
        %v5781 = vunpack.c.l.bf16 %v5770
        %v5782 = vunpack.c.h.bf16 %v5770
        %s5783 = scalar_lea.vmem %s183, 504 [#allocation2]
        %v5784 = vld [vmem:[%s5783] ss:$2 sm:$0x3f]
        %v5786 = vlaneseq
        %v5787 = vshrl.u32 %v5786, 7
        %v5788 = vsub.s32 0, %v5787
        %v5789 = vrot.slane %v5784, %v5788
        %v5790 = vlaneseq
        %v5791 = vshrl.u32 %v5790, 7
        %v5792 = vsub.s32 1, %v5791
        %v5793 = vrot.slane %v5784, %v5792
        %v5794 = vlaneseq
        %v5795 = vshrl.u32 %v5794, 7
        %v5796 = vsub.s32 2, %v5795
        %v5797 = vrot.slane %v5784, %v5796
        %v5798 = vlaneseq
        %v5799 = vshrl.u32 %v5798, 7
        %v5800 = vsub.s32 3, %v5799
        %v5801 = vrot.slane %v5784, %v5800
        %v5802 = vlaneseq
        %v5803 = vshrl.u32 %v5802, 7
        %v5804 = vsub.s32 4, %v5803
        %v5805 = vrot.slane %v5784, %v5804
        %v5806 = vlaneseq
        %v5807 = vshrl.u32 %v5806, 7
        %v5808 = vsub.s32 5, %v5807
        %v5809 = vrot.slane %v5784, %v5808
        %v5816 = vmul.f32 %v5789, %v5771
        %v5817 = vmul.f32 %v5793, %v5772
        %v5818 = vmul.f32 %v5797, %v5773
        %v5819 = vmul.f32 %v5801, %v5774
        %v5820 = vmul.f32 %v5805, %v5775
        %v5821 = vmul.f32 %v5809, %v5776
        %v5822 = vmul.f32 %v5789, %v5777
        %v5823 = vmul.f32 %v5793, %v5778
        %v5824 = vmul.f32 %v5797, %v5779
        %v5825 = vmul.f32 %v5801, %v5780
        %v5826 = vmul.f32 %v5805, %v5781
        %v5827 = vmul.f32 %v5809, %v5782
        %v5828 = vadd.f32 %v5816, %v5817
        %v5829 = vadd.f32 %v5822, %v5823
        %v5830 = vadd.f32 %v5828, %v5818
        %v5831 = vadd.f32 %v5829, %v5824
        %v5832 = vadd.f32 %v5830, %v5819
        %v5833 = vadd.f32 %v5831, %v5825
        %v5834 = vadd.f32 %v5832, %v5820
        %v5835 = vadd.f32 %v5833, %v5826
        %v5836 = vadd.f32 %v5834, %v5821
        %v5837 = vadd.f32 %v5835, %v5827
        %v5838 = vadd.f32 %v5706, %v5836
        %v5839 = vadd.f32 %v5707, %v5837
        %s5840 = scalar_lea.vmem %s183, 505 [#allocation2]
        %v5841 = vld [vmem:[%s5840] ss:$2 sm:$0x3f]
        %v5843 = vlaneseq
        %v5844 = vshrl.u32 %v5843, 7
        %v5845 = vsub.s32 0, %v5844
        %v5846 = vrot.slane %v5841, %v5845
        %v5847 = vlaneseq
        %v5848 = vshrl.u32 %v5847, 7
        %v5849 = vsub.s32 1, %v5848
        %v5850 = vrot.slane %v5841, %v5849
        %v5851 = vlaneseq
        %v5852 = vshrl.u32 %v5851, 7
        %v5853 = vsub.s32 2, %v5852
        %v5854 = vrot.slane %v5841, %v5853
        %v5855 = vlaneseq
        %v5856 = vshrl.u32 %v5855, 7
        %v5857 = vsub.s32 3, %v5856
        %v5858 = vrot.slane %v5841, %v5857
        %v5859 = vlaneseq
        %v5860 = vshrl.u32 %v5859, 7
        %v5861 = vsub.s32 4, %v5860
        %v5862 = vrot.slane %v5841, %v5861
        %v5863 = vlaneseq
        %v5864 = vshrl.u32 %v5863, 7
        %v5865 = vsub.s32 5, %v5864
        %v5866 = vrot.slane %v5841, %v5865
        %v5873 = vmul.f32 %v5846, %v5771
        %v5874 = vmul.f32 %v5850, %v5772
        %v5875 = vmul.f32 %v5854, %v5773
        %v5876 = vmul.f32 %v5858, %v5774
        %v5877 = vmul.f32 %v5862, %v5775
        %v5878 = vmul.f32 %v5866, %v5776
        %v5879 = vmul.f32 %v5846, %v5777
        %v5880 = vmul.f32 %v5850, %v5778
        %v5881 = vmul.f32 %v5854, %v5779
        %v5882 = vmul.f32 %v5858, %v5780
        %v5883 = vmul.f32 %v5862, %v5781
        %v5884 = vmul.f32 %v5866, %v5782
        %v5885 = vadd.f32 %v5873, %v5874
        %v5886 = vadd.f32 %v5879, %v5880
        %v5887 = vadd.f32 %v5885, %v5875
        %v5888 = vadd.f32 %v5886, %v5881
        %v5889 = vadd.f32 %v5887, %v5876
        %v5890 = vadd.f32 %v5888, %v5882
        %v5891 = vadd.f32 %v5889, %v5877
        %v5892 = vadd.f32 %v5890, %v5883
        %v5893 = vadd.f32 %v5891, %v5878
        %v5894 = vadd.f32 %v5892, %v5884
        %v5895 = vadd.f32 %v5763, %v5893
        %v5896 = vadd.f32 %v5764, %v5894
        %v5897 = vld [vmem:[%s192 + $0x408] sm:$0xff]
        %v5898 = vld [vmem:[%s192 + $0x410] sm:$0xff]
        %v5899 = vld [vmem:[%s192 + $0x418] sm:$0xff]
        %v5900 = vld [vmem:[%s192 + $0x930] sm:$0x33]
        %v5901 = vld [vmem:[%s192 + $0x938] sm:$0x33]
        %v5902 = vld [vmem:[%s192 + $0x940] sm:$0x33]
        %v5903 = vunpack.c.l.bf16 %v5897
        %v5904 = vunpack.c.h.bf16 %v5897
        %v5905 = vunpack.c.l.bf16 %v5898
        %v5906 = vunpack.c.h.bf16 %v5898
        %v5907 = vunpack.c.l.bf16 %v5899
        %v5908 = vunpack.c.h.bf16 %v5899
        %v5909 = vunpack.c.l.bf16 %v5900
        %v5910 = vunpack.c.h.bf16 %v5900
        %v5911 = vunpack.c.l.bf16 %v5901
        %v5912 = vunpack.c.h.bf16 %v5901
        %v5913 = vunpack.c.l.bf16 %v5902
        %v5914 = vunpack.c.h.bf16 %v5902
        %s5915 = scalar_lea.vmem %s183, 516 [#allocation2]
        %v5916 = vld [vmem:[%s5915] ss:$2 sm:$0x3f]
        %v5918 = vlaneseq
        %v5919 = vshrl.u32 %v5918, 7
        %v5920 = vsub.s32 0, %v5919
        %v5921 = vrot.slane %v5916, %v5920
        %v5922 = vlaneseq
        %v5923 = vshrl.u32 %v5922, 7
        %v5924 = vsub.s32 1, %v5923
        %v5925 = vrot.slane %v5916, %v5924
        %v5926 = vlaneseq
        %v5927 = vshrl.u32 %v5926, 7
        %v5928 = vsub.s32 2, %v5927
        %v5929 = vrot.slane %v5916, %v5928
        %v5930 = vlaneseq
        %v5931 = vshrl.u32 %v5930, 7
        %v5932 = vsub.s32 3, %v5931
        %v5933 = vrot.slane %v5916, %v5932
        %v5934 = vlaneseq
        %v5935 = vshrl.u32 %v5934, 7
        %v5936 = vsub.s32 4, %v5935
        %v5937 = vrot.slane %v5916, %v5936
        %v5938 = vlaneseq
        %v5939 = vshrl.u32 %v5938, 7
        %v5940 = vsub.s32 5, %v5939
        %v5941 = vrot.slane %v5916, %v5940
        %v5948 = vmul.f32 %v5921, %v5903
        %v5949 = vmul.f32 %v5925, %v5904
        %v5950 = vmul.f32 %v5929, %v5905
        %v5951 = vmul.f32 %v5933, %v5906
        %v5952 = vmul.f32 %v5937, %v5907
        %v5953 = vmul.f32 %v5941, %v5908
        %v5954 = vmul.f32 %v5921, %v5909
        %v5955 = vmul.f32 %v5925, %v5910
        %v5956 = vmul.f32 %v5929, %v5911
        %v5957 = vmul.f32 %v5933, %v5912
        %v5958 = vmul.f32 %v5937, %v5913
        %v5959 = vmul.f32 %v5941, %v5914
        %v5960 = vadd.f32 %v5948, %v5949
        %v5961 = vadd.f32 %v5954, %v5955
        %v5962 = vadd.f32 %v5960, %v5950
        %v5963 = vadd.f32 %v5961, %v5956
        %v5964 = vadd.f32 %v5962, %v5951
        %v5965 = vadd.f32 %v5963, %v5957
        %v5966 = vadd.f32 %v5964, %v5952
        %v5967 = vadd.f32 %v5965, %v5958
        %v5968 = vadd.f32 %v5966, %v5953
        %v5969 = vadd.f32 %v5967, %v5959
        %v5970 = vadd.f32 %v5838, %v5968
        %v5971 = vadd.f32 %v5839, %v5969
        %s5972 = scalar_lea.vmem %s183, 517 [#allocation2]
        %v5973 = vld [vmem:[%s5972] ss:$2 sm:$0x3f]
        %v5975 = vlaneseq
        %v5976 = vshrl.u32 %v5975, 7
        %v5977 = vsub.s32 0, %v5976
        %v5978 = vrot.slane %v5973, %v5977
        %v5979 = vlaneseq
        %v5980 = vshrl.u32 %v5979, 7
        %v5981 = vsub.s32 1, %v5980
        %v5982 = vrot.slane %v5973, %v5981
        %v5983 = vlaneseq
        %v5984 = vshrl.u32 %v5983, 7
        %v5985 = vsub.s32 2, %v5984
        %v5986 = vrot.slane %v5973, %v5985
        %v5987 = vlaneseq
        %v5988 = vshrl.u32 %v5987, 7
        %v5989 = vsub.s32 3, %v5988
        %v5990 = vrot.slane %v5973, %v5989
        %v5991 = vlaneseq
        %v5992 = vshrl.u32 %v5991, 7
        %v5993 = vsub.s32 4, %v5992
        %v5994 = vrot.slane %v5973, %v5993
        %v5995 = vlaneseq
        %v5996 = vshrl.u32 %v5995, 7
        %v5997 = vsub.s32 5, %v5996
        %v5998 = vrot.slane %v5973, %v5997
        %v6005 = vmul.f32 %v5978, %v5903
        %v6006 = vmul.f32 %v5982, %v5904
        %v6007 = vmul.f32 %v5986, %v5905
        %v6008 = vmul.f32 %v5990, %v5906
        %v6009 = vmul.f32 %v5994, %v5907
        %v6010 = vmul.f32 %v5998, %v5908
        %v6011 = vmul.f32 %v5978, %v5909
        %v6012 = vmul.f32 %v5982, %v5910
        %v6013 = vmul.f32 %v5986, %v5911
        %v6014 = vmul.f32 %v5990, %v5912
        %v6015 = vmul.f32 %v5994, %v5913
        %v6016 = vmul.f32 %v5998, %v5914
        %v6017 = vadd.f32 %v6005, %v6006
        %v6018 = vadd.f32 %v6011, %v6012
        %v6019 = vadd.f32 %v6017, %v6007
        %v6020 = vadd.f32 %v6018, %v6013
        %v6021 = vadd.f32 %v6019, %v6008
        %v6022 = vadd.f32 %v6020, %v6014
        %v6023 = vadd.f32 %v6021, %v6009
        %v6024 = vadd.f32 %v6022, %v6015
        %v6025 = vadd.f32 %v6023, %v6010
        %v6026 = vadd.f32 %v6024, %v6016
        %v6027 = vadd.f32 %v5895, %v6025
        %v6028 = vadd.f32 %v5896, %v6026
        %v6029 = vld [vmem:[%s192 + $0x420] sm:$0xff]
        %v6030 = vld [vmem:[%s192 + $0x428] sm:$0xff]
        %v6031 = vld [vmem:[%s192 + $0x430] sm:$0xff]
        %v6032 = vld [vmem:[%s192 + $0x948] sm:$0x33]
        %v6033 = vld [vmem:[%s192 + $0x950] sm:$0x33]
        %v6034 = vld [vmem:[%s192 + $0x958] sm:$0x33]
        %v6035 = vunpack.c.l.bf16 %v6029
        %v6036 = vunpack.c.h.bf16 %v6029
        %v6037 = vunpack.c.l.bf16 %v6030
        %v6038 = vunpack.c.h.bf16 %v6030
        %v6039 = vunpack.c.l.bf16 %v6031
        %v6040 = vunpack.c.h.bf16 %v6031
        %v6041 = vunpack.c.l.bf16 %v6032
        %v6042 = vunpack.c.h.bf16 %v6032
        %v6043 = vunpack.c.l.bf16 %v6033
        %v6044 = vunpack.c.h.bf16 %v6033
        %v6045 = vunpack.c.l.bf16 %v6034
        %v6046 = vunpack.c.h.bf16 %v6034
        %s6047 = scalar_lea.vmem %s183, 528 [#allocation2]
        %v6048 = vld [vmem:[%s6047] ss:$2 sm:$0x3f]
        %v6050 = vlaneseq
        %v6051 = vshrl.u32 %v6050, 7
        %v6052 = vsub.s32 0, %v6051
        %v6053 = vrot.slane %v6048, %v6052
        %v6054 = vlaneseq
        %v6055 = vshrl.u32 %v6054, 7
        %v6056 = vsub.s32 1, %v6055
        %v6057 = vrot.slane %v6048, %v6056
        %v6058 = vlaneseq
        %v6059 = vshrl.u32 %v6058, 7
        %v6060 = vsub.s32 2, %v6059
        %v6061 = vrot.slane %v6048, %v6060
        %v6062 = vlaneseq
        %v6063 = vshrl.u32 %v6062, 7
        %v6064 = vsub.s32 3, %v6063
        %v6065 = vrot.slane %v6048, %v6064
        %v6066 = vlaneseq
        %v6067 = vshrl.u32 %v6066, 7
        %v6068 = vsub.s32 4, %v6067
        %v6069 = vrot.slane %v6048, %v6068
        %v6070 = vlaneseq
        %v6071 = vshrl.u32 %v6070, 7
        %v6072 = vsub.s32 5, %v6071
        %v6073 = vrot.slane %v6048, %v6072
        %v6080 = vmul.f32 %v6053, %v6035
        %v6081 = vmul.f32 %v6057, %v6036
        %v6082 = vmul.f32 %v6061, %v6037
        %v6083 = vmul.f32 %v6065, %v6038
        %v6084 = vmul.f32 %v6069, %v6039
        %v6085 = vmul.f32 %v6073, %v6040
        %v6086 = vmul.f32 %v6053, %v6041
        %v6087 = vmul.f32 %v6057, %v6042
        %v6088 = vmul.f32 %v6061, %v6043
        %v6089 = vmul.f32 %v6065, %v6044
        %v6090 = vmul.f32 %v6069, %v6045
        %v6091 = vmul.f32 %v6073, %v6046
        %v6092 = vadd.f32 %v6080, %v6081
        %v6093 = vadd.f32 %v6086, %v6087
        %v6094 = vadd.f32 %v6092, %v6082
        %v6095 = vadd.f32 %v6093, %v6088
        %v6096 = vadd.f32 %v6094, %v6083
        %v6097 = vadd.f32 %v6095, %v6089
        %v6098 = vadd.f32 %v6096, %v6084
        %v6099 = vadd.f32 %v6097, %v6090
        %v6100 = vadd.f32 %v6098, %v6085
        %v6101 = vadd.f32 %v6099, %v6091
        %v6102 = vadd.f32 %v5970, %v6100
        %v6103 = vadd.f32 %v5971, %v6101
        %s6104 = scalar_lea.vmem %s183, 529 [#allocation2]
        %v6105 = vld [vmem:[%s6104] ss:$2 sm:$0x3f]
        %v6107 = vlaneseq
        %v6108 = vshrl.u32 %v6107, 7
        %v6109 = vsub.s32 0, %v6108
        %v6110 = vrot.slane %v6105, %v6109
        %v6111 = vlaneseq
        %v6112 = vshrl.u32 %v6111, 7
        %v6113 = vsub.s32 1, %v6112
        %v6114 = vrot.slane %v6105, %v6113
        %v6115 = vlaneseq
        %v6116 = vshrl.u32 %v6115, 7
        %v6117 = vsub.s32 2, %v6116
        %v6118 = vrot.slane %v6105, %v6117
        %v6119 = vlaneseq
        %v6120 = vshrl.u32 %v6119, 7
        %v6121 = vsub.s32 3, %v6120
        %v6122 = vrot.slane %v6105, %v6121
        %v6123 = vlaneseq
        %v6124 = vshrl.u32 %v6123, 7
        %v6125 = vsub.s32 4, %v6124
        %v6126 = vrot.slane %v6105, %v6125
        %v6127 = vlaneseq
        %v6128 = vshrl.u32 %v6127, 7
        %v6129 = vsub.s32 5, %v6128
        %v6130 = vrot.slane %v6105, %v6129
        %v6137 = vmul.f32 %v6110, %v6035
        %v6138 = vmul.f32 %v6114, %v6036
        %v6139 = vmul.f32 %v6118, %v6037
        %v6140 = vmul.f32 %v6122, %v6038
        %v6141 = vmul.f32 %v6126, %v6039
        %v6142 = vmul.f32 %v6130, %v6040
        %v6143 = vmul.f32 %v6110, %v6041
        %v6144 = vmul.f32 %v6114, %v6042
        %v6145 = vmul.f32 %v6118, %v6043
        %v6146 = vmul.f32 %v6122, %v6044
        %v6147 = vmul.f32 %v6126, %v6045
        %v6148 = vmul.f32 %v6130, %v6046
        %v6149 = vadd.f32 %v6137, %v6138
        %v6150 = vadd.f32 %v6143, %v6144
        %v6151 = vadd.f32 %v6149, %v6139
        %v6152 = vadd.f32 %v6150, %v6145
        %v6153 = vadd.f32 %v6151, %v6140
        %v6154 = vadd.f32 %v6152, %v6146
        %v6155 = vadd.f32 %v6153, %v6141
        %v6156 = vadd.f32 %v6154, %v6147
        %v6157 = vadd.f32 %v6155, %v6142
        %v6158 = vadd.f32 %v6156, %v6148
        %v6159 = vadd.f32 %v6027, %v6157
        %v6160 = vadd.f32 %v6028, %v6158
        %v6161 = vld [vmem:[%s192 + $0x438] sm:$0xff]
        %v6162 = vld [vmem:[%s192 + $0x440] sm:$0xff]
        %v6163 = vld [vmem:[%s192 + $0x448] sm:$0xff]
        %v6164 = vld [vmem:[%s192 + $0x960] sm:$0x33]
        %v6165 = vld [vmem:[%s192 + $0x968] sm:$0x33]
        %v6166 = vld [vmem:[%s192 + $0x970] sm:$0x33]
        %v6167 = vunpack.c.l.bf16 %v6161
        %v6168 = vunpack.c.h.bf16 %v6161
        %v6169 = vunpack.c.l.bf16 %v6162
        %v6170 = vunpack.c.h.bf16 %v6162
        %v6171 = vunpack.c.l.bf16 %v6163
        %v6172 = vunpack.c.h.bf16 %v6163
        %v6173 = vunpack.c.l.bf16 %v6164
        %v6174 = vunpack.c.h.bf16 %v6164
        %v6175 = vunpack.c.l.bf16 %v6165
        %v6176 = vunpack.c.h.bf16 %v6165
        %v6177 = vunpack.c.l.bf16 %v6166
        %v6178 = vunpack.c.h.bf16 %v6166
        %s6179 = scalar_lea.vmem %s183, 540 [#allocation2]
        %v6180 = vld [vmem:[%s6179] ss:$2 sm:$0x3f]
        %v6182 = vlaneseq
        %v6183 = vshrl.u32 %v6182, 7
        %v6184 = vsub.s32 0, %v6183
        %v6185 = vrot.slane %v6180, %v6184
        %v6186 = vlaneseq
        %v6187 = vshrl.u32 %v6186, 7
        %v6188 = vsub.s32 1, %v6187
        %v6189 = vrot.slane %v6180, %v6188
        %v6190 = vlaneseq
        %v6191 = vshrl.u32 %v6190, 7
        %v6192 = vsub.s32 2, %v6191
        %v6193 = vrot.slane %v6180, %v6192
        %v6194 = vlaneseq
        %v6195 = vshrl.u32 %v6194, 7
        %v6196 = vsub.s32 3, %v6195
        %v6197 = vrot.slane %v6180, %v6196
        %v6198 = vlaneseq
        %v6199 = vshrl.u32 %v6198, 7
        %v6200 = vsub.s32 4, %v6199
        %v6201 = vrot.slane %v6180, %v6200
        %v6202 = vlaneseq
        %v6203 = vshrl.u32 %v6202, 7
        %v6204 = vsub.s32 5, %v6203
        %v6205 = vrot.slane %v6180, %v6204
        %v6212 = vmul.f32 %v6185, %v6167
        %v6213 = vmul.f32 %v6189, %v6168
        %v6214 = vmul.f32 %v6193, %v6169
        %v6215 = vmul.f32 %v6197, %v6170
        %v6216 = vmul.f32 %v6201, %v6171
        %v6217 = vmul.f32 %v6205, %v6172
        %v6218 = vmul.f32 %v6185, %v6173
        %v6219 = vmul.f32 %v6189, %v6174
        %v6220 = vmul.f32 %v6193, %v6175
        %v6221 = vmul.f32 %v6197, %v6176
        %v6222 = vmul.f32 %v6201, %v6177
        %v6223 = vmul.f32 %v6205, %v6178
        %v6224 = vadd.f32 %v6212, %v6213
        %v6225 = vadd.f32 %v6218, %v6219
        %v6226 = vadd.f32 %v6224, %v6214
        %v6227 = vadd.f32 %v6225, %v6220
        %v6228 = vadd.f32 %v6226, %v6215
        %v6229 = vadd.f32 %v6227, %v6221
        %v6230 = vadd.f32 %v6228, %v6216
        %v6231 = vadd.f32 %v6229, %v6222
        %v6232 = vadd.f32 %v6230, %v6217
        %v6233 = vadd.f32 %v6231, %v6223
        %v6234 = vadd.f32 %v6102, %v6232
        %v6235 = vadd.f32 %v6103, %v6233
        %s6236 = scalar_lea.vmem %s183, 541 [#allocation2]
        %v6237 = vld [vmem:[%s6236] ss:$2 sm:$0x3f]
        %v6239 = vlaneseq
        %v6240 = vshrl.u32 %v6239, 7
        %v6241 = vsub.s32 0, %v6240
        %v6242 = vrot.slane %v6237, %v6241
        %v6243 = vlaneseq
        %v6244 = vshrl.u32 %v6243, 7
        %v6245 = vsub.s32 1, %v6244
        %v6246 = vrot.slane %v6237, %v6245
        %v6247 = vlaneseq
        %v6248 = vshrl.u32 %v6247, 7
        %v6249 = vsub.s32 2, %v6248
        %v6250 = vrot.slane %v6237, %v6249
        %v6251 = vlaneseq
        %v6252 = vshrl.u32 %v6251, 7
        %v6253 = vsub.s32 3, %v6252
        %v6254 = vrot.slane %v6237, %v6253
        %v6255 = vlaneseq
        %v6256 = vshrl.u32 %v6255, 7
        %v6257 = vsub.s32 4, %v6256
        %v6258 = vrot.slane %v6237, %v6257
        %v6259 = vlaneseq
        %v6260 = vshrl.u32 %v6259, 7
        %v6261 = vsub.s32 5, %v6260
        %v6262 = vrot.slane %v6237, %v6261
        %v6269 = vmul.f32 %v6242, %v6167
        %v6270 = vmul.f32 %v6246, %v6168
        %v6271 = vmul.f32 %v6250, %v6169
        %v6272 = vmul.f32 %v6254, %v6170
        %v6273 = vmul.f32 %v6258, %v6171
        %v6274 = vmul.f32 %v6262, %v6172
        %v6275 = vmul.f32 %v6242, %v6173
        %v6276 = vmul.f32 %v6246, %v6174
        %v6277 = vmul.f32 %v6250, %v6175
        %v6278 = vmul.f32 %v6254, %v6176
        %v6279 = vmul.f32 %v6258, %v6177
        %v6280 = vmul.f32 %v6262, %v6178
        %v6281 = vadd.f32 %v6269, %v6270
        %v6282 = vadd.f32 %v6275, %v6276
        %v6283 = vadd.f32 %v6281, %v6271
        %v6284 = vadd.f32 %v6282, %v6277
        %v6285 = vadd.f32 %v6283, %v6272
        %v6286 = vadd.f32 %v6284, %v6278
        %v6287 = vadd.f32 %v6285, %v6273
        %v6288 = vadd.f32 %v6286, %v6279
        %v6289 = vadd.f32 %v6287, %v6274
        %v6290 = vadd.f32 %v6288, %v6280
        %v6291 = vadd.f32 %v6159, %v6289
        %v6292 = vadd.f32 %v6160, %v6290
        %v6293 = vld [vmem:[%s192 + $0x450] sm:$0xff]
        %v6294 = vld [vmem:[%s192 + $0x458] sm:$0xff]
        %v6295 = vld [vmem:[%s192 + $0x460] sm:$0xff]
        %v6296 = vld [vmem:[%s192 + $0x978] sm:$0x33]
        %v6297 = vld [vmem:[%s192 + $0x980] sm:$0x33]
        %v6298 = vld [vmem:[%s192 + $0x988] sm:$0x33]
        %v6299 = vunpack.c.l.bf16 %v6293
        %v6300 = vunpack.c.h.bf16 %v6293
        %v6301 = vunpack.c.l.bf16 %v6294
        %v6302 = vunpack.c.h.bf16 %v6294
        %v6303 = vunpack.c.l.bf16 %v6295
        %v6304 = vunpack.c.h.bf16 %v6295
        %v6305 = vunpack.c.l.bf16 %v6296
        %v6306 = vunpack.c.h.bf16 %v6296
        %v6307 = vunpack.c.l.bf16 %v6297
        %v6308 = vunpack.c.h.bf16 %v6297
        %v6309 = vunpack.c.l.bf16 %v6298
        %v6310 = vunpack.c.h.bf16 %v6298
        %s6311 = scalar_lea.vmem %s183, 552 [#allocation2]
        %v6312 = vld [vmem:[%s6311] ss:$2 sm:$0x3f]
        %v6314 = vlaneseq
        %v6315 = vshrl.u32 %v6314, 7
        %v6316 = vsub.s32 0, %v6315
        %v6317 = vrot.slane %v6312, %v6316
        %v6318 = vlaneseq
        %v6319 = vshrl.u32 %v6318, 7
        %v6320 = vsub.s32 1, %v6319
        %v6321 = vrot.slane %v6312, %v6320
        %v6322 = vlaneseq
        %v6323 = vshrl.u32 %v6322, 7
        %v6324 = vsub.s32 2, %v6323
        %v6325 = vrot.slane %v6312, %v6324
        %v6326 = vlaneseq
        %v6327 = vshrl.u32 %v6326, 7
        %v6328 = vsub.s32 3, %v6327
        %v6329 = vrot.slane %v6312, %v6328
        %v6330 = vlaneseq
        %v6331 = vshrl.u32 %v6330, 7
        %v6332 = vsub.s32 4, %v6331
        %v6333 = vrot.slane %v6312, %v6332
        %v6334 = vlaneseq
        %v6335 = vshrl.u32 %v6334, 7
        %v6336 = vsub.s32 5, %v6335
        %v6337 = vrot.slane %v6312, %v6336
        %v6344 = vmul.f32 %v6317, %v6299
        %v6345 = vmul.f32 %v6321, %v6300
        %v6346 = vmul.f32 %v6325, %v6301
        %v6347 = vmul.f32 %v6329, %v6302
        %v6348 = vmul.f32 %v6333, %v6303
        %v6349 = vmul.f32 %v6337, %v6304
        %v6350 = vmul.f32 %v6317, %v6305
        %v6351 = vmul.f32 %v6321, %v6306
        %v6352 = vmul.f32 %v6325, %v6307
        %v6353 = vmul.f32 %v6329, %v6308
        %v6354 = vmul.f32 %v6333, %v6309
        %v6355 = vmul.f32 %v6337, %v6310
        %v6356 = vadd.f32 %v6344, %v6345
        %v6357 = vadd.f32 %v6350, %v6351
        %v6358 = vadd.f32 %v6356, %v6346
        %v6359 = vadd.f32 %v6357, %v6352
        %v6360 = vadd.f32 %v6358, %v6347
        %v6361 = vadd.f32 %v6359, %v6353
        %v6362 = vadd.f32 %v6360, %v6348
        %v6363 = vadd.f32 %v6361, %v6354
        %v6364 = vadd.f32 %v6362, %v6349
        %v6365 = vadd.f32 %v6363, %v6355
        %v6366 = vadd.f32 %v6234, %v6364
        %v6367 = vadd.f32 %v6235, %v6365
        %s6368 = scalar_lea.vmem %s183, 553 [#allocation2]
        %v6369 = vld [vmem:[%s6368] ss:$2 sm:$0x3f]
        %v6371 = vlaneseq
        %v6372 = vshrl.u32 %v6371, 7
        %v6373 = vsub.s32 0, %v6372
        %v6374 = vrot.slane %v6369, %v6373
        %v6375 = vlaneseq
        %v6376 = vshrl.u32 %v6375, 7
        %v6377 = vsub.s32 1, %v6376
        %v6378 = vrot.slane %v6369, %v6377
        %v6379 = vlaneseq
        %v6380 = vshrl.u32 %v6379, 7
        %v6381 = vsub.s32 2, %v6380
        %v6382 = vrot.slane %v6369, %v6381
        %v6383 = vlaneseq
        %v6384 = vshrl.u32 %v6383, 7
        %v6385 = vsub.s32 3, %v6384
        %v6386 = vrot.slane %v6369, %v6385
        %v6387 = vlaneseq
        %v6388 = vshrl.u32 %v6387, 7
        %v6389 = vsub.s32 4, %v6388
        %v6390 = vrot.slane %v6369, %v6389
        %v6391 = vlaneseq
        %v6392 = vshrl.u32 %v6391, 7
        %v6393 = vsub.s32 5, %v6392
        %v6394 = vrot.slane %v6369, %v6393
        %v6401 = vmul.f32 %v6374, %v6299
        %v6402 = vmul.f32 %v6378, %v6300
        %v6403 = vmul.f32 %v6382, %v6301
        %v6404 = vmul.f32 %v6386, %v6302
        %v6405 = vmul.f32 %v6390, %v6303
        %v6406 = vmul.f32 %v6394, %v6304
        %v6407 = vmul.f32 %v6374, %v6305
        %v6408 = vmul.f32 %v6378, %v6306
        %v6409 = vmul.f32 %v6382, %v6307
        %v6410 = vmul.f32 %v6386, %v6308
        %v6411 = vmul.f32 %v6390, %v6309
        %v6412 = vmul.f32 %v6394, %v6310
        %v6413 = vadd.f32 %v6401, %v6402
        %v6414 = vadd.f32 %v6407, %v6408
        %v6415 = vadd.f32 %v6413, %v6403
        %v6416 = vadd.f32 %v6414, %v6409
        %v6417 = vadd.f32 %v6415, %v6404
        %v6418 = vadd.f32 %v6416, %v6410
        %v6419 = vadd.f32 %v6417, %v6405
        %v6420 = vadd.f32 %v6418, %v6411
        %v6421 = vadd.f32 %v6419, %v6406
        %v6422 = vadd.f32 %v6420, %v6412
        %v6423 = vadd.f32 %v6291, %v6421
        %v6424 = vadd.f32 %v6292, %v6422
        %v6425 = vld [vmem:[%s192 + $0x468] sm:$0xff]
        %v6426 = vld [vmem:[%s192 + $0x470] sm:$0xff]
        %v6427 = vld [vmem:[%s192 + $0x478] sm:$0xff]
        %v6428 = vld [vmem:[%s192 + $0x990] sm:$0x33]
        %v6429 = vld [vmem:[%s192 + $0x998] sm:$0x33]
        %v6430 = vld [vmem:[%s192 + $0x9a0] sm:$0x33]
        %v6431 = vunpack.c.l.bf16 %v6425
        %v6432 = vunpack.c.h.bf16 %v6425
        %v6433 = vunpack.c.l.bf16 %v6426
        %v6434 = vunpack.c.h.bf16 %v6426
        %v6435 = vunpack.c.l.bf16 %v6427
        %v6436 = vunpack.c.h.bf16 %v6427
        %v6437 = vunpack.c.l.bf16 %v6428
        %v6438 = vunpack.c.h.bf16 %v6428
        %v6439 = vunpack.c.l.bf16 %v6429
        %v6440 = vunpack.c.h.bf16 %v6429
        %v6441 = vunpack.c.l.bf16 %v6430
        %v6442 = vunpack.c.h.bf16 %v6430
        %s6443 = scalar_lea.vmem %s183, 564 [#allocation2]
        %v6444 = vld [vmem:[%s6443] ss:$2 sm:$0x3f]
        %v6446 = vlaneseq
        %v6447 = vshrl.u32 %v6446, 7
        %v6448 = vsub.s32 0, %v6447
        %v6449 = vrot.slane %v6444, %v6448
        %v6450 = vlaneseq
        %v6451 = vshrl.u32 %v6450, 7
        %v6452 = vsub.s32 1, %v6451
        %v6453 = vrot.slane %v6444, %v6452
        %v6454 = vlaneseq
        %v6455 = vshrl.u32 %v6454, 7
        %v6456 = vsub.s32 2, %v6455
        %v6457 = vrot.slane %v6444, %v6456
        %v6458 = vlaneseq
        %v6459 = vshrl.u32 %v6458, 7
        %v6460 = vsub.s32 3, %v6459
        %v6461 = vrot.slane %v6444, %v6460
        %v6462 = vlaneseq
        %v6463 = vshrl.u32 %v6462, 7
        %v6464 = vsub.s32 4, %v6463
        %v6465 = vrot.slane %v6444, %v6464
        %v6466 = vlaneseq
        %v6467 = vshrl.u32 %v6466, 7
        %v6468 = vsub.s32 5, %v6467
        %v6469 = vrot.slane %v6444, %v6468
        %v6476 = vmul.f32 %v6449, %v6431
        %v6477 = vmul.f32 %v6453, %v6432
        %v6478 = vmul.f32 %v6457, %v6433
        %v6479 = vmul.f32 %v6461, %v6434
        %v6480 = vmul.f32 %v6465, %v6435
        %v6481 = vmul.f32 %v6469, %v6436
        %v6482 = vmul.f32 %v6449, %v6437
        %v6483 = vmul.f32 %v6453, %v6438
        %v6484 = vmul.f32 %v6457, %v6439
        %v6485 = vmul.f32 %v6461, %v6440
        %v6486 = vmul.f32 %v6465, %v6441
        %v6487 = vmul.f32 %v6469, %v6442
        %v6488 = vadd.f32 %v6476, %v6477
        %v6489 = vadd.f32 %v6482, %v6483
        %v6490 = vadd.f32 %v6488, %v6478
        %v6491 = vadd.f32 %v6489, %v6484
        %v6492 = vadd.f32 %v6490, %v6479
        %v6493 = vadd.f32 %v6491, %v6485
        %v6494 = vadd.f32 %v6492, %v6480
        %v6495 = vadd.f32 %v6493, %v6486
        %v6496 = vadd.f32 %v6494, %v6481
        %v6497 = vadd.f32 %v6495, %v6487
        %v6498 = vadd.f32 %v6366, %v6496
        %v6499 = vadd.f32 %v6367, %v6497
        %s6500 = scalar_lea.vmem %s183, 565 [#allocation2]
        %v6501 = vld [vmem:[%s6500] ss:$2 sm:$0x3f]
        %v6503 = vlaneseq
        %v6504 = vshrl.u32 %v6503, 7
        %v6505 = vsub.s32 0, %v6504
        %v6506 = vrot.slane %v6501, %v6505
        %v6507 = vlaneseq
        %v6508 = vshrl.u32 %v6507, 7
        %v6509 = vsub.s32 1, %v6508
        %v6510 = vrot.slane %v6501, %v6509
        %v6511 = vlaneseq
        %v6512 = vshrl.u32 %v6511, 7
        %v6513 = vsub.s32 2, %v6512
        %v6514 = vrot.slane %v6501, %v6513
        %v6515 = vlaneseq
        %v6516 = vshrl.u32 %v6515, 7
        %v6517 = vsub.s32 3, %v6516
        %v6518 = vrot.slane %v6501, %v6517
        %v6519 = vlaneseq
        %v6520 = vshrl.u32 %v6519, 7
        %v6521 = vsub.s32 4, %v6520
        %v6522 = vrot.slane %v6501, %v6521
        %v6523 = vlaneseq
        %v6524 = vshrl.u32 %v6523, 7
        %v6525 = vsub.s32 5, %v6524
        %v6526 = vrot.slane %v6501, %v6525
        %v6533 = vmul.f32 %v6506, %v6431
        %v6534 = vmul.f32 %v6510, %v6432
        %v6535 = vmul.f32 %v6514, %v6433
        %v6536 = vmul.f32 %v6518, %v6434
        %v6537 = vmul.f32 %v6522, %v6435
        %v6538 = vmul.f32 %v6526, %v6436
        %v6539 = vmul.f32 %v6506, %v6437
        %v6540 = vmul.f32 %v6510, %v6438
        %v6541 = vmul.f32 %v6514, %v6439
        %v6542 = vmul.f32 %v6518, %v6440
        %v6543 = vmul.f32 %v6522, %v6441
        %v6544 = vmul.f32 %v6526, %v6442
        %v6545 = vadd.f32 %v6533, %v6534
        %v6546 = vadd.f32 %v6539, %v6540
        %v6547 = vadd.f32 %v6545, %v6535
        %v6548 = vadd.f32 %v6546, %v6541
        %v6549 = vadd.f32 %v6547, %v6536
        %v6550 = vadd.f32 %v6548, %v6542
        %v6551 = vadd.f32 %v6549, %v6537
        %v6552 = vadd.f32 %v6550, %v6543
        %v6553 = vadd.f32 %v6551, %v6538
        %v6554 = vadd.f32 %v6552, %v6544
        %v6555 = vadd.f32 %v6423, %v6553
        %v6556 = vadd.f32 %v6424, %v6554
        %v6557 = vld [vmem:[%s192 + $0x480] sm:$0xff]
        %v6558 = vld [vmem:[%s192 + $0x488] sm:$0xff]
        %v6559 = vld [vmem:[%s192 + $0x490] sm:$0xff]
        %v6560 = vld [vmem:[%s192 + $0x9a8] sm:$0x33]
        %v6561 = vld [vmem:[%s192 + $0x9b0] sm:$0x33]
        %v6562 = vld [vmem:[%s192 + $0x9b8] sm:$0x33]
        %v6563 = vunpack.c.l.bf16 %v6557
        %v6564 = vunpack.c.h.bf16 %v6557
        %v6565 = vunpack.c.l.bf16 %v6558
        %v6566 = vunpack.c.h.bf16 %v6558
        %v6567 = vunpack.c.l.bf16 %v6559
        %v6568 = vunpack.c.h.bf16 %v6559
        %v6569 = vunpack.c.l.bf16 %v6560
        %v6570 = vunpack.c.h.bf16 %v6560
        %v6571 = vunpack.c.l.bf16 %v6561
        %v6572 = vunpack.c.h.bf16 %v6561
        %v6573 = vunpack.c.l.bf16 %v6562
        %v6574 = vunpack.c.h.bf16 %v6562
        %s6575 = scalar_lea.vmem %s183, 576 [#allocation2]
        %v6576 = vld [vmem:[%s6575] ss:$2 sm:$0x3f]
        %v6578 = vlaneseq
        %v6579 = vshrl.u32 %v6578, 7
        %v6580 = vsub.s32 0, %v6579
        %v6581 = vrot.slane %v6576, %v6580
        %v6582 = vlaneseq
        %v6583 = vshrl.u32 %v6582, 7
        %v6584 = vsub.s32 1, %v6583
        %v6585 = vrot.slane %v6576, %v6584
        %v6586 = vlaneseq
        %v6587 = vshrl.u32 %v6586, 7
        %v6588 = vsub.s32 2, %v6587
        %v6589 = vrot.slane %v6576, %v6588
        %v6590 = vlaneseq
        %v6591 = vshrl.u32 %v6590, 7
        %v6592 = vsub.s32 3, %v6591
        %v6593 = vrot.slane %v6576, %v6592
        %v6594 = vlaneseq
        %v6595 = vshrl.u32 %v6594, 7
        %v6596 = vsub.s32 4, %v6595
        %v6597 = vrot.slane %v6576, %v6596
        %v6598 = vlaneseq
        %v6599 = vshrl.u32 %v6598, 7
        %v6600 = vsub.s32 5, %v6599
        %v6601 = vrot.slane %v6576, %v6600
        %v6608 = vmul.f32 %v6581, %v6563
        %v6609 = vmul.f32 %v6585, %v6564
        %v6610 = vmul.f32 %v6589, %v6565
        %v6611 = vmul.f32 %v6593, %v6566
        %v6612 = vmul.f32 %v6597, %v6567
        %v6613 = vmul.f32 %v6601, %v6568
        %v6614 = vmul.f32 %v6581, %v6569
        %v6615 = vmul.f32 %v6585, %v6570
        %v6616 = vmul.f32 %v6589, %v6571
        %v6617 = vmul.f32 %v6593, %v6572
        %v6618 = vmul.f32 %v6597, %v6573
        %v6619 = vmul.f32 %v6601, %v6574
        %v6620 = vadd.f32 %v6608, %v6609
        %v6621 = vadd.f32 %v6614, %v6615
        %v6622 = vadd.f32 %v6620, %v6610
        %v6623 = vadd.f32 %v6621, %v6616
        %v6624 = vadd.f32 %v6622, %v6611
        %v6625 = vadd.f32 %v6623, %v6617
        %v6626 = vadd.f32 %v6624, %v6612
        %v6627 = vadd.f32 %v6625, %v6618
        %v6628 = vadd.f32 %v6626, %v6613
        %v6629 = vadd.f32 %v6627, %v6619
        %v6630 = vadd.f32 %v6498, %v6628
        %v6631 = vadd.f32 %v6499, %v6629
        %s6632 = scalar_lea.vmem %s183, 577 [#allocation2]
        %v6633 = vld [vmem:[%s6632] ss:$2 sm:$0x3f]
        %v6635 = vlaneseq
        %v6636 = vshrl.u32 %v6635, 7
        %v6637 = vsub.s32 0, %v6636
        %v6638 = vrot.slane %v6633, %v6637
        %v6639 = vlaneseq
        %v6640 = vshrl.u32 %v6639, 7
        %v6641 = vsub.s32 1, %v6640
        %v6642 = vrot.slane %v6633, %v6641
        %v6643 = vlaneseq
        %v6644 = vshrl.u32 %v6643, 7
        %v6645 = vsub.s32 2, %v6644
        %v6646 = vrot.slane %v6633, %v6645
        %v6647 = vlaneseq
        %v6648 = vshrl.u32 %v6647, 7
        %v6649 = vsub.s32 3, %v6648
        %v6650 = vrot.slane %v6633, %v6649
        %v6651 = vlaneseq
        %v6652 = vshrl.u32 %v6651, 7
        %v6653 = vsub.s32 4, %v6652
        %v6654 = vrot.slane %v6633, %v6653
        %v6655 = vlaneseq
        %v6656 = vshrl.u32 %v6655, 7
        %v6657 = vsub.s32 5, %v6656
        %v6658 = vrot.slane %v6633, %v6657
        %v6665 = vmul.f32 %v6638, %v6563
        %v6666 = vmul.f32 %v6642, %v6564
        %v6667 = vmul.f32 %v6646, %v6565
        %v6668 = vmul.f32 %v6650, %v6566
        %v6669 = vmul.f32 %v6654, %v6567
        %v6670 = vmul.f32 %v6658, %v6568
        %v6671 = vmul.f32 %v6638, %v6569
        %v6672 = vmul.f32 %v6642, %v6570
        %v6673 = vmul.f32 %v6646, %v6571
        %v6674 = vmul.f32 %v6650, %v6572
        %v6675 = vmul.f32 %v6654, %v6573
        %v6676 = vmul.f32 %v6658, %v6574
        %v6677 = vadd.f32 %v6665, %v6666
        %v6678 = vadd.f32 %v6671, %v6672
        %v6679 = vadd.f32 %v6677, %v6667
        %v6680 = vadd.f32 %v6678, %v6673
        %v6681 = vadd.f32 %v6679, %v6668
        %v6682 = vadd.f32 %v6680, %v6674
        %v6683 = vadd.f32 %v6681, %v6669
        %v6684 = vadd.f32 %v6682, %v6675
        %v6685 = vadd.f32 %v6683, %v6670
        %v6686 = vadd.f32 %v6684, %v6676
        %v6687 = vadd.f32 %v6555, %v6685
        %v6688 = vadd.f32 %v6556, %v6686
        %v6689 = vld [vmem:[%s192 + $0x498] sm:$0xff]
        %v6690 = vld [vmem:[%s192 + $0x4a0] sm:$0xff]
        %v6691 = vld [vmem:[%s192 + $0x4a8] sm:$0xff]
        %v6692 = vld [vmem:[%s192 + $0x9c0] sm:$0x33]
        %v6693 = vld [vmem:[%s192 + $0x9c8] sm:$0x33]
        %v6694 = vld [vmem:[%s192 + $0x9d0] sm:$0x33]
        %v6695 = vunpack.c.l.bf16 %v6689
        %v6696 = vunpack.c.h.bf16 %v6689
        %v6697 = vunpack.c.l.bf16 %v6690
        %v6698 = vunpack.c.h.bf16 %v6690
        %v6699 = vunpack.c.l.bf16 %v6691
        %v6700 = vunpack.c.h.bf16 %v6691
        %v6701 = vunpack.c.l.bf16 %v6692
        %v6702 = vunpack.c.h.bf16 %v6692
        %v6703 = vunpack.c.l.bf16 %v6693
        %v6704 = vunpack.c.h.bf16 %v6693
        %v6705 = vunpack.c.l.bf16 %v6694
        %v6706 = vunpack.c.h.bf16 %v6694
        %s6707 = scalar_lea.vmem %s183, 588 [#allocation2]
        %v6708 = vld [vmem:[%s6707] ss:$2 sm:$0x3f]
        %v6710 = vlaneseq
        %v6711 = vshrl.u32 %v6710, 7
        %v6712 = vsub.s32 0, %v6711
        %v6713 = vrot.slane %v6708, %v6712
        %v6714 = vlaneseq
        %v6715 = vshrl.u32 %v6714, 7
        %v6716 = vsub.s32 1, %v6715
        %v6717 = vrot.slane %v6708, %v6716
        %v6718 = vlaneseq
        %v6719 = vshrl.u32 %v6718, 7
        %v6720 = vsub.s32 2, %v6719
        %v6721 = vrot.slane %v6708, %v6720
        %v6722 = vlaneseq
        %v6723 = vshrl.u32 %v6722, 7
        %v6724 = vsub.s32 3, %v6723
        %v6725 = vrot.slane %v6708, %v6724
        %v6726 = vlaneseq
        %v6727 = vshrl.u32 %v6726, 7
        %v6728 = vsub.s32 4, %v6727
        %v6729 = vrot.slane %v6708, %v6728
        %v6730 = vlaneseq
        %v6731 = vshrl.u32 %v6730, 7
        %v6732 = vsub.s32 5, %v6731
        %v6733 = vrot.slane %v6708, %v6732
        %v6740 = vmul.f32 %v6713, %v6695
        %v6741 = vmul.f32 %v6717, %v6696
        %v6742 = vmul.f32 %v6721, %v6697
        %v6743 = vmul.f32 %v6725, %v6698
        %v6744 = vmul.f32 %v6729, %v6699
        %v6745 = vmul.f32 %v6733, %v6700
        %v6746 = vmul.f32 %v6713, %v6701
        %v6747 = vmul.f32 %v6717, %v6702
        %v6748 = vmul.f32 %v6721, %v6703
        %v6749 = vmul.f32 %v6725, %v6704
        %v6750 = vmul.f32 %v6729, %v6705
        %v6751 = vmul.f32 %v6733, %v6706
        %v6752 = vadd.f32 %v6740, %v6741
        %v6753 = vadd.f32 %v6746, %v6747
        %v6754 = vadd.f32 %v6752, %v6742
        %v6755 = vadd.f32 %v6753, %v6748
        %v6756 = vadd.f32 %v6754, %v6743
        %v6757 = vadd.f32 %v6755, %v6749
        %v6758 = vadd.f32 %v6756, %v6744
        %v6759 = vadd.f32 %v6757, %v6750
        %v6760 = vadd.f32 %v6758, %v6745
        %v6761 = vadd.f32 %v6759, %v6751
        %v6762 = vadd.f32 %v6630, %v6760
        %v6763 = vadd.f32 %v6631, %v6761
        %s6764 = scalar_lea.vmem %s183, 589 [#allocation2]
        %v6765 = vld [vmem:[%s6764] ss:$2 sm:$0x3f]
        %v6767 = vlaneseq
        %v6768 = vshrl.u32 %v6767, 7
        %v6769 = vsub.s32 0, %v6768
        %v6770 = vrot.slane %v6765, %v6769
        %v6771 = vlaneseq
        %v6772 = vshrl.u32 %v6771, 7
        %v6773 = vsub.s32 1, %v6772
        %v6774 = vrot.slane %v6765, %v6773
        %v6775 = vlaneseq
        %v6776 = vshrl.u32 %v6775, 7
        %v6777 = vsub.s32 2, %v6776
        %v6778 = vrot.slane %v6765, %v6777
        %v6779 = vlaneseq
        %v6780 = vshrl.u32 %v6779, 7
        %v6781 = vsub.s32 3, %v6780
        %v6782 = vrot.slane %v6765, %v6781
        %v6783 = vlaneseq
        %v6784 = vshrl.u32 %v6783, 7
        %v6785 = vsub.s32 4, %v6784
        %v6786 = vrot.slane %v6765, %v6785
        %v6787 = vlaneseq
        %v6788 = vshrl.u32 %v6787, 7
        %v6789 = vsub.s32 5, %v6788
        %v6790 = vrot.slane %v6765, %v6789
        %v6797 = vmul.f32 %v6770, %v6695
        %v6798 = vmul.f32 %v6774, %v6696
        %v6799 = vmul.f32 %v6778, %v6697
        %v6800 = vmul.f32 %v6782, %v6698
        %v6801 = vmul.f32 %v6786, %v6699
        %v6802 = vmul.f32 %v6790, %v6700
        %v6803 = vmul.f32 %v6770, %v6701
        %v6804 = vmul.f32 %v6774, %v6702
        %v6805 = vmul.f32 %v6778, %v6703
        %v6806 = vmul.f32 %v6782, %v6704
        %v6807 = vmul.f32 %v6786, %v6705
        %v6808 = vmul.f32 %v6790, %v6706
        %v6809 = vadd.f32 %v6797, %v6798
        %v6810 = vadd.f32 %v6803, %v6804
        %v6811 = vadd.f32 %v6809, %v6799
        %v6812 = vadd.f32 %v6810, %v6805
        %v6813 = vadd.f32 %v6811, %v6800
        %v6814 = vadd.f32 %v6812, %v6806
        %v6815 = vadd.f32 %v6813, %v6801
        %v6816 = vadd.f32 %v6814, %v6807
        %v6817 = vadd.f32 %v6815, %v6802
        %v6818 = vadd.f32 %v6816, %v6808
        %v6819 = vadd.f32 %v6687, %v6817
        %v6820 = vadd.f32 %v6688, %v6818
        %v6821 = vld [vmem:[%s192 + $0x4b0] sm:$0xff]
        %v6822 = vld [vmem:[%s192 + $0x4b8] sm:$0xff]
        %v6823 = vld [vmem:[%s192 + $0x4c0] sm:$0xff]
        %v6824 = vld [vmem:[%s192 + $0x9d8] sm:$0x33]
        %v6825 = vld [vmem:[%s192 + $0x9e0] sm:$0x33]
        %v6826 = vld [vmem:[%s192 + $0x9e8] sm:$0x33]
        %v6827 = vunpack.c.l.bf16 %v6821
        %v6828 = vunpack.c.h.bf16 %v6821
        %v6829 = vunpack.c.l.bf16 %v6822
        %v6830 = vunpack.c.h.bf16 %v6822
        %v6831 = vunpack.c.l.bf16 %v6823
        %v6832 = vunpack.c.h.bf16 %v6823
        %v6833 = vunpack.c.l.bf16 %v6824
        %v6834 = vunpack.c.h.bf16 %v6824
        %v6835 = vunpack.c.l.bf16 %v6825
        %v6836 = vunpack.c.h.bf16 %v6825
        %v6837 = vunpack.c.l.bf16 %v6826
        %v6838 = vunpack.c.h.bf16 %v6826
        %s6839 = scalar_lea.vmem %s183, 600 [#allocation2]
        %v6840 = vld [vmem:[%s6839] ss:$2 sm:$0x3f]
        %v6842 = vlaneseq
        %v6843 = vshrl.u32 %v6842, 7
        %v6844 = vsub.s32 0, %v6843
        %v6845 = vrot.slane %v6840, %v6844
        %v6846 = vlaneseq
        %v6847 = vshrl.u32 %v6846, 7
        %v6848 = vsub.s32 1, %v6847
        %v6849 = vrot.slane %v6840, %v6848
        %v6850 = vlaneseq
        %v6851 = vshrl.u32 %v6850, 7
        %v6852 = vsub.s32 2, %v6851
        %v6853 = vrot.slane %v6840, %v6852
        %v6854 = vlaneseq
        %v6855 = vshrl.u32 %v6854, 7
        %v6856 = vsub.s32 3, %v6855
        %v6857 = vrot.slane %v6840, %v6856
        %v6858 = vlaneseq
        %v6859 = vshrl.u32 %v6858, 7
        %v6860 = vsub.s32 4, %v6859
        %v6861 = vrot.slane %v6840, %v6860
        %v6862 = vlaneseq
        %v6863 = vshrl.u32 %v6862, 7
        %v6864 = vsub.s32 5, %v6863
        %v6865 = vrot.slane %v6840, %v6864
        %v6872 = vmul.f32 %v6845, %v6827
        %v6873 = vmul.f32 %v6849, %v6828
        %v6874 = vmul.f32 %v6853, %v6829
        %v6875 = vmul.f32 %v6857, %v6830
        %v6876 = vmul.f32 %v6861, %v6831
        %v6877 = vmul.f32 %v6865, %v6832
        %v6878 = vmul.f32 %v6845, %v6833
        %v6879 = vmul.f32 %v6849, %v6834
        %v6880 = vmul.f32 %v6853, %v6835
        %v6881 = vmul.f32 %v6857, %v6836
        %v6882 = vmul.f32 %v6861, %v6837
        %v6883 = vmul.f32 %v6865, %v6838
        %v6884 = vadd.f32 %v6872, %v6873
        %v6885 = vadd.f32 %v6878, %v6879
        %v6886 = vadd.f32 %v6884, %v6874
        %v6887 = vadd.f32 %v6885, %v6880
        %v6888 = vadd.f32 %v6886, %v6875
        %v6889 = vadd.f32 %v6887, %v6881
        %v6890 = vadd.f32 %v6888, %v6876
        %v6891 = vadd.f32 %v6889, %v6882
        %v6892 = vadd.f32 %v6890, %v6877
        %v6893 = vadd.f32 %v6891, %v6883
        %v6894 = vadd.f32 %v6762, %v6892
        %v6895 = vadd.f32 %v6763, %v6893
        %s6896 = scalar_lea.vmem %s183, 601 [#allocation2]
        %v6897 = vld [vmem:[%s6896] ss:$2 sm:$0x3f]
        %v6899 = vlaneseq
        %v6900 = vshrl.u32 %v6899, 7
        %v6901 = vsub.s32 0, %v6900
        %v6902 = vrot.slane %v6897, %v6901
        %v6903 = vlaneseq
        %v6904 = vshrl.u32 %v6903, 7
        %v6905 = vsub.s32 1, %v6904
        %v6906 = vrot.slane %v6897, %v6905
        %v6907 = vlaneseq
        %v6908 = vshrl.u32 %v6907, 7
        %v6909 = vsub.s32 2, %v6908
        %v6910 = vrot.slane %v6897, %v6909
        %v6911 = vlaneseq
        %v6912 = vshrl.u32 %v6911, 7
        %v6913 = vsub.s32 3, %v6912
        %v6914 = vrot.slane %v6897, %v6913
        %v6915 = vlaneseq
        %v6916 = vshrl.u32 %v6915, 7
        %v6917 = vsub.s32 4, %v6916
        %v6918 = vrot.slane %v6897, %v6917
        %v6919 = vlaneseq
        %v6920 = vshrl.u32 %v6919, 7
        %v6921 = vsub.s32 5, %v6920
        %v6922 = vrot.slane %v6897, %v6921
        %v6929 = vmul.f32 %v6902, %v6827
        %v6930 = vmul.f32 %v6906, %v6828
        %v6931 = vmul.f32 %v6910, %v6829
        %v6932 = vmul.f32 %v6914, %v6830
        %v6933 = vmul.f32 %v6918, %v6831
        %v6934 = vmul.f32 %v6922, %v6832
        %v6935 = vmul.f32 %v6902, %v6833
        %v6936 = vmul.f32 %v6906, %v6834
        %v6937 = vmul.f32 %v6910, %v6835
        %v6938 = vmul.f32 %v6914, %v6836
        %v6939 = vmul.f32 %v6918, %v6837
        %v6940 = vmul.f32 %v6922, %v6838
        %v6941 = vadd.f32 %v6929, %v6930
        %v6942 = vadd.f32 %v6935, %v6936
        %v6943 = vadd.f32 %v6941, %v6931
        %v6944 = vadd.f32 %v6942, %v6937
        %v6945 = vadd.f32 %v6943, %v6932
        %v6946 = vadd.f32 %v6944, %v6938
        %v6947 = vadd.f32 %v6945, %v6933
        %v6948 = vadd.f32 %v6946, %v6939
        %v6949 = vadd.f32 %v6947, %v6934
        %v6950 = vadd.f32 %v6948, %v6940
        %v6951 = vadd.f32 %v6819, %v6949
        %v6952 = vadd.f32 %v6820, %v6950
        %v6953 = vld [vmem:[%s192 + $0x4c8] sm:$0xff]
        %v6954 = vld [vmem:[%s192 + $0x4d0] sm:$0xff]
        %v6955 = vld [vmem:[%s192 + $0x4d8] sm:$0xff]
        %v6956 = vld [vmem:[%s192 + $0x9f0] sm:$0x33]
        %v6957 = vld [vmem:[%s192 + $0x9f8] sm:$0x33]
        %v6958 = vld [vmem:[%s192 + $0xa00] sm:$0x33]
        %v6959 = vunpack.c.l.bf16 %v6953
        %v6960 = vunpack.c.h.bf16 %v6953
        %v6961 = vunpack.c.l.bf16 %v6954
        %v6962 = vunpack.c.h.bf16 %v6954
        %v6963 = vunpack.c.l.bf16 %v6955
        %v6964 = vunpack.c.h.bf16 %v6955
        %v6965 = vunpack.c.l.bf16 %v6956
        %v6966 = vunpack.c.h.bf16 %v6956
        %v6967 = vunpack.c.l.bf16 %v6957
        %v6968 = vunpack.c.h.bf16 %v6957
        %v6969 = vunpack.c.l.bf16 %v6958
        %v6970 = vunpack.c.h.bf16 %v6958
        %s6971 = scalar_lea.vmem %s183, 612 [#allocation2]
        %v6972 = vld [vmem:[%s6971] ss:$2 sm:$0x3f]
        %v6974 = vlaneseq
        %v6975 = vshrl.u32 %v6974, 7
        %v6976 = vsub.s32 0, %v6975
        %v6977 = vrot.slane %v6972, %v6976
        %v6978 = vlaneseq
        %v6979 = vshrl.u32 %v6978, 7
        %v6980 = vsub.s32 1, %v6979
        %v6981 = vrot.slane %v6972, %v6980
        %v6982 = vlaneseq
        %v6983 = vshrl.u32 %v6982, 7
        %v6984 = vsub.s32 2, %v6983
        %v6985 = vrot.slane %v6972, %v6984
        %v6986 = vlaneseq
        %v6987 = vshrl.u32 %v6986, 7
        %v6988 = vsub.s32 3, %v6987
        %v6989 = vrot.slane %v6972, %v6988
        %v6990 = vlaneseq
        %v6991 = vshrl.u32 %v6990, 7
        %v6992 = vsub.s32 4, %v6991
        %v6993 = vrot.slane %v6972, %v6992
        %v6994 = vlaneseq
        %v6995 = vshrl.u32 %v6994, 7
        %v6996 = vsub.s32 5, %v6995
        %v6997 = vrot.slane %v6972, %v6996
        %v7004 = vmul.f32 %v6977, %v6959
        %v7005 = vmul.f32 %v6981, %v6960
        %v7006 = vmul.f32 %v6985, %v6961
        %v7007 = vmul.f32 %v6989, %v6962
        %v7008 = vmul.f32 %v6993, %v6963
        %v7009 = vmul.f32 %v6997, %v6964
        %v7010 = vmul.f32 %v6977, %v6965
        %v7011 = vmul.f32 %v6981, %v6966
        %v7012 = vmul.f32 %v6985, %v6967
        %v7013 = vmul.f32 %v6989, %v6968
        %v7014 = vmul.f32 %v6993, %v6969
        %v7015 = vmul.f32 %v6997, %v6970
        %v7016 = vadd.f32 %v7004, %v7005
        %v7017 = vadd.f32 %v7010, %v7011
        %v7018 = vadd.f32 %v7016, %v7006
        %v7019 = vadd.f32 %v7017, %v7012
        %v7020 = vadd.f32 %v7018, %v7007
        %v7021 = vadd.f32 %v7019, %v7013
        %v7022 = vadd.f32 %v7020, %v7008
        %v7023 = vadd.f32 %v7021, %v7014
        %v7024 = vadd.f32 %v7022, %v7009
        %v7025 = vadd.f32 %v7023, %v7015
        %v7026 = vadd.f32 %v6894, %v7024
        %v7027 = vadd.f32 %v6895, %v7025
        %s7028 = scalar_lea.vmem %s183, 613 [#allocation2]
        %v7029 = vld [vmem:[%s7028] ss:$2 sm:$0x3f]
        %v7031 = vlaneseq
        %v7032 = vshrl.u32 %v7031, 7
        %v7033 = vsub.s32 0, %v7032
        %v7034 = vrot.slane %v7029, %v7033
        %v7035 = vlaneseq
        %v7036 = vshrl.u32 %v7035, 7
        %v7037 = vsub.s32 1, %v7036
        %v7038 = vrot.slane %v7029, %v7037
        %v7039 = vlaneseq
        %v7040 = vshrl.u32 %v7039, 7
        %v7041 = vsub.s32 2, %v7040
        %v7042 = vrot.slane %v7029, %v7041
        %v7043 = vlaneseq
        %v7044 = vshrl.u32 %v7043, 7
        %v7045 = vsub.s32 3, %v7044
        %v7046 = vrot.slane %v7029, %v7045
        %v7047 = vlaneseq
        %v7048 = vshrl.u32 %v7047, 7
        %v7049 = vsub.s32 4, %v7048
        %v7050 = vrot.slane %v7029, %v7049
        %v7051 = vlaneseq
        %v7052 = vshrl.u32 %v7051, 7
        %v7053 = vsub.s32 5, %v7052
        %v7054 = vrot.slane %v7029, %v7053
        %v7061 = vmul.f32 %v7034, %v6959
        %v7062 = vmul.f32 %v7038, %v6960
        %v7063 = vmul.f32 %v7042, %v6961
        %v7064 = vmul.f32 %v7046, %v6962
        %v7065 = vmul.f32 %v7050, %v6963
        %v7066 = vmul.f32 %v7054, %v6964
        %v7067 = vmul.f32 %v7034, %v6965
        %v7068 = vmul.f32 %v7038, %v6966
        %v7069 = vmul.f32 %v7042, %v6967
        %v7070 = vmul.f32 %v7046, %v6968
        %v7071 = vmul.f32 %v7050, %v6969
        %v7072 = vmul.f32 %v7054, %v6970
        %v7073 = vadd.f32 %v7061, %v7062
        %v7074 = vadd.f32 %v7067, %v7068
        %v7075 = vadd.f32 %v7073, %v7063
        %v7076 = vadd.f32 %v7074, %v7069
        %v7077 = vadd.f32 %v7075, %v7064
        %v7078 = vadd.f32 %v7076, %v7070
        %v7079 = vadd.f32 %v7077, %v7065
        %v7080 = vadd.f32 %v7078, %v7071
        %v7081 = vadd.f32 %v7079, %v7066
        %v7082 = vadd.f32 %v7080, %v7072
        %v7083 = vadd.f32 %v6951, %v7081
        %v7084 = vadd.f32 %v6952, %v7082
        %v7085 = vld [vmem:[%s192 + $0x4e0] sm:$0xff]
        %v7086 = vld [vmem:[%s192 + $0x4e8] sm:$0xff]
        %v7087 = vld [vmem:[%s192 + $0x4f0] sm:$0xff]
        %v7088 = vld [vmem:[%s192 + $0xa08] sm:$0x33]
        %v7089 = vld [vmem:[%s192 + $0xa10] sm:$0x33]
        %v7090 = vld [vmem:[%s192 + $0xa18] sm:$0x33]
        %v7091 = vunpack.c.l.bf16 %v7085
        %v7092 = vunpack.c.h.bf16 %v7085
        %v7093 = vunpack.c.l.bf16 %v7086
        %v7094 = vunpack.c.h.bf16 %v7086
        %v7095 = vunpack.c.l.bf16 %v7087
        %v7096 = vunpack.c.h.bf16 %v7087
        %v7097 = vunpack.c.l.bf16 %v7088
        %v7098 = vunpack.c.h.bf16 %v7088
        %v7099 = vunpack.c.l.bf16 %v7089
        %v7100 = vunpack.c.h.bf16 %v7089
        %v7101 = vunpack.c.l.bf16 %v7090
        %v7102 = vunpack.c.h.bf16 %v7090
        %s7103 = scalar_lea.vmem %s183, 624 [#allocation2]
        %v7104 = vld [vmem:[%s7103] ss:$2 sm:$0x3f]
        %v7106 = vlaneseq
        %v7107 = vshrl.u32 %v7106, 7
        %v7108 = vsub.s32 0, %v7107
        %v7109 = vrot.slane %v7104, %v7108
        %v7110 = vlaneseq
        %v7111 = vshrl.u32 %v7110, 7
        %v7112 = vsub.s32 1, %v7111
        %v7113 = vrot.slane %v7104, %v7112
        %v7114 = vlaneseq
        %v7115 = vshrl.u32 %v7114, 7
        %v7116 = vsub.s32 2, %v7115
        %v7117 = vrot.slane %v7104, %v7116
        %v7118 = vlaneseq
        %v7119 = vshrl.u32 %v7118, 7
        %v7120 = vsub.s32 3, %v7119
        %v7121 = vrot.slane %v7104, %v7120
        %v7122 = vlaneseq
        %v7123 = vshrl.u32 %v7122, 7
        %v7124 = vsub.s32 4, %v7123
        %v7125 = vrot.slane %v7104, %v7124
        %v7126 = vlaneseq
        %v7127 = vshrl.u32 %v7126, 7
        %v7128 = vsub.s32 5, %v7127
        %v7129 = vrot.slane %v7104, %v7128
        %v7136 = vmul.f32 %v7109, %v7091
        %v7137 = vmul.f32 %v7113, %v7092
        %v7138 = vmul.f32 %v7117, %v7093
        %v7139 = vmul.f32 %v7121, %v7094
        %v7140 = vmul.f32 %v7125, %v7095
        %v7141 = vmul.f32 %v7129, %v7096
        %v7142 = vmul.f32 %v7109, %v7097
        %v7143 = vmul.f32 %v7113, %v7098
        %v7144 = vmul.f32 %v7117, %v7099
        %v7145 = vmul.f32 %v7121, %v7100
        %v7146 = vmul.f32 %v7125, %v7101
        %v7147 = vmul.f32 %v7129, %v7102
        %v7148 = vadd.f32 %v7136, %v7137
        %v7149 = vadd.f32 %v7142, %v7143
        %v7150 = vadd.f32 %v7148, %v7138
        %v7151 = vadd.f32 %v7149, %v7144
        %v7152 = vadd.f32 %v7150, %v7139
        %v7153 = vadd.f32 %v7151, %v7145
        %v7154 = vadd.f32 %v7152, %v7140
        %v7155 = vadd.f32 %v7153, %v7146
        %v7156 = vadd.f32 %v7154, %v7141
        %v7157 = vadd.f32 %v7155, %v7147
        %v7158 = vadd.f32 %v7026, %v7156
        %v7159 = vadd.f32 %v7027, %v7157
        %s7160 = scalar_lea.vmem %s183, 625 [#allocation2]
        %v7161 = vld [vmem:[%s7160] ss:$2 sm:$0x3f]
        %v7163 = vlaneseq
        %v7164 = vshrl.u32 %v7163, 7
        %v7165 = vsub.s32 0, %v7164
        %v7166 = vrot.slane %v7161, %v7165
        %v7167 = vlaneseq
        %v7168 = vshrl.u32 %v7167, 7
        %v7169 = vsub.s32 1, %v7168
        %v7170 = vrot.slane %v7161, %v7169
        %v7171 = vlaneseq
        %v7172 = vshrl.u32 %v7171, 7
        %v7173 = vsub.s32 2, %v7172
        %v7174 = vrot.slane %v7161, %v7173
        %v7175 = vlaneseq
        %v7176 = vshrl.u32 %v7175, 7
        %v7177 = vsub.s32 3, %v7176
        %v7178 = vrot.slane %v7161, %v7177
        %v7179 = vlaneseq
        %v7180 = vshrl.u32 %v7179, 7
        %v7181 = vsub.s32 4, %v7180
        %v7182 = vrot.slane %v7161, %v7181
        %v7183 = vlaneseq
        %v7184 = vshrl.u32 %v7183, 7
        %v7185 = vsub.s32 5, %v7184
        %v7186 = vrot.slane %v7161, %v7185
        %v7193 = vmul.f32 %v7166, %v7091
        %v7194 = vmul.f32 %v7170, %v7092
        %v7195 = vmul.f32 %v7174, %v7093
        %v7196 = vmul.f32 %v7178, %v7094
        %v7197 = vmul.f32 %v7182, %v7095
        %v7198 = vmul.f32 %v7186, %v7096
        %v7199 = vmul.f32 %v7166, %v7097
        %v7200 = vmul.f32 %v7170, %v7098
        %v7201 = vmul.f32 %v7174, %v7099
        %v7202 = vmul.f32 %v7178, %v7100
        %v7203 = vmul.f32 %v7182, %v7101
        %v7204 = vmul.f32 %v7186, %v7102
        %v7205 = vadd.f32 %v7193, %v7194
        %v7206 = vadd.f32 %v7199, %v7200
        %v7207 = vadd.f32 %v7205, %v7195
        %v7208 = vadd.f32 %v7206, %v7201
        %v7209 = vadd.f32 %v7207, %v7196
        %v7210 = vadd.f32 %v7208, %v7202
        %v7211 = vadd.f32 %v7209, %v7197
        %v7212 = vadd.f32 %v7210, %v7203
        %v7213 = vadd.f32 %v7211, %v7198
        %v7214 = vadd.f32 %v7212, %v7204
        %v7215 = vadd.f32 %v7083, %v7213
        %v7216 = vadd.f32 %v7084, %v7214
        %v7217 = vld [vmem:[%s192 + $0x4f8] sm:$0xff]
        %v7218 = vld [vmem:[%s192 + $0x500] sm:$0xff]
        %v7219 = vld [vmem:[%s192 + $0x508] sm:$0xff]
        %v7220 = vld [vmem:[%s192 + $0xa20] sm:$0x33]
        %v7221 = vld [vmem:[%s192 + $0xa28] sm:$0x33]
        %v7222 = vld [vmem:[%s192 + $0xa30] sm:$0x33]
        %v7223 = vunpack.c.l.bf16 %v7217
        %v7224 = vunpack.c.h.bf16 %v7217
        %v7225 = vunpack.c.l.bf16 %v7218
        %v7226 = vunpack.c.h.bf16 %v7218
        %v7227 = vunpack.c.l.bf16 %v7219
        %v7228 = vunpack.c.h.bf16 %v7219
        %v7229 = vunpack.c.l.bf16 %v7220
        %v7230 = vunpack.c.h.bf16 %v7220
        %v7231 = vunpack.c.l.bf16 %v7221
        %v7232 = vunpack.c.h.bf16 %v7221
        %v7233 = vunpack.c.l.bf16 %v7222
        %v7234 = vunpack.c.h.bf16 %v7222
        %s7235 = scalar_lea.vmem %s183, 636 [#allocation2]
        %v7236 = vld [vmem:[%s7235] ss:$2 sm:$0x3f]
        %v7238 = vlaneseq
        %v7239 = vshrl.u32 %v7238, 7
        %v7240 = vsub.s32 0, %v7239
        %v7241 = vrot.slane %v7236, %v7240
        %v7242 = vlaneseq
        %v7243 = vshrl.u32 %v7242, 7
        %v7244 = vsub.s32 1, %v7243
        %v7245 = vrot.slane %v7236, %v7244
        %v7246 = vlaneseq
        %v7247 = vshrl.u32 %v7246, 7
        %v7248 = vsub.s32 2, %v7247
        %v7249 = vrot.slane %v7236, %v7248
        %v7250 = vlaneseq
        %v7251 = vshrl.u32 %v7250, 7
        %v7252 = vsub.s32 3, %v7251
        %v7253 = vrot.slane %v7236, %v7252
        %v7254 = vlaneseq
        %v7255 = vshrl.u32 %v7254, 7
        %v7256 = vsub.s32 4, %v7255
        %v7257 = vrot.slane %v7236, %v7256
        %v7258 = vlaneseq
        %v7259 = vshrl.u32 %v7258, 7
        %v7260 = vsub.s32 5, %v7259
        %v7261 = vrot.slane %v7236, %v7260
        %v7268 = vmul.f32 %v7241, %v7223
        %v7269 = vmul.f32 %v7245, %v7224
        %v7270 = vmul.f32 %v7249, %v7225
        %v7271 = vmul.f32 %v7253, %v7226
        %v7272 = vmul.f32 %v7257, %v7227
        %v7273 = vmul.f32 %v7261, %v7228
        %v7274 = vmul.f32 %v7241, %v7229
        %v7275 = vmul.f32 %v7245, %v7230
        %v7276 = vmul.f32 %v7249, %v7231
        %v7277 = vmul.f32 %v7253, %v7232
        %v7278 = vmul.f32 %v7257, %v7233
        %v7279 = vmul.f32 %v7261, %v7234
        %v7280 = vadd.f32 %v7268, %v7269
        %v7281 = vadd.f32 %v7274, %v7275
        %v7282 = vadd.f32 %v7280, %v7270
        %v7283 = vadd.f32 %v7281, %v7276
        %v7284 = vadd.f32 %v7282, %v7271
        %v7285 = vadd.f32 %v7283, %v7277
        %v7286 = vadd.f32 %v7284, %v7272
        %v7287 = vadd.f32 %v7285, %v7278
        %v7288 = vadd.f32 %v7286, %v7273
        %v7289 = vadd.f32 %v7287, %v7279
        %v7290 = vadd.f32 %v7158, %v7288
        %v7291 = vadd.f32 %v7159, %v7289
        %s7292 = scalar_lea.vmem %s183, 637 [#allocation2]
        %v7293 = vld [vmem:[%s7292] ss:$2 sm:$0x3f]
        %v7295 = vlaneseq
        %v7296 = vshrl.u32 %v7295, 7
        %v7297 = vsub.s32 0, %v7296
        %v7298 = vrot.slane %v7293, %v7297
        %v7299 = vlaneseq
        %v7300 = vshrl.u32 %v7299, 7
        %v7301 = vsub.s32 1, %v7300
        %v7302 = vrot.slane %v7293, %v7301
        %v7303 = vlaneseq
        %v7304 = vshrl.u32 %v7303, 7
        %v7305 = vsub.s32 2, %v7304
        %v7306 = vrot.slane %v7293, %v7305
        %v7307 = vlaneseq
        %v7308 = vshrl.u32 %v7307, 7
        %v7309 = vsub.s32 3, %v7308
        %v7310 = vrot.slane %v7293, %v7309
        %v7311 = vlaneseq
        %v7312 = vshrl.u32 %v7311, 7
        %v7313 = vsub.s32 4, %v7312
        %v7314 = vrot.slane %v7293, %v7313
        %v7315 = vlaneseq
        %v7316 = vshrl.u32 %v7315, 7
        %v7317 = vsub.s32 5, %v7316
        %v7318 = vrot.slane %v7293, %v7317
        %v7325 = vmul.f32 %v7298, %v7223
        %v7326 = vmul.f32 %v7302, %v7224
        %v7327 = vmul.f32 %v7306, %v7225
        %v7328 = vmul.f32 %v7310, %v7226
        %v7329 = vmul.f32 %v7314, %v7227
        %v7330 = vmul.f32 %v7318, %v7228
        %v7331 = vmul.f32 %v7298, %v7229
        %v7332 = vmul.f32 %v7302, %v7230
        %v7333 = vmul.f32 %v7306, %v7231
        %v7334 = vmul.f32 %v7310, %v7232
        %v7335 = vmul.f32 %v7314, %v7233
        %v7336 = vmul.f32 %v7318, %v7234
        %v7337 = vadd.f32 %v7325, %v7326
        %v7338 = vadd.f32 %v7331, %v7332
        %v7339 = vadd.f32 %v7337, %v7327
        %v7340 = vadd.f32 %v7338, %v7333
        %v7341 = vadd.f32 %v7339, %v7328
        %v7342 = vadd.f32 %v7340, %v7334
        %v7343 = vadd.f32 %v7341, %v7329
        %v7344 = vadd.f32 %v7342, %v7335
        %v7345 = vadd.f32 %v7343, %v7330
        %v7346 = vadd.f32 %v7344, %v7336
        %v7347 = vadd.f32 %v7215, %v7345
        %v7348 = vadd.f32 %v7216, %v7346
        %v7349 = vld [vmem:[%s192 + $0x510] sm:$0xff]
        %v7350 = vld [vmem:[%s192 + $0x518] sm:$0xff]
        %v7351 = vld [vmem:[%s192 + $0x520] sm:$0xff]
        %v7352 = vld [vmem:[%s192 + $0xa38] sm:$0x33]
        %v7353 = vld [vmem:[%s192 + $0xa40] sm:$0x33]
        %v7354 = vld [vmem:[%s192 + $0xa48] sm:$0x33]
        %v7355 = vunpack.c.l.bf16 %v7349
        %v7356 = vunpack.c.h.bf16 %v7349
        %v7357 = vunpack.c.l.bf16 %v7350
        %v7358 = vunpack.c.h.bf16 %v7350
        %v7359 = vunpack.c.l.bf16 %v7351
        %v7360 = vunpack.c.h.bf16 %v7351
        %v7361 = vunpack.c.l.bf16 %v7352
        %v7362 = vunpack.c.h.bf16 %v7352
        %v7363 = vunpack.c.l.bf16 %v7353
        %v7364 = vunpack.c.h.bf16 %v7353
        %v7365 = vunpack.c.l.bf16 %v7354
        %v7366 = vunpack.c.h.bf16 %v7354
        %s7367 = scalar_lea.vmem %s183, 648 [#allocation2]
        %v7368 = vld [vmem:[%s7367] ss:$2 sm:$0x3f]
        %v7370 = vlaneseq
        %v7371 = vshrl.u32 %v7370, 7
        %v7372 = vsub.s32 0, %v7371
        %v7373 = vrot.slane %v7368, %v7372
        %v7374 = vlaneseq
        %v7375 = vshrl.u32 %v7374, 7
        %v7376 = vsub.s32 1, %v7375
        %v7377 = vrot.slane %v7368, %v7376
        %v7378 = vlaneseq
        %v7379 = vshrl.u32 %v7378, 7
        %v7380 = vsub.s32 2, %v7379
        %v7381 = vrot.slane %v7368, %v7380
        %v7382 = vlaneseq
        %v7383 = vshrl.u32 %v7382, 7
        %v7384 = vsub.s32 3, %v7383
        %v7385 = vrot.slane %v7368, %v7384
        %v7386 = vlaneseq
        %v7387 = vshrl.u32 %v7386, 7
        %v7388 = vsub.s32 4, %v7387
        %v7389 = vrot.slane %v7368, %v7388
        %v7390 = vlaneseq
        %v7391 = vshrl.u32 %v7390, 7
        %v7392 = vsub.s32 5, %v7391
        %v7393 = vrot.slane %v7368, %v7392
        %v7400 = vmul.f32 %v7373, %v7355
        %v7401 = vmul.f32 %v7377, %v7356
        %v7402 = vmul.f32 %v7381, %v7357
        %v7403 = vmul.f32 %v7385, %v7358
        %v7404 = vmul.f32 %v7389, %v7359
        %v7405 = vmul.f32 %v7393, %v7360
        %v7406 = vmul.f32 %v7373, %v7361
        %v7407 = vmul.f32 %v7377, %v7362
        %v7408 = vmul.f32 %v7381, %v7363
        %v7409 = vmul.f32 %v7385, %v7364
        %v7410 = vmul.f32 %v7389, %v7365
        %v7411 = vmul.f32 %v7393, %v7366
        %v7412 = vadd.f32 %v7400, %v7401
        %v7413 = vadd.f32 %v7406, %v7407
        %v7414 = vadd.f32 %v7412, %v7402
        %v7415 = vadd.f32 %v7413, %v7408
        %v7416 = vadd.f32 %v7414, %v7403
        %v7417 = vadd.f32 %v7415, %v7409
        %v7418 = vadd.f32 %v7416, %v7404
        %v7419 = vadd.f32 %v7417, %v7410
        %v7420 = vadd.f32 %v7418, %v7405
        %v7421 = vadd.f32 %v7419, %v7411
        %v7422 = vadd.f32 %v7290, %v7420
        %v7423 = vadd.f32 %v7291, %v7421
        %s7424 = scalar_lea.vmem %s183, 649 [#allocation2]
        %v7425 = vld [vmem:[%s7424] ss:$2 sm:$0x3f]
        %v7427 = vlaneseq
        %v7428 = vshrl.u32 %v7427, 7
        %v7429 = vsub.s32 0, %v7428
        %v7430 = vrot.slane %v7425, %v7429
        %v7431 = vlaneseq
        %v7432 = vshrl.u32 %v7431, 7
        %v7433 = vsub.s32 1, %v7432
        %v7434 = vrot.slane %v7425, %v7433
        %v7435 = vlaneseq
        %v7436 = vshrl.u32 %v7435, 7
        %v7437 = vsub.s32 2, %v7436
        %v7438 = vrot.slane %v7425, %v7437
        %v7439 = vlaneseq
        %v7440 = vshrl.u32 %v7439, 7
        %v7441 = vsub.s32 3, %v7440
        %v7442 = vrot.slane %v7425, %v7441
        %v7443 = vlaneseq
        %v7444 = vshrl.u32 %v7443, 7
        %v7445 = vsub.s32 4, %v7444
        %v7446 = vrot.slane %v7425, %v7445
        %v7447 = vlaneseq
        %v7448 = vshrl.u32 %v7447, 7
        %v7449 = vsub.s32 5, %v7448
        %v7450 = vrot.slane %v7425, %v7449
        %v7457 = vmul.f32 %v7430, %v7355
        %v7458 = vmul.f32 %v7434, %v7356
        %v7459 = vmul.f32 %v7438, %v7357
        %v7460 = vmul.f32 %v7442, %v7358
        %v7461 = vmul.f32 %v7446, %v7359
        %v7462 = vmul.f32 %v7450, %v7360
        %v7463 = vmul.f32 %v7430, %v7361
        %v7464 = vmul.f32 %v7434, %v7362
        %v7465 = vmul.f32 %v7438, %v7363
        %v7466 = vmul.f32 %v7442, %v7364
        %v7467 = vmul.f32 %v7446, %v7365
        %v7468 = vmul.f32 %v7450, %v7366
        %v7469 = vadd.f32 %v7457, %v7458
        %v7470 = vadd.f32 %v7463, %v7464
        %v7471 = vadd.f32 %v7469, %v7459
        %v7472 = vadd.f32 %v7470, %v7465
        %v7473 = vadd.f32 %v7471, %v7460
        %v7474 = vadd.f32 %v7472, %v7466
        %v7475 = vadd.f32 %v7473, %v7461
        %v7476 = vadd.f32 %v7474, %v7467
        %v7477 = vadd.f32 %v7475, %v7462
        %v7478 = vadd.f32 %v7476, %v7468
        %v7479 = vadd.f32 %v7347, %v7477
        %v7480 = vadd.f32 %v7348, %v7478
        %7481 = vadd.xlane.f32.xlu0 %v7422
        %v7482 = vpop.xlane.xlu0 %7481
        %vm7483 = vcmask 1042432
        %v7484 = vsel %vm7483, %v7423, 0.0
        %7485 = vadd.xlane.f32.xlu0 %v7484
        %v7486 = vpop.xlane.xlu0 %7485
        %7487 = vadd.xlane.f32.xlu0 %v7479
        %v7488 = vpop.xlane.xlu0 %7487
        %v7489 = vsel %vm7483, %v7480, 0.0
        %7490 = vadd.xlane.f32.xlu0 %v7489
        %v7491 = vpop.xlane.xlu0 %7490
        %p7492 = scmp.eq.s32.totalorder %s27, 0
        // Predicated region
        $region37: #{tpu_custom_call.1} parent=27 // pred_check
          %p7493 = pneg %p7492
        $region38: #{tpu_custom_call.1} parent=27 // pred_check_branch
          %7495 = sbr.rel (%p7493) target = $region40
        $region39: #{tpu_custom_call.1} parent=27 // pred_region
          %v7500 = vlaneseq
          %v7501 = vand.u32 %v7500, 127
          %v7502 = vlaneseq
          %v7503 = vshrl.u32 %v7502, 7
          %v7504 = vsub.s32 %v7501, %v7503
          %v7505 = vrot.slane %v7482, %v7504
          %v7506 = vadd.s32 %v7501, 4294967288
          %v7507 = vlaneseq
          %v7508 = vshrl.u32 %v7507, 7
          %v7509 = vsub.s32 %v7506, %v7508
          %v7510 = vrot.slane %v7486, %v7509
          %vm7511 = vcmask 130112
          %v7512 = vsel %vm7511, %v7510, %v7505
          %v7513 = vlaneseq
          %v7514 = vshrl.u32 %v7513, 7
          %v7515 = vsub.s32 %v7501, %v7514
          %v7516 = vrot.slane %v7488, %v7515
          %v7517 = vlaneseq
          %v7518 = vshrl.u32 %v7517, 7
          %v7519 = vsub.s32 %v7506, %v7518
          %v7520 = vrot.slane %v7491, %v7519
          %v7521 = vsel %vm7511, %v7520, %v7516
          %vm7522 = vcmask 1041409
          %v7523 = vsel %vm7522, %v7521, %v7512
          %vm7525 = vcmask 82944
          %7526 = vst.msk [vmem:[%s217] sm:$0x3] %vm7525, %v7523
        $region40: #{tpu_custom_call.1} parent=27 // pred_fallthru
          _
        %p7527 = scmp.ne.s32.totalorder %s27, 0
        // Predicated region
        $region41: #{tpu_custom_call.1} parent=27 // pred_check
          %p7528 = pneg %p7527
        $region42: #{tpu_custom_call.1} parent=27 // pred_check_branch
          %7530 = sbr.rel (%p7528) target = $region44
        $region43: #{tpu_custom_call.1} parent=27 // pred_region
          %v7531 = vld [vmem:[%s217] sm:$0x3]
          %v7536 = vlaneseq
          %v7537 = vand.u32 %v7536, 127
          %v7538 = vlaneseq
          %v7539 = vshrl.u32 %v7538, 7
          %v7540 = vsub.s32 %v7537, %v7539
          %v7541 = vrot.slane %v7482, %v7540
          %v7542 = vadd.s32 %v7537, 4294967288
          %v7543 = vlaneseq
          %v7544 = vshrl.u32 %v7543, 7
          %v7545 = vsub.s32 %v7542, %v7544
          %v7546 = vrot.slane %v7486, %v7545
          %vm7547 = vcmask 130112
          %v7548 = vsel %vm7547, %v7546, %v7541
          %v7549 = vlaneseq
          %v7550 = vshrl.u32 %v7549, 7
          %v7551 = vsub.s32 %v7537, %v7550
          %v7552 = vrot.slane %v7488, %v7551
          %v7553 = vlaneseq
          %v7554 = vshrl.u32 %v7553, 7
          %v7555 = vsub.s32 %v7542, %v7554
          %v7556 = vrot.slane %v7491, %v7555
          %v7557 = vsel %vm7547, %v7556, %v7552
          %vm7558 = vcmask 1041409
          %v7559 = vsel %vm7558, %v7557, %v7548
          %v7561 = vadd.f32 %v7531, %v7559
          %vm7562 = vcmask 82944
          %7563 = vst.msk [vmem:[%s217] sm:$0x3] %vm7562, %v7561
        $region44: #{tpu_custom_call.1} parent=27 // pred_fallthru
          _
        %s7564 = sand.u32 %s98, 1
        %s7565 = scalar_lea.sflag [#allocation4], %s7564
        %s7566 = sand.u32 %s98, 1
        %s7567 = smul.addr %s7566, 2
        %s7568 = scalar_lea.vmem [#allocation7], %s7567
        // Predicated region
        $region45: #{tpu_custom_call.1} parent=27 // pred_check
          %p7569 = pneg %p108
        $region46: #{tpu_custom_call.1} parent=27 // pred_check_branch
          %7571 = sbr.rel (%p7569) target = $region48
        $region47: #{tpu_custom_call.1} parent=27 // pred_region
          %s7573 = ssub.s32 32, 32
          %7574 = vsyncadd %s7565, %s7573
          %s7575 = smul.addr %s26, 32
          %s7576 = scalar_lea.hbm %s2, %s7575
          %s7578 = sshll.u32 %s7568, 4
          %s7579 = int_to_ptr.vmem [resolvable:$true] %s7578
          %7581 = dma.vmem_to_hbm [thread:$0]  %s7579, 32, %s7576, %s7565
        $region48: #{tpu_custom_call.1} parent=27 // pred_fallthru
          _
      $region28: #{tpu_custom_call.1} parent=5 // pred_fallthru
        _
      %p7582 = scmp.le.s32.totalorder 2, %s17
      // Predicated region
      $region49: #{tpu_custom_call.1} parent=5 // pred_check
        %p7583 = pneg %p7582
      $region50: #{tpu_custom_call.1} parent=5 // pred_check_branch
        %7585 = sbr.rel (%p7583) target = $region52
      $region51: #{tpu_custom_call.1} parent=5 // pred_region
        %s7586 = ssub.s32 %s17, 2
        // Predicated region
        $region53: #{tpu_custom_call.1} parent=51 // pred_check
          %p7587 = pneg %p114
        $region54: #{tpu_custom_call.1} parent=51 // pred_check_branch
          %7589 = sbr.rel (%p7587) target = $region56
        $region55: #{tpu_custom_call.1} parent=51 // pred_region
          %s7590 = sand.u32 %s99, 1
          %s7591 = scalar_lea.sflag [#allocation4], %s7590
          %s7592 = sand.u32 %s99, 1
          %s7593 = smul.addr %s7592, 2
          %s7594 = scalar_lea.vmem [#allocation7], %s7593
          %7595 = dma.done %s7591, 32
        $region56: #{tpu_custom_call.1} parent=51 // pred_fallthru
          _
      $region52: #{tpu_custom_call.1} parent=5 // pred_fallthru
        _
    $region6: #{tpu_custom_call.1} parent=1 // loop_footer
      %s21 = sadd.s32 1, %s17
    $region7: #{tpu_custom_call.1} parent=1 // loop_footer_branch
      %16 = sbr.rel target = $region3
    $region8: #{tpu_custom_call.1} parent=1 // loop_exit
      _
    %7596 = vsyncpa [#allocation3], 1
    %s7597 = scalar_lea.sflag [#allocation3], 1
    %7598 = vsyncpa %s7597, 1
    %7599 = vsyncpa [#allocation6], 1
    %s7600 = scalar_lea.sflag [#allocation6], 1
    %7601 = vsyncpa %s7600, 1
    %7602 = vsyncpa [#allocation4], 1
    %s7603 = scalar_lea.sflag [#allocation4], 1
    %7604 = vsyncpa %s7603, 1

</llo_original>
